<compile_context>
chip_gen: v7x
topology: tpu7x:2x2x1
jax: 0.10.0
libtpu: 0.0.40
codegen_flags: <defaults>
</compile_context>

<pallas_src>
import functools
import math

import jax
import jax.numpy as jnp
import numpy as np
from jax import lax
from jax.experimental import pallas as pl
from jax.experimental.pallas import tpu as pltpu


def _layernorm(x, gamma, beta, eps=1e-5):
    mu = jnp.mean(x, axis=-1, keepdims=True)
    xc = x - mu
    var = jnp.mean(xc * xc, axis=-1, keepdims=True)
    inv = lax.rsqrt(var + eps)
    return xc * inv * gamma + beta


def _cross_attn_ffn_kernel(
    q_ref, k_ref, v_ref,
    wq_ref, wk_ref, wv_ref, bq_ref, bk_ref, bv_ref,
    wo3_ref, bo_ref,
    g1_ref, be1_ref,
    w1_ref, b1_ref, w2_ref, b2_ref,
    g2_ref, be2_ref,
    out_ref,
    *, num_heads, b_blk, lq, lkv, split_heads_by_transpose,
):
    f32, bf16 = jnp.float32, jnp.bfloat16

    # Hoisted loads; q is also the residual input and stays f32.
    q = q_ref[...]            # (mq, E)
    k = k_ref[...]            # (mkv, E)
    v = v_ref[...]            # (mkv, E)

    # ---- batched in-projections: tall 2-D MXU matmuls over all rows of the block ----
    qp = jnp.dot(q.astype(bf16), wq_ref[...], preferred_element_type=f32) + bq_ref[...]
    kp = jnp.dot(k.astype(bf16), wk_ref[...], preferred_element_type=f32) + bk_ref[...]
    vp = jnp.dot(v.astype(bf16), wv_ref[...], preferred_element_type=f32) + bv_ref[...]

    embd = qp.shape[-1]
    hd = embd // num_heads
    mq = b_blk * lq
    scale = 1.0 / math.sqrt(hd)

    # Fold the softmax scale into q (cheaper than scaling the scores).
    qp_b = (qp * scale).astype(bf16)
    kp_b = kp.astype(bf16)
    vp_b = vp.astype(bf16)

    # Lane-dense output-projection accumulator; bias folded into the init (hoisted once).
    attn = jnp.broadcast_to(bo_ref[...], (mq, embd)).astype(f32)

    if split_heads_by_transpose:
        # One up-front relayout per operand; heads then live on the leading (batch) axis,
        # so the score/softmax/context step is a single batched matmul over (head, batch).
        def to_heads(x, seq):
            return (x.reshape(b_blk, seq, num_heads, hd)
                     .transpose(2, 0, 1, 3)
                     .reshape(num_heads * b_blk, seq, hd))

        qh = to_heads(qp_b, lq)
        kh = to_heads(kp_b, lkv)
        vh = to_heads(vp_b, lkv)

        s = jnp.einsum("bqd,bkd->bqk", qh, kh, preferred_element_type=f32)
        s = s - jnp.max(s, axis=-1, keepdims=True)
        p = jnp.exp(s)
        p = p * pl.reciprocal(jnp.sum(p, axis=-1, keepdims=True), approx=True)
        ctx = jnp.einsum("bqk,bkd->bqd", p.astype(bf16), vh,
                         preferred_element_type=f32)           # (nh*b_blk, lq, hd)

        # Fused per-head output projection: accumulate straight into the (mq, E) f32
        # accumulator -- no ctx scratch round trip, no masked partial stores.
        ctx_h = ctx.reshape(num_heads, mq, hd)
        for h in range(num_heads):                              # num_heads is small; static index
            attn = attn + jnp.dot(ctx_h[h].astype(bf16), wo3_ref[h],
                                  preferred_element_type=f32)
    else:
        # Fallback (no transposes): one lane slice per head (not per (batch, head)),
        # attention batched over the whole batch block inside each head.
        for h in range(num_heads):
            cs = slice(h * hd, (h + 1) * hd)
            qh = qp_b[:, cs].reshape(b_blk, lq, hd)
            kh = kp_b[:, cs].reshape(b_blk, lkv, hd)
            vh = vp_b[:, cs].reshape(b_blk, lkv, hd)
            s = jnp.einsum("bqd,bkd->bqk", qh, kh, preferred_element_type=f32)
            s = s - jnp.max(s, axis=-1, keepdims=True)
            p = jnp.exp(s)
            p = p * pl.reciprocal(jnp.sum(p, axis=-1, keepdims=True), approx=True)
            ctx = jnp.einsum("bqk,bkd->bqd", p.astype(bf16), vh,
                             preferred_element_type=f32)        # (b_blk, lq, hd)
            attn = attn + jnp.dot(ctx.reshape(mq, hd).astype(bf16), wo3_ref[h],
                                  preferred_element_type=f32)

    # ---- residual + LayerNorm 1 (f32 elementwise math) ----
    x = _layernorm(q + attn, g1_ref[...], be1_ref[...])

    # ---- FFN: Linear -> ReLU -> [Dropout=id] -> Linear -> [Dropout=id] ----
    h1 = jnp.dot(x.astype(bf16), w1_ref[...], preferred_element_type=f32) + b1_ref[...]
    h1 = jnp.maximum(h1, 0.0)
    ffn = jnp.dot(h1.astype(bf16), w2_ref[...], preferred_element_type=f32) + b2_ref[...]

    # ---- residual + LayerNorm 2; lane-dense (mq, E) store ----
    y = _layernorm(x + ffn, g2_ref[...], be2_ref[...])
    out_ref[...] = y.astype(out_ref.dtype)


# ----------------------------- wrapper-side sizing ---------------------------------


def _vmem_capacity_bytes():
    try:
        return int(pltpu.get_tpu_info().vmem_capacity_bytes)
    except Exception:
        return 64 * 1024 * 1024   # conservative (v7x-sized) default


def _estimate_vmem_bytes(b_blk, lq, lkv, embd, ffn_h, num_heads, weight_buffers):
    """Rough per-step VMEM footprint estimate (weights + pipelined blocks + temps)."""
    mq, mkv = b_blk * lq, b_blk * lkv
    weights = weight_buffers * 2 * (4 * embd * embd + 2 * embd * ffn_h)   # bf16 weights
    io = 2 * 4 * ((mq + 2 * mkv) * embd + mq * embd)     # double-buffered f32 row blocks
    tmp = 4 * (mq * (3 * embd + ffn_h) + 2 * mkv * embd)                  # f32 temps
    tmp += 2 * (mq + 2 * mkv) * embd                                      # bf16 head layouts
    tmp += 2 * 4 * num_heads * b_blk * lq * lkv                           # scores + probs
    return weights + io + tmp


def _pick_batch_block(batch, lq, lkv, embd, ffn_h, num_heads, *, target_rows=512):
    """Pick b_blk (divisor of batch) so that:
       * grid = batch // b_blk >= 2 when possible (megacore sharding + DMA overlap),
       * block sublane extents are multiples of 8 when grid > 1 ((8,128) rule),
       * the estimated VMEM footprint fits the device budget,
       * rows-per-step reaches target_rows when it can (MXU M fill, step overhead)."""
    budget = int(_vmem_capacity_bytes() * 0.7)
    divisors = [d for d in range(1, batch + 1) if batch % d == 0]

    def ok(d, need_grid_ge_2):
        grid = batch // d
        if need_grid_ge_2 and grid < 2:
            return False
        if grid > 1 and ((d * lq) % 8 or (d * lkv) % 8):
            return False
        return _estimate_vmem_bytes(d, lq, lkv, embd, ffn_h, num_heads, 1) <= budget

    for need2 in ((batch > 1), False):
        cands = [d for d in divisors if ok(d, need2)]
        if cands:
            for d in cands:
                if d * lq >= target_rows:
                    return d
            return max(cands)
    return 1


def _vmem_limit_bytes(b_blk, lq, lkv, embd, ffn_h, num_heads, weight_buffers):
    need = _estimate_vmem_bytes(b_blk, lq, lkv, embd, ffn_h, num_heads, weight_buffers)
    need += 8 * 1024 * 1024                      # scheduler / spill headroom
    cap = _vmem_capacity_bytes()
    return int(max(32 * 1024 * 1024, min(need, int(cap * 0.9))))


# ----------------------------------- entry point ------------------------------------


def cross_attention_ffn(query, key, value, params, num_heads):
    """query: [B, Lq, E], key/value: [B, Lkv, E]  ->  [B, Lq, E]"""
    B, Lq, E = query.shape
    _, Lkv, _ = key.shape
    assert E % num_heads == 0, "embd must be divisible by num_heads"
    H = params["w1_t"].shape[-1]
    hd = E // num_heads

    b_blk = _pick_batch_block(B, Lq, Lkv, E, H, num_heads)
    mq, mkv = b_blk * Lq, b_blk * Lkv
    grid = (B // b_blk,)

    # Fold batch into the row (M / sublane) axis: all matmuls see tall 2-D operands and
    # the output store is a lane-dense 2-D block.
    q2 = query.reshape(B * Lq, E)
    k2 = key.reshape(B * Lkv, E)
    v2 = value.reshape(B * Lkv, E)

    bf16 = jnp.bfloat16
    # Weights feed the MXU in bf16 (halves weight DMA / VMEM residency); biases and
    # LayerNorm params stay f32.  wo is pre-split per head for the fused output projection.
    wq = params["wq_t"].astype(bf16)
    wk = params["wk_t"].astype(bf16)
    wv = params["wv_t"].astype(bf16)
    wo3 = params["wo_t"].reshape(num_heads, hd, E).astype(bf16)
    w1 = params["w1_t"].astype(bf16)
    w2 = params["w2_t"].astype(bf16)

    flops = 2 * B * (
        Lq * E * E + 2 * Lkv * E * E      # q/k/v in-projections
        + 2 * Lq * Lkv * E                # scores + context (summed over heads)
        + Lq * E * E                      # output projection
        + 2 * Lq * E * H                  # FFN matmuls
    )
    transcendentals = B * num_heads * Lq * Lkv + 4 * B * Lq
    bytes_accessed = (
        4 * (q2.size + k2.size + v2.size + B * Lq * E)
        + 2 * (4 * E * E + 2 * E * H)
        + 4 * (8 * E + H)
    )
    ce = pl.CostEstimate(flops=int(flops), transcendentals=int(transcendentals),
                         bytes_accessed=int(bytes_accessed))

    def rows_spec(m):
        return pl.BlockSpec((m, E), lambda i: (i, 0))

    def build(single_buffer_weights, split_heads_by_transpose):
        def const_spec(shape):
            # Grid-invariant operand (weights / biases / LN params); constant index_map so
            # the same resident block is reused every step.  Single-buffered when supported
            # (no point double-buffering an invariant block; halves weight VMEM).
            idx = lambda i, n=len(shape): (0,) * n
            if single_buffer_weights:
                return pl.BlockSpec(shape, idx, pipeline_mode=pl.Buffered(1))
            return pl.BlockSpec(shape, idx)

        in_specs = [
            rows_spec(mq), rows_spec(mkv), rows_spec(mkv),               # q, k, v rows
            const_spec((E, E)), const_spec((E, E)), const_spec((E, E)),  # wq_t, wk_t, wv_t
            const_spec((1, E)), const_spec((1, E)), const_spec((1, E)),  # bq, bk, bv
            const_spec((num_heads, hd, E)), const_spec((1, E)),          # wo (per-head), bo
            const_spec((1, E)), const_spec((1, E)),                      # norm1 gamma, beta
            const_spec((E, H)), const_spec((1, H)),                      # w1_t, b1
            const_spec((H, E)), const_spec((1, E)),                      # w2_t, b2
            const_spec((1, E)), const_spec((1, E)),                      # norm2 gamma, beta
        ]

        kernel = functools.partial(
            _cross_attn_ffn_kernel,
            num_heads=num_heads, b_blk=b_blk, lq=Lq, lkv=Lkv,
            split_heads_by_transpose=split_heads_by_transpose,
        )

        vmem_limit = _vmem_limit_bytes(b_blk, Lq, Lkv, E, H, num_heads,
                                       1 if single_buffer_weights else 2)

        return pl.pallas_call(
            kernel,
            out_shape=jax.ShapeDtypeStruct((B * Lq, E), query.dtype),
            grid=grid,
            in_specs=in_specs,
            out_specs=rows_spec(mq),
            compiler_params=pltpu.CompilerParams(
                dimension_semantics=("parallel",),
                vmem_limit_bytes=vmem_limit,
            ),
            cost_estimate=ce,
        )

    operands = (
        q2, k2, v2,
        wq, wk, wv, params["bq"], params["bk"], params["bv"],
        wo3, params["bo"],
        params["g1"], params["be1"],
        w1, params["b1"], w2, params["b2"],
        params["g2"], params["be2"],
    )

    # Try the most optimized configuration first; fall back to progressively more
    # conservative (but known-good) ones if a feature fails to lower on this stack.
    attempts = (
        dict(single_buffer_weights=True, split_heads_by_transpose=True),
        dict(single_buffer_weights=False, split_heads_by_transpose=True),
        dict(single_buffer_weights=True, split_heads_by_transpose=False),
        dict(single_buffer_weights=False, split_heads_by_transpose=False),
    )
    out2, last_err = None, None
    for cfg in attempts:
        try:
            out2 = jax.block_until_ready(build(**cfg)(*operands))
            break
        except Exception as e:   # noqa: BLE001 - fall back to a safer configuration
            last_err = e
    if out2 is None:
        raise last_err
    return out2.reshape(B, Lq, E)


# ------------------------------- reference & params ---------------------------------


def _reference(query, key, value, params, num_heads):
    """Pure-JAX f32 reference of the same forward (eval-mode PyTorch semantics)."""
    B, Lq, E = query.shape
    hd = E // num_heads
    qp = query @ params["wq_t"] + params["bq"]
    kp = key @ params["wk_t"] + params["bk"]
    vp = value @ params["wv_t"] + params["bv"]

    def split(x):
        return x.reshape(B, -1, num_heads, hd).transpose(0, 2, 1, 3)

    qh, kh, vh = split(qp), split(kp), split(vp)
    s = jnp.einsum("bhqd,bhkd->bhqk", qh, kh) / math.sqrt(hd)
    p = jax.nn.softmax(s, axis=-1)
    ctx = jnp.einsum("bhqk,bhkd->bhqd", p, vh).transpose(0, 2, 1, 3).reshape(B, Lq, E)
    attn_out = ctx @ params["wo_t"] + params["bo"]

    def ln(x, g, b, eps=1e-5):
        mu = jnp.mean(x, -1, keepdims=True)
        var = jnp.mean((x - mu) ** 2, -1, keepdims=True)
        return (x - mu) / jnp.sqrt(var + eps) * g + b

    x = ln(query + attn_out, params["g1"], params["be1"])
    h1 = jax.nn.relu(x @ params["w1_t"] + params["b1"])
    ffn = h1 @ params["w2_t"] + params["b2"]
    return ln(x + ffn, params["g2"], params["be2"])


def init_params(key, embd, ffn_hidden_dim):
    ks = jax.random.split(key, 8)
    scale = 0.1
    # PyTorch Linear weight is (out, in); we store the transposed (in, out) form.
    wq = scale * jax.random.normal(ks[0], (embd, embd), jnp.float32)
    wk = scale * jax.random.normal(ks[1], (embd, embd), jnp.float32)
    wv = scale * jax.random.normal(ks[2], (embd, embd), jnp.float32)
    wo = scale * jax.random.normal(ks[3], (embd, embd), jnp.float32)
    w1 = scale * jax.random.normal(ks[4], (ffn_hidden_dim, embd), jnp.float32)
    w2 = scale * jax.random.normal(ks[5], (embd, ffn_hidden_dim), jnp.float32)
    return {
        "wq_t": wq.T, "wk_t": wk.T, "wv_t": wv.T,
        "bq": 0.01 * jnp.ones((1, embd), jnp.float32),
        "bk": 0.02 * jnp.ones((1, embd), jnp.float32),
        "bv": 0.03 * jnp.ones((1, embd), jnp.float32),
        "wo_t": wo.T,
        "bo": 0.04 * jnp.ones((1, embd), jnp.float32),
        "g1": jnp.ones((1, embd), jnp.float32),
        "be1": jnp.zeros((1, embd), jnp.float32),
        "w1_t": w1.T,
        "b1": 0.05 * jnp.ones((1, ffn_hidden_dim), jnp.float32),
        "w2_t": w2.T,
        "b2": 0.06 * jnp.ones((1, embd), jnp.float32),
        "g2": jnp.ones((1, embd), jnp.float32),
        "be2": jnp.zeros((1, embd), jnp.float32),
    }


if __name__ == "__main__":
    B, Lq, Lkv, E, NH = 2, 8, 8, 32, 4
    FFN_H = 4 * E  # default ffn_hidden_dim = 4 * embd

    root = jax.random.PRNGKey(0)
    kq, kk, kv, kp = jax.random.split(root, 4)
    query = jax.random.normal(kq, (B, Lq, E), jnp.float32)
    key_ = jax.random.normal(kk, (B, Lkv, E), jnp.float32)
    value = jax.random.normal(kv, (B, Lkv, E), jnp.float32)
    params = init_params(kp, E, FFN_H)

    out = cross_attention_ffn(query, key_, value, params, NH)
    out = jax.block_until_ready(out)

    ref = _reference(query, key_, value, params, NH)
    # bf16 MXU operands with f32 accumulation -> relaxed tolerance vs the pure-f32 reference.
    np.testing.assert_allclose(np.asarray(out), np.asarray(ref), rtol=3e-2, atol=3e-2)

    print("KERNEL_OK")
</pallas_src>

<mosaic_0001>
module attributes {stable_mosaic.version = 11 : i64} {
  func.func @_cross_attn_ffn_kernel(%arg0: i32, %arg1: memref<8x32xf32, #tpu.memory_space<vmem>>, %arg2: memref<8x32xf32, #tpu.memory_space<vmem>>, %arg3: memref<8x32xf32, #tpu.memory_space<vmem>>, %arg4: memref<32x32xbf16, #tpu.memory_space<vmem>>, %arg5: memref<32x32xbf16, #tpu.memory_space<vmem>>, %arg6: memref<32x32xbf16, #tpu.memory_space<vmem>>, %arg7: memref<1x32xf32, #tpu.memory_space<vmem>>, %arg8: memref<1x32xf32, #tpu.memory_space<vmem>>, %arg9: memref<1x32xf32, #tpu.memory_space<vmem>>, %arg10: memref<4x8x32xbf16, #tpu.memory_space<vmem>>, %arg11: memref<1x32xf32, #tpu.memory_space<vmem>>, %arg12: memref<1x32xf32, #tpu.memory_space<vmem>>, %arg13: memref<1x32xf32, #tpu.memory_space<vmem>>, %arg14: memref<32x128xbf16, #tpu.memory_space<vmem>>, %arg15: memref<1x128xf32, #tpu.memory_space<vmem>>, %arg16: memref<128x32xbf16, #tpu.memory_space<vmem>>, %arg17: memref<1x32xf32, #tpu.memory_space<vmem>>, %arg18: memref<1x32xf32, #tpu.memory_space<vmem>>, %arg19: memref<1x32xf32, #tpu.memory_space<vmem>>, %arg20: memref<8x32xf32, #tpu.memory_space<vmem>>) attributes {dimension_semantics = [#tpu.dimension_semantics<parallel>], iteration_bounds = array<i64: 2>, scalar_prefetch = 0 : i64, scratch_operands = 0 : i64, tpu.core_type = #tpu.core_type<tc>, window_params = [{transform_indices = @transform_0, window_bounds = array<i64: 8, 32>}, {transform_indices = @transform_1, window_bounds = array<i64: 8, 32>}, {transform_indices = @transform_2, window_bounds = array<i64: 8, 32>}, {pipeline_mode = #tpu.pipeline_mode<synchronous>, transform_indices = @transform_3, window_bounds = array<i64: 32, 32>}, {pipeline_mode = #tpu.pipeline_mode<synchronous>, transform_indices = @transform_4, window_bounds = array<i64: 32, 32>}, {pipeline_mode = #tpu.pipeline_mode<synchronous>, transform_indices = @transform_5, window_bounds = array<i64: 32, 32>}, {pipeline_mode = #tpu.pipeline_mode<synchronous>, transform_indices = @transform_6, window_bounds = array<i64: 1, 32>}, {pipeline_mode = #tpu.pipeline_mode<synchronous>, transform_indices = @transform_7, window_bounds = array<i64: 1, 32>}, {pipeline_mode = #tpu.pipeline_mode<synchronous>, transform_indices = @transform_8, window_bounds = array<i64: 1, 32>}, {pipeline_mode = #tpu.pipeline_mode<synchronous>, transform_indices = @transform_9, window_bounds = array<i64: 4, 8, 32>}, {pipeline_mode = #tpu.pipeline_mode<synchronous>, transform_indices = @transform_10, window_bounds = array<i64: 1, 32>}, {pipeline_mode = #tpu.pipeline_mode<synchronous>, transform_indices = @transform_11, window_bounds = array<i64: 1, 32>}, {pipeline_mode = #tpu.pipeline_mode<synchronous>, transform_indices = @transform_12, window_bounds = array<i64: 1, 32>}, {pipeline_mode = #tpu.pipeline_mode<synchronous>, transform_indices = @transform_13, window_bounds = array<i64: 32, 128>}, {pipeline_mode = #tpu.pipeline_mode<synchronous>, transform_indices = @transform_14, window_bounds = array<i64: 1, 128>}, {pipeline_mode = #tpu.pipeline_mode<synchronous>, transform_indices = @transform_15, window_bounds = array<i64: 128, 32>}, {pipeline_mode = #tpu.pipeline_mode<synchronous>, transform_indices = @transform_16, window_bounds = array<i64: 1, 32>}, {pipeline_mode = #tpu.pipeline_mode<synchronous>, transform_indices = @transform_17, window_bounds = array<i64: 1, 32>}, {pipeline_mode = #tpu.pipeline_mode<synchronous>, transform_indices = @transform_18, window_bounds = array<i64: 1, 32>}, {transform_indices = @transform_19, window_bounds = array<i64: 8, 32>}]} {
    %c0 = arith.constant 0 : index
    %c0_0 = arith.constant 0 : index
    %0 = vector.load %arg1[%c0, %c0_0] : memref<8x32xf32, #tpu.memory_space<vmem>>, vector<8x32xf32>
    %c0_1 = arith.constant 0 : index
    %c0_2 = arith.constant 0 : index
    %1 = vector.load %arg2[%c0_1, %c0_2] : memref<8x32xf32, #tpu.memory_space<vmem>>, vector<8x32xf32>
    %c0_3 = arith.constant 0 : index
    %c0_4 = arith.constant 0 : index
    %2 = vector.load %arg3[%c0_3, %c0_4] : memref<8x32xf32, #tpu.memory_space<vmem>>, vector<8x32xf32>
    %3 = arith.truncf %0 : vector<8x32xf32> to vector<8x32xbf16>
    %c0_5 = arith.constant 0 : index
    %c0_6 = arith.constant 0 : index
    %4 = vector.load %arg4[%c0_5, %c0_6] : memref<32x32xbf16, #tpu.memory_space<vmem>>, vector<32x32xbf16>
    %cst = arith.constant dense<0.000000e+00> : vector<8x32xf32>
    %5 = tpu.matmul %3, %4, %cst {dimension_numbers = #tpu.dot_dimension_numbers<[1], [0], [0], [1], [0, 0, 1, 1], [], []>} : vector<8x32xbf16>, vector<32x32xbf16>, vector<8x32xf32> -> vector<8x32xf32>
    %c0_7 = arith.constant 0 : index
    %c0_8 = arith.constant 0 : index
    %6 = vector.load %arg7[%c0_7, %c0_8] : memref<1x32xf32, #tpu.memory_space<vmem>>, vector<1x32xf32>
    %7 = vector.broadcast %6 : vector<1x32xf32> to vector<8x32xf32>
    %8 = arith.addf %5, %7 : vector<8x32xf32>
    %9 = arith.truncf %1 : vector<8x32xf32> to vector<8x32xbf16>
    %c0_9 = arith.constant 0 : index
    %c0_10 = arith.constant 0 : index
    %10 = vector.load %arg5[%c0_9, %c0_10] : memref<32x32xbf16, #tpu.memory_space<vmem>>, vector<32x32xbf16>
    %cst_11 = arith.constant dense<0.000000e+00> : vector<8x32xf32>
    %11 = tpu.matmul %9, %10, %cst_11 {dimension_numbers = #tpu.dot_dimension_numbers<[1], [0], [0], [1], [0, 0, 1, 1], [], []>} : vector<8x32xbf16>, vector<32x32xbf16>, vector<8x32xf32> -> vector<8x32xf32>
    %c0_12 = arith.constant 0 : index
    %c0_13 = arith.constant 0 : index
    %12 = vector.load %arg8[%c0_12, %c0_13] : memref<1x32xf32, #tpu.memory_space<vmem>>, vector<1x32xf32>
    %13 = vector.broadcast %12 : vector<1x32xf32> to vector<8x32xf32>
    %14 = arith.addf %11, %13 : vector<8x32xf32>
    %15 = arith.truncf %2 : vector<8x32xf32> to vector<8x32xbf16>
    %c0_14 = arith.constant 0 : index
    %c0_15 = arith.constant 0 : index
    %16 = vector.load %arg6[%c0_14, %c0_15] : memref<32x32xbf16, #tpu.memory_space<vmem>>, vector<32x32xbf16>
    %cst_16 = arith.constant dense<0.000000e+00> : vector<8x32xf32>
    %17 = tpu.matmul %15, %16, %cst_16 {dimension_numbers = #tpu.dot_dimension_numbers<[1], [0], [0], [1], [0, 0, 1, 1], [], []>} : vector<8x32xbf16>, vector<32x32xbf16>, vector<8x32xf32> -> vector<8x32xf32>
    %c0_17 = arith.constant 0 : index
    %c0_18 = arith.constant 0 : index
    %18 = vector.load %arg9[%c0_17, %c0_18] : memref<1x32xf32, #tpu.memory_space<vmem>>, vector<1x32xf32>
    %19 = vector.broadcast %18 : vector<1x32xf32> to vector<8x32xf32>
    %20 = arith.addf %17, %19 : vector<8x32xf32>
    %cst_19 = arith.constant 0.353553385 : f32
    %21 = vector.broadcast %cst_19 : f32 to vector<8x32xf32>
    %22 = arith.mulf %8, %21 : vector<8x32xf32>
    %23 = arith.truncf %22 : vector<8x32xf32> to vector<8x32xbf16>
    %24 = arith.truncf %14 : vector<8x32xf32> to vector<8x32xbf16>
    %25 = arith.truncf %20 : vector<8x32xf32> to vector<8x32xbf16>
    %c0_20 = arith.constant 0 : index
    %c0_21 = arith.constant 0 : index
    %26 = vector.load %arg11[%c0_20, %c0_21] : memref<1x32xf32, #tpu.memory_space<vmem>>, vector<1x32xf32>
    %27 = vector.shape_cast %26 : vector<1x32xf32> to vector<1x32xf32>
    %28 = vector.broadcast %27 : vector<1x32xf32> to vector<8x32xf32>
    %29 = vector.shape_cast %23 : vector<8x32xbf16> to vector<1x8x4x8xbf16>
    %30 = tpu.transpose %29, [2, 0, 1, 3] : vector<1x8x4x8xbf16> -> vector<4x1x8x8xbf16>
    %31 = vector.shape_cast %30 : vector<4x1x8x8xbf16> to vector<4x8x8xbf16>
    %32 = vector.shape_cast %24 : vector<8x32xbf16> to vector<1x8x4x8xbf16>
    %33 = tpu.transpose %32, [2, 0, 1, 3] : vector<1x8x4x8xbf16> -> vector<4x1x8x8xbf16>
    %34 = vector.shape_cast %33 : vector<4x1x8x8xbf16> to vector<4x8x8xbf16>
    %35 = vector.shape_cast %25 : vector<8x32xbf16> to vector<1x8x4x8xbf16>
    %36 = tpu.transpose %35, [2, 0, 1, 3] : vector<1x8x4x8xbf16> -> vector<4x1x8x8xbf16>
    %37 = vector.shape_cast %36 : vector<4x1x8x8xbf16> to vector<4x8x8xbf16>
    "tpu.trace_start"() <{level = 10 : i32, message = "bqd,bkd->bqk"}> : () -> ()
    %cst_22 = arith.constant dense<0.000000e+00> : vector<4x8x8xf32>
    %38 = tpu.matmul %31, %34, %cst_22 {dimension_numbers = #tpu.dot_dimension_numbers<[2], [2], [1], [1], [0, 0, 0, 1, 1, 1], [0], [0]>} : vector<4x8x8xbf16>, vector<4x8x8xbf16>, vector<4x8x8xf32> -> vector<4x8x8xf32>
    "tpu.trace_stop"() : () -> ()
    %cst_23 = arith.constant dense<0xFF800000> : vector<4x8xf32>
    %39 = vector.multi_reduction <maximumf>, %38, %cst_23 [2] : vector<4x8x8xf32> to vector<4x8xf32>
    %40 = vector.shape_cast %39 : vector<4x8xf32> to vector<4x8x1xf32>
    %41 = vector.broadcast %40 : vector<4x8x1xf32> to vector<4x8x8xf32>
    %42 = arith.subf %38, %41 : vector<4x8x8xf32>
    %43 = math.exp %42 : vector<4x8x8xf32>
    %cst_24 = arith.constant dense<0.000000e+00> : vector<4x8xf32>
    %44 = vector.multi_reduction <add>, %43, %cst_24 [2] : vector<4x8x8xf32> to vector<4x8xf32>
    %45 = vector.shape_cast %44 : vector<4x8xf32> to vector<4x8x1xf32>
    %46 = tpu.reciprocal %45 {approx = true} : vector<4x8x1xf32> -> vector<4x8x1xf32>
    %47 = vector.broadcast %46 : vector<4x8x1xf32> to vector<4x8x8xf32>
    %48 = arith.mulf %43, %47 : vector<4x8x8xf32>
    %49 = arith.truncf %48 : vector<4x8x8xf32> to vector<4x8x8xbf16>
    "tpu.trace_start"() <{level = 10 : i32, message = "bqk,bkd->bqd"}> : () -> ()
    %cst_25 = arith.constant dense<0.000000e+00> : vector<4x8x8xf32>
    %50 = tpu.matmul %49, %37, %cst_25 {dimension_numbers = #tpu.dot_dimension_numbers<[2], [1], [1], [2], [0, 0, 0, 1, 1, 2], [0], [0]>} : vector<4x8x8xbf16>, vector<4x8x8xbf16>, vector<4x8x8xf32> -> vector<4x8x8xf32>
    "tpu.trace_stop"() : () -> ()
    %51 = vector.extract_strided_slice %50 {offsets = [0, 0, 0], sizes = [1, 8, 8], strides = [1, 1, 1]} : vector<4x8x8xf32> to vector<1x8x8xf32>
    %52 = vector.shape_cast %51 : vector<1x8x8xf32> to vector<8x8xf32>
    %53 = arith.truncf %52 : vector<8x8xf32> to vector<8x8xbf16>
    %c0_26 = arith.constant 0 : index
    %c0_27 = arith.constant 0 : index
    %c0_28 = arith.constant 0 : index
    %54 = vector.load %arg10[%c0_26, %c0_27, %c0_28] : memref<4x8x32xbf16, #tpu.memory_space<vmem>>, vector<1x8x32xbf16>
    %55 = vector.shape_cast %54 : vector<1x8x32xbf16> to vector<8x32xbf16>
    %cst_29 = arith.constant dense<0.000000e+00> : vector<8x32xf32>
    %56 = tpu.matmul %53, %55, %cst_29 {dimension_numbers = #tpu.dot_dimension_numbers<[1], [0], [0], [1], [0, 0, 1, 1], [], []>} : vector<8x8xbf16>, vector<8x32xbf16>, vector<8x32xf32> -> vector<8x32xf32>
    %57 = arith.addf %28, %56 : vector<8x32xf32>
    %58 = vector.extract_strided_slice %50 {offsets = [1, 0, 0], sizes = [1, 8, 8], strides = [1, 1, 1]} : vector<4x8x8xf32> to vector<1x8x8xf32>
    %59 = vector.shape_cast %58 : vector<1x8x8xf32> to vector<8x8xf32>
    %60 = arith.truncf %59 : vector<8x8xf32> to vector<8x8xbf16>
    %c1 = arith.constant 1 : index
    %c0_30 = arith.constant 0 : index
    %c0_31 = arith.constant 0 : index
    %61 = vector.load %arg10[%c1, %c0_30, %c0_31] : memref<4x8x32xbf16, #tpu.memory_space<vmem>>, vector<1x8x32xbf16>
    %62 = vector.shape_cast %61 : vector<1x8x32xbf16> to vector<8x32xbf16>
    %cst_32 = arith.constant dense<0.000000e+00> : vector<8x32xf32>
    %63 = tpu.matmul %60, %62, %cst_32 {dimension_numbers = #tpu.dot_dimension_numbers<[1], [0], [0], [1], [0, 0, 1, 1], [], []>} : vector<8x8xbf16>, vector<8x32xbf16>, vector<8x32xf32> -> vector<8x32xf32>
    %64 = arith.addf %57, %63 : vector<8x32xf32>
    %65 = vector.extract_strided_slice %50 {offsets = [2, 0, 0], sizes = [1, 8, 8], strides = [1, 1, 1]} : vector<4x8x8xf32> to vector<1x8x8xf32>
    %66 = vector.shape_cast %65 : vector<1x8x8xf32> to vector<8x8xf32>
    %67 = arith.truncf %66 : vector<8x8xf32> to vector<8x8xbf16>
    %c2 = arith.constant 2 : index
    %c0_33 = arith.constant 0 : index
    %c0_34 = arith.constant 0 : index
    %68 = vector.load %arg10[%c2, %c0_33, %c0_34] : memref<4x8x32xbf16, #tpu.memory_space<vmem>>, vector<1x8x32xbf16>
    %69 = vector.shape_cast %68 : vector<1x8x32xbf16> to vector<8x32xbf16>
    %cst_35 = arith.constant dense<0.000000e+00> : vector<8x32xf32>
    %70 = tpu.matmul %67, %69, %cst_35 {dimension_numbers = #tpu.dot_dimension_numbers<[1], [0], [0], [1], [0, 0, 1, 1], [], []>} : vector<8x8xbf16>, vector<8x32xbf16>, vector<8x32xf32> -> vector<8x32xf32>
    %71 = arith.addf %64, %70 : vector<8x32xf32>
    %72 = vector.extract_strided_slice %50 {offsets = [3, 0, 0], sizes = [1, 8, 8], strides = [1, 1, 1]} : vector<4x8x8xf32> to vector<1x8x8xf32>
    %73 = vector.shape_cast %72 : vector<1x8x8xf32> to vector<8x8xf32>
    %74 = arith.truncf %73 : vector<8x8xf32> to vector<8x8xbf16>
    %c3 = arith.constant 3 : index
    %c0_36 = arith.constant 0 : index
    %c0_37 = arith.constant 0 : index
    %75 = vector.load %arg10[%c3, %c0_36, %c0_37] : memref<4x8x32xbf16, #tpu.memory_space<vmem>>, vector<1x8x32xbf16>
    %76 = vector.shape_cast %75 : vector<1x8x32xbf16> to vector<8x32xbf16>
    %cst_38 = arith.constant dense<0.000000e+00> : vector<8x32xf32>
    %77 = tpu.matmul %74, %76, %cst_38 {dimension_numbers = #tpu.dot_dimension_numbers<[1], [0], [0], [1], [0, 0, 1, 1], [], []>} : vector<8x8xbf16>, vector<8x32xbf16>, vector<8x32xf32> -> vector<8x32xf32>
    %78 = arith.addf %71, %77 : vector<8x32xf32>
    %79 = arith.addf %0, %78 : vector<8x32xf32>
    %c0_39 = arith.constant 0 : index
    %c0_40 = arith.constant 0 : index
    %80 = vector.load %arg12[%c0_39, %c0_40] : memref<1x32xf32, #tpu.memory_space<vmem>>, vector<1x32xf32>
    %c0_41 = arith.constant 0 : index
    %c0_42 = arith.constant 0 : index
    %81 = vector.load %arg13[%c0_41, %c0_42] : memref<1x32xf32, #tpu.memory_space<vmem>>, vector<1x32xf32>
    %cst_43 = arith.constant dense<0.000000e+00> : vector<8xf32>
    %82 = vector.multi_reduction <add>, %79, %cst_43 [1] : vector<8x32xf32> to vector<8xf32>
    %83 = vector.shape_cast %82 : vector<8xf32> to vector<8x1xf32>
    %cst_44 = arith.constant 3.200000e+01 : f32
    %84 = vector.broadcast %cst_44 : f32 to vector<8x1xf32>
    %85 = arith.divf %83, %84 : vector<8x1xf32>
    %86 = vector.broadcast %85 : vector<8x1xf32> to vector<8x32xf32>
    %87 = arith.subf %79, %86 : vector<8x32xf32>
    %88 = arith.mulf %87, %87 : vector<8x32xf32>
    %cst_45 = arith.constant dense<0.000000e+00> : vector<8xf32>
    %89 = vector.multi_reduction <add>, %88, %cst_45 [1] : vector<8x32xf32> to vector<8xf32>
    %90 = vector.shape_cast %89 : vector<8xf32> to vector<8x1xf32>
    %cst_46 = arith.constant 3.200000e+01 : f32
    %91 = vector.broadcast %cst_46 : f32 to vector<8x1xf32>
    %92 = arith.divf %90, %91 : vector<8x1xf32>
    %cst_47 = arith.constant 9.99999974E-6 : f32
    %93 = vector.broadcast %cst_47 : f32 to vector<8x1xf32>
    %94 = arith.addf %92, %93 : vector<8x1xf32>
    %95 = math.rsqrt %94 : vector<8x1xf32>
    %96 = vector.broadcast %95 : vector<8x1xf32> to vector<8x32xf32>
    %97 = arith.mulf %87, %96 : vector<8x32xf32>
    %98 = vector.broadcast %80 : vector<1x32xf32> to vector<8x32xf32>
    %99 = arith.mulf %97, %98 : vector<8x32xf32>
    %100 = vector.broadcast %81 : vector<1x32xf32> to vector<8x32xf32>
    %101 = arith.addf %99, %100 : vector<8x32xf32>
    %102 = arith.truncf %101 : vector<8x32xf32> to vector<8x32xbf16>
    %c0_48 = arith.constant 0 : index
    %c0_49 = arith.constant 0 : index
    %103 = vector.load %arg14[%c0_48, %c0_49] : memref<32x128xbf16, #tpu.memory_space<vmem>>, vector<32x128xbf16>
    %cst_50 = arith.constant dense<0.000000e+00> : vector<8x128xf32>
    %104 = tpu.matmul %102, %103, %cst_50 {dimension_numbers = #tpu.dot_dimension_numbers<[1], [0], [0], [1], [0, 0, 1, 1], [], []>} : vector<8x32xbf16>, vector<32x128xbf16>, vector<8x128xf32> -> vector<8x128xf32>
    %c0_51 = arith.constant 0 : index
    %c0_52 = arith.constant 0 : index
    %105 = vector.load %arg15[%c0_51, %c0_52] : memref<1x128xf32, #tpu.memory_space<vmem>>, vector<1x128xf32>
    %106 = vector.broadcast %105 : vector<1x128xf32> to vector<8x128xf32>
    %107 = arith.addf %104, %106 : vector<8x128xf32>
    %cst_53 = arith.constant 0.000000e+00 : f32
    %108 = vector.broadcast %cst_53 : f32 to vector<8x128xf32>
    %109 = arith.maximumf %107, %108 : vector<8x128xf32>
    %110 = arith.truncf %109 : vector<8x128xf32> to vector<8x128xbf16>
    %c0_54 = arith.constant 0 : index
    %c0_55 = arith.constant 0 : index
    %111 = vector.load %arg16[%c0_54, %c0_55] : memref<128x32xbf16, #tpu.memory_space<vmem>>, vector<128x32xbf16>
    %cst_56 = arith.constant dense<0.000000e+00> : vector<8x32xf32>
    %112 = tpu.matmul %110, %111, %cst_56 {dimension_numbers = #tpu.dot_dimension_numbers<[1], [0], [0], [1], [0, 0, 1, 1], [], []>} : vector<8x128xbf16>, vector<128x32xbf16>, vector<8x32xf32> -> vector<8x32xf32>
    %c0_57 = arith.constant 0 : index
    %c0_58 = arith.constant 0 : index
    %113 = vector.load %arg17[%c0_57, %c0_58] : memref<1x32xf32, #tpu.memory_space<vmem>>, vector<1x32xf32>
    %114 = vector.broadcast %113 : vector<1x32xf32> to vector<8x32xf32>
    %115 = arith.addf %112, %114 : vector<8x32xf32>
    %116 = arith.addf %101, %115 : vector<8x32xf32>
    %c0_59 = arith.constant 0 : index
    %c0_60 = arith.constant 0 : index
    %117 = vector.load %arg18[%c0_59, %c0_60] : memref<1x32xf32, #tpu.memory_space<vmem>>, vector<1x32xf32>
    %c0_61 = arith.constant 0 : index
    %c0_62 = arith.constant 0 : index
    %118 = vector.load %arg19[%c0_61, %c0_62] : memref<1x32xf32, #tpu.memory_space<vmem>>, vector<1x32xf32>
    %cst_63 = arith.constant dense<0.000000e+00> : vector<8xf32>
    %119 = vector.multi_reduction <add>, %116, %cst_63 [1] : vector<8x32xf32> to vector<8xf32>
    %120 = vector.shape_cast %119 : vector<8xf32> to vector<8x1xf32>
    %cst_64 = arith.constant 3.200000e+01 : f32
    %121 = vector.broadcast %cst_64 : f32 to vector<8x1xf32>
    %122 = arith.divf %120, %121 : vector<8x1xf32>
    %123 = vector.broadcast %122 : vector<8x1xf32> to vector<8x32xf32>
    %124 = arith.subf %116, %123 : vector<8x32xf32>
    %125 = arith.mulf %124, %124 : vector<8x32xf32>
    %cst_65 = arith.constant dense<0.000000e+00> : vector<8xf32>
    %126 = vector.multi_reduction <add>, %125, %cst_65 [1] : vector<8x32xf32> to vector<8xf32>
    %127 = vector.shape_cast %126 : vector<8xf32> to vector<8x1xf32>
    %cst_66 = arith.constant 3.200000e+01 : f32
    %128 = vector.broadcast %cst_66 : f32 to vector<8x1xf32>
    %129 = arith.divf %127, %128 : vector<8x1xf32>
    %cst_67 = arith.constant 9.99999974E-6 : f32
    %130 = vector.broadcast %cst_67 : f32 to vector<8x1xf32>
    %131 = arith.addf %129, %130 : vector<8x1xf32>
    %132 = math.rsqrt %131 : vector<8x1xf32>
    %133 = vector.broadcast %132 : vector<8x1xf32> to vector<8x32xf32>
    %134 = arith.mulf %124, %133 : vector<8x32xf32>
    %135 = vector.broadcast %117 : vector<1x32xf32> to vector<8x32xf32>
    %136 = arith.mulf %134, %135 : vector<8x32xf32>
    %137 = vector.broadcast %118 : vector<1x32xf32> to vector<8x32xf32>
    %138 = arith.addf %136, %137 : vector<8x32xf32>
    %c0_68 = arith.constant 0 : index
    %c0_69 = arith.constant 0 : index
    %139 = vector.load %arg20[%c0_68, %c0_69] : memref<8x32xf32, #tpu.memory_space<vmem>>, vector<8x32xf32>
    tpu.vector_store %arg20[%c0_68, %c0_69], %138 {strides = array<i32>} : memref<8x32xf32, #tpu.memory_space<vmem>>, vector<8x32xf32>,
    return
  }
  func.func @transform_0(%arg0: i32) -> (i32, i32) {
    %c0_i32 = arith.constant 0 : i32
    %c0_i32_0 = arith.constant 0 : i32
    return %arg0, %c0_i32 : i32, i32
  }
  func.func @transform_1(%arg0: i32) -> (i32, i32) {
    %c0_i32 = arith.constant 0 : i32
    %c0_i32_0 = arith.constant 0 : i32
    return %arg0, %c0_i32 : i32, i32
  }
  func.func @transform_2(%arg0: i32) -> (i32, i32) {
    %c0_i32 = arith.constant 0 : i32
    %c0_i32_0 = arith.constant 0 : i32
    return %arg0, %c0_i32 : i32, i32
  }
  func.func @transform_3(%arg0: i32) -> (i32, i32) {
    %c0_i32 = arith.constant 0 : i32
    %c0_i32_0 = arith.constant 0 : i32
    %c0_i32_1 = arith.constant 0 : i32
    return %c0_i32, %c0_i32_0 : i32, i32
  }
  func.func @transform_4(%arg0: i32) -> (i32, i32) {
    %c0_i32 = arith.constant 0 : i32
    %c0_i32_0 = arith.constant 0 : i32
    %c0_i32_1 = arith.constant 0 : i32
    return %c0_i32, %c0_i32_0 : i32, i32
  }
  func.func @transform_5(%arg0: i32) -> (i32, i32) {
    %c0_i32 = arith.constant 0 : i32
    %c0_i32_0 = arith.constant 0 : i32
    %c0_i32_1 = arith.constant 0 : i32
    return %c0_i32, %c0_i32_0 : i32, i32
  }
  func.func @transform_6(%arg0: i32) -> (i32, i32) {
    %c0_i32 = arith.constant 0 : i32
    %c0_i32_0 = arith.constant 0 : i32
    %c0_i32_1 = arith.constant 0 : i32
    return %c0_i32, %c0_i32_0 : i32, i32
  }
  func.func @transform_7(%arg0: i32) -> (i32, i32) {
    %c0_i32 = arith.constant 0 : i32
    %c0_i32_0 = arith.constant 0 : i32
    %c0_i32_1 = arith.constant 0 : i32
    return %c0_i32, %c0_i32_0 : i32, i32
  }
  func.func @transform_8(%arg0: i32) -> (i32, i32) {
    %c0_i32 = arith.constant 0 : i32
    %c0_i32_0 = arith.constant 0 : i32
    %c0_i32_1 = arith.constant 0 : i32
    return %c0_i32, %c0_i32_0 : i32, i32
  }
  func.func @transform_9(%arg0: i32) -> (i32, i32, i32) {
    %c0_i32 = arith.constant 0 : i32
    %c0_i32_0 = arith.constant 0 : i32
    %c0_i32_1 = arith.constant 0 : i32
    %c0_i32_2 = arith.constant 0 : i32
    return %c0_i32, %c0_i32_0, %c0_i32_1 : i32, i32, i32
  }
  func.func @transform_10(%arg0: i32) -> (i32, i32) {
    %c0_i32 = arith.constant 0 : i32
    %c0_i32_0 = arith.constant 0 : i32
    %c0_i32_1 = arith.constant 0 : i32
    return %c0_i32, %c0_i32_0 : i32, i32
  }
  func.func @transform_11(%arg0: i32) -> (i32, i32) {
    %c0_i32 = arith.constant 0 : i32
    %c0_i32_0 = arith.constant 0 : i32
    %c0_i32_1 = arith.constant 0 : i32
    return %c0_i32, %c0_i32_0 : i32, i32
  }
  func.func @transform_12(%arg0: i32) -> (i32, i32) {
    %c0_i32 = arith.constant 0 : i32
    %c0_i32_0 = arith.constant 0 : i32
    %c0_i32_1 = arith.constant 0 : i32
    return %c0_i32, %c0_i32_0 : i32, i32
  }
  func.func @transform_13(%arg0: i32) -> (i32, i32) {
    %c0_i32 = arith.constant 0 : i32
    %c0_i32_0 = arith.constant 0 : i32
    %c0_i32_1 = arith.constant 0 : i32
    return %c0_i32, %c0_i32_0 : i32, i32
  }
  func.func @transform_14(%arg0: i32) -> (i32, i32) {
    %c0_i32 = arith.constant 0 : i32
    %c0_i32_0 = arith.constant 0 : i32
    %c0_i32_1 = arith.constant 0 : i32
    return %c0_i32, %c0_i32_0 : i32, i32
  }
  func.func @transform_15(%arg0: i32) -> (i32, i32) {
    %c0_i32 = arith.constant 0 : i32
    %c0_i32_0 = arith.constant 0 : i32
    %c0_i32_1 = arith.constant 0 : i32
    return %c0_i32, %c0_i32_0 : i32, i32
  }
  func.func @transform_16(%arg0: i32) -> (i32, i32) {
    %c0_i32 = arith.constant 0 : i32
    %c0_i32_0 = arith.constant 0 : i32
    %c0_i32_1 = arith.constant 0 : i32
    return %c0_i32, %c0_i32_0 : i32, i32
  }
  func.func @transform_17(%arg0: i32) -> (i32, i32) {
    %c0_i32 = arith.constant 0 : i32
    %c0_i32_0 = arith.constant 0 : i32
    %c0_i32_1 = arith.constant 0 : i32
    return %c0_i32, %c0_i32_0 : i32, i32
  }
  func.func @transform_18(%arg0: i32) -> (i32, i32) {
    %c0_i32 = arith.constant 0 : i32
    %c0_i32_0 = arith.constant 0 : i32
    %c0_i32_1 = arith.constant 0 : i32
    return %c0_i32, %c0_i32_0 : i32, i32
  }
  func.func @transform_19(%arg0: i32) -> (i32, i32) {
    %c0_i32 = arith.constant 0 : i32
    %c0_i32_0 = arith.constant 0 : i32
    return %arg0, %c0_i32 : i32, i32
  }
}

module attributes {stable_mosaic.version = 11 : i64} {
  func.func @_cross_attn_ffn_kernel(%arg0: i32, %arg1: memref<8x32xf32, #tpu.memory_space<vmem>>, %arg2: memref<8x32xf32, #tpu.memory_space<vmem>>, %arg3: memref<8x32xf32, #tpu.memory_space<vmem>>, %arg4: memref<32x32xbf16, #tpu.memory_space<vmem>>, %arg5: memref<32x32xbf16, #tpu.memory_space<vmem>>, %arg6: memref<32x32xbf16, #tpu.memory_space<vmem>>, %arg7: memref<1x32xf32, #tpu.memory_space<vmem>>, %arg8: memref<1x32xf32, #tpu.memory_space<vmem>>, %arg9: memref<1x32xf32, #tpu.memory_space<vmem>>, %arg10: memref<4x8x32xbf16, #tpu.memory_space<vmem>>, %arg11: memref<1x32xf32, #tpu.memory_space<vmem>>, %arg12: memref<1x32xf32, #tpu.memory_space<vmem>>, %arg13: memref<1x32xf32, #tpu.memory_space<vmem>>, %arg14: memref<32x128xbf16, #tpu.memory_space<vmem>>, %arg15: memref<1x128xf32, #tpu.memory_space<vmem>>, %arg16: memref<128x32xbf16, #tpu.memory_space<vmem>>, %arg17: memref<1x32xf32, #tpu.memory_space<vmem>>, %arg18: memref<1x32xf32, #tpu.memory_space<vmem>>, %arg19: memref<1x32xf32, #tpu.memory_space<vmem>>, %arg20: memref<8x32xf32, #tpu.memory_space<vmem>>) attributes {dimension_semantics = [#tpu.dimension_semantics<parallel>], iteration_bounds = array<i64: 2>, scalar_prefetch = 0 : i64, scratch_operands = 0 : i64, tpu.core_type = #tpu.core_type<tc>, window_params = [{transform_indices = @transform_0, window_bounds = array<i64: 8, 32>}, {transform_indices = @transform_1, window_bounds = array<i64: 8, 32>}, {transform_indices = @transform_2, window_bounds = array<i64: 8, 32>}, {pipeline_mode = #tpu.pipeline_mode<synchronous>, transform_indices = @transform_3, window_bounds = array<i64: 32, 32>}, {pipeline_mode = #tpu.pipeline_mode<synchronous>, transform_indices = @transform_4, window_bounds = array<i64: 32, 32>}, {pipeline_mode = #tpu.pipeline_mode<synchronous>, transform_indices = @transform_5, window_bounds = array<i64: 32, 32>}, {pipeline_mode = #tpu.pipeline_mode<synchronous>, transform_indices = @transform_6, window_bounds = array<i64: 1, 32>}, {pipeline_mode = #tpu.pipeline_mode<synchronous>, transform_indices = @transform_7, window_bounds = array<i64: 1, 32>}, {pipeline_mode = #tpu.pipeline_mode<synchronous>, transform_indices = @transform_8, window_bounds = array<i64: 1, 32>}, {pipeline_mode = #tpu.pipeline_mode<synchronous>, transform_indices = @transform_9, window_bounds = array<i64: 4, 8, 32>}, {pipeline_mode = #tpu.pipeline_mode<synchronous>, transform_indices = @transform_10, window_bounds = array<i64: 1, 32>}, {pipeline_mode = #tpu.pipeline_mode<synchronous>, transform_indices = @transform_11, window_bounds = array<i64: 1, 32>}, {pipeline_mode = #tpu.pipeline_mode<synchronous>, transform_indices = @transform_12, window_bounds = array<i64: 1, 32>}, {pipeline_mode = #tpu.pipeline_mode<synchronous>, transform_indices = @transform_13, window_bounds = array<i64: 32, 128>}, {pipeline_mode = #tpu.pipeline_mode<synchronous>, transform_indices = @transform_14, window_bounds = array<i64: 1, 128>}, {pipeline_mode = #tpu.pipeline_mode<synchronous>, transform_indices = @transform_15, window_bounds = array<i64: 128, 32>}, {pipeline_mode = #tpu.pipeline_mode<synchronous>, transform_indices = @transform_16, window_bounds = array<i64: 1, 32>}, {pipeline_mode = #tpu.pipeline_mode<synchronous>, transform_indices = @transform_17, window_bounds = array<i64: 1, 32>}, {pipeline_mode = #tpu.pipeline_mode<synchronous>, transform_indices = @transform_18, window_bounds = array<i64: 1, 32>}, {transform_indices = @transform_19, window_bounds = array<i64: 8, 32>}]} {
    %c0 = arith.constant 0 : index
    %c0_0 = arith.constant 0 : index
    %0 = vector.load %arg1[%c0, %c0_0] : memref<8x32xf32, #tpu.memory_space<vmem>>, vector<8x32xf32>
    %c0_1 = arith.constant 0 : index
    %c0_2 = arith.constant 0 : index
    %1 = vector.load %arg2[%c0_1, %c0_2] : memref<8x32xf32, #tpu.memory_space<vmem>>, vector<8x32xf32>
    %c0_3 = arith.constant 0 : index
    %c0_4 = arith.constant 0 : index
    %2 = vector.load %arg3[%c0_3, %c0_4] : memref<8x32xf32, #tpu.memory_space<vmem>>, vector<8x32xf32>
    %3 = arith.truncf %0 : vector<8x32xf32> to vector<8x32xbf16>
    %c0_5 = arith.constant 0 : index
    %c0_6 = arith.constant 0 : index
    %4 = vector.load %arg4[%c0_5, %c0_6] : memref<32x32xbf16, #tpu.memory_space<vmem>>, vector<32x32xbf16>
    %cst = arith.constant dense<0.000000e+00> : vector<8x32xf32>
    %5 = tpu.matmul %3, %4, %cst {dimension_numbers = #tpu.dot_dimension_numbers<[1], [0], [0], [1], [0, 0, 1, 1], [], []>} : vector<8x32xbf16>, vector<32x32xbf16>, vector<8x32xf32> -> vector<8x32xf32>
    %c0_7 = arith.constant 0 : index
    %c0_8 = arith.constant 0 : index
    %6 = vector.load %arg7[%c0_7, %c0_8] : memref<1x32xf32, #tpu.memory_space<vmem>>, vector<1x32xf32>
    %7 = vector.broadcast %6 : vector<1x32xf32> to vector<8x32xf32>
    %8 = arith.addf %5, %7 : vector<8x32xf32>
    %9 = arith.truncf %1 : vector<8x32xf32> to vector<8x32xbf16>
    %c0_9 = arith.constant 0 : index
    %c0_10 = arith.constant 0 : index
    %10 = vector.load %arg5[%c0_9, %c0_10] : memref<32x32xbf16, #tpu.memory_space<vmem>>, vector<32x32xbf16>
    %cst_11 = arith.constant dense<0.000000e+00> : vector<8x32xf32>
    %11 = tpu.matmul %9, %10, %cst_11 {dimension_numbers = #tpu.dot_dimension_numbers<[1], [0], [0], [1], [0, 0, 1, 1], [], []>} : vector<8x32xbf16>, vector<32x32xbf16>, vector<8x32xf32> -> vector<8x32xf32>
    %c0_12 = arith.constant 0 : index
    %c0_13 = arith.constant 0 : index
    %12 = vector.load %arg8[%c0_12, %c0_13] : memref<1x32xf32, #tpu.memory_space<vmem>>, vector<1x32xf32>
    %13 = vector.broadcast %12 : vector<1x32xf32> to vector<8x32xf32>
    %14 = arith.addf %11, %13 : vector<8x32xf32>
    %15 = arith.truncf %2 : vector<8x32xf32> to vector<8x32xbf16>
    %c0_14 = arith.constant 0 : index
    %c0_15 = arith.constant 0 : index
    %16 = vector.load %arg6[%c0_14, %c0_15] : memref<32x32xbf16, #tpu.memory_space<vmem>>, vector<32x32xbf16>
    %cst_16 = arith.constant dense<0.000000e+00> : vector<8x32xf32>
    %17 = tpu.matmul %15, %16, %cst_16 {dimension_numbers = #tpu.dot_dimension_numbers<[1], [0], [0], [1], [0, 0, 1, 1], [], []>} : vector<8x32xbf16>, vector<32x32xbf16>, vector<8x32xf32> -> vector<8x32xf32>
    %c0_17 = arith.constant 0 : index
    %c0_18 = arith.constant 0 : index
    %18 = vector.load %arg9[%c0_17, %c0_18] : memref<1x32xf32, #tpu.memory_space<vmem>>, vector<1x32xf32>
    %19 = vector.broadcast %18 : vector<1x32xf32> to vector<8x32xf32>
    %20 = arith.addf %17, %19 : vector<8x32xf32>
    %cst_19 = arith.constant 0.353553385 : f32
    %21 = vector.broadcast %cst_19 : f32 to vector<8x32xf32>
    %22 = arith.mulf %8, %21 : vector<8x32xf32>
    %23 = arith.truncf %22 : vector<8x32xf32> to vector<8x32xbf16>
    %24 = arith.truncf %14 : vector<8x32xf32> to vector<8x32xbf16>
    %25 = arith.truncf %20 : vector<8x32xf32> to vector<8x32xbf16>
    %c0_20 = arith.constant 0 : index
    %c0_21 = arith.constant 0 : index
    %26 = vector.load %arg11[%c0_20, %c0_21] : memref<1x32xf32, #tpu.memory_space<vmem>>, vector<1x32xf32>
    %27 = vector.shape_cast %26 : vector<1x32xf32> to vector<1x32xf32>
    %28 = vector.broadcast %27 : vector<1x32xf32> to vector<8x32xf32>
    %29 = vector.shape_cast %23 : vector<8x32xbf16> to vector<1x8x4x8xbf16>
    %30 = tpu.transpose %29, [2, 0, 1, 3] : vector<1x8x4x8xbf16> -> vector<4x1x8x8xbf16>
    %31 = vector.shape_cast %30 : vector<4x1x8x8xbf16> to vector<4x8x8xbf16>
    %32 = vector.shape_cast %24 : vector<8x32xbf16> to vector<1x8x4x8xbf16>
    %33 = tpu.transpose %32, [2, 0, 1, 3] : vector<1x8x4x8xbf16> -> vector<4x1x8x8xbf16>
    %34 = vector.shape_cast %33 : vector<4x1x8x8xbf16> to vector<4x8x8xbf16>
    %35 = vector.shape_cast %25 : vector<8x32xbf16> to vector<1x8x4x8xbf16>
    %36 = tpu.transpose %35, [2, 0, 1, 3] : vector<1x8x4x8xbf16> -> vector<4x1x8x8xbf16>
    %37 = vector.shape_cast %36 : vector<4x1x8x8xbf16> to vector<4x8x8xbf16>
    "tpu.trace_start"() <{level = 10 : i32, message = "bqd,bkd->bqk"}> : () -> ()
    %cst_22 = arith.constant dense<0.000000e+00> : vector<4x8x8xf32>
    %38 = tpu.matmul %31, %34, %cst_22 {dimension_numbers = #tpu.dot_dimension_numbers<[2], [2], [1], [1], [0, 0, 0, 1, 1, 1], [0], [0]>} : vector<4x8x8xbf16>, vector<4x8x8xbf16>, vector<4x8x8xf32> -> vector<4x8x8xf32>
    "tpu.trace_stop"() : () -> ()
    %cst_23 = arith.constant dense<0xFF800000> : vector<4x8xf32>
    %39 = vector.multi_reduction <maximumf>, %38, %cst_23 [2] : vector<4x8x8xf32> to vector<4x8xf32>
    %40 = vector.shape_cast %39 : vector<4x8xf32> to vector<4x8x1xf32>
    %41 = vector.broadcast %40 : vector<4x8x1xf32> to vector<4x8x8xf32>
    %42 = arith.subf %38, %41 : vector<4x8x8xf32>
    %43 = math.exp %42 : vector<4x8x8xf32>
    %cst_24 = arith.constant dense<0.000000e+00> : vector<4x8xf32>
    %44 = vector.multi_reduction <add>, %43, %cst_24 [2] : vector<4x8x8xf32> to vector<4x8xf32>
    %45 = vector.shape_cast %44 : vector<4x8xf32> to vector<4x8x1xf32>
    %46 = tpu.reciprocal %45 {approx = true} : vector<4x8x1xf32> -> vector<4x8x1xf32>
    %47 = vector.broadcast %46 : vector<4x8x1xf32> to vector<4x8x8xf32>
    %48 = arith.mulf %43, %47 : vector<4x8x8xf32>
    %49 = arith.truncf %48 : vector<4x8x8xf32> to vector<4x8x8xbf16>
    "tpu.trace_start"() <{level = 10 : i32, message = "bqk,bkd->bqd"}> : () -> ()
    %cst_25 = arith.constant dense<0.000000e+00> : vector<4x8x8xf32>
    %50 = tpu.matmul %49, %37, %cst_25 {dimension_numbers = #tpu.dot_dimension_numbers<[2], [1], [1], [2], [0, 0, 0, 1, 1, 2], [0], [0]>} : vector<4x8x8xbf16>, vector<4x8x8xbf16>, vector<4x8x8xf32> -> vector<4x8x8xf32>
    "tpu.trace_stop"() : () -> ()
    %51 = vector.extract_strided_slice %50 {offsets = [0, 0, 0], sizes = [1, 8, 8], strides = [1, 1, 1]} : vector<4x8x8xf32> to vector<1x8x8xf32>
    %52 = vector.shape_cast %51 : vector<1x8x8xf32> to vector<8x8xf32>
    %53 = arith.truncf %52 : vector<8x8xf32> to vector<8x8xbf16>
    %c0_26 = arith.constant 0 : index
    %c0_27 = arith.constant 0 : index
    %c0_28 = arith.constant 0 : index
    %54 = vector.load %arg10[%c0_26, %c0_27, %c0_28] : memref<4x8x32xbf16, #tpu.memory_space<vmem>>, vector<1x8x32xbf16>
    %55 = vector.shape_cast %54 : vector<1x8x32xbf16> to vector<8x32xbf16>
    %cst_29 = arith.constant dense<0.000000e+00> : vector<8x32xf32>
    %56 = tpu.matmul %53, %55, %cst_29 {dimension_numbers = #tpu.dot_dimension_numbers<[1], [0], [0], [1], [0, 0, 1, 1], [], []>} : vector<8x8xbf16>, vector<8x32xbf16>, vector<8x32xf32> -> vector<8x32xf32>
    %57 = arith.addf %28, %56 : vector<8x32xf32>
    %58 = vector.extract_strided_slice %50 {offsets = [1, 0, 0], sizes = [1, 8, 8], strides = [1, 1, 1]} : vector<4x8x8xf32> to vector<1x8x8xf32>
    %59 = vector.shape_cast %58 : vector<1x8x8xf32> to vector<8x8xf32>
    %60 = arith.truncf %59 : vector<8x8xf32> to vector<8x8xbf16>
    %c1 = arith.constant 1 : index
    %c0_30 = arith.constant 0 : index
    %c0_31 = arith.constant 0 : index
    %61 = vector.load %arg10[%c1, %c0_30, %c0_31] : memref<4x8x32xbf16, #tpu.memory_space<vmem>>, vector<1x8x32xbf16>
    %62 = vector.shape_cast %61 : vector<1x8x32xbf16> to vector<8x32xbf16>
    %cst_32 = arith.constant dense<0.000000e+00> : vector<8x32xf32>
    %63 = tpu.matmul %60, %62, %cst_32 {dimension_numbers = #tpu.dot_dimension_numbers<[1], [0], [0], [1], [0, 0, 1, 1], [], []>} : vector<8x8xbf16>, vector<8x32xbf16>, vector<8x32xf32> -> vector<8x32xf32>
    %64 = arith.addf %57, %63 : vector<8x32xf32>
    %65 = vector.extract_strided_slice %50 {offsets = [2, 0, 0], sizes = [1, 8, 8], strides = [1, 1, 1]} : vector<4x8x8xf32> to vector<1x8x8xf32>
    %66 = vector.shape_cast %65 : vector<1x8x8xf32> to vector<8x8xf32>
    %67 = arith.truncf %66 : vector<8x8xf32> to vector<8x8xbf16>
    %c2 = arith.constant 2 : index
    %c0_33 = arith.constant 0 : index
    %c0_34 = arith.constant 0 : index
    %68 = vector.load %arg10[%c2, %c0_33, %c0_34] : memref<4x8x32xbf16, #tpu.memory_space<vmem>>, vector<1x8x32xbf16>
    %69 = vector.shape_cast %68 : vector<1x8x32xbf16> to vector<8x32xbf16>
    %cst_35 = arith.constant dense<0.000000e+00> : vector<8x32xf32>
    %70 = tpu.matmul %67, %69, %cst_35 {dimension_numbers = #tpu.dot_dimension_numbers<[1], [0], [0], [1], [0, 0, 1, 1], [], []>} : vector<8x8xbf16>, vector<8x32xbf16>, vector<8x32xf32> -> vector<8x32xf32>
    %71 = arith.addf %64, %70 : vector<8x32xf32>
    %72 = vector.extract_strided_slice %50 {offsets = [3, 0, 0], sizes = [1, 8, 8], strides = [1, 1, 1]} : vector<4x8x8xf32> to vector<1x8x8xf32>
    %73 = vector.shape_cast %72 : vector<1x8x8xf32> to vector<8x8xf32>
    %74 = arith.truncf %73 : vector<8x8xf32> to vector<8x8xbf16>
    %c3 = arith.constant 3 : index
    %c0_36 = arith.constant 0 : index
    %c0_37 = arith.constant 0 : index
    %75 = vector.load %arg10[%c3, %c0_36, %c0_37] : memref<4x8x32xbf16, #tpu.memory_space<vmem>>, vector<1x8x32xbf16>
    %76 = vector.shape_cast %75 : vector<1x8x32xbf16> to vector<8x32xbf16>
    %cst_38 = arith.constant dense<0.000000e+00> : vector<8x32xf32>
    %77 = tpu.matmul %74, %76, %cst_38 {dimension_numbers = #tpu.dot_dimension_numbers<[1], [0], [0], [1], [0, 0, 1, 1], [], []>} : vector<8x8xbf16>, vector<8x32xbf16>, vector<8x32xf32> -> vector<8x32xf32>
    %78 = arith.addf %71, %77 : vector<8x32xf32>
    %79 = arith.addf %0, %78 : vector<8x32xf32>
    %c0_39 = arith.constant 0 : index
    %c0_40 = arith.constant 0 : index
    %80 = vector.load %arg12[%c0_39, %c0_40] : memref<1x32xf32, #tpu.memory_space<vmem>>, vector<1x32xf32>
    %c0_41 = arith.constant 0 : index
    %c0_42 = arith.constant 0 : index
    %81 = vector.load %arg13[%c0_41, %c0_42] : memref<1x32xf32, #tpu.memory_space<vmem>>, vector<1x32xf32>
    %cst_43 = arith.constant dense<0.000000e+00> : vector<8xf32>
    %82 = vector.multi_reduction <add>, %79, %cst_43 [1] : vector<8x32xf32> to vector<8xf32>
    %83 = vector.shape_cast %82 : vector<8xf32> to vector<8x1xf32>
    %cst_44 = arith.constant 3.200000e+01 : f32
    %84 = vector.broadcast %cst_44 : f32 to vector<8x1xf32>
    %85 = arith.divf %83, %84 : vector<8x1xf32>
    %86 = vector.broadcast %85 : vector<8x1xf32> to vector<8x32xf32>
    %87 = arith.subf %79, %86 : vector<8x32xf32>
    %88 = arith.mulf %87, %87 : vector<8x32xf32>
    %cst_45 = arith.constant dense<0.000000e+00> : vector<8xf32>
    %89 = vector.multi_reduction <add>, %88, %cst_45 [1] : vector<8x32xf32> to vector<8xf32>
    %90 = vector.shape_cast %89 : vector<8xf32> to vector<8x1xf32>
    %cst_46 = arith.constant 3.200000e+01 : f32
    %91 = vector.broadcast %cst_46 : f32 to vector<8x1xf32>
    %92 = arith.divf %90, %91 : vector<8x1xf32>
    %cst_47 = arith.constant 9.99999974E-6 : f32
    %93 = vector.broadcast %cst_47 : f32 to vector<8x1xf32>
    %94 = arith.addf %92, %93 : vector<8x1xf32>
    %95 = math.rsqrt %94 : vector<8x1xf32>
    %96 = vector.broadcast %95 : vector<8x1xf32> to vector<8x32xf32>
    %97 = arith.mulf %87, %96 : vector<8x32xf32>
    %98 = vector.broadcast %80 : vector<1x32xf32> to vector<8x32xf32>
    %99 = arith.mulf %97, %98 : vector<8x32xf32>
    %100 = vector.broadcast %81 : vector<1x32xf32> to vector<8x32xf32>
    %101 = arith.addf %99, %100 : vector<8x32xf32>
    %102 = arith.truncf %101 : vector<8x32xf32> to vector<8x32xbf16>
    %c0_48 = arith.constant 0 : index
    %c0_49 = arith.constant 0 : index
    %103 = vector.load %arg14[%c0_48, %c0_49] : memref<32x128xbf16, #tpu.memory_space<vmem>>, vector<32x128xbf16>
    %cst_50 = arith.constant dense<0.000000e+00> : vector<8x128xf32>
    %104 = tpu.matmul %102, %103, %cst_50 {dimension_numbers = #tpu.dot_dimension_numbers<[1], [0], [0], [1], [0, 0, 1, 1], [], []>} : vector<8x32xbf16>, vector<32x128xbf16>, vector<8x128xf32> -> vector<8x128xf32>
    %c0_51 = arith.constant 0 : index
    %c0_52 = arith.constant 0 : index
    %105 = vector.load %arg15[%c0_51, %c0_52] : memref<1x128xf32, #tpu.memory_space<vmem>>, vector<1x128xf32>
    %106 = vector.broadcast %105 : vector<1x128xf32> to vector<8x128xf32>
    %107 = arith.addf %104, %106 : vector<8x128xf32>
    %cst_53 = arith.constant 0.000000e+00 : f32
    %108 = vector.broadcast %cst_53 : f32 to vector<8x128xf32>
    %109 = arith.maximumf %107, %108 : vector<8x128xf32>
    %110 = arith.truncf %109 : vector<8x128xf32> to vector<8x128xbf16>
    %c0_54 = arith.constant 0 : index
    %c0_55 = arith.constant 0 : index
    %111 = vector.load %arg16[%c0_54, %c0_55] : memref<128x32xbf16, #tpu.memory_space<vmem>>, vector<128x32xbf16>
    %cst_56 = arith.constant dense<0.000000e+00> : vector<8x32xf32>
    %112 = tpu.matmul %110, %111, %cst_56 {dimension_numbers = #tpu.dot_dimension_numbers<[1], [0], [0], [1], [0, 0, 1, 1], [], []>} : vector<8x128xbf16>, vector<128x32xbf16>, vector<8x32xf32> -> vector<8x32xf32>
    %c0_57 = arith.constant 0 : index
    %c0_58 = arith.constant 0 : index
    %113 = vector.load %arg17[%c0_57, %c0_58] : memref<1x32xf32, #tpu.memory_space<vmem>>, vector<1x32xf32>
    %114 = vector.broadcast %113 : vector<1x32xf32> to vector<8x32xf32>
    %115 = arith.addf %112, %114 : vector<8x32xf32>
    %116 = arith.addf %101, %115 : vector<8x32xf32>
    %c0_59 = arith.constant 0 : index
    %c0_60 = arith.constant 0 : index
    %117 = vector.load %arg18[%c0_59, %c0_60] : memref<1x32xf32, #tpu.memory_space<vmem>>, vector<1x32xf32>
    %c0_61 = arith.constant 0 : index
    %c0_62 = arith.constant 0 : index
    %118 = vector.load %arg19[%c0_61, %c0_62] : memref<1x32xf32, #tpu.memory_space<vmem>>, vector<1x32xf32>
    %cst_63 = arith.constant dense<0.000000e+00> : vector<8xf32>
    %119 = vector.multi_reduction <add>, %116, %cst_63 [1] : vector<8x32xf32> to vector<8xf32>
    %120 = vector.shape_cast %119 : vector<8xf32> to vector<8x1xf32>
    %cst_64 = arith.constant 3.200000e+01 : f32
    %121 = vector.broadcast %cst_64 : f32 to vector<8x1xf32>
    %122 = arith.divf %120, %121 : vector<8x1xf32>
    %123 = vector.broadcast %122 : vector<8x1xf32> to vector<8x32xf32>
    %124 = arith.subf %116, %123 : vector<8x32xf32>
    %125 = arith.mulf %124, %124 : vector<8x32xf32>
    %cst_65 = arith.constant dense<0.000000e+00> : vector<8xf32>
    %126 = vector.multi_reduction <add>, %125, %cst_65 [1] : vector<8x32xf32> to vector<8xf32>
    %127 = vector.shape_cast %126 : vector<8xf32> to vector<8x1xf32>
    %cst_66 = arith.constant 3.200000e+01 : f32
    %128 = vector.broadcast %cst_66 : f32 to vector<8x1xf32>
    %129 = arith.divf %127, %128 : vector<8x1xf32>
    %cst_67 = arith.constant 9.99999974E-6 : f32
    %130 = vector.broadcast %cst_67 : f32 to vector<8x1xf32>
    %131 = arith.addf %129, %130 : vector<8x1xf32>
    %132 = math.rsqrt %131 : vector<8x1xf32>
    %133 = vector.broadcast %132 : vector<8x1xf32> to vector<8x32xf32>
    %134 = arith.mulf %124, %133 : vector<8x32xf32>
    %135 = vector.broadcast %117 : vector<1x32xf32> to vector<8x32xf32>
    %136 = arith.mulf %134, %135 : vector<8x32xf32>
    %137 = vector.broadcast %118 : vector<1x32xf32> to vector<8x32xf32>
    %138 = arith.addf %136, %137 : vector<8x32xf32>
    %c0_68 = arith.constant 0 : index
    %c0_69 = arith.constant 0 : index
    %139 = vector.load %arg20[%c0_68, %c0_69] : memref<8x32xf32, #tpu.memory_space<vmem>>, vector<8x32xf32>
    tpu.vector_store %arg20[%c0_68, %c0_69], %138 {strides = array<i32>} : memref<8x32xf32, #tpu.memory_space<vmem>>, vector<8x32xf32>,
    return
  }
  func.func @transform_0(%arg0: i32) -> (i32, i32) {
    %c0_i32 = arith.constant 0 : i32
    %c0_i32_0 = arith.constant 0 : i32
    return %arg0, %c0_i32 : i32, i32
  }
  func.func @transform_1(%arg0: i32) -> (i32, i32) {
    %c0_i32 = arith.constant 0 : i32
    %c0_i32_0 = arith.constant 0 : i32
    return %arg0, %c0_i32 : i32, i32
  }
  func.func @transform_2(%arg0: i32) -> (i32, i32) {
    %c0_i32 = arith.constant 0 : i32
    %c0_i32_0 = arith.constant 0 : i32
    return %arg0, %c0_i32 : i32, i32
  }
  func.func @transform_3(%arg0: i32) -> (i32, i32) {
    %c0_i32 = arith.constant 0 : i32
    %c0_i32_0 = arith.constant 0 : i32
    %c0_i32_1 = arith.constant 0 : i32
    return %c0_i32, %c0_i32_0 : i32, i32
  }
  func.func @transform_4(%arg0: i32) -> (i32, i32) {
    %c0_i32 = arith.constant 0 : i32
    %c0_i32_0 = arith.constant 0 : i32
    %c0_i32_1 = arith.constant 0 : i32
    return %c0_i32, %c0_i32_0 : i32, i32
  }
  func.func @transform_5(%arg0: i32) -> (i32, i32) {
    %c0_i32 = arith.constant 0 : i32
    %c0_i32_0 = arith.constant 0 : i32
    %c0_i32_1 = arith.constant 0 : i32
    return %c0_i32, %c0_i32_0 : i32, i32
  }
  func.func @transform_6(%arg0: i32) -> (i32, i32) {
    %c0_i32 = arith.constant 0 : i32
    %c0_i32_0 = arith.constant 0 : i32
    %c0_i32_1 = arith.constant 0 : i32
    return %c0_i32, %c0_i32_0 : i32, i32
  }
  func.func @transform_7(%arg0: i32) -> (i32, i32) {
    %c0_i32 = arith.constant 0 : i32
    %c0_i32_0 = arith.constant 0 : i32
    %c0_i32_1 = arith.constant 0 : i32
    return %c0_i32, %c0_i32_0 : i32, i32
  }
  func.func @transform_8(%arg0: i32) -> (i32, i32) {
    %c0_i32 = arith.constant 0 : i32
    %c0_i32_0 = arith.constant 0 : i32
    %c0_i32_1 = arith.constant 0 : i32
    return %c0_i32, %c0_i32_0 : i32, i32
  }
  func.func @transform_9(%arg0: i32) -> (i32, i32, i32) {
    %c0_i32 = arith.constant 0 : i32
    %c0_i32_0 = arith.constant 0 : i32
    %c0_i32_1 = arith.constant 0 : i32
    %c0_i32_2 = arith.constant 0 : i32
    return %c0_i32, %c0_i32_0, %c0_i32_1 : i32, i32, i32
  }
  func.func @transform_10(%arg0: i32) -> (i32, i32) {
    %c0_i32 = arith.constant 0 : i32
    %c0_i32_0 = arith.constant 0 : i32
    %c0_i32_1 = arith.constant 0 : i32
    return %c0_i32, %c0_i32_0 : i32, i32
  }
  func.func @transform_11(%arg0: i32) -> (i32, i32) {
    %c0_i32 = arith.constant 0 : i32
    %c0_i32_0 = arith.constant 0 : i32
    %c0_i32_1 = arith.constant 0 : i32
    return %c0_i32, %c0_i32_0 : i32, i32
  }
  func.func @transform_12(%arg0: i32) -> (i32, i32) {
    %c0_i32 = arith.constant 0 : i32
    %c0_i32_0 = arith.constant 0 : i32
    %c0_i32_1 = arith.constant 0 : i32
    return %c0_i32, %c0_i32_0 : i32, i32
  }
  func.func @transform_13(%arg0: i32) -> (i32, i32) {
    %c0_i32 = arith.constant 0 : i32
    %c0_i32_0 = arith.constant 0 : i32
    %c0_i32_1 = arith.constant 0 : i32
    return %c0_i32, %c0_i32_0 : i32, i32
  }
  func.func @transform_14(%arg0: i32) -> (i32, i32) {
    %c0_i32 = arith.constant 0 : i32
    %c0_i32_0 = arith.constant 0 : i32
    %c0_i32_1 = arith.constant 0 : i32
    return %c0_i32, %c0_i32_0 : i32, i32
  }
  func.func @transform_15(%arg0: i32) -> (i32, i32) {
    %c0_i32 = arith.constant 0 : i32
    %c0_i32_0 = arith.constant 0 : i32
    %c0_i32_1 = arith.constant 0 : i32
    return %c0_i32, %c0_i32_0 : i32, i32
  }
  func.func @transform_16(%arg0: i32) -> (i32, i32) {
    %c0_i32 = arith.constant 0 : i32
    %c0_i32_0 = arith.constant 0 : i32
    %c0_i32_1 = arith.constant 0 : i32
    return %c0_i32, %c0_i32_0 : i32, i32
  }
  func.func @transform_17(%arg0: i32) -> (i32, i32) {
    %c0_i32 = arith.constant 0 : i32
    %c0_i32_0 = arith.constant 0 : i32
    %c0_i32_1 = arith.constant 0 : i32
    return %c0_i32, %c0_i32_0 : i32, i32
  }
  func.func @transform_18(%arg0: i32) -> (i32, i32) {
    %c0_i32 = arith.constant 0 : i32
    %c0_i32_0 = arith.constant 0 : i32
    %c0_i32_1 = arith.constant 0 : i32
    return %c0_i32, %c0_i32_0 : i32, i32
  }
  func.func @transform_19(%arg0: i32) -> (i32, i32) {
    %c0_i32 = arith.constant 0 : i32
    %c0_i32_0 = arith.constant 0 : i32
    return %arg0, %c0_i32 : i32, i32
  }
}

module attributes {stable_mosaic.version = 11 : i64} {
  func.func @_cross_attn_ffn_kernel(%arg0: i32, %arg1: memref<8x32xf32, #tpu.memory_space<vmem>>, %arg2: memref<8x32xf32, #tpu.memory_space<vmem>>, %arg3: memref<8x32xf32, #tpu.memory_space<vmem>>, %arg4: memref<32x32xbf16, #tpu.memory_space<vmem>>, %arg5: memref<32x32xbf16, #tpu.memory_space<vmem>>, %arg6: memref<32x32xbf16, #tpu.memory_space<vmem>>, %arg7: memref<1x32xf32, #tpu.memory_space<vmem>>, %arg8: memref<1x32xf32, #tpu.memory_space<vmem>>, %arg9: memref<1x32xf32, #tpu.memory_space<vmem>>, %arg10: memref<4x8x32xbf16, #tpu.memory_space<vmem>>, %arg11: memref<1x32xf32, #tpu.memory_space<vmem>>, %arg12: memref<1x32xf32, #tpu.memory_space<vmem>>, %arg13: memref<1x32xf32, #tpu.memory_space<vmem>>, %arg14: memref<32x128xbf16, #tpu.memory_space<vmem>>, %arg15: memref<1x128xf32, #tpu.memory_space<vmem>>, %arg16: memref<128x32xbf16, #tpu.memory_space<vmem>>, %arg17: memref<1x32xf32, #tpu.memory_space<vmem>>, %arg18: memref<1x32xf32, #tpu.memory_space<vmem>>, %arg19: memref<1x32xf32, #tpu.memory_space<vmem>>, %arg20: memref<8x32xf32, #tpu.memory_space<vmem>>) attributes {dimension_semantics = [#tpu.dimension_semantics<parallel>], iteration_bounds = array<i64: 2>, scalar_prefetch = 0 : i64, scratch_operands = 0 : i64, tpu.core_type = #tpu.core_type<tc>, window_params = [{transform_indices = @transform_0, window_bounds = array<i64: 8, 32>}, {transform_indices = @transform_1, window_bounds = array<i64: 8, 32>}, {transform_indices = @transform_2, window_bounds = array<i64: 8, 32>}, {pipeline_mode = #tpu.pipeline_mode<synchronous>, transform_indices = @transform_3, window_bounds = array<i64: 32, 32>}, {pipeline_mode = #tpu.pipeline_mode<synchronous>, transform_indices = @transform_4, window_bounds = array<i64: 32, 32>}, {pipeline_mode = #tpu.pipeline_mode<synchronous>, transform_indices = @transform_5, window_bounds = array<i64: 32, 32>}, {pipeline_mode = #tpu.pipeline_mode<synchronous>, transform_indices = @transform_6, window_bounds = array<i64: 1, 32>}, {pipeline_mode = #tpu.pipeline_mode<synchronous>, transform_indices = @transform_7, window_bounds = array<i64: 1, 32>}, {pipeline_mode = #tpu.pipeline_mode<synchronous>, transform_indices = @transform_8, window_bounds = array<i64: 1, 32>}, {pipeline_mode = #tpu.pipeline_mode<synchronous>, transform_indices = @transform_9, window_bounds = array<i64: 4, 8, 32>}, {pipeline_mode = #tpu.pipeline_mode<synchronous>, transform_indices = @transform_10, window_bounds = array<i64: 1, 32>}, {pipeline_mode = #tpu.pipeline_mode<synchronous>, transform_indices = @transform_11, window_bounds = array<i64: 1, 32>}, {pipeline_mode = #tpu.pipeline_mode<synchronous>, transform_indices = @transform_12, window_bounds = array<i64: 1, 32>}, {pipeline_mode = #tpu.pipeline_mode<synchronous>, transform_indices = @transform_13, window_bounds = array<i64: 32, 128>}, {pipeline_mode = #tpu.pipeline_mode<synchronous>, transform_indices = @transform_14, window_bounds = array<i64: 1, 128>}, {pipeline_mode = #tpu.pipeline_mode<synchronous>, transform_indices = @transform_15, window_bounds = array<i64: 128, 32>}, {pipeline_mode = #tpu.pipeline_mode<synchronous>, transform_indices = @transform_16, window_bounds = array<i64: 1, 32>}, {pipeline_mode = #tpu.pipeline_mode<synchronous>, transform_indices = @transform_17, window_bounds = array<i64: 1, 32>}, {pipeline_mode = #tpu.pipeline_mode<synchronous>, transform_indices = @transform_18, window_bounds = array<i64: 1, 32>}, {transform_indices = @transform_19, window_bounds = array<i64: 8, 32>}]} {
    %c0 = arith.constant 0 : index
    %c0_0 = arith.constant 0 : index
    %0 = vector.load %arg1[%c0, %c0_0] : memref<8x32xf32, #tpu.memory_space<vmem>>, vector<8x32xf32>
    %c0_1 = arith.constant 0 : index
    %c0_2 = arith.constant 0 : index
    %1 = vector.load %arg2[%c0_1, %c0_2] : memref<8x32xf32, #tpu.memory_space<vmem>>, vector<8x32xf32>
    %c0_3 = arith.constant 0 : index
    %c0_4 = arith.constant 0 : index
    %2 = vector.load %arg3[%c0_3, %c0_4] : memref<8x32xf32, #tpu.memory_space<vmem>>, vector<8x32xf32>
    %3 = arith.truncf %0 : vector<8x32xf32> to vector<8x32xbf16>
    %c0_5 = arith.constant 0 : index
    %c0_6 = arith.constant 0 : index
    %4 = vector.load %arg4[%c0_5, %c0_6] : memref<32x32xbf16, #tpu.memory_space<vmem>>, vector<32x32xbf16>
    %cst = arith.constant dense<0.000000e+00> : vector<8x32xf32>
    %5 = tpu.matmul %3, %4, %cst {dimension_numbers = #tpu.dot_dimension_numbers<[1], [0], [0], [1], [0, 0, 1, 1], [], []>} : vector<8x32xbf16>, vector<32x32xbf16>, vector<8x32xf32> -> vector<8x32xf32>
    %c0_7 = arith.constant 0 : index
    %c0_8 = arith.constant 0 : index
    %6 = vector.load %arg7[%c0_7, %c0_8] : memref<1x32xf32, #tpu.memory_space<vmem>>, vector<1x32xf32>
    %7 = vector.broadcast %6 : vector<1x32xf32> to vector<8x32xf32>
    %8 = arith.addf %5, %7 : vector<8x32xf32>
    %9 = arith.truncf %1 : vector<8x32xf32> to vector<8x32xbf16>
    %c0_9 = arith.constant 0 : index
    %c0_10 = arith.constant 0 : index
    %10 = vector.load %arg5[%c0_9, %c0_10] : memref<32x32xbf16, #tpu.memory_space<vmem>>, vector<32x32xbf16>
    %cst_11 = arith.constant dense<0.000000e+00> : vector<8x32xf32>
    %11 = tpu.matmul %9, %10, %cst_11 {dimension_numbers = #tpu.dot_dimension_numbers<[1], [0], [0], [1], [0, 0, 1, 1], [], []>} : vector<8x32xbf16>, vector<32x32xbf16>, vector<8x32xf32> -> vector<8x32xf32>
    %c0_12 = arith.constant 0 : index
    %c0_13 = arith.constant 0 : index
    %12 = vector.load %arg8[%c0_12, %c0_13] : memref<1x32xf32, #tpu.memory_space<vmem>>, vector<1x32xf32>
    %13 = vector.broadcast %12 : vector<1x32xf32> to vector<8x32xf32>
    %14 = arith.addf %11, %13 : vector<8x32xf32>
    %15 = arith.truncf %2 : vector<8x32xf32> to vector<8x32xbf16>
    %c0_14 = arith.constant 0 : index
    %c0_15 = arith.constant 0 : index
    %16 = vector.load %arg6[%c0_14, %c0_15] : memref<32x32xbf16, #tpu.memory_space<vmem>>, vector<32x32xbf16>
    %cst_16 = arith.constant dense<0.000000e+00> : vector<8x32xf32>
    %17 = tpu.matmul %15, %16, %cst_16 {dimension_numbers = #tpu.dot_dimension_numbers<[1], [0], [0], [1], [0, 0, 1, 1], [], []>} : vector<8x32xbf16>, vector<32x32xbf16>, vector<8x32xf32> -> vector<8x32xf32>
    %c0_17 = arith.constant 0 : index
    %c0_18 = arith.constant 0 : index
    %18 = vector.load %arg9[%c0_17, %c0_18] : memref<1x32xf32, #tpu.memory_space<vmem>>, vector<1x32xf32>
    %19 = vector.broadcast %18 : vector<1x32xf32> to vector<8x32xf32>
    %20 = arith.addf %17, %19 : vector<8x32xf32>
    %cst_19 = arith.constant 0.353553385 : f32
    %21 = vector.broadcast %cst_19 : f32 to vector<8x32xf32>
    %22 = arith.mulf %8, %21 : vector<8x32xf32>
    %23 = arith.truncf %22 : vector<8x32xf32> to vector<8x32xbf16>
    %24 = arith.truncf %14 : vector<8x32xf32> to vector<8x32xbf16>
    %25 = arith.truncf %20 : vector<8x32xf32> to vector<8x32xbf16>
    %c0_20 = arith.constant 0 : index
    %c0_21 = arith.constant 0 : index
    %26 = vector.load %arg11[%c0_20, %c0_21] : memref<1x32xf32, #tpu.memory_space<vmem>>, vector<1x32xf32>
    %27 = vector.shape_cast %26 : vector<1x32xf32> to vector<1x32xf32>
    %28 = vector.broadcast %27 : vector<1x32xf32> to vector<8x32xf32>
    %29 = vector.extract_strided_slice %23 {offsets = [0, 0], sizes = [8, 8], strides = [1, 1]} : vector<8x32xbf16> to vector<8x8xbf16>
    %30 = vector.shape_cast %29 : vector<8x8xbf16> to vector<1x8x8xbf16>
    %31 = vector.extract_strided_slice %24 {offsets = [0, 0], sizes = [8, 8], strides = [1, 1]} : vector<8x32xbf16> to vector<8x8xbf16>
    %32 = vector.shape_cast %31 : vector<8x8xbf16> to vector<1x8x8xbf16>
    %33 = vector.extract_strided_slice %25 {offsets = [0, 0], sizes = [8, 8], strides = [1, 1]} : vector<8x32xbf16> to vector<8x8xbf16>
    %34 = vector.shape_cast %33 : vector<8x8xbf16> to vector<1x8x8xbf16>
    "tpu.trace_start"() <{level = 10 : i32, message = "bqd,bkd->bqk"}> : () -> ()
    %cst_22 = arith.constant dense<0.000000e+00> : vector<1x8x8xf32>
    %35 = tpu.matmul %30, %32, %cst_22 {dimension_numbers = #tpu.dot_dimension_numbers<[2], [2], [1], [1], [0, 0, 0, 1, 1, 1], [0], [0]>} : vector<1x8x8xbf16>, vector<1x8x8xbf16>, vector<1x8x8xf32> -> vector<1x8x8xf32>
    "tpu.trace_stop"() : () -> ()
    %cst_23 = arith.constant dense<0xFF800000> : vector<1x8xf32>
    %36 = vector.multi_reduction <maximumf>, %35, %cst_23 [2] : vector<1x8x8xf32> to vector<1x8xf32>
    %37 = vector.shape_cast %36 : vector<1x8xf32> to vector<1x8x1xf32>
    %38 = vector.broadcast %37 : vector<1x8x1xf32> to vector<1x8x8xf32>
    %39 = arith.subf %35, %38 : vector<1x8x8xf32>
    %40 = math.exp %39 : vector<1x8x8xf32>
    %cst_24 = arith.constant dense<0.000000e+00> : vector<1x8xf32>
    %41 = vector.multi_reduction <add>, %40, %cst_24 [2] : vector<1x8x8xf32> to vector<1x8xf32>
    %42 = vector.shape_cast %41 : vector<1x8xf32> to vector<1x8x1xf32>
    %43 = tpu.reciprocal %42 {approx = true} : vector<1x8x1xf32> -> vector<1x8x1xf32>
    %44 = vector.broadcast %43 : vector<1x8x1xf32> to vector<1x8x8xf32>
    %45 = arith.mulf %40, %44 : vector<1x8x8xf32>
    %46 = arith.truncf %45 : vector<1x8x8xf32> to vector<1x8x8xbf16>
    "tpu.trace_start"() <{level = 10 : i32, message = "bqk,bkd->bqd"}> : () -> ()
    %cst_25 = arith.constant dense<0.000000e+00> : vector<1x8x8xf32>
    %47 = tpu.matmul %46, %34, %cst_25 {dimension_numbers = #tpu.dot_dimension_numbers<[2], [1], [1], [2], [0, 0, 0, 1, 1, 2], [0], [0]>} : vector<1x8x8xbf16>, vector<1x8x8xbf16>, vector<1x8x8xf32> -> vector<1x8x8xf32>
    "tpu.trace_stop"() : () -> ()
    %48 = vector.shape_cast %47 : vector<1x8x8xf32> to vector<8x8xf32>
    %49 = arith.truncf %48 : vector<8x8xf32> to vector<8x8xbf16>
    %c0_26 = arith.constant 0 : index
    %c0_27 = arith.constant 0 : index
    %c0_28 = arith.constant 0 : index
    %50 = vector.load %arg10[%c0_26, %c0_27, %c0_28] : memref<4x8x32xbf16, #tpu.memory_space<vmem>>, vector<1x8x32xbf16>
    %51 = vector.shape_cast %50 : vector<1x8x32xbf16> to vector<8x32xbf16>
    %cst_29 = arith.constant dense<0.000000e+00> : vector<8x32xf32>
    %52 = tpu.matmul %49, %51, %cst_29 {dimension_numbers = #tpu.dot_dimension_numbers<[1], [0], [0], [1], [0, 0, 1, 1], [], []>} : vector<8x8xbf16>, vector<8x32xbf16>, vector<8x32xf32> -> vector<8x32xf32>
    %53 = arith.addf %28, %52 : vector<8x32xf32>
    %54 = vector.extract_strided_slice %23 {offsets = [0, 8], sizes = [8, 8], strides = [1, 1]} : vector<8x32xbf16> to vector<8x8xbf16>
    %55 = vector.shape_cast %54 : vector<8x8xbf16> to vector<1x8x8xbf16>
    %56 = vector.extract_strided_slice %24 {offsets = [0, 8], sizes = [8, 8], strides = [1, 1]} : vector<8x32xbf16> to vector<8x8xbf16>
    %57 = vector.shape_cast %56 : vector<8x8xbf16> to vector<1x8x8xbf16>
    %58 = vector.extract_strided_slice %25 {offsets = [0, 8], sizes = [8, 8], strides = [1, 1]} : vector<8x32xbf16> to vector<8x8xbf16>
    %59 = vector.shape_cast %58 : vector<8x8xbf16> to vector<1x8x8xbf16>
    "tpu.trace_start"() <{level = 10 : i32, message = "bqd,bkd->bqk"}> : () -> ()
    %cst_30 = arith.constant dense<0.000000e+00> : vector<1x8x8xf32>
    %60 = tpu.matmul %55, %57, %cst_30 {dimension_numbers = #tpu.dot_dimension_numbers<[2], [2], [1], [1], [0, 0, 0, 1, 1, 1], [0], [0]>} : vector<1x8x8xbf16>, vector<1x8x8xbf16>, vector<1x8x8xf32> -> vector<1x8x8xf32>
    "tpu.trace_stop"() : () -> ()
    %cst_31 = arith.constant dense<0xFF800000> : vector<1x8xf32>
    %61 = vector.multi_reduction <maximumf>, %60, %cst_31 [2] : vector<1x8x8xf32> to vector<1x8xf32>
    %62 = vector.shape_cast %61 : vector<1x8xf32> to vector<1x8x1xf32>
    %63 = vector.broadcast %62 : vector<1x8x1xf32> to vector<1x8x8xf32>
    %64 = arith.subf %60, %63 : vector<1x8x8xf32>
    %65 = math.exp %64 : vector<1x8x8xf32>
    %cst_32 = arith.constant dense<0.000000e+00> : vector<1x8xf32>
    %66 = vector.multi_reduction <add>, %65, %cst_32 [2] : vector<1x8x8xf32> to vector<1x8xf32>
    %67 = vector.shape_cast %66 : vector<1x8xf32> to vector<1x8x1xf32>
    %68 = tpu.reciprocal %67 {approx = true} : vector<1x8x1xf32> -> vector<1x8x1xf32>
    %69 = vector.broadcast %68 : vector<1x8x1xf32> to vector<1x8x8xf32>
    %70 = arith.mulf %65, %69 : vector<1x8x8xf32>
    %71 = arith.truncf %70 : vector<1x8x8xf32> to vector<1x8x8xbf16>
    "tpu.trace_start"() <{level = 10 : i32, message = "bqk,bkd->bqd"}> : () -> ()
    %cst_33 = arith.constant dense<0.000000e+00> : vector<1x8x8xf32>
    %72 = tpu.matmul %71, %59, %cst_33 {dimension_numbers = #tpu.dot_dimension_numbers<[2], [1], [1], [2], [0, 0, 0, 1, 1, 2], [0], [0]>} : vector<1x8x8xbf16>, vector<1x8x8xbf16>, vector<1x8x8xf32> -> vector<1x8x8xf32>
    "tpu.trace_stop"() : () -> ()
    %73 = vector.shape_cast %72 : vector<1x8x8xf32> to vector<8x8xf32>
    %74 = arith.truncf %73 : vector<8x8xf32> to vector<8x8xbf16>
    %c1 = arith.constant 1 : index
    %c0_34 = arith.constant 0 : index
    %c0_35 = arith.constant 0 : index
    %75 = vector.load %arg10[%c1, %c0_34, %c0_35] : memref<4x8x32xbf16, #tpu.memory_space<vmem>>, vector<1x8x32xbf16>
    %76 = vector.shape_cast %75 : vector<1x8x32xbf16> to vector<8x32xbf16>
    %cst_36 = arith.constant dense<0.000000e+00> : vector<8x32xf32>
    %77 = tpu.matmul %74, %76, %cst_36 {dimension_numbers = #tpu.dot_dimension_numbers<[1], [0], [0], [1], [0, 0, 1, 1], [], []>} : vector<8x8xbf16>, vector<8x32xbf16>, vector<8x32xf32> -> vector<8x32xf32>
    %78 = arith.addf %53, %77 : vector<8x32xf32>
    %79 = vector.extract_strided_slice %23 {offsets = [0, 16], sizes = [8, 8], strides = [1, 1]} : vector<8x32xbf16> to vector<8x8xbf16>
    %80 = vector.shape_cast %79 : vector<8x8xbf16> to vector<1x8x8xbf16>
    %81 = vector.extract_strided_slice %24 {offsets = [0, 16], sizes = [8, 8], strides = [1, 1]} : vector<8x32xbf16> to vector<8x8xbf16>
    %82 = vector.shape_cast %81 : vector<8x8xbf16> to vector<1x8x8xbf16>
    %83 = vector.extract_strided_slice %25 {offsets = [0, 16], sizes = [8, 8], strides = [1, 1]} : vector<8x32xbf16> to vector<8x8xbf16>
    %84 = vector.shape_cast %83 : vector<8x8xbf16> to vector<1x8x8xbf16>
    "tpu.trace_start"() <{level = 10 : i32, message = "bqd,bkd->bqk"}> : () -> ()
    %cst_37 = arith.constant dense<0.000000e+00> : vector<1x8x8xf32>
    %85 = tpu.matmul %80, %82, %cst_37 {dimension_numbers = #tpu.dot_dimension_numbers<[2], [2], [1], [1], [0, 0, 0, 1, 1, 1], [0], [0]>} : vector<1x8x8xbf16>, vector<1x8x8xbf16>, vector<1x8x8xf32> -> vector<1x8x8xf32>
    "tpu.trace_stop"() : () -> ()
    %cst_38 = arith.constant dense<0xFF800000> : vector<1x8xf32>
    %86 = vector.multi_reduction <maximumf>, %85, %cst_38 [2] : vector<1x8x8xf32> to vector<1x8xf32>
    %87 = vector.shape_cast %86 : vector<1x8xf32> to vector<1x8x1xf32>
    %88 = vector.broadcast %87 : vector<1x8x1xf32> to vector<1x8x8xf32>
    %89 = arith.subf %85, %88 : vector<1x8x8xf32>
    %90 = math.exp %89 : vector<1x8x8xf32>
    %cst_39 = arith.constant dense<0.000000e+00> : vector<1x8xf32>
    %91 = vector.multi_reduction <add>, %90, %cst_39 [2] : vector<1x8x8xf32> to vector<1x8xf32>
    %92 = vector.shape_cast %91 : vector<1x8xf32> to vector<1x8x1xf32>
    %93 = tpu.reciprocal %92 {approx = true} : vector<1x8x1xf32> -> vector<1x8x1xf32>
    %94 = vector.broadcast %93 : vector<1x8x1xf32> to vector<1x8x8xf32>
    %95 = arith.mulf %90, %94 : vector<1x8x8xf32>
    %96 = arith.truncf %95 : vector<1x8x8xf32> to vector<1x8x8xbf16>
    "tpu.trace_start"() <{level = 10 : i32, message = "bqk,bkd->bqd"}> : () -> ()
    %cst_40 = arith.constant dense<0.000000e+00> : vector<1x8x8xf32>
    %97 = tpu.matmul %96, %84, %cst_40 {dimension_numbers = #tpu.dot_dimension_numbers<[2], [1], [1], [2], [0, 0, 0, 1, 1, 2], [0], [0]>} : vector<1x8x8xbf16>, vector<1x8x8xbf16>, vector<1x8x8xf32> -> vector<1x8x8xf32>
    "tpu.trace_stop"() : () -> ()
    %98 = vector.shape_cast %97 : vector<1x8x8xf32> to vector<8x8xf32>
    %99 = arith.truncf %98 : vector<8x8xf32> to vector<8x8xbf16>
    %c2 = arith.constant 2 : index
    %c0_41 = arith.constant 0 : index
    %c0_42 = arith.constant 0 : index
    %100 = vector.load %arg10[%c2, %c0_41, %c0_42] : memref<4x8x32xbf16, #tpu.memory_space<vmem>>, vector<1x8x32xbf16>
    %101 = vector.shape_cast %100 : vector<1x8x32xbf16> to vector<8x32xbf16>
    %cst_43 = arith.constant dense<0.000000e+00> : vector<8x32xf32>
    %102 = tpu.matmul %99, %101, %cst_43 {dimension_numbers = #tpu.dot_dimension_numbers<[1], [0], [0], [1], [0, 0, 1, 1], [], []>} : vector<8x8xbf16>, vector<8x32xbf16>, vector<8x32xf32> -> vector<8x32xf32>
    %103 = arith.addf %78, %102 : vector<8x32xf32>
    %104 = vector.extract_strided_slice %23 {offsets = [0, 24], sizes = [8, 8], strides = [1, 1]} : vector<8x32xbf16> to vector<8x8xbf16>
    %105 = vector.shape_cast %104 : vector<8x8xbf16> to vector<1x8x8xbf16>
    %106 = vector.extract_strided_slice %24 {offsets = [0, 24], sizes = [8, 8], strides = [1, 1]} : vector<8x32xbf16> to vector<8x8xbf16>
    %107 = vector.shape_cast %106 : vector<8x8xbf16> to vector<1x8x8xbf16>
    %108 = vector.extract_strided_slice %25 {offsets = [0, 24], sizes = [8, 8], strides = [1, 1]} : vector<8x32xbf16> to vector<8x8xbf16>
    %109 = vector.shape_cast %108 : vector<8x8xbf16> to vector<1x8x8xbf16>
    "tpu.trace_start"() <{level = 10 : i32, message = "bqd,bkd->bqk"}> : () -> ()
    %cst_44 = arith.constant dense<0.000000e+00> : vector<1x8x8xf32>
    %110 = tpu.matmul %105, %107, %cst_44 {dimension_numbers = #tpu.dot_dimension_numbers<[2], [2], [1], [1], [0, 0, 0, 1, 1, 1], [0], [0]>} : vector<1x8x8xbf16>, vector<1x8x8xbf16>, vector<1x8x8xf32> -> vector<1x8x8xf32>
    "tpu.trace_stop"() : () -> ()
    %cst_45 = arith.constant dense<0xFF800000> : vector<1x8xf32>
    %111 = vector.multi_reduction <maximumf>, %110, %cst_45 [2] : vector<1x8x8xf32> to vector<1x8xf32>
    %112 = vector.shape_cast %111 : vector<1x8xf32> to vector<1x8x1xf32>
    %113 = vector.broadcast %112 : vector<1x8x1xf32> to vector<1x8x8xf32>
    %114 = arith.subf %110, %113 : vector<1x8x8xf32>
    %115 = math.exp %114 : vector<1x8x8xf32>
    %cst_46 = arith.constant dense<0.000000e+00> : vector<1x8xf32>
    %116 = vector.multi_reduction <add>, %115, %cst_46 [2] : vector<1x8x8xf32> to vector<1x8xf32>
    %117 = vector.shape_cast %116 : vector<1x8xf32> to vector<1x8x1xf32>
    %118 = tpu.reciprocal %117 {approx = true} : vector<1x8x1xf32> -> vector<1x8x1xf32>
    %119 = vector.broadcast %118 : vector<1x8x1xf32> to vector<1x8x8xf32>
    %120 = arith.mulf %115, %119 : vector<1x8x8xf32>
    %121 = arith.truncf %120 : vector<1x8x8xf32> to vector<1x8x8xbf16>
    "tpu.trace_start"() <{level = 10 : i32, message = "bqk,bkd->bqd"}> : () -> ()
    %cst_47 = arith.constant dense<0.000000e+00> : vector<1x8x8xf32>
    %122 = tpu.matmul %121, %109, %cst_47 {dimension_numbers = #tpu.dot_dimension_numbers<[2], [1], [1], [2], [0, 0, 0, 1, 1, 2], [0], [0]>} : vector<1x8x8xbf16>, vector<1x8x8xbf16>, vector<1x8x8xf32> -> vector<1x8x8xf32>
    "tpu.trace_stop"() : () -> ()
    %123 = vector.shape_cast %122 : vector<1x8x8xf32> to vector<8x8xf32>
    %124 = arith.truncf %123 : vector<8x8xf32> to vector<8x8xbf16>
    %c3 = arith.constant 3 : index
    %c0_48 = arith.constant 0 : index
    %c0_49 = arith.constant 0 : index
    %125 = vector.load %arg10[%c3, %c0_48, %c0_49] : memref<4x8x32xbf16, #tpu.memory_space<vmem>>, vector<1x8x32xbf16>
    %126 = vector.shape_cast %125 : vector<1x8x32xbf16> to vector<8x32xbf16>
    %cst_50 = arith.constant dense<0.000000e+00> : vector<8x32xf32>
    %127 = tpu.matmul %124, %126, %cst_50 {dimension_numbers = #tpu.dot_dimension_numbers<[1], [0], [0], [1], [0, 0, 1, 1], [], []>} : vector<8x8xbf16>, vector<8x32xbf16>, vector<8x32xf32> -> vector<8x32xf32>
    %128 = arith.addf %103, %127 : vector<8x32xf32>
    %129 = arith.addf %0, %128 : vector<8x32xf32>
    %c0_51 = arith.constant 0 : index
    %c0_52 = arith.constant 0 : index
    %130 = vector.load %arg12[%c0_51, %c0_52] : memref<1x32xf32, #tpu.memory_space<vmem>>, vector<1x32xf32>
    %c0_53 = arith.constant 0 : index
    %c0_54 = arith.constant 0 : index
    %131 = vector.load %arg13[%c0_53, %c0_54] : memref<1x32xf32, #tpu.memory_space<vmem>>, vector<1x32xf32>
    %cst_55 = arith.constant dense<0.000000e+00> : vector<8xf32>
    %132 = vector.multi_reduction <add>, %129, %cst_55 [1] : vector<8x32xf32> to vector<8xf32>
    %133 = vector.shape_cast %132 : vector<8xf32> to vector<8x1xf32>
    %cst_56 = arith.constant 3.200000e+01 : f32
    %134 = vector.broadcast %cst_56 : f32 to vector<8x1xf32>
    %135 = arith.divf %133, %134 : vector<8x1xf32>
    %136 = vector.broadcast %135 : vector<8x1xf32> to vector<8x32xf32>
    %137 = arith.subf %129, %136 : vector<8x32xf32>
    %138 = arith.mulf %137, %137 : vector<8x32xf32>
    %cst_57 = arith.constant dense<0.000000e+00> : vector<8xf32>
    %139 = vector.multi_reduction <add>, %138, %cst_57 [1] : vector<8x32xf32> to vector<8xf32>
    %140 = vector.shape_cast %139 : vector<8xf32> to vector<8x1xf32>
    %cst_58 = arith.constant 3.200000e+01 : f32
    %141 = vector.broadcast %cst_58 : f32 to vector<8x1xf32>
    %142 = arith.divf %140, %141 : vector<8x1xf32>
    %cst_59 = arith.constant 9.99999974E-6 : f32
    %143 = vector.broadcast %cst_59 : f32 to vector<8x1xf32>
    %144 = arith.addf %142, %143 : vector<8x1xf32>
    %145 = math.rsqrt %144 : vector<8x1xf32>
    %146 = vector.broadcast %145 : vector<8x1xf32> to vector<8x32xf32>
    %147 = arith.mulf %137, %146 : vector<8x32xf32>
    %148 = vector.broadcast %130 : vector<1x32xf32> to vector<8x32xf32>
    %149 = arith.mulf %147, %148 : vector<8x32xf32>
    %150 = vector.broadcast %131 : vector<1x32xf32> to vector<8x32xf32>
    %151 = arith.addf %149, %150 : vector<8x32xf32>
    %152 = arith.truncf %151 : vector<8x32xf32> to vector<8x32xbf16>
    %c0_60 = arith.constant 0 : index
    %c0_61 = arith.constant 0 : index
    %153 = vector.load %arg14[%c0_60, %c0_61] : memref<32x128xbf16, #tpu.memory_space<vmem>>, vector<32x128xbf16>
    %cst_62 = arith.constant dense<0.000000e+00> : vector<8x128xf32>
    %154 = tpu.matmul %152, %153, %cst_62 {dimension_numbers = #tpu.dot_dimension_numbers<[1], [0], [0], [1], [0, 0, 1, 1], [], []>} : vector<8x32xbf16>, vector<32x128xbf16>, vector<8x128xf32> -> vector<8x128xf32>
    %c0_63 = arith.constant 0 : index
    %c0_64 = arith.constant 0 : index
    %155 = vector.load %arg15[%c0_63, %c0_64] : memref<1x128xf32, #tpu.memory_space<vmem>>, vector<1x128xf32>
    %156 = vector.broadcast %155 : vector<1x128xf32> to vector<8x128xf32>
    %157 = arith.addf %154, %156 : vector<8x128xf32>
    %cst_65 = arith.constant 0.000000e+00 : f32
    %158 = vector.broadcast %cst_65 : f32 to vector<8x128xf32>
    %159 = arith.maximumf %157, %158 : vector<8x128xf32>
    %160 = arith.truncf %159 : vector<8x128xf32> to vector<8x128xbf16>
    %c0_66 = arith.constant 0 : index
    %c0_67 = arith.constant 0 : index
    %161 = vector.load %arg16[%c0_66, %c0_67] : memref<128x32xbf16, #tpu.memory_space<vmem>>, vector<128x32xbf16>
    %cst_68 = arith.constant dense<0.000000e+00> : vector<8x32xf32>
    %162 = tpu.matmul %160, %161, %cst_68 {dimension_numbers = #tpu.dot_dimension_numbers<[1], [0], [0], [1], [0, 0, 1, 1], [], []>} : vector<8x128xbf16>, vector<128x32xbf16>, vector<8x32xf32> -> vector<8x32xf32>
    %c0_69 = arith.constant 0 : index
    %c0_70 = arith.constant 0 : index
    %163 = vector.load %arg17[%c0_69, %c0_70] : memref<1x32xf32, #tpu.memory_space<vmem>>, vector<1x32xf32>
    %164 = vector.broadcast %163 : vector<1x32xf32> to vector<8x32xf32>
    %165 = arith.addf %162, %164 : vector<8x32xf32>
    %166 = arith.addf %151, %165 : vector<8x32xf32>
    %c0_71 = arith.constant 0 : index
    %c0_72 = arith.constant 0 : index
    %167 = vector.load %arg18[%c0_71, %c0_72] : memref<1x32xf32, #tpu.memory_space<vmem>>, vector<1x32xf32>
    %c0_73 = arith.constant 0 : index
    %c0_74 = arith.constant 0 : index
    %168 = vector.load %arg19[%c0_73, %c0_74] : memref<1x32xf32, #tpu.memory_space<vmem>>, vector<1x32xf32>
    %cst_75 = arith.constant dense<0.000000e+00> : vector<8xf32>
    %169 = vector.multi_reduction <add>, %166, %cst_75 [1] : vector<8x32xf32> to vector<8xf32>
    %170 = vector.shape_cast %169 : vector<8xf32> to vector<8x1xf32>
    %cst_76 = arith.constant 3.200000e+01 : f32
    %171 = vector.broadcast %cst_76 : f32 to vector<8x1xf32>
    %172 = arith.divf %170, %171 : vector<8x1xf32>
    %173 = vector.broadcast %172 : vector<8x1xf32> to vector<8x32xf32>
    %174 = arith.subf %166, %173 : vector<8x32xf32>
    %175 = arith.mulf %174, %174 : vector<8x32xf32>
    %cst_77 = arith.constant dense<0.000000e+00> : vector<8xf32>
    %176 = vector.multi_reduction <add>, %175, %cst_77 [1] : vector<8x32xf32> to vector<8xf32>
    %177 = vector.shape_cast %176 : vector<8xf32> to vector<8x1xf32>
    %cst_78 = arith.constant 3.200000e+01 : f32
    %178 = vector.broadcast %cst_78 : f32 to vector<8x1xf32>
    %179 = arith.divf %177, %178 : vector<8x1xf32>
    %cst_79 = arith.constant 9.99999974E-6 : f32
    %180 = vector.broadcast %cst_79 : f32 to vector<8x1xf32>
    %181 = arith.addf %179, %180 : vector<8x1xf32>
    %182 = math.rsqrt %181 : vector<8x1xf32>
    %183 = vector.broadcast %182 : vector<8x1xf32> to vector<8x32xf32>
    %184 = arith.mulf %174, %183 : vector<8x32xf32>
    %185 = vector.broadcast %167 : vector<1x32xf32> to vector<8x32xf32>
    %186 = arith.mulf %184, %185 : vector<8x32xf32>
    %187 = vector.broadcast %168 : vector<1x32xf32> to vector<8x32xf32>
    %188 = arith.addf %186, %187 : vector<8x32xf32>
    %c0_80 = arith.constant 0 : index
    %c0_81 = arith.constant 0 : index
    %189 = vector.load %arg20[%c0_80, %c0_81] : memref<8x32xf32, #tpu.memory_space<vmem>>, vector<8x32xf32>
    tpu.vector_store %arg20[%c0_80, %c0_81], %188 {strides = array<i32>} : memref<8x32xf32, #tpu.memory_space<vmem>>, vector<8x32xf32>,
    return
  }
  func.func @transform_0(%arg0: i32) -> (i32, i32) {
    %c0_i32 = arith.constant 0 : i32
    %c0_i32_0 = arith.constant 0 : i32
    return %arg0, %c0_i32 : i32, i32
  }
  func.func @transform_1(%arg0: i32) -> (i32, i32) {
    %c0_i32 = arith.constant 0 : i32
    %c0_i32_0 = arith.constant 0 : i32
    return %arg0, %c0_i32 : i32, i32
  }
  func.func @transform_2(%arg0: i32) -> (i32, i32) {
    %c0_i32 = arith.constant 0 : i32
    %c0_i32_0 = arith.constant 0 : i32
    return %arg0, %c0_i32 : i32, i32
  }
  func.func @transform_3(%arg0: i32) -> (i32, i32) {
    %c0_i32 = arith.constant 0 : i32
    %c0_i32_0 = arith.constant 0 : i32
    %c0_i32_1 = arith.constant 0 : i32
    return %c0_i32, %c0_i32_0 : i32, i32
  }
  func.func @transform_4(%arg0: i32) -> (i32, i32) {
    %c0_i32 = arith.constant 0 : i32
    %c0_i32_0 = arith.constant 0 : i32
    %c0_i32_1 = arith.constant 0 : i32
    return %c0_i32, %c0_i32_0 : i32, i32
  }
  func.func @transform_5(%arg0: i32) -> (i32, i32) {
    %c0_i32 = arith.constant 0 : i32
    %c0_i32_0 = arith.constant 0 : i32
    %c0_i32_1 = arith.constant 0 : i32
    return %c0_i32, %c0_i32_0 : i32, i32
  }
  func.func @transform_6(%arg0: i32) -> (i32, i32) {
    %c0_i32 = arith.constant 0 : i32
    %c0_i32_0 = arith.constant 0 : i32
    %c0_i32_1 = arith.constant 0 : i32
    return %c0_i32, %c0_i32_0 : i32, i32
  }
  func.func @transform_7(%arg0: i32) -> (i32, i32) {
    %c0_i32 = arith.constant 0 : i32
    %c0_i32_0 = arith.constant 0 : i32
    %c0_i32_1 = arith.constant 0 : i32
    return %c0_i32, %c0_i32_0 : i32, i32
  }
  func.func @transform_8(%arg0: i32) -> (i32, i32) {
    %c0_i32 = arith.constant 0 : i32
    %c0_i32_0 = arith.constant 0 : i32
    %c0_i32_1 = arith.constant 0 : i32
    return %c0_i32, %c0_i32_0 : i32, i32
  }
  func.func @transform_9(%arg0: i32) -> (i32, i32, i32) {
    %c0_i32 = arith.constant 0 : i32
    %c0_i32_0 = arith.constant 0 : i32
    %c0_i32_1 = arith.constant 0 : i32
    %c0_i32_2 = arith.constant 0 : i32
    return %c0_i32, %c0_i32_0, %c0_i32_1 : i32, i32, i32
  }
  func.func @transform_10(%arg0: i32) -> (i32, i32) {
    %c0_i32 = arith.constant 0 : i32
    %c0_i32_0 = arith.constant 0 : i32
    %c0_i32_1 = arith.constant 0 : i32
    return %c0_i32, %c0_i32_0 : i32, i32
  }
  func.func @transform_11(%arg0: i32) -> (i32, i32) {
    %c0_i32 = arith.constant 0 : i32
    %c0_i32_0 = arith.constant 0 : i32
    %c0_i32_1 = arith.constant 0 : i32
    return %c0_i32, %c0_i32_0 : i32, i32
  }
  func.func @transform_12(%arg0: i32) -> (i32, i32) {
    %c0_i32 = arith.constant 0 : i32
    %c0_i32_0 = arith.constant 0 : i32
    %c0_i32_1 = arith.constant 0 : i32
    return %c0_i32, %c0_i32_0 : i32, i32
  }
  func.func @transform_13(%arg0: i32) -> (i32, i32) {
    %c0_i32 = arith.constant 0 : i32
    %c0_i32_0 = arith.constant 0 : i32
    %c0_i32_1 = arith.constant 0 : i32
    return %c0_i32, %c0_i32_0 : i32, i32
  }
  func.func @transform_14(%arg0: i32) -> (i32, i32) {
    %c0_i32 = arith.constant 0 : i32
    %c0_i32_0 = arith.constant 0 : i32
    %c0_i32_1 = arith.constant 0 : i32
    return %c0_i32, %c0_i32_0 : i32, i32
  }
  func.func @transform_15(%arg0: i32) -> (i32, i32) {
    %c0_i32 = arith.constant 0 : i32
    %c0_i32_0 = arith.constant 0 : i32
    %c0_i32_1 = arith.constant 0 : i32
    return %c0_i32, %c0_i32_0 : i32, i32
  }
  func.func @transform_16(%arg0: i32) -> (i32, i32) {
    %c0_i32 = arith.constant 0 : i32
    %c0_i32_0 = arith.constant 0 : i32
    %c0_i32_1 = arith.constant 0 : i32
    return %c0_i32, %c0_i32_0 : i32, i32
  }
  func.func @transform_17(%arg0: i32) -> (i32, i32) {
    %c0_i32 = arith.constant 0 : i32
    %c0_i32_0 = arith.constant 0 : i32
    %c0_i32_1 = arith.constant 0 : i32
    return %c0_i32, %c0_i32_0 : i32, i32
  }
  func.func @transform_18(%arg0: i32) -> (i32, i32) {
    %c0_i32 = arith.constant 0 : i32
    %c0_i32_0 = arith.constant 0 : i32
    %c0_i32_1 = arith.constant 0 : i32
    return %c0_i32, %c0_i32_0 : i32, i32
  }
  func.func @transform_19(%arg0: i32) -> (i32, i32) {
    %c0_i32 = arith.constant 0 : i32
    %c0_i32_0 = arith.constant 0 : i32
    return %arg0, %c0_i32 : i32, i32
  }
}

module attributes {stable_mosaic.version = 11 : i64} {
  func.func @_cross_attn_ffn_kernel(%arg0: i32, %arg1: memref<8x32xf32, #tpu.memory_space<vmem>>, %arg2: memref<8x32xf32, #tpu.memory_space<vmem>>, %arg3: memref<8x32xf32, #tpu.memory_space<vmem>>, %arg4: memref<32x32xbf16, #tpu.memory_space<vmem>>, %arg5: memref<32x32xbf16, #tpu.memory_space<vmem>>, %arg6: memref<32x32xbf16, #tpu.memory_space<vmem>>, %arg7: memref<1x32xf32, #tpu.memory_space<vmem>>, %arg8: memref<1x32xf32, #tpu.memory_space<vmem>>, %arg9: memref<1x32xf32, #tpu.memory_space<vmem>>, %arg10: memref<4x8x32xbf16, #tpu.memory_space<vmem>>, %arg11: memref<1x32xf32, #tpu.memory_space<vmem>>, %arg12: memref<1x32xf32, #tpu.memory_space<vmem>>, %arg13: memref<1x32xf32, #tpu.memory_space<vmem>>, %arg14: memref<32x128xbf16, #tpu.memory_space<vmem>>, %arg15: memref<1x128xf32, #tpu.memory_space<vmem>>, %arg16: memref<128x32xbf16, #tpu.memory_space<vmem>>, %arg17: memref<1x32xf32, #tpu.memory_space<vmem>>, %arg18: memref<1x32xf32, #tpu.memory_space<vmem>>, %arg19: memref<1x32xf32, #tpu.memory_space<vmem>>, %arg20: memref<8x32xf32, #tpu.memory_space<vmem>>) attributes {dimension_semantics = [#tpu.dimension_semantics<parallel>], iteration_bounds = array<i64: 2>, scalar_prefetch = 0 : i64, scratch_operands = 0 : i64, tpu.core_type = #tpu.core_type<tc>, window_params = [{transform_indices = @transform_0, window_bounds = array<i64: 8, 32>}, {transform_indices = @transform_1, window_bounds = array<i64: 8, 32>}, {transform_indices = @transform_2, window_bounds = array<i64: 8, 32>}, {pipeline_mode = #tpu.pipeline_mode<synchronous>, transform_indices = @transform_3, window_bounds = array<i64: 32, 32>}, {pipeline_mode = #tpu.pipeline_mode<synchronous>, transform_indices = @transform_4, window_bounds = array<i64: 32, 32>}, {pipeline_mode = #tpu.pipeline_mode<synchronous>, transform_indices = @transform_5, window_bounds = array<i64: 32, 32>}, {pipeline_mode = #tpu.pipeline_mode<synchronous>, transform_indices = @transform_6, window_bounds = array<i64: 1, 32>}, {pipeline_mode = #tpu.pipeline_mode<synchronous>, transform_indices = @transform_7, window_bounds = array<i64: 1, 32>}, {pipeline_mode = #tpu.pipeline_mode<synchronous>, transform_indices = @transform_8, window_bounds = array<i64: 1, 32>}, {pipeline_mode = #tpu.pipeline_mode<synchronous>, transform_indices = @transform_9, window_bounds = array<i64: 4, 8, 32>}, {pipeline_mode = #tpu.pipeline_mode<synchronous>, transform_indices = @transform_10, window_bounds = array<i64: 1, 32>}, {pipeline_mode = #tpu.pipeline_mode<synchronous>, transform_indices = @transform_11, window_bounds = array<i64: 1, 32>}, {pipeline_mode = #tpu.pipeline_mode<synchronous>, transform_indices = @transform_12, window_bounds = array<i64: 1, 32>}, {pipeline_mode = #tpu.pipeline_mode<synchronous>, transform_indices = @transform_13, window_bounds = array<i64: 32, 128>}, {pipeline_mode = #tpu.pipeline_mode<synchronous>, transform_indices = @transform_14, window_bounds = array<i64: 1, 128>}, {pipeline_mode = #tpu.pipeline_mode<synchronous>, transform_indices = @transform_15, window_bounds = array<i64: 128, 32>}, {pipeline_mode = #tpu.pipeline_mode<synchronous>, transform_indices = @transform_16, window_bounds = array<i64: 1, 32>}, {pipeline_mode = #tpu.pipeline_mode<synchronous>, transform_indices = @transform_17, window_bounds = array<i64: 1, 32>}, {pipeline_mode = #tpu.pipeline_mode<synchronous>, transform_indices = @transform_18, window_bounds = array<i64: 1, 32>}, {transform_indices = @transform_19, window_bounds = array<i64: 8, 32>}]} {
    %c0 = arith.constant 0 : index
    %c0_0 = arith.constant 0 : index
    %0 = vector.load %arg1[%c0, %c0_0] : memref<8x32xf32, #tpu.memory_space<vmem>>, vector<8x32xf32>
    %c0_1 = arith.constant 0 : index
    %c0_2 = arith.constant 0 : index
    %1 = vector.load %arg2[%c0_1, %c0_2] : memref<8x32xf32, #tpu.memory_space<vmem>>, vector<8x32xf32>
    %c0_3 = arith.constant 0 : index
    %c0_4 = arith.constant 0 : index
    %2 = vector.load %arg3[%c0_3, %c0_4] : memref<8x32xf32, #tpu.memory_space<vmem>>, vector<8x32xf32>
    %3 = arith.truncf %0 : vector<8x32xf32> to vector<8x32xbf16>
    %c0_5 = arith.constant 0 : index
    %c0_6 = arith.constant 0 : index
    %4 = vector.load %arg4[%c0_5, %c0_6] : memref<32x32xbf16, #tpu.memory_space<vmem>>, vector<32x32xbf16>
    %cst = arith.constant dense<0.000000e+00> : vector<8x32xf32>
    %5 = tpu.matmul %3, %4, %cst {dimension_numbers = #tpu.dot_dimension_numbers<[1], [0], [0], [1], [0, 0, 1, 1], [], []>} : vector<8x32xbf16>, vector<32x32xbf16>, vector<8x32xf32> -> vector<8x32xf32>
    %c0_7 = arith.constant 0 : index
    %c0_8 = arith.constant 0 : index
    %6 = vector.load %arg7[%c0_7, %c0_8] : memref<1x32xf32, #tpu.memory_space<vmem>>, vector<1x32xf32>
    %7 = vector.broadcast %6 : vector<1x32xf32> to vector<8x32xf32>
    %8 = arith.addf %5, %7 : vector<8x32xf32>
    %9 = arith.truncf %1 : vector<8x32xf32> to vector<8x32xbf16>
    %c0_9 = arith.constant 0 : index
    %c0_10 = arith.constant 0 : index
    %10 = vector.load %arg5[%c0_9, %c0_10] : memref<32x32xbf16, #tpu.memory_space<vmem>>, vector<32x32xbf16>
    %cst_11 = arith.constant dense<0.000000e+00> : vector<8x32xf32>
    %11 = tpu.matmul %9, %10, %cst_11 {dimension_numbers = #tpu.dot_dimension_numbers<[1], [0], [0], [1], [0, 0, 1, 1], [], []>} : vector<8x32xbf16>, vector<32x32xbf16>, vector<8x32xf32> -> vector<8x32xf32>
    %c0_12 = arith.constant 0 : index
    %c0_13 = arith.constant 0 : index
    %12 = vector.load %arg8[%c0_12, %c0_13] : memref<1x32xf32, #tpu.memory_space<vmem>>, vector<1x32xf32>
    %13 = vector.broadcast %12 : vector<1x32xf32> to vector<8x32xf32>
    %14 = arith.addf %11, %13 : vector<8x32xf32>
    %15 = arith.truncf %2 : vector<8x32xf32> to vector<8x32xbf16>
    %c0_14 = arith.constant 0 : index
    %c0_15 = arith.constant 0 : index
    %16 = vector.load %arg6[%c0_14, %c0_15] : memref<32x32xbf16, #tpu.memory_space<vmem>>, vector<32x32xbf16>
    %cst_16 = arith.constant dense<0.000000e+00> : vector<8x32xf32>
    %17 = tpu.matmul %15, %16, %cst_16 {dimension_numbers = #tpu.dot_dimension_numbers<[1], [0], [0], [1], [0, 0, 1, 1], [], []>} : vector<8x32xbf16>, vector<32x32xbf16>, vector<8x32xf32> -> vector<8x32xf32>
    %c0_17 = arith.constant 0 : index
    %c0_18 = arith.constant 0 : index
    %18 = vector.load %arg9[%c0_17, %c0_18] : memref<1x32xf32, #tpu.memory_space<vmem>>, vector<1x32xf32>
    %19 = vector.broadcast %18 : vector<1x32xf32> to vector<8x32xf32>
    %20 = arith.addf %17, %19 : vector<8x32xf32>
    %cst_19 = arith.constant 0.353553385 : f32
    %21 = vector.broadcast %cst_19 : f32 to vector<8x32xf32>
    %22 = arith.mulf %8, %21 : vector<8x32xf32>
    %23 = arith.truncf %22 : vector<8x32xf32> to vector<8x32xbf16>
    %24 = arith.truncf %14 : vector<8x32xf32> to vector<8x32xbf16>
    %25 = arith.truncf %20 : vector<8x32xf32> to vector<8x32xbf16>
    %c0_20 = arith.constant 0 : index
    %c0_21 = arith.constant 0 : index
    %26 = vector.load %arg11[%c0_20, %c0_21] : memref<1x32xf32, #tpu.memory_space<vmem>>, vector<1x32xf32>
    %27 = vector.shape_cast %26 : vector<1x32xf32> to vector<1x32xf32>
    %28 = vector.broadcast %27 : vector<1x32xf32> to vector<8x32xf32>
    %29 = vector.extract_strided_slice %23 {offsets = [0, 0], sizes = [8, 8], strides = [1, 1]} : vector<8x32xbf16> to vector<8x8xbf16>
    %30 = vector.shape_cast %29 : vector<8x8xbf16> to vector<1x8x8xbf16>
    %31 = vector.extract_strided_slice %24 {offsets = [0, 0], sizes = [8, 8], strides = [1, 1]} : vector<8x32xbf16> to vector<8x8xbf16>
    %32 = vector.shape_cast %31 : vector<8x8xbf16> to vector<1x8x8xbf16>
    %33 = vector.extract_strided_slice %25 {offsets = [0, 0], sizes = [8, 8], strides = [1, 1]} : vector<8x32xbf16> to vector<8x8xbf16>
    %34 = vector.shape_cast %33 : vector<8x8xbf16> to vector<1x8x8xbf16>
    "tpu.trace_start"() <{level = 10 : i32, message = "bqd,bkd->bqk"}> : () -> ()
    %cst_22 = arith.constant dense<0.000000e+00> : vector<1x8x8xf32>
    %35 = tpu.matmul %30, %32, %cst_22 {dimension_numbers = #tpu.dot_dimension_numbers<[2], [2], [1], [1], [0, 0, 0, 1, 1, 1], [0], [0]>} : vector<1x8x8xbf16>, vector<1x8x8xbf16>, vector<1x8x8xf32> -> vector<1x8x8xf32>
    "tpu.trace_stop"() : () -> ()
    %cst_23 = arith.constant dense<0xFF800000> : vector<1x8xf32>
    %36 = vector.multi_reduction <maximumf>, %35, %cst_23 [2] : vector<1x8x8xf32> to vector<1x8xf32>
    %37 = vector.shape_cast %36 : vector<1x8xf32> to vector<1x8x1xf32>
    %38 = vector.broadcast %37 : vector<1x8x1xf32> to vector<1x8x8xf32>
    %39 = arith.subf %35, %38 : vector<1x8x8xf32>
    %40 = math.exp %39 : vector<1x8x8xf32>
    %cst_24 = arith.constant dense<0.000000e+00> : vector<1x8xf32>
    %41 = vector.multi_reduction <add>, %40, %cst_24 [2] : vector<1x8x8xf32> to vector<1x8xf32>
    %42 = vector.shape_cast %41 : vector<1x8xf32> to vector<1x8x1xf32>
    %43 = tpu.reciprocal %42 {approx = true} : vector<1x8x1xf32> -> vector<1x8x1xf32>
    %44 = vector.broadcast %43 : vector<1x8x1xf32> to vector<1x8x8xf32>
    %45 = arith.mulf %40, %44 : vector<1x8x8xf32>
    %46 = arith.truncf %45 : vector<1x8x8xf32> to vector<1x8x8xbf16>
    "tpu.trace_start"() <{level = 10 : i32, message = "bqk,bkd->bqd"}> : () -> ()
    %cst_25 = arith.constant dense<0.000000e+00> : vector<1x8x8xf32>
    %47 = tpu.matmul %46, %34, %cst_25 {dimension_numbers = #tpu.dot_dimension_numbers<[2], [1], [1], [2], [0, 0, 0, 1, 1, 2], [0], [0]>} : vector<1x8x8xbf16>, vector<1x8x8xbf16>, vector<1x8x8xf32> -> vector<1x8x8xf32>
    "tpu.trace_stop"() : () -> ()
    %48 = vector.shape_cast %47 : vector<1x8x8xf32> to vector<8x8xf32>
    %49 = arith.truncf %48 : vector<8x8xf32> to vector<8x8xbf16>
    %c0_26 = arith.constant 0 : index
    %c0_27 = arith.constant 0 : index
    %c0_28 = arith.constant 0 : index
    %50 = vector.load %arg10[%c0_26, %c0_27, %c0_28] : memref<4x8x32xbf16, #tpu.memory_space<vmem>>, vector<1x8x32xbf16>
    %51 = vector.shape_cast %50 : vector<1x8x32xbf16> to vector<8x32xbf16>
    %cst_29 = arith.constant dense<0.000000e+00> : vector<8x32xf32>
    %52 = tpu.matmul %49, %51, %cst_29 {dimension_numbers = #tpu.dot_dimension_numbers<[1], [0], [0], [1], [0, 0, 1, 1], [], []>} : vector<8x8xbf16>, vector<8x32xbf16>, vector<8x32xf32> -> vector<8x32xf32>
    %53 = arith.addf %28, %52 : vector<8x32xf32>
    %54 = vector.extract_strided_slice %23 {offsets = [0, 8], sizes = [8, 8], strides = [1, 1]} : vector<8x32xbf16> to vector<8x8xbf16>
    %55 = vector.shape_cast %54 : vector<8x8xbf16> to vector<1x8x8xbf16>
    %56 = vector.extract_strided_slice %24 {offsets = [0, 8], sizes = [8, 8], strides = [1, 1]} : vector<8x32xbf16> to vector<8x8xbf16>
    %57 = vector.shape_cast %56 : vector<8x8xbf16> to vector<1x8x8xbf16>
    %58 = vector.extract_strided_slice %25 {offsets = [0, 8], sizes = [8, 8], strides = [1, 1]} : vector<8x32xbf16> to vector<8x8xbf16>
    %59 = vector.shape_cast %58 : vector<8x8xbf16> to vector<1x8x8xbf16>
    "tpu.trace_start"() <{level = 10 : i32, message = "bqd,bkd->bqk"}> : () -> ()
    %cst_30 = arith.constant dense<0.000000e+00> : vector<1x8x8xf32>
    %60 = tpu.matmul %55, %57, %cst_30 {dimension_numbers = #tpu.dot_dimension_numbers<[2], [2], [1], [1], [0, 0, 0, 1, 1, 1], [0], [0]>} : vector<1x8x8xbf16>, vector<1x8x8xbf16>, vector<1x8x8xf32> -> vector<1x8x8xf32>
    "tpu.trace_stop"() : () -> ()
    %cst_31 = arith.constant dense<0xFF800000> : vector<1x8xf32>
    %61 = vector.multi_reduction <maximumf>, %60, %cst_31 [2] : vector<1x8x8xf32> to vector<1x8xf32>
    %62 = vector.shape_cast %61 : vector<1x8xf32> to vector<1x8x1xf32>
    %63 = vector.broadcast %62 : vector<1x8x1xf32> to vector<1x8x8xf32>
    %64 = arith.subf %60, %63 : vector<1x8x8xf32>
    %65 = math.exp %64 : vector<1x8x8xf32>
    %cst_32 = arith.constant dense<0.000000e+00> : vector<1x8xf32>
    %66 = vector.multi_reduction <add>, %65, %cst_32 [2] : vector<1x8x8xf32> to vector<1x8xf32>
    %67 = vector.shape_cast %66 : vector<1x8xf32> to vector<1x8x1xf32>
    %68 = tpu.reciprocal %67 {approx = true} : vector<1x8x1xf32> -> vector<1x8x1xf32>
    %69 = vector.broadcast %68 : vector<1x8x1xf32> to vector<1x8x8xf32>
    %70 = arith.mulf %65, %69 : vector<1x8x8xf32>
    %71 = arith.truncf %70 : vector<1x8x8xf32> to vector<1x8x8xbf16>
    "tpu.trace_start"() <{level = 10 : i32, message = "bqk,bkd->bqd"}> : () -> ()
    %cst_33 = arith.constant dense<0.000000e+00> : vector<1x8x8xf32>
    %72 = tpu.matmul %71, %59, %cst_33 {dimension_numbers = #tpu.dot_dimension_numbers<[2], [1], [1], [2], [0, 0, 0, 1, 1, 2], [0], [0]>} : vector<1x8x8xbf16>, vector<1x8x8xbf16>, vector<1x8x8xf32> -> vector<1x8x8xf32>
    "tpu.trace_stop"() : () -> ()
    %73 = vector.shape_cast %72 : vector<1x8x8xf32> to vector<8x8xf32>
    %74 = arith.truncf %73 : vector<8x8xf32> to vector<8x8xbf16>
    %c1 = arith.constant 1 : index
    %c0_34 = arith.constant 0 : index
    %c0_35 = arith.constant 0 : index
    %75 = vector.load %arg10[%c1, %c0_34, %c0_35] : memref<4x8x32xbf16, #tpu.memory_space<vmem>>, vector<1x8x32xbf16>
    %76 = vector.shape_cast %75 : vector<1x8x32xbf16> to vector<8x32xbf16>
    %cst_36 = arith.constant dense<0.000000e+00> : vector<8x32xf32>
    %77 = tpu.matmul %74, %76, %cst_36 {dimension_numbers = #tpu.dot_dimension_numbers<[1], [0], [0], [1], [0, 0, 1, 1], [], []>} : vector<8x8xbf16>, vector<8x32xbf16>, vector<8x32xf32> -> vector<8x32xf32>
    %78 = arith.addf %53, %77 : vector<8x32xf32>
    %79 = vector.extract_strided_slice %23 {offsets = [0, 16], sizes = [8, 8], strides = [1, 1]} : vector<8x32xbf16> to vector<8x8xbf16>
    %80 = vector.shape_cast %79 : vector<8x8xbf16> to vector<1x8x8xbf16>
    %81 = vector.extract_strided_slice %24 {offsets = [0, 16], sizes = [8, 8], strides = [1, 1]} : vector<8x32xbf16> to vector<8x8xbf16>
    %82 = vector.shape_cast %81 : vector<8x8xbf16> to vector<1x8x8xbf16>
    %83 = vector.extract_strided_slice %25 {offsets = [0, 16], sizes = [8, 8], strides = [1, 1]} : vector<8x32xbf16> to vector<8x8xbf16>
    %84 = vector.shape_cast %83 : vector<8x8xbf16> to vector<1x8x8xbf16>
    "tpu.trace_start"() <{level = 10 : i32, message = "bqd,bkd->bqk"}> : () -> ()
    %cst_37 = arith.constant dense<0.000000e+00> : vector<1x8x8xf32>
    %85 = tpu.matmul %80, %82, %cst_37 {dimension_numbers = #tpu.dot_dimension_numbers<[2], [2], [1], [1], [0, 0, 0, 1, 1, 1], [0], [0]>} : vector<1x8x8xbf16>, vector<1x8x8xbf16>, vector<1x8x8xf32> -> vector<1x8x8xf32>
    "tpu.trace_stop"() : () -> ()
    %cst_38 = arith.constant dense<0xFF800000> : vector<1x8xf32>
    %86 = vector.multi_reduction <maximumf>, %85, %cst_38 [2] : vector<1x8x8xf32> to vector<1x8xf32>
    %87 = vector.shape_cast %86 : vector<1x8xf32> to vector<1x8x1xf32>
    %88 = vector.broadcast %87 : vector<1x8x1xf32> to vector<1x8x8xf32>
    %89 = arith.subf %85, %88 : vector<1x8x8xf32>
    %90 = math.exp %89 : vector<1x8x8xf32>
    %cst_39 = arith.constant dense<0.000000e+00> : vector<1x8xf32>
    %91 = vector.multi_reduction <add>, %90, %cst_39 [2] : vector<1x8x8xf32> to vector<1x8xf32>
    %92 = vector.shape_cast %91 : vector<1x8xf32> to vector<1x8x1xf32>
    %93 = tpu.reciprocal %92 {approx = true} : vector<1x8x1xf32> -> vector<1x8x1xf32>
    %94 = vector.broadcast %93 : vector<1x8x1xf32> to vector<1x8x8xf32>
    %95 = arith.mulf %90, %94 : vector<1x8x8xf32>
    %96 = arith.truncf %95 : vector<1x8x8xf32> to vector<1x8x8xbf16>
    "tpu.trace_start"() <{level = 10 : i32, message = "bqk,bkd->bqd"}> : () -> ()
    %cst_40 = arith.constant dense<0.000000e+00> : vector<1x8x8xf32>
    %97 = tpu.matmul %96, %84, %cst_40 {dimension_numbers = #tpu.dot_dimension_numbers<[2], [1], [1], [2], [0, 0, 0, 1, 1, 2], [0], [0]>} : vector<1x8x8xbf16>, vector<1x8x8xbf16>, vector<1x8x8xf32> -> vector<1x8x8xf32>
    "tpu.trace_stop"() : () -> ()
    %98 = vector.shape_cast %97 : vector<1x8x8xf32> to vector<8x8xf32>
    %99 = arith.truncf %98 : vector<8x8xf32> to vector<8x8xbf16>
    %c2 = arith.constant 2 : index
    %c0_41 = arith.constant 0 : index
    %c0_42 = arith.constant 0 : index
    %100 = vector.load %arg10[%c2, %c0_41, %c0_42] : memref<4x8x32xbf16, #tpu.memory_space<vmem>>, vector<1x8x32xbf16>
    %101 = vector.shape_cast %100 : vector<1x8x32xbf16> to vector<8x32xbf16>
    %cst_43 = arith.constant dense<0.000000e+00> : vector<8x32xf32>
    %102 = tpu.matmul %99, %101, %cst_43 {dimension_numbers = #tpu.dot_dimension_numbers<[1], [0], [0], [1], [0, 0, 1, 1], [], []>} : vector<8x8xbf16>, vector<8x32xbf16>, vector<8x32xf32> -> vector<8x32xf32>
    %103 = arith.addf %78, %102 : vector<8x32xf32>
    %104 = vector.extract_strided_slice %23 {offsets = [0, 24], sizes = [8, 8], strides = [1, 1]} : vector<8x32xbf16> to vector<8x8xbf16>
    %105 = vector.shape_cast %104 : vector<8x8xbf16> to vector<1x8x8xbf16>
    %106 = vector.extract_strided_slice %24 {offsets = [0, 24], sizes = [8, 8], strides = [1, 1]} : vector<8x32xbf16> to vector<8x8xbf16>
    %107 = vector.shape_cast %106 : vector<8x8xbf16> to vector<1x8x8xbf16>
    %108 = vector.extract_strided_slice %25 {offsets = [0, 24], sizes = [8, 8], strides = [1, 1]} : vector<8x32xbf16> to vector<8x8xbf16>
    %109 = vector.shape_cast %108 : vector<8x8xbf16> to vector<1x8x8xbf16>
    "tpu.trace_start"() <{level = 10 : i32, message = "bqd,bkd->bqk"}> : () -> ()
    %cst_44 = arith.constant dense<0.000000e+00> : vector<1x8x8xf32>
    %110 = tpu.matmul %105, %107, %cst_44 {dimension_numbers = #tpu.dot_dimension_numbers<[2], [2], [1], [1], [0, 0, 0, 1, 1, 1], [0], [0]>} : vector<1x8x8xbf16>, vector<1x8x8xbf16>, vector<1x8x8xf32> -> vector<1x8x8xf32>
    "tpu.trace_stop"() : () -> ()
    %cst_45 = arith.constant dense<0xFF800000> : vector<1x8xf32>
    %111 = vector.multi_reduction <maximumf>, %110, %cst_45 [2] : vector<1x8x8xf32> to vector<1x8xf32>
    %112 = vector.shape_cast %111 : vector<1x8xf32> to vector<1x8x1xf32>
    %113 = vector.broadcast %112 : vector<1x8x1xf32> to vector<1x8x8xf32>
    %114 = arith.subf %110, %113 : vector<1x8x8xf32>
    %115 = math.exp %114 : vector<1x8x8xf32>
    %cst_46 = arith.constant dense<0.000000e+00> : vector<1x8xf32>
    %116 = vector.multi_reduction <add>, %115, %cst_46 [2] : vector<1x8x8xf32> to vector<1x8xf32>
    %117 = vector.shape_cast %116 : vector<1x8xf32> to vector<1x8x1xf32>
    %118 = tpu.reciprocal %117 {approx = true} : vector<1x8x1xf32> -> vector<1x8x1xf32>
    %119 = vector.broadcast %118 : vector<1x8x1xf32> to vector<1x8x8xf32>
    %120 = arith.mulf %115, %119 : vector<1x8x8xf32>
    %121 = arith.truncf %120 : vector<1x8x8xf32> to vector<1x8x8xbf16>
    "tpu.trace_start"() <{level = 10 : i32, message = "bqk,bkd->bqd"}> : () -> ()
    %cst_47 = arith.constant dense<0.000000e+00> : vector<1x8x8xf32>
    %122 = tpu.matmul %121, %109, %cst_47 {dimension_numbers = #tpu.dot_dimension_numbers<[2], [1], [1], [2], [0, 0, 0, 1, 1, 2], [0], [0]>} : vector<1x8x8xbf16>, vector<1x8x8xbf16>, vector<1x8x8xf32> -> vector<1x8x8xf32>
    "tpu.trace_stop"() : () -> ()
    %123 = vector.shape_cast %122 : vector<1x8x8xf32> to vector<8x8xf32>
    %124 = arith.truncf %123 : vector<8x8xf32> to vector<8x8xbf16>
    %c3 = arith.constant 3 : index
    %c0_48 = arith.constant 0 : index
    %c0_49 = arith.constant 0 : index
    %125 = vector.load %arg10[%c3, %c0_48, %c0_49] : memref<4x8x32xbf16, #tpu.memory_space<vmem>>, vector<1x8x32xbf16>
    %126 = vector.shape_cast %125 : vector<1x8x32xbf16> to vector<8x32xbf16>
    %cst_50 = arith.constant dense<0.000000e+00> : vector<8x32xf32>
    %127 = tpu.matmul %124, %126, %cst_50 {dimension_numbers = #tpu.dot_dimension_numbers<[1], [0], [0], [1], [0, 0, 1, 1], [], []>} : vector<8x8xbf16>, vector<8x32xbf16>, vector<8x32xf32> -> vector<8x32xf32>
    %128 = arith.addf %103, %127 : vector<8x32xf32>
    %129 = arith.addf %0, %128 : vector<8x32xf32>
    %c0_51 = arith.constant 0 : index
    %c0_52 = arith.constant 0 : index
    %130 = vector.load %arg12[%c0_51, %c0_52] : memref<1x32xf32, #tpu.memory_space<vmem>>, vector<1x32xf32>
    %c0_53 = arith.constant 0 : index
    %c0_54 = arith.constant 0 : index
    %131 = vector.load %arg13[%c0_53, %c0_54] : memref<1x32xf32, #tpu.memory_space<vmem>>, vector<1x32xf32>
    %cst_55 = arith.constant dense<0.000000e+00> : vector<8xf32>
    %132 = vector.multi_reduction <add>, %129, %cst_55 [1] : vector<8x32xf32> to vector<8xf32>
    %133 = vector.shape_cast %132 : vector<8xf32> to vector<8x1xf32>
    %cst_56 = arith.constant 3.200000e+01 : f32
    %134 = vector.broadcast %cst_56 : f32 to vector<8x1xf32>
    %135 = arith.divf %133, %134 : vector<8x1xf32>
    %136 = vector.broadcast %135 : vector<8x1xf32> to vector<8x32xf32>
    %137 = arith.subf %129, %136 : vector<8x32xf32>
    %138 = arith.mulf %137, %137 : vector<8x32xf32>
    %cst_57 = arith.constant dense<0.000000e+00> : vector<8xf32>
    %139 = vector.multi_reduction <add>, %138, %cst_57 [1] : vector<8x32xf32> to vector<8xf32>
    %140 = vector.shape_cast %139 : vector<8xf32> to vector<8x1xf32>
    %cst_58 = arith.constant 3.200000e+01 : f32
    %141 = vector.broadcast %cst_58 : f32 to vector<8x1xf32>
    %142 = arith.divf %140, %141 : vector<8x1xf32>
    %cst_59 = arith.constant 9.99999974E-6 : f32
    %143 = vector.broadcast %cst_59 : f32 to vector<8x1xf32>
    %144 = arith.addf %142, %143 : vector<8x1xf32>
    %145 = math.rsqrt %144 : vector<8x1xf32>
    %146 = vector.broadcast %145 : vector<8x1xf32> to vector<8x32xf32>
    %147 = arith.mulf %137, %146 : vector<8x32xf32>
    %148 = vector.broadcast %130 : vector<1x32xf32> to vector<8x32xf32>
    %149 = arith.mulf %147, %148 : vector<8x32xf32>
    %150 = vector.broadcast %131 : vector<1x32xf32> to vector<8x32xf32>
    %151 = arith.addf %149, %150 : vector<8x32xf32>
    %152 = arith.truncf %151 : vector<8x32xf32> to vector<8x32xbf16>
    %c0_60 = arith.constant 0 : index
    %c0_61 = arith.constant 0 : index
    %153 = vector.load %arg14[%c0_60, %c0_61] : memref<32x128xbf16, #tpu.memory_space<vmem>>, vector<32x128xbf16>
    %cst_62 = arith.constant dense<0.000000e+00> : vector<8x128xf32>
    %154 = tpu.matmul %152, %153, %cst_62 {dimension_numbers = #tpu.dot_dimension_numbers<[1], [0], [0], [1], [0, 0, 1, 1], [], []>} : vector<8x32xbf16>, vector<32x128xbf16>, vector<8x128xf32> -> vector<8x128xf32>
    %c0_63 = arith.constant 0 : index
    %c0_64 = arith.constant 0 : index
    %155 = vector.load %arg15[%c0_63, %c0_64] : memref<1x128xf32, #tpu.memory_space<vmem>>, vector<1x128xf32>
    %156 = vector.broadcast %155 : vector<1x128xf32> to vector<8x128xf32>
    %157 = arith.addf %154, %156 : vector<8x128xf32>
    %cst_65 = arith.constant 0.000000e+00 : f32
    %158 = vector.broadcast %cst_65 : f32 to vector<8x128xf32>
    %159 = arith.maximumf %157, %158 : vector<8x128xf32>
    %160 = arith.truncf %159 : vector<8x128xf32> to vector<8x128xbf16>
    %c0_66 = arith.constant 0 : index
    %c0_67 = arith.constant 0 : index
    %161 = vector.load %arg16[%c0_66, %c0_67] : memref<128x32xbf16, #tpu.memory_space<vmem>>, vector<128x32xbf16>
    %cst_68 = arith.constant dense<0.000000e+00> : vector<8x32xf32>
    %162 = tpu.matmul %160, %161, %cst_68 {dimension_numbers = #tpu.dot_dimension_numbers<[1], [0], [0], [1], [0, 0, 1, 1], [], []>} : vector<8x128xbf16>, vector<128x32xbf16>, vector<8x32xf32> -> vector<8x32xf32>
    %c0_69 = arith.constant 0 : index
    %c0_70 = arith.constant 0 : index
    %163 = vector.load %arg17[%c0_69, %c0_70] : memref<1x32xf32, #tpu.memory_space<vmem>>, vector<1x32xf32>
    %164 = vector.broadcast %163 : vector<1x32xf32> to vector<8x32xf32>
    %165 = arith.addf %162, %164 : vector<8x32xf32>
    %166 = arith.addf %151, %165 : vector<8x32xf32>
    %c0_71 = arith.constant 0 : index
    %c0_72 = arith.constant 0 : index
    %167 = vector.load %arg18[%c0_71, %c0_72] : memref<1x32xf32, #tpu.memory_space<vmem>>, vector<1x32xf32>
    %c0_73 = arith.constant 0 : index
    %c0_74 = arith.constant 0 : index
    %168 = vector.load %arg19[%c0_73, %c0_74] : memref<1x32xf32, #tpu.memory_space<vmem>>, vector<1x32xf32>
    %cst_75 = arith.constant dense<0.000000e+00> : vector<8xf32>
    %169 = vector.multi_reduction <add>, %166, %cst_75 [1] : vector<8x32xf32> to vector<8xf32>
    %170 = vector.shape_cast %169 : vector<8xf32> to vector<8x1xf32>
    %cst_76 = arith.constant 3.200000e+01 : f32
    %171 = vector.broadcast %cst_76 : f32 to vector<8x1xf32>
    %172 = arith.divf %170, %171 : vector<8x1xf32>
    %173 = vector.broadcast %172 : vector<8x1xf32> to vector<8x32xf32>
    %174 = arith.subf %166, %173 : vector<8x32xf32>
    %175 = arith.mulf %174, %174 : vector<8x32xf32>
    %cst_77 = arith.constant dense<0.000000e+00> : vector<8xf32>
    %176 = vector.multi_reduction <add>, %175, %cst_77 [1] : vector<8x32xf32> to vector<8xf32>
    %177 = vector.shape_cast %176 : vector<8xf32> to vector<8x1xf32>
    %cst_78 = arith.constant 3.200000e+01 : f32
    %178 = vector.broadcast %cst_78 : f32 to vector<8x1xf32>
    %179 = arith.divf %177, %178 : vector<8x1xf32>
    %cst_79 = arith.constant 9.99999974E-6 : f32
    %180 = vector.broadcast %cst_79 : f32 to vector<8x1xf32>
    %181 = arith.addf %179, %180 : vector<8x1xf32>
    %182 = math.rsqrt %181 : vector<8x1xf32>
    %183 = vector.broadcast %182 : vector<8x1xf32> to vector<8x32xf32>
    %184 = arith.mulf %174, %183 : vector<8x32xf32>
    %185 = vector.broadcast %167 : vector<1x32xf32> to vector<8x32xf32>
    %186 = arith.mulf %184, %185 : vector<8x32xf32>
    %187 = vector.broadcast %168 : vector<1x32xf32> to vector<8x32xf32>
    %188 = arith.addf %186, %187 : vector<8x32xf32>
    %c0_80 = arith.constant 0 : index
    %c0_81 = arith.constant 0 : index
    %189 = vector.load %arg20[%c0_80, %c0_81] : memref<8x32xf32, #tpu.memory_space<vmem>>, vector<8x32xf32>
    tpu.vector_store %arg20[%c0_80, %c0_81], %188 {strides = array<i32>} : memref<8x32xf32, #tpu.memory_space<vmem>>, vector<8x32xf32>,
    return
  }
  func.func @transform_0(%arg0: i32) -> (i32, i32) {
    %c0_i32 = arith.constant 0 : i32
    %c0_i32_0 = arith.constant 0 : i32
    return %arg0, %c0_i32 : i32, i32
  }
  func.func @transform_1(%arg0: i32) -> (i32, i32) {
    %c0_i32 = arith.constant 0 : i32
    %c0_i32_0 = arith.constant 0 : i32
    return %arg0, %c0_i32 : i32, i32
  }
  func.func @transform_2(%arg0: i32) -> (i32, i32) {
    %c0_i32 = arith.constant 0 : i32
    %c0_i32_0 = arith.constant 0 : i32
    return %arg0, %c0_i32 : i32, i32
  }
  func.func @transform_3(%arg0: i32) -> (i32, i32) {
    %c0_i32 = arith.constant 0 : i32
    %c0_i32_0 = arith.constant 0 : i32
    %c0_i32_1 = arith.constant 0 : i32
    return %c0_i32, %c0_i32_0 : i32, i32
  }
  func.func @transform_4(%arg0: i32) -> (i32, i32) {
    %c0_i32 = arith.constant 0 : i32
    %c0_i32_0 = arith.constant 0 : i32
    %c0_i32_1 = arith.constant 0 : i32
    return %c0_i32, %c0_i32_0 : i32, i32
  }
  func.func @transform_5(%arg0: i32) -> (i32, i32) {
    %c0_i32 = arith.constant 0 : i32
    %c0_i32_0 = arith.constant 0 : i32
    %c0_i32_1 = arith.constant 0 : i32
    return %c0_i32, %c0_i32_0 : i32, i32
  }
  func.func @transform_6(%arg0: i32) -> (i32, i32) {
    %c0_i32 = arith.constant 0 : i32
    %c0_i32_0 = arith.constant 0 : i32
    %c0_i32_1 = arith.constant 0 : i32
    return %c0_i32, %c0_i32_0 : i32, i32
  }
  func.func @transform_7(%arg0: i32) -> (i32, i32) {
    %c0_i32 = arith.constant 0 : i32
    %c0_i32_0 = arith.constant 0 : i32
    %c0_i32_1 = arith.constant 0 : i32
    return %c0_i32, %c0_i32_0 : i32, i32
  }
  func.func @transform_8(%arg0: i32) -> (i32, i32) {
    %c0_i32 = arith.constant 0 : i32
    %c0_i32_0 = arith.constant 0 : i32
    %c0_i32_1 = arith.constant 0 : i32
    return %c0_i32, %c0_i32_0 : i32, i32
  }
  func.func @transform_9(%arg0: i32) -> (i32, i32, i32) {
    %c0_i32 = arith.constant 0 : i32
    %c0_i32_0 = arith.constant 0 : i32
    %c0_i32_1 = arith.constant 0 : i32
    %c0_i32_2 = arith.constant 0 : i32
    return %c0_i32, %c0_i32_0, %c0_i32_1 : i32, i32, i32
  }
  func.func @transform_10(%arg0: i32) -> (i32, i32) {
    %c0_i32 = arith.constant 0 : i32
    %c0_i32_0 = arith.constant 0 : i32
    %c0_i32_1 = arith.constant 0 : i32
    return %c0_i32, %c0_i32_0 : i32, i32
  }
  func.func @transform_11(%arg0: i32) -> (i32, i32) {
    %c0_i32 = arith.constant 0 : i32
    %c0_i32_0 = arith.constant 0 : i32
    %c0_i32_1 = arith.constant 0 : i32
    return %c0_i32, %c0_i32_0 : i32, i32
  }
  func.func @transform_12(%arg0: i32) -> (i32, i32) {
    %c0_i32 = arith.constant 0 : i32
    %c0_i32_0 = arith.constant 0 : i32
    %c0_i32_1 = arith.constant 0 : i32
    return %c0_i32, %c0_i32_0 : i32, i32
  }
  func.func @transform_13(%arg0: i32) -> (i32, i32) {
    %c0_i32 = arith.constant 0 : i32
    %c0_i32_0 = arith.constant 0 : i32
    %c0_i32_1 = arith.constant 0 : i32
    return %c0_i32, %c0_i32_0 : i32, i32
  }
  func.func @transform_14(%arg0: i32) -> (i32, i32) {
    %c0_i32 = arith.constant 0 : i32
    %c0_i32_0 = arith.constant 0 : i32
    %c0_i32_1 = arith.constant 0 : i32
    return %c0_i32, %c0_i32_0 : i32, i32
  }
  func.func @transform_15(%arg0: i32) -> (i32, i32) {
    %c0_i32 = arith.constant 0 : i32
    %c0_i32_0 = arith.constant 0 : i32
    %c0_i32_1 = arith.constant 0 : i32
    return %c0_i32, %c0_i32_0 : i32, i32
  }
  func.func @transform_16(%arg0: i32) -> (i32, i32) {
    %c0_i32 = arith.constant 0 : i32
    %c0_i32_0 = arith.constant 0 : i32
    %c0_i32_1 = arith.constant 0 : i32
    return %c0_i32, %c0_i32_0 : i32, i32
  }
  func.func @transform_17(%arg0: i32) -> (i32, i32) {
    %c0_i32 = arith.constant 0 : i32
    %c0_i32_0 = arith.constant 0 : i32
    %c0_i32_1 = arith.constant 0 : i32
    return %c0_i32, %c0_i32_0 : i32, i32
  }
  func.func @transform_18(%arg0: i32) -> (i32, i32) {
    %c0_i32 = arith.constant 0 : i32
    %c0_i32_0 = arith.constant 0 : i32
    %c0_i32_1 = arith.constant 0 : i32
    return %c0_i32, %c0_i32_0 : i32, i32
  }
  func.func @transform_19(%arg0: i32) -> (i32, i32) {
    %c0_i32 = arith.constant 0 : i32
    %c0_i32_0 = arith.constant 0 : i32
    return %arg0, %c0_i32 : i32, i32
  }
}

</mosaic_0001>

<llo_original>
// kernel: tpu_custom_call.1
$region0: #{tpu_custom_call.1}
  #allocation0 [shape = 'u32[]', space=smem, size = 0x4, offset = 0x4, fixed_abs, tag = 'smem constant byte address 0x4 - core index']
  #allocation1 [shape = 'u32[144,128]{1,0:T(1,128)}', space=vmem, size = 0x12000, scoped, tag = 'internal scratch']
  %s0 = inlined_call_operand.vmem [shape: f32[16,32], index: 0, kind: input, shape index: {}]
  %s1 = inlined_call_operand.vmem [shape: f32[16,32], index: 1, kind: input, shape index: {}]
  %s2 = inlined_call_operand.vmem [shape: f32[16,32], index: 2, kind: input, shape index: {}]
  %s3 = inlined_call_operand.vmem [shape: bf16[32,32], index: 3, kind: input, shape index: {}]
  %s4 = inlined_call_operand.vmem [shape: bf16[32,32], index: 4, kind: input, shape index: {}]
  %s5 = inlined_call_operand.hbm [shape: bf16[32,32], index: 5, kind: input, shape index: {}]
  %s6 = inlined_call_operand.vmem [shape: f32[1,32], index: 6, kind: input, shape index: {}]
  %s7 = inlined_call_operand.hbm [shape: f32[1,32], index: 7, kind: input, shape index: {}]
  %s8 = inlined_call_operand.hbm [shape: f32[1,32], index: 8, kind: input, shape index: {}]
  %s9 = inlined_call_operand.vmem [shape: bf16[4,8,32], index: 9, kind: input, shape index: {}]
  %s10 = inlined_call_operand.hbm [shape: f32[1,32], index: 10, kind: input, shape index: {}]
  %s11 = inlined_call_operand.hbm [shape: f32[1,32], index: 11, kind: input, shape index: {}]
  %s12 = inlined_call_operand.hbm [shape: f32[1,32], index: 12, kind: input, shape index: {}]
  %s13 = inlined_call_operand.vmem [shape: bf16[32,128], index: 13, kind: input, shape index: {}]
  %s14 = inlined_call_operand.vmem [shape: f32[1,128], index: 14, kind: input, shape index: {}]
  %s15 = inlined_call_operand.vmem [shape: bf16[128,32], index: 15, kind: input, shape index: {}]
  %s16 = inlined_call_operand.vmem [shape: f32[1,32], index: 16, kind: input, shape index: {}]
  %s17 = inlined_call_operand.vmem [shape: f32[1,32], index: 17, kind: input, shape index: {}]
  %s18 = inlined_call_operand.vmem [shape: f32[1,32], index: 18, kind: input, shape index: {}]
  %s19 = inlined_call_operand.hbm [shape: f32[16,32], index: 19, kind: output, shape index: {}]
  %s20 = sld [smem:[#allocation0]]
  $region133: #{tpu_custom_call.1} parent=0
    _
  %s22 = ssub.s32 1, %s20
  %s23 = scalar_select 0, %s22, %s20
  $region1: #{tpu_custom_call.1} parent=0
    #allocation2 [shape = 'u8[8192]{0}', space=vmem, size = 0x2000, scoped, tag = 'input window, operand 5, single buffered']
    #allocation3 [shape = 's32[2]{0}', space=sflag, size = 0x8, scoped, tag = 'scoped memory for tpu_custom_call.1']
    #allocation4 [shape = 's32[2]{0}', space=sflag, size = 0x8, scoped, tag = 'scoped memory for tpu_custom_call.1']
    #allocation5 [shape = 'u8[512]{0}', space=vmem, size = 0x400, scoped, tag = 'input window, operand 7, single buffered']
    #allocation6 [shape = 's32[1]{0}', space=sflag, size = 0x4, scoped, tag = 'scoped memory for tpu_custom_call.1']
    #allocation7 [shape = 'u8[512]{0}', space=vmem, size = 0x400, scoped, tag = 'input window, operand 8, single buffered']
    #allocation8 [shape = 'u8[512]{0}', space=vmem, size = 0x400, scoped, tag = 'input window, operand 10, single buffered']
    #allocation9 [shape = 's32[1]{0}', space=sflag, size = 0x4, scoped, tag = 'scoped memory for tpu_custom_call.1']
    #allocation10 [shape = 'u8[512]{0}', space=vmem, size = 0x400, scoped, tag = 'input window, operand 11, single buffered']
    #allocation11 [shape = 'u8[512]{0}', space=vmem, size = 0x400, scoped, tag = 'input window, operand 12, single buffered']
    #allocation12 [shape = 's32[1]{0}', space=sflag, size = 0x4, scoped, tag = 'scoped memory for tpu_custom_call.1']
    #allocation13 [shape = 'u8[8192]{0}', space=vmem, size = 0x2000, scoped, tag = 'output window, operand 0']
    %24 = vsyncpa [#allocation3], 0
    %25 = vsyncpa [#allocation6], 0
    %26 = vsyncpa [#allocation9], 0
    %27 = vsyncpa [#allocation12], 0
    %28 = vsyncpa [#allocation4], 0
    %s29 = scalar_lea.sflag [#allocation4], 1
    %30 = vsyncpa %s29, 0
    loop: start=0, step=1, limit=4
    $region2: #{tpu_custom_call.1} parent=1 // loop_pre_header
      _
    $region3: #{tpu_custom_call.1} parent=1 // loop_header
      %s32 = sphi 0, %s36
      %p33 = scmp.ge.s32.totalorder %s32, 4
      %s42 = sphi 0, %s44
      %s45 = sphi 0, %s42
      %s46 = sphi 0, %s45
      %s62 = sphi 0, %s46
      %s68 = sphi 0, %s70
      %s71 = sphi 0, %s68
      %s72 = sphi 0, %s71
      %s88 = sphi 0, %s72
      %s94 = sphi 0, %s96
      %s97 = sphi 0, %s94
      %s98 = sphi 0, %s97
      %s114 = sphi 0, %s98
      %s118 = sphi 0, %s118
      %s120 = sphi 0, %s118
      %s121 = sphi 0, %s120
      %s135 = sphi 0, %s121
      %s139 = sphi 0, %s139
      %s141 = sphi 0, %s139
      %s142 = sphi 0, %s141
      %s156 = sphi 0, %s142
      %s160 = sphi 0, %s160
      %s162 = sphi 0, %s160
      %s163 = sphi 0, %s162
      %s177 = sphi 0, %s163
      %s181 = sphi 0, %s181
      %s183 = sphi 0, %s181
      %s184 = sphi 0, %s183
      %s198 = sphi 0, %s184
      %s202 = sphi 0, %s202
      %s204 = sphi 0, %s202
      %s205 = sphi 0, %s204
      %s219 = sphi 0, %s205
      %s223 = sphi 0, %s223
      %s225 = sphi 0, %s223
      %s226 = sphi 0, %s225
      %s240 = sphi 0, %s226
      %s244 = sphi 0, %s244
      %s246 = sphi 0, %s244
      %s247 = sphi 0, %s246
      %s261 = sphi 0, %s247
      %s265 = sphi 0, %s265
      %s267 = sphi 0, %s265
      %s268 = sphi 0, %s267
      %s282 = sphi 0, %s268
      %s286 = sphi 0, %s286
      %s288 = sphi 0, %s286
      %s289 = sphi 0, %s288
      %s303 = sphi 0, %s289
      %s307 = sphi 0, %s307
      %s309 = sphi 0, %s307
      %s310 = sphi 0, %s309
      %s324 = sphi 0, %s310
      %s328 = sphi 0, %s328
      %s330 = sphi 0, %s328
      %s331 = sphi 0, %s330
      %s345 = sphi 0, %s331
      %s349 = sphi 0, %s349
      %s351 = sphi 0, %s349
      %s352 = sphi 0, %s351
      %s366 = sphi 0, %s352
      %s370 = sphi 0, %s370
      %s372 = sphi 0, %s370
      %s373 = sphi 0, %s372
      %s387 = sphi 0, %s373
      %s391 = sphi 0, %s391
      %s393 = sphi 0, %s391
      %s394 = sphi 0, %s393
      %s408 = sphi 0, %s394
      %s412 = sphi 0, %s412
      %s414 = sphi 0, %s412
      %s415 = sphi 0, %s414
      %s429 = sphi 0, %s415
      %s433 = sphi 0, %s433
      %s435 = sphi 0, %s433
      %s436 = sphi 0, %s435
      %s450 = sphi 0, %s436
      %s456 = sphi 0, %s458
      %s459 = sphi 0, %s456
      %s460 = sphi 0, %s459
      %s476 = sphi 0, %s460
    $region4: #{tpu_custom_call.1} parent=1 // loop_header_branch
      %35 = sbr.rel (%p33) target = $region8
    $region5: #{tpu_custom_call.1} parent=1 // loop_body
      %s37 = ssub.s32 %s32, 1
      %s38 = ssub.s32 %s32, 2
      %s39 = sadd.s32 %s32, 1
      %s40 = ssub.s32 %s32, %s39
      %p41 = scmp.eq.s32.totalorder %s40, 0
      %s43 = sadd.s32 %s42, 1
      %s44 = scalar_select %p41, %s42, %s43
      %p47 = pneg %p41
      %p48 = scmp.eq.s32.totalorder %s32, 1
      %p49 = por %p47, %p48
      %p50 = scmp.ne.s32.totalorder %s42, %s45
      %p51 = scmp.eq.s32.totalorder %s32, 0
      %p52 = por %p50, %p51
      %p53 = scmp.ne.s32.totalorder %s42, %s45
      %p54 = scmp.eq.s32.totalorder %s37, 1
      %p55 = por %p53, %p54
      %p56 = scmp.ne.s32.totalorder %s45, %s46
      %p57 = scmp.eq.s32.totalorder %s37, 0
      %p58 = por %p56, %p57
      %p59 = scmp.ne.s32.totalorder %s45, %s46
      %p60 = scmp.eq.s32.totalorder %s38, 1
      %p61 = por %p59, %p60
      %p63 = scmp.ne.s32.totalorder %s46, %s62
      %p64 = scmp.eq.s32.totalorder %s38, 0
      %p65 = por %p63, %p64
      %s66 = ssub.s32 %s32, %s39
      %p67 = scmp.eq.s32.totalorder %s66, 0
      %s69 = sadd.s32 %s68, 1
      %s70 = scalar_select %p67, %s68, %s69
      %p73 = pneg %p67
      %p74 = scmp.eq.s32.totalorder %s32, 1
      %p75 = por %p73, %p74
      %p76 = scmp.ne.s32.totalorder %s68, %s71
      %p77 = scmp.eq.s32.totalorder %s32, 0
      %p78 = por %p76, %p77
      %p79 = scmp.ne.s32.totalorder %s68, %s71
      %p80 = scmp.eq.s32.totalorder %s37, 1
      %p81 = por %p79, %p80
      %p82 = scmp.ne.s32.totalorder %s71, %s72
      %p83 = scmp.eq.s32.totalorder %s37, 0
      %p84 = por %p82, %p83
      %p85 = scmp.ne.s32.totalorder %s71, %s72
      %p86 = scmp.eq.s32.totalorder %s38, 1
      %p87 = por %p85, %p86
      %p89 = scmp.ne.s32.totalorder %s72, %s88
      %p90 = scmp.eq.s32.totalorder %s38, 0
      %p91 = por %p89, %p90
      %s92 = ssub.s32 %s32, %s39
      %p93 = scmp.eq.s32.totalorder %s92, 0
      %s95 = sadd.s32 %s94, 1
      %s96 = scalar_select %p93, %s94, %s95
      %p99 = pneg %p93
      %p100 = scmp.eq.s32.totalorder %s32, 1
      %p101 = por %p99, %p100
      %p102 = scmp.ne.s32.totalorder %s94, %s97
      %p103 = scmp.eq.s32.totalorder %s32, 0
      %p104 = por %p102, %p103
      %p105 = scmp.ne.s32.totalorder %s94, %s97
      %p106 = scmp.eq.s32.totalorder %s37, 1
      %p107 = por %p105, %p106
      %p108 = scmp.ne.s32.totalorder %s97, %s98
      %p109 = scmp.eq.s32.totalorder %s37, 0
      %p110 = por %p108, %p109
      %p111 = scmp.ne.s32.totalorder %s97, %s98
      %p112 = scmp.eq.s32.totalorder %s38, 1
      %p113 = por %p111, %p112
      %p115 = scmp.ne.s32.totalorder %s98, %s114
      %p116 = scmp.eq.s32.totalorder %s38, 0
      %p117 = por %p115, %p116
      %s119 = sadd.s32 %s118, 1
      %p122 = scmp.eq.s32.totalorder %s32, 1
      %p123 = scmp.ne.s32.totalorder %s118, %s120
      %p124 = scmp.eq.s32.totalorder %s32, 0
      %p125 = por %p123, %p124
      %p126 = scmp.ne.s32.totalorder %s118, %s120
      %p127 = scmp.eq.s32.totalorder %s37, 1
      %p128 = por %p126, %p127
      %p129 = scmp.ne.s32.totalorder %s120, %s121
      %p130 = scmp.eq.s32.totalorder %s37, 0
      %p131 = por %p129, %p130
      %p132 = scmp.ne.s32.totalorder %s120, %s121
      %p133 = scmp.eq.s32.totalorder %s38, 1
      %p134 = por %p132, %p133
      %p136 = scmp.ne.s32.totalorder %s121, %s135
      %p137 = scmp.eq.s32.totalorder %s38, 0
      %p138 = por %p136, %p137
      %s140 = sadd.s32 %s139, 1
      %p143 = scmp.eq.s32.totalorder %s32, 1
      %p144 = scmp.ne.s32.totalorder %s139, %s141
      %p145 = scmp.eq.s32.totalorder %s32, 0
      %p146 = por %p144, %p145
      %p147 = scmp.ne.s32.totalorder %s139, %s141
      %p148 = scmp.eq.s32.totalorder %s37, 1
      %p149 = por %p147, %p148
      %p150 = scmp.ne.s32.totalorder %s141, %s142
      %p151 = scmp.eq.s32.totalorder %s37, 0
      %p152 = por %p150, %p151
      %p153 = scmp.ne.s32.totalorder %s141, %s142
      %p154 = scmp.eq.s32.totalorder %s38, 1
      %p155 = por %p153, %p154
      %p157 = scmp.ne.s32.totalorder %s142, %s156
      %p158 = scmp.eq.s32.totalorder %s38, 0
      %p159 = por %p157, %p158
      %s161 = sadd.s32 %s160, 1
      %p164 = scmp.eq.s32.totalorder %s32, 1
      %p165 = scmp.ne.s32.totalorder %s160, %s162
      %p166 = scmp.eq.s32.totalorder %s32, 0
      %p167 = por %p165, %p166
      %p168 = scmp.ne.s32.totalorder %s160, %s162
      %p169 = scmp.eq.s32.totalorder %s37, 1
      %p170 = por %p168, %p169
      %p171 = scmp.ne.s32.totalorder %s162, %s163
      %p172 = scmp.eq.s32.totalorder %s37, 0
      %p173 = por %p171, %p172
      %p174 = scmp.ne.s32.totalorder %s162, %s163
      %p175 = scmp.eq.s32.totalorder %s38, 1
      %p176 = por %p174, %p175
      %p178 = scmp.ne.s32.totalorder %s163, %s177
      %p179 = scmp.eq.s32.totalorder %s38, 0
      %p180 = por %p178, %p179
      %s182 = sadd.s32 %s181, 1
      %p185 = scmp.eq.s32.totalorder %s32, 1
      %p186 = scmp.ne.s32.totalorder %s181, %s183
      %p187 = scmp.eq.s32.totalorder %s32, 0
      %p188 = por %p186, %p187
      %p189 = scmp.ne.s32.totalorder %s181, %s183
      %p190 = scmp.eq.s32.totalorder %s37, 1
      %p191 = por %p189, %p190
      %p192 = scmp.ne.s32.totalorder %s183, %s184
      %p193 = scmp.eq.s32.totalorder %s37, 0
      %p194 = por %p192, %p193
      %p195 = scmp.ne.s32.totalorder %s183, %s184
      %p196 = scmp.eq.s32.totalorder %s38, 1
      %p197 = por %p195, %p196
      %p199 = scmp.ne.s32.totalorder %s184, %s198
      %p200 = scmp.eq.s32.totalorder %s38, 0
      %p201 = por %p199, %p200
      %s203 = sadd.s32 %s202, 1
      %p206 = scmp.eq.s32.totalorder %s32, 1
      %p207 = scmp.ne.s32.totalorder %s202, %s204
      %p208 = scmp.eq.s32.totalorder %s32, 0
      %p209 = por %p207, %p208
      %p210 = scmp.ne.s32.totalorder %s202, %s204
      %p211 = scmp.eq.s32.totalorder %s37, 1
      %p212 = por %p210, %p211
      %p213 = scmp.ne.s32.totalorder %s204, %s205
      %p214 = scmp.eq.s32.totalorder %s37, 0
      %p215 = por %p213, %p214
      %p216 = scmp.ne.s32.totalorder %s204, %s205
      %p217 = scmp.eq.s32.totalorder %s38, 1
      %p218 = por %p216, %p217
      %p220 = scmp.ne.s32.totalorder %s205, %s219
      %p221 = scmp.eq.s32.totalorder %s38, 0
      %p222 = por %p220, %p221
      %s224 = sadd.s32 %s223, 1
      %p227 = scmp.eq.s32.totalorder %s32, 1
      %p228 = scmp.ne.s32.totalorder %s223, %s225
      %p229 = scmp.eq.s32.totalorder %s32, 0
      %p230 = por %p228, %p229
      %p231 = scmp.ne.s32.totalorder %s223, %s225
      %p232 = scmp.eq.s32.totalorder %s37, 1
      %p233 = por %p231, %p232
      %p234 = scmp.ne.s32.totalorder %s225, %s226
      %p235 = scmp.eq.s32.totalorder %s37, 0
      %p236 = por %p234, %p235
      %p237 = scmp.ne.s32.totalorder %s225, %s226
      %p238 = scmp.eq.s32.totalorder %s38, 1
      %p239 = por %p237, %p238
      %p241 = scmp.ne.s32.totalorder %s226, %s240
      %p242 = scmp.eq.s32.totalorder %s38, 0
      %p243 = por %p241, %p242
      %s245 = sadd.s32 %s244, 1
      %p248 = scmp.eq.s32.totalorder %s32, 1
      %p249 = scmp.ne.s32.totalorder %s244, %s246
      %p250 = scmp.eq.s32.totalorder %s32, 0
      %p251 = por %p249, %p250
      %p252 = scmp.ne.s32.totalorder %s244, %s246
      %p253 = scmp.eq.s32.totalorder %s37, 1
      %p254 = por %p252, %p253
      %p255 = scmp.ne.s32.totalorder %s246, %s247
      %p256 = scmp.eq.s32.totalorder %s37, 0
      %p257 = por %p255, %p256
      %p258 = scmp.ne.s32.totalorder %s246, %s247
      %p259 = scmp.eq.s32.totalorder %s38, 1
      %p260 = por %p258, %p259
      %p262 = scmp.ne.s32.totalorder %s247, %s261
      %p263 = scmp.eq.s32.totalorder %s38, 0
      %p264 = por %p262, %p263
      %s266 = sadd.s32 %s265, 1
      %p269 = scmp.eq.s32.totalorder %s32, 1
      %p270 = scmp.ne.s32.totalorder %s265, %s267
      %p271 = scmp.eq.s32.totalorder %s32, 0
      %p272 = por %p270, %p271
      %p273 = scmp.ne.s32.totalorder %s265, %s267
      %p274 = scmp.eq.s32.totalorder %s37, 1
      %p275 = por %p273, %p274
      %p276 = scmp.ne.s32.totalorder %s267, %s268
      %p277 = scmp.eq.s32.totalorder %s37, 0
      %p278 = por %p276, %p277
      %p279 = scmp.ne.s32.totalorder %s267, %s268
      %p280 = scmp.eq.s32.totalorder %s38, 1
      %p281 = por %p279, %p280
      %p283 = scmp.ne.s32.totalorder %s268, %s282
      %p284 = scmp.eq.s32.totalorder %s38, 0
      %p285 = por %p283, %p284
      %s287 = sadd.s32 %s286, 1
      %p290 = scmp.eq.s32.totalorder %s32, 1
      %p291 = scmp.ne.s32.totalorder %s286, %s288
      %p292 = scmp.eq.s32.totalorder %s32, 0
      %p293 = por %p291, %p292
      %p294 = scmp.ne.s32.totalorder %s286, %s288
      %p295 = scmp.eq.s32.totalorder %s37, 1
      %p296 = por %p294, %p295
      %p297 = scmp.ne.s32.totalorder %s288, %s289
      %p298 = scmp.eq.s32.totalorder %s37, 0
      %p299 = por %p297, %p298
      %p300 = scmp.ne.s32.totalorder %s288, %s289
      %p301 = scmp.eq.s32.totalorder %s38, 1
      %p302 = por %p300, %p301
      %p304 = scmp.ne.s32.totalorder %s289, %s303
      %p305 = scmp.eq.s32.totalorder %s38, 0
      %p306 = por %p304, %p305
      %s308 = sadd.s32 %s307, 1
      %p311 = scmp.eq.s32.totalorder %s32, 1
      %p312 = scmp.ne.s32.totalorder %s307, %s309
      %p313 = scmp.eq.s32.totalorder %s32, 0
      %p314 = por %p312, %p313
      %p315 = scmp.ne.s32.totalorder %s307, %s309
      %p316 = scmp.eq.s32.totalorder %s37, 1
      %p317 = por %p315, %p316
      %p318 = scmp.ne.s32.totalorder %s309, %s310
      %p319 = scmp.eq.s32.totalorder %s37, 0
      %p320 = por %p318, %p319
      %p321 = scmp.ne.s32.totalorder %s309, %s310
      %p322 = scmp.eq.s32.totalorder %s38, 1
      %p323 = por %p321, %p322
      %p325 = scmp.ne.s32.totalorder %s310, %s324
      %p326 = scmp.eq.s32.totalorder %s38, 0
      %p327 = por %p325, %p326
      %s329 = sadd.s32 %s328, 1
      %p332 = scmp.eq.s32.totalorder %s32, 1
      %p333 = scmp.ne.s32.totalorder %s328, %s330
      %p334 = scmp.eq.s32.totalorder %s32, 0
      %p335 = por %p333, %p334
      %p336 = scmp.ne.s32.totalorder %s328, %s330
      %p337 = scmp.eq.s32.totalorder %s37, 1
      %p338 = por %p336, %p337
      %p339 = scmp.ne.s32.totalorder %s330, %s331
      %p340 = scmp.eq.s32.totalorder %s37, 0
      %p341 = por %p339, %p340
      %p342 = scmp.ne.s32.totalorder %s330, %s331
      %p343 = scmp.eq.s32.totalorder %s38, 1
      %p344 = por %p342, %p343
      %p346 = scmp.ne.s32.totalorder %s331, %s345
      %p347 = scmp.eq.s32.totalorder %s38, 0
      %p348 = por %p346, %p347
      %s350 = sadd.s32 %s349, 1
      %p353 = scmp.eq.s32.totalorder %s32, 1
      %p354 = scmp.ne.s32.totalorder %s349, %s351
      %p355 = scmp.eq.s32.totalorder %s32, 0
      %p356 = por %p354, %p355
      %p357 = scmp.ne.s32.totalorder %s349, %s351
      %p358 = scmp.eq.s32.totalorder %s37, 1
      %p359 = por %p357, %p358
      %p360 = scmp.ne.s32.totalorder %s351, %s352
      %p361 = scmp.eq.s32.totalorder %s37, 0
      %p362 = por %p360, %p361
      %p363 = scmp.ne.s32.totalorder %s351, %s352
      %p364 = scmp.eq.s32.totalorder %s38, 1
      %p365 = por %p363, %p364
      %p367 = scmp.ne.s32.totalorder %s352, %s366
      %p368 = scmp.eq.s32.totalorder %s38, 0
      %p369 = por %p367, %p368
      %s371 = sadd.s32 %s370, 1
      %p374 = scmp.eq.s32.totalorder %s32, 1
      %p375 = scmp.ne.s32.totalorder %s370, %s372
      %p376 = scmp.eq.s32.totalorder %s32, 0
      %p377 = por %p375, %p376
      %p378 = scmp.ne.s32.totalorder %s370, %s372
      %p379 = scmp.eq.s32.totalorder %s37, 1
      %p380 = por %p378, %p379
      %p381 = scmp.ne.s32.totalorder %s372, %s373
      %p382 = scmp.eq.s32.totalorder %s37, 0
      %p383 = por %p381, %p382
      %p384 = scmp.ne.s32.totalorder %s372, %s373
      %p385 = scmp.eq.s32.totalorder %s38, 1
      %p386 = por %p384, %p385
      %p388 = scmp.ne.s32.totalorder %s373, %s387
      %p389 = scmp.eq.s32.totalorder %s38, 0
      %p390 = por %p388, %p389
      %s392 = sadd.s32 %s391, 1
      %p395 = scmp.eq.s32.totalorder %s32, 1
      %p396 = scmp.ne.s32.totalorder %s391, %s393
      %p397 = scmp.eq.s32.totalorder %s32, 0
      %p398 = por %p396, %p397
      %p399 = scmp.ne.s32.totalorder %s391, %s393
      %p400 = scmp.eq.s32.totalorder %s37, 1
      %p401 = por %p399, %p400
      %p402 = scmp.ne.s32.totalorder %s393, %s394
      %p403 = scmp.eq.s32.totalorder %s37, 0
      %p404 = por %p402, %p403
      %p405 = scmp.ne.s32.totalorder %s393, %s394
      %p406 = scmp.eq.s32.totalorder %s38, 1
      %p407 = por %p405, %p406
      %p409 = scmp.ne.s32.totalorder %s394, %s408
      %p410 = scmp.eq.s32.totalorder %s38, 0
      %p411 = por %p409, %p410
      %s413 = sadd.s32 %s412, 1
      %p416 = scmp.eq.s32.totalorder %s32, 1
      %p417 = scmp.ne.s32.totalorder %s412, %s414
      %p418 = scmp.eq.s32.totalorder %s32, 0
      %p419 = por %p417, %p418
      %p420 = scmp.ne.s32.totalorder %s412, %s414
      %p421 = scmp.eq.s32.totalorder %s37, 1
      %p422 = por %p420, %p421
      %p423 = scmp.ne.s32.totalorder %s414, %s415
      %p424 = scmp.eq.s32.totalorder %s37, 0
      %p425 = por %p423, %p424
      %p426 = scmp.ne.s32.totalorder %s414, %s415
      %p427 = scmp.eq.s32.totalorder %s38, 1
      %p428 = por %p426, %p427
      %p430 = scmp.ne.s32.totalorder %s415, %s429
      %p431 = scmp.eq.s32.totalorder %s38, 0
      %p432 = por %p430, %p431
      %s434 = sadd.s32 %s433, 1
      %p437 = scmp.eq.s32.totalorder %s32, 1
      %p438 = scmp.ne.s32.totalorder %s433, %s435
      %p439 = scmp.eq.s32.totalorder %s32, 0
      %p440 = por %p438, %p439
      %p441 = scmp.ne.s32.totalorder %s433, %s435
      %p442 = scmp.eq.s32.totalorder %s37, 1
      %p443 = por %p441, %p442
      %p444 = scmp.ne.s32.totalorder %s435, %s436
      %p445 = scmp.eq.s32.totalorder %s37, 0
      %p446 = por %p444, %p445
      %p447 = scmp.ne.s32.totalorder %s435, %s436
      %p448 = scmp.eq.s32.totalorder %s38, 1
      %p449 = por %p447, %p448
      %p451 = scmp.ne.s32.totalorder %s436, %s450
      %p452 = scmp.eq.s32.totalorder %s38, 0
      %p453 = por %p451, %p452
      %s454 = ssub.s32 %s32, %s39
      %p455 = scmp.eq.s32.totalorder %s454, 0
      %s457 = sadd.s32 %s456, 1
      %s458 = scalar_select %p455, %s456, %s457
      %p461 = pneg %p455
      %p462 = scmp.eq.s32.totalorder %s32, 1
      %p463 = por %p461, %p462
      %p464 = scmp.ne.s32.totalorder %s456, %s459
      %p465 = scmp.eq.s32.totalorder %s32, 0
      %p466 = por %p464, %p465
      %p467 = scmp.ne.s32.totalorder %s456, %s459
      %p468 = scmp.eq.s32.totalorder %s37, 1
      %p469 = por %p467, %p468
      %p470 = scmp.ne.s32.totalorder %s459, %s460
      %p471 = scmp.eq.s32.totalorder %s37, 0
      %p472 = por %p470, %p471
      %p473 = scmp.ne.s32.totalorder %s459, %s460
      %p474 = scmp.eq.s32.totalorder %s38, 1
      %p475 = por %p473, %p474
      %p477 = scmp.ne.s32.totalorder %s460, %s476
      %p478 = scmp.eq.s32.totalorder %s38, 0
      %p479 = por %p477, %p478
      %p480 = scmp.le.s32.totalorder 1, %s32
      %p481 = scmp.lt.s32.totalorder %s32, 3
      %p482 = pnand %p480, %p481
      %p483 = pneg %p482
      // Predicated region
      $region9: #{tpu_custom_call.1} parent=5 // pred_check
        _
      $region10: #{tpu_custom_call.1} parent=5 // pred_check_branch
        %485 = sbr.rel (%p482) target = $region12
      $region11: #{tpu_custom_call.1} parent=5 // pred_region
        %s486 = ssub.s32 %s32, 1
        // Predicated region
        $region13: #{tpu_custom_call.1} parent=11 // pred_check
          %p487 = pneg %p131
        $region14: #{tpu_custom_call.1} parent=11 // pred_check_branch
          %489 = sbr.rel (%p487) target = $region16
        $region15: #{tpu_custom_call.1} parent=11 // pred_region
          _
        $region16: #{tpu_custom_call.1} parent=11 // pred_fallthru
          _
        // Predicated region
        $region17: #{tpu_custom_call.1} parent=11 // pred_check
          %p490 = pneg %p152
        $region18: #{tpu_custom_call.1} parent=11 // pred_check_branch
          %492 = sbr.rel (%p490) target = $region20
        $region19: #{tpu_custom_call.1} parent=11 // pred_region
          _
        $region20: #{tpu_custom_call.1} parent=11 // pred_fallthru
          _
        // Predicated region
        $region21: #{tpu_custom_call.1} parent=11 // pred_check
          %p493 = pneg %p173
        $region22: #{tpu_custom_call.1} parent=11 // pred_check_branch
          %495 = sbr.rel (%p493) target = $region24
        $region23: #{tpu_custom_call.1} parent=11 // pred_region
          %s497 = ssub.s32 256, 256
          %498 = vsyncadd [#allocation3], %s497
          %s499 = sshll.u32 [#allocation2], 4
          %s500 = int_to_ptr.vmem [resolvable:$true] %s499
          %505 = dma.hbm_to_vmem [thread:$0]  %s5, 256, %s500, [#allocation3], 64, 64, 4
        $region24: #{tpu_custom_call.1} parent=11 // pred_fallthru
          _
        // Predicated region
        $region25: #{tpu_custom_call.1} parent=11 // pred_check
          %p506 = pneg %p194
        $region26: #{tpu_custom_call.1} parent=11 // pred_check_branch
          %508 = sbr.rel (%p506) target = $region28
        $region27: #{tpu_custom_call.1} parent=11 // pred_region
          _
        $region28: #{tpu_custom_call.1} parent=11 // pred_fallthru
          _
        // Predicated region
        $region29: #{tpu_custom_call.1} parent=11 // pred_check
          %p509 = pneg %p215
        $region30: #{tpu_custom_call.1} parent=11 // pred_check_branch
          %511 = sbr.rel (%p509) target = $region32
        $region31: #{tpu_custom_call.1} parent=11 // pred_region
          %s513 = ssub.s32 16, 16
          %514 = vsyncadd [#allocation6], %s513
          %s516 = sshll.u32 [#allocation5], 4
          %s517 = int_to_ptr.vmem [resolvable:$true] %s516
          %519 = dma.hbm_to_vmem [thread:$0]  %s7, 16, %s517, [#allocation6]
        $region32: #{tpu_custom_call.1} parent=11 // pred_fallthru
          _
        // Predicated region
        $region33: #{tpu_custom_call.1} parent=11 // pred_check
          %p520 = pneg %p236
        $region34: #{tpu_custom_call.1} parent=11 // pred_check_branch
          %522 = sbr.rel (%p520) target = $region36
        $region35: #{tpu_custom_call.1} parent=11 // pred_region
          %s524 = ssub.s32 16, 16
          %525 = vsyncadd [#allocation6], %s524
          %s527 = sshll.u32 [#allocation7], 4
          %s528 = int_to_ptr.vmem [resolvable:$true] %s527
          %530 = dma.hbm_to_vmem [thread:$0]  %s8, 16, %s528, [#allocation6]
        $region36: #{tpu_custom_call.1} parent=11 // pred_fallthru
          _
        // Predicated region
        $region37: #{tpu_custom_call.1} parent=11 // pred_check
          %p531 = pneg %p257
        $region38: #{tpu_custom_call.1} parent=11 // pred_check_branch
          %533 = sbr.rel (%p531) target = $region40
        $region39: #{tpu_custom_call.1} parent=11 // pred_region
          _
        $region40: #{tpu_custom_call.1} parent=11 // pred_fallthru
          _
        // Predicated region
        $region41: #{tpu_custom_call.1} parent=11 // pred_check
          %p534 = pneg %p278
        $region42: #{tpu_custom_call.1} parent=11 // pred_check_branch
          %536 = sbr.rel (%p534) target = $region44
        $region43: #{tpu_custom_call.1} parent=11 // pred_region
          %s538 = ssub.s32 16, 16
          %539 = vsyncadd [#allocation9], %s538
          %s541 = sshll.u32 [#allocation8], 4
          %s542 = int_to_ptr.vmem [resolvable:$true] %s541
          %544 = dma.hbm_to_vmem [thread:$0]  %s10, 16, %s542, [#allocation9]
        $region44: #{tpu_custom_call.1} parent=11 // pred_fallthru
          _
        // Predicated region
        $region45: #{tpu_custom_call.1} parent=11 // pred_check
          %p545 = pneg %p299
        $region46: #{tpu_custom_call.1} parent=11 // pred_check_branch
          %547 = sbr.rel (%p545) target = $region48
        $region47: #{tpu_custom_call.1} parent=11 // pred_region
          %s549 = ssub.s32 16, 16
          %550 = vsyncadd [#allocation9], %s549
          %s552 = sshll.u32 [#allocation10], 4
          %s553 = int_to_ptr.vmem [resolvable:$true] %s552
          %555 = dma.hbm_to_vmem [thread:$0]  %s11, 16, %s553, [#allocation9]
        $region48: #{tpu_custom_call.1} parent=11 // pred_fallthru
          _
        // Predicated region
        $region49: #{tpu_custom_call.1} parent=11 // pred_check
          %p556 = pneg %p320
        $region50: #{tpu_custom_call.1} parent=11 // pred_check_branch
          %558 = sbr.rel (%p556) target = $region52
        $region51: #{tpu_custom_call.1} parent=11 // pred_region
          %s560 = ssub.s32 16, 16
          %561 = vsyncadd [#allocation12], %s560
          %s563 = sshll.u32 [#allocation11], 4
          %s564 = int_to_ptr.vmem [resolvable:$true] %s563
          %566 = dma.hbm_to_vmem [thread:$0]  %s12, 16, %s564, [#allocation12]
        $region52: #{tpu_custom_call.1} parent=11 // pred_fallthru
          _
        // Predicated region
        $region53: #{tpu_custom_call.1} parent=11 // pred_check
          %p567 = pneg %p341
        $region54: #{tpu_custom_call.1} parent=11 // pred_check_branch
          %569 = sbr.rel (%p567) target = $region56
        $region55: #{tpu_custom_call.1} parent=11 // pred_region
          _
        $region56: #{tpu_custom_call.1} parent=11 // pred_fallthru
          _
        // Predicated region
        $region57: #{tpu_custom_call.1} parent=11 // pred_check
          %p570 = pneg %p362
        $region58: #{tpu_custom_call.1} parent=11 // pred_check_branch
          %572 = sbr.rel (%p570) target = $region60
        $region59: #{tpu_custom_call.1} parent=11 // pred_region
          _
        $region60: #{tpu_custom_call.1} parent=11 // pred_fallthru
          _
        // Predicated region
        $region61: #{tpu_custom_call.1} parent=11 // pred_check
          %p573 = pneg %p383
        $region62: #{tpu_custom_call.1} parent=11 // pred_check_branch
          %575 = sbr.rel (%p573) target = $region64
        $region63: #{tpu_custom_call.1} parent=11 // pred_region
          _
        $region64: #{tpu_custom_call.1} parent=11 // pred_fallthru
          _
        // Predicated region
        $region65: #{tpu_custom_call.1} parent=11 // pred_check
          %p576 = pneg %p404
        $region66: #{tpu_custom_call.1} parent=11 // pred_check_branch
          %578 = sbr.rel (%p576) target = $region68
        $region67: #{tpu_custom_call.1} parent=11 // pred_region
          _
        $region68: #{tpu_custom_call.1} parent=11 // pred_fallthru
          _
        // Predicated region
        $region69: #{tpu_custom_call.1} parent=11 // pred_check
          %p579 = pneg %p425
        $region70: #{tpu_custom_call.1} parent=11 // pred_check_branch
          %581 = sbr.rel (%p579) target = $region72
        $region71: #{tpu_custom_call.1} parent=11 // pred_region
          _
        $region72: #{tpu_custom_call.1} parent=11 // pred_fallthru
          _
        // Predicated region
        $region73: #{tpu_custom_call.1} parent=11 // pred_check
          %p582 = pneg %p446
        $region74: #{tpu_custom_call.1} parent=11 // pred_check_branch
          %584 = sbr.rel (%p582) target = $region76
        $region75: #{tpu_custom_call.1} parent=11 // pred_region
          _
        $region76: #{tpu_custom_call.1} parent=11 // pred_fallthru
          _
      $region12: #{tpu_custom_call.1} parent=5 // pred_fallthru
        _
      %p585 = scmp.lt.s32.totalorder %s32, 2
      // Predicated region
      $region77: #{tpu_custom_call.1} parent=5 // pred_check
        %p586 = pneg %p585
      $region78: #{tpu_custom_call.1} parent=5 // pred_check_branch
        %588 = sbr.rel (%p586) target = $region80
      $region79: #{tpu_custom_call.1} parent=5 // pred_region
        // Predicated region
        $region81: #{tpu_custom_call.1} parent=79 // pred_check
          %p589 = pneg %p52
        $region82: #{tpu_custom_call.1} parent=79 // pred_check_branch
          %591 = sbr.rel (%p589) target = $region84
        $region83: #{tpu_custom_call.1} parent=79 // pred_region
          %p592 = scmp.lt.s32.totalorder %s32, 1
          %s593 = scalar_select %p592, %s32, 1
          %s594 = smul.addr %s593, 8
          %s595 = scalar_lea.vmem %s0, %s594
        $region84: #{tpu_custom_call.1} parent=79 // pred_fallthru
          _
        // Predicated region
        $region85: #{tpu_custom_call.1} parent=79 // pred_check
          %p596 = pneg %p78
        $region86: #{tpu_custom_call.1} parent=79 // pred_check_branch
          %598 = sbr.rel (%p596) target = $region88
        $region87: #{tpu_custom_call.1} parent=79 // pred_region
          %p599 = scmp.lt.s32.totalorder %s32, 1
          %s600 = scalar_select %p599, %s32, 1
          %s601 = smul.addr %s600, 8
          %s602 = scalar_lea.vmem %s1, %s601
        $region88: #{tpu_custom_call.1} parent=79 // pred_fallthru
          _
        // Predicated region
        $region89: #{tpu_custom_call.1} parent=79 // pred_check
          %p603 = pneg %p104
        $region90: #{tpu_custom_call.1} parent=79 // pred_check_branch
          %605 = sbr.rel (%p603) target = $region92
        $region91: #{tpu_custom_call.1} parent=79 // pred_region
          %p606 = scmp.lt.s32.totalorder %s32, 1
          %s607 = scalar_select %p606, %s32, 1
          %s608 = smul.addr %s607, 8
          %s609 = scalar_lea.vmem %s2, %s608
        $region92: #{tpu_custom_call.1} parent=79 // pred_fallthru
          _
      $region80: #{tpu_custom_call.1} parent=5 // pred_fallthru
        _
      %p610 = scmp.le.s32.totalorder 1, %s32
      %p611 = scmp.lt.s32.totalorder %s32, 3
      %p612 = pnand %p610, %p611
      %p613 = pneg %p612
      // Predicated region
      $region93: #{tpu_custom_call.1} parent=5 // pred_check
        _
      $region94: #{tpu_custom_call.1} parent=5 // pred_check_branch
        %615 = sbr.rel (%p612) target = $region96
      $region95: #{tpu_custom_call.1} parent=5 // pred_region
        %s616 = ssub.s32 %s32, 1
        // Predicated region
        $region97: #{tpu_custom_call.1} parent=95 // pred_check
          %p617 = pneg %p173
        $region98: #{tpu_custom_call.1} parent=95 // pred_check_branch
          %619 = sbr.rel (%p617) target = $region100
        $region99: #{tpu_custom_call.1} parent=95 // pred_region
          %620 = dma.done [#allocation3], 256
        $region100: #{tpu_custom_call.1} parent=95 // pred_fallthru
          _
        // Predicated region
        $region101: #{tpu_custom_call.1} parent=95 // pred_check
          %p621 = pneg %p215
        $region102: #{tpu_custom_call.1} parent=95 // pred_check_branch
          %623 = sbr.rel (%p621) target = $region104
        $region103: #{tpu_custom_call.1} parent=95 // pred_region
          %624 = dma.done [#allocation6], 16
        $region104: #{tpu_custom_call.1} parent=95 // pred_fallthru
          _
        // Predicated region
        $region105: #{tpu_custom_call.1} parent=95 // pred_check
          %p625 = pneg %p236
        $region106: #{tpu_custom_call.1} parent=95 // pred_check_branch
          %627 = sbr.rel (%p625) target = $region108
        $region107: #{tpu_custom_call.1} parent=95 // pred_region
          %628 = dma.done [#allocation6], 16
        $region108: #{tpu_custom_call.1} parent=95 // pred_fallthru
          _
        // Predicated region
        $region109: #{tpu_custom_call.1} parent=95 // pred_check
          %p629 = pneg %p278
        $region110: #{tpu_custom_call.1} parent=95 // pred_check_branch
          %631 = sbr.rel (%p629) target = $region112
        $region111: #{tpu_custom_call.1} parent=95 // pred_region
          %632 = dma.done [#allocation9], 16
        $region112: #{tpu_custom_call.1} parent=95 // pred_fallthru
          _
        // Predicated region
        $region113: #{tpu_custom_call.1} parent=95 // pred_check
          %p633 = pneg %p299
        $region114: #{tpu_custom_call.1} parent=95 // pred_check_branch
          %635 = sbr.rel (%p633) target = $region116
        $region115: #{tpu_custom_call.1} parent=95 // pred_region
          %636 = dma.done [#allocation9], 16
        $region116: #{tpu_custom_call.1} parent=95 // pred_fallthru
          _
        // Predicated region
        $region117: #{tpu_custom_call.1} parent=95 // pred_check
          %p637 = pneg %p320
        $region118: #{tpu_custom_call.1} parent=95 // pred_check_branch
          %639 = sbr.rel (%p637) target = $region120
        $region119: #{tpu_custom_call.1} parent=95 // pred_region
          %640 = dma.done [#allocation12], 16
        $region120: #{tpu_custom_call.1} parent=95 // pred_fallthru
          _
        %p641 = scmp.lt.s32.totalorder %s37, 1
        %s642 = scalar_select %p641, %s37, 1
        %s643 = smul.addr %s642, 8
        %s644 = scalar_lea.vmem %s0, %s643
        %p645 = pneg %p58
        %p646 = pneg %p55
        %p647 = scmp.lt.s32.totalorder %s37, 1
        %s648 = scalar_select %p647, %s37, 1
        %s649 = smul.addr %s648, 8
        %s650 = scalar_lea.vmem %s1, %s649
        %p651 = pneg %p84
        %p652 = pneg %p81
        %p653 = scmp.lt.s32.totalorder %s37, 1
        %s654 = scalar_select %p653, %s37, 1
        %s655 = smul.addr %s654, 8
        %s656 = scalar_lea.vmem %s2, %s655
        %p657 = pneg %p110
        %p658 = pneg %p107
        %p659 = pneg %p131
        %p660 = pneg %p128
        %p661 = pneg %p152
        %p662 = pneg %p149
        %p663 = pneg %p173
        %p664 = pneg %p170
        %p665 = pneg %p194
        %p666 = pneg %p191
        %p667 = pneg %p215
        %p668 = pneg %p212
        %p669 = pneg %p236
        %p670 = pneg %p233
        %p671 = pneg %p257
        %p672 = pneg %p254
        %p673 = pneg %p278
        %p674 = pneg %p275
        %p675 = pneg %p299
        %p676 = pneg %p296
        %p677 = pneg %p320
        %p678 = pneg %p317
        %p679 = pneg %p341
        %p680 = pneg %p338
        %p681 = pneg %p362
        %p682 = pneg %p359
        %p683 = pneg %p383
        %p684 = pneg %p380
        %p685 = pneg %p404
        %p686 = pneg %p401
        %p687 = pneg %p425
        %p688 = pneg %p422
        %p689 = pneg %p446
        %p690 = pneg %p443
        %p691 = pneg %p472
        %p692 = pneg %p469
        %s693 = sand.u32 %s459, 1
        %s694 = scalar_lea.sflag [#allocation4], %s693
        %s695 = sand.u32 %s459, 1
        %s696 = smul.addr %s695, 8
        %s697 = scalar_lea.vmem [#allocation13], %s696
        %p698 = scmp.lt.s32.totalorder %s37, 1
        %s699 = scalar_select %p698, %s37, 1
        %s700 = smul.addr %s699, 8
        %s701 = scalar_lea.vmem %s0, %s700
        %p702 = scmp.lt.s32.totalorder %s37, 1
        %s703 = scalar_select %p702, %s37, 1
        %s704 = smul.addr %s703, 8
        %s705 = scalar_lea.vmem %s1, %s704
        %p706 = scmp.lt.s32.totalorder %s37, 1
        %s707 = scalar_select %p706, %s37, 1
        %s708 = smul.addr %s707, 8
        %s709 = scalar_lea.vmem %s2, %s708
        %v711 = vld [vmem:[%s701] sm:$0xff]
        %v712 = vld [vmem:[%s705] sm:$0xff]
        %v713 = vld [vmem:[%s709] sm:$0xff]
        %v714 = vpack.c.bf16 %v711, %v711
        %v715 = vld [vmem:[%s3] sm:$0xf]
        %v716 = vld [vmem:[%s3 + $0x4] sm:$0xf]
        %v717 = vld [vmem:[%s3 + $0x8] sm:$0xf]
        %v718 = vld [vmem:[%s3 + $0xc] sm:$0xf]
        %v719 = vld [vmem:[%s6] sm:$0x1]
        %v721 = vlaneseq
        %v722 = vshrl.u32 %v721, 7
        %v723 = vsub.s32 0, %v722
        %v724 = vrot.slane %v719, %v723
        %v730 = vunpack.c.l.b16 %v715
        %v731 = vunpack.c.l.b16 %v716
        %v732 = vunpack.c.l.b16 %v717
        %v733 = vunpack.c.l.b16 %v718
        %v734 = vpack.c.b16 %v731, %v730
        %v735 = vpack.c.b16 %v733, %v732
        %vm738 = vcmask 261120
        %v740 = vsel %vm738, %v714, 0
        %742 = vmatprep.subr.bf16.mxu0 0
        %743 = vmatpush1.bf16.msra.mxu0 %v734
        %744 = vmatprep.subr.bf16.mxu0 0
        %745 = vmatpush1.bf16.msra.mxu0 %v735
        %746 = vmatprep.subr.bf16.mxu0 0
        %747 = vmatpush1.bf16.msra.mxu0 0
        %748 = vmatprep.subr.bf16.mxu0 0
        %749 = vmatpush1.bf16.msra.mxu0 0
        %750 = vmatprep.subr.bf16.mxu0 0
        %751 = vmatpush1.bf16.msra.mxu0 0
        %752 = vmatprep.subr.bf16.mxu0 0
        %753 = vmatpush1.bf16.msra.mxu0 0
        %754 = vmatprep.subr.bf16.mxu0 0
        %755 = vmatpush1.bf16.msra.mxu0 0
        %756 = vmatprep.subr.bf16.mxu0 0
        %757 = vmatpush1.bf16.msra.mxu0 0
        %758 = vmatprep.subr.bf16.mxu0 0
        %759 = vmatpush1.bf16.msra.mxu0 0
        %760 = vmatprep.subr.bf16.mxu0 0
        %761 = vmatpush1.bf16.msra.mxu0 0
        %762 = vmatprep.subr.bf16.mxu0 0
        %763 = vmatpush1.bf16.msra.mxu0 0
        %764 = vmatprep.subr.bf16.mxu0 0
        %765 = vmatpush1.bf16.msra.mxu0 0
        %766 = vmatprep.subr.bf16.mxu0 0
        %767 = vmatpush1.bf16.msra.mxu0 0
        %768 = vmatprep.subr.bf16.mxu0 0
        %769 = vmatpush1.bf16.msra.mxu0 0
        %770 = vmatprep.subr.bf16.mxu0 0
        %771 = vmatpush1.bf16.msra.mxu0 0
        %772 = vmatprep.subr.bf16.mxu0 0
        %773 = vmatpush1.bf16.msra.mxu0 0
        %774 = vmatprep.mubr.bf16.mxu0 0
        %775 = vmatmul.mubr.bf16.gmra.mrb[0].mxu0 %v740
        %v776 = vpop.f32.mrb[0].mxu0
        %v777 = vadd.f32 %v724, %v776
        %v778 = vpop.f32.mrb[0].mxu0
        %v779 = vpop.f32.mrb[0].mxu0
        %v780 = vpop.f32.mrb[0].mxu0
        %781 = vdwg.mxu0
        %v782 = vpack.c.bf16 %v712, %v712
        %v783 = vld [vmem:[%s4] sm:$0xf]
        %v784 = vld [vmem:[%s4 + $0x4] sm:$0xf]
        %v785 = vld [vmem:[%s4 + $0x8] sm:$0xf]
        %v786 = vld [vmem:[%s4 + $0xc] sm:$0xf]
        %v787 = vld [vmem:[#allocation5] sm:$0x1]
        %v789 = vlaneseq
        %v790 = vshrl.u32 %v789, 7
        %v791 = vsub.s32 0, %v790
        %v792 = vrot.slane %v787, %v791
        %v798 = vunpack.c.l.b16 %v783
        %v799 = vunpack.c.l.b16 %v784
        %v800 = vunpack.c.l.b16 %v785
        %v801 = vunpack.c.l.b16 %v786
        %v802 = vpack.c.b16 %v799, %v798
        %v803 = vpack.c.b16 %v801, %v800
        %v807 = vsel %vm738, %v782, 0
        %809 = vmatprep.subr.bf16.mxu0 0
        %810 = vmatpush1.bf16.msra.mxu0 %v802
        %811 = vmatprep.subr.bf16.mxu0 0
        %812 = vmatpush1.bf16.msra.mxu0 %v803
        %813 = vmatprep.subr.bf16.mxu0 0
        %814 = vmatpush1.bf16.msra.mxu0 0
        %815 = vmatprep.subr.bf16.mxu0 0
        %816 = vmatpush1.bf16.msra.mxu0 0
        %817 = vmatprep.subr.bf16.mxu0 0
        %818 = vmatpush1.bf16.msra.mxu0 0
        %819 = vmatprep.subr.bf16.mxu0 0
        %820 = vmatpush1.bf16.msra.mxu0 0
        %821 = vmatprep.subr.bf16.mxu0 0
        %822 = vmatpush1.bf16.msra.mxu0 0
        %823 = vmatprep.subr.bf16.mxu0 0
        %824 = vmatpush1.bf16.msra.mxu0 0
        %825 = vmatprep.subr.bf16.mxu0 0
        %826 = vmatpush1.bf16.msra.mxu0 0
        %827 = vmatprep.subr.bf16.mxu0 0
        %828 = vmatpush1.bf16.msra.mxu0 0
        %829 = vmatprep.subr.bf16.mxu0 0
        %830 = vmatpush1.bf16.msra.mxu0 0
        %831 = vmatprep.subr.bf16.mxu0 0
        %832 = vmatpush1.bf16.msra.mxu0 0
        %833 = vmatprep.subr.bf16.mxu0 0
        %834 = vmatpush1.bf16.msra.mxu0 0
        %835 = vmatprep.subr.bf16.mxu0 0
        %836 = vmatpush1.bf16.msra.mxu0 0
        %837 = vmatprep.subr.bf16.mxu0 0
        %838 = vmatpush1.bf16.msra.mxu0 0
        %839 = vmatprep.subr.bf16.mxu0 0
        %840 = vmatpush1.bf16.msra.mxu0 0
        %841 = vmatprep.mubr.bf16.mxu0 0
        %842 = vmatmul.mubr.bf16.gmra.mrb[0].mxu0 %v807
        %v843 = vpop.f32.mrb[0].mxu0
        %v844 = vadd.f32 %v792, %v843
        %v845 = vpop.f32.mrb[0].mxu0
        %v846 = vpop.f32.mrb[0].mxu0
        %v847 = vpop.f32.mrb[0].mxu0
        %848 = vdwg.mxu0
        %v849 = vpack.c.bf16 %v713, %v713
        %v850 = vld [vmem:[#allocation2] sm:$0xf]
        %v851 = vld [vmem:[#allocation2 + $0x4] sm:$0xf]
        %v852 = vld [vmem:[#allocation2 + $0x8] sm:$0xf]
        %v853 = vld [vmem:[#allocation2 + $0xc] sm:$0xf]
        %v854 = vld [vmem:[#allocation7] sm:$0x1]
        %v856 = vlaneseq
        %v857 = vshrl.u32 %v856, 7
        %v858 = vsub.s32 0, %v857
        %v859 = vrot.slane %v854, %v858
        %v865 = vunpack.c.l.b16 %v850
        %v866 = vunpack.c.l.b16 %v851
        %v867 = vunpack.c.l.b16 %v852
        %v868 = vunpack.c.l.b16 %v853
        %v869 = vpack.c.b16 %v866, %v865
        %v870 = vpack.c.b16 %v868, %v867
        %v874 = vsel %vm738, %v849, 0
        %876 = vmatprep.subr.bf16.mxu0 0
        %877 = vmatpush1.bf16.msra.mxu0 %v869
        %878 = vmatprep.subr.bf16.mxu0 0
        %879 = vmatpush1.bf16.msra.mxu0 %v870
        %880 = vmatprep.subr.bf16.mxu0 0
        %881 = vmatpush1.bf16.msra.mxu0 0
        %882 = vmatprep.subr.bf16.mxu0 0
        %883 = vmatpush1.bf16.msra.mxu0 0
        %884 = vmatprep.subr.bf16.mxu0 0
        %885 = vmatpush1.bf16.msra.mxu0 0
        %886 = vmatprep.subr.bf16.mxu0 0
        %887 = vmatpush1.bf16.msra.mxu0 0
        %888 = vmatprep.subr.bf16.mxu0 0
        %889 = vmatpush1.bf16.msra.mxu0 0
        %890 = vmatprep.subr.bf16.mxu0 0
        %891 = vmatpush1.bf16.msra.mxu0 0
        %892 = vmatprep.subr.bf16.mxu0 0
        %893 = vmatpush1.bf16.msra.mxu0 0
        %894 = vmatprep.subr.bf16.mxu0 0
        %895 = vmatpush1.bf16.msra.mxu0 0
        %896 = vmatprep.subr.bf16.mxu0 0
        %897 = vmatpush1.bf16.msra.mxu0 0
        %898 = vmatprep.subr.bf16.mxu0 0
        %899 = vmatpush1.bf16.msra.mxu0 0
        %900 = vmatprep.subr.bf16.mxu0 0
        %901 = vmatpush1.bf16.msra.mxu0 0
        %902 = vmatprep.subr.bf16.mxu0 0
        %903 = vmatpush1.bf16.msra.mxu0 0
        %904 = vmatprep.subr.bf16.mxu0 0
        %905 = vmatpush1.bf16.msra.mxu0 0
        %906 = vmatprep.subr.bf16.mxu0 0
        %907 = vmatpush1.bf16.msra.mxu0 0
        %908 = vmatprep.mubr.bf16.mxu0 0
        %909 = vmatmul.mubr.bf16.gmra.mrb[0].mxu0 %v874
        %v910 = vpop.f32.mrb[0].mxu0
        %v911 = vadd.f32 %v859, %v910
        %v912 = vpop.f32.mrb[0].mxu0
        %v913 = vpop.f32.mrb[0].mxu0
        %v914 = vpop.f32.mrb[0].mxu0
        %915 = vdwg.mxu0
        %v916 = vmul.f32 %v777, 0.35355338
        %v917 = vpack.c.bf16 %v916, %v916
        %v918 = vpack.c.bf16 %v844, %v844
        %v919 = vpack.c.bf16 %v911, %v911
        %v920 = vld [vmem:[#allocation8] sm:$0x1]
        %v922 = vlaneseq
        %v923 = vshrl.u32 %v922, 7
        %v924 = vsub.s32 0, %v923
        %v925 = vrot.slane %v920, %v924
        %928 = vrot.lane.b32.xlu0 %v917, 120
        %v929 = vpop.permute.xlu0 %928
        %930 = vrot.lane.b32.xlu0 %v917, 112
        %v931 = vpop.permute.xlu0 %930
        %932 = vrot.lane.b32.xlu0 %v917, 104
        %v933 = vpop.permute.xlu0 %932
        %v935 = vunpack.c.l.s4 1983009808
        %v936 = vunpack.c.0.s8 %v935
        %v937 = vlaneseq
        %v938 = vshrl.u32 %v937, 7
        %v939 = vsub.s32 %v936, %v938
        %v940 = vrot.slane %v917, %v939
        %v943 = vunpack.c.l.s4 1983009808
        %v944 = vunpack.c.0.s8 %v943
        %v945 = vlaneseq
        %v946 = vshrl.u32 %v945, 7
        %v947 = vsub.s32 %v944, %v946
        %v948 = vrot.slane %v931, %v947
        %v949 = vcombine.low %v940, %v948
        %v950 = vcombine.high %v940, %v948
        %v952 = vunpack.c.l.s4 1934713408
        %v953 = vunpack.c.0.s8 %v952
        %v954 = vlaneseq
        %v955 = vshrl.u32 %v954, 7
        %v956 = vsub.s32 %v953, %v955
        %v957 = vrot.slane %v949, %v956
        %v959 = vunpack.c.l.s4 1934713408
        %v960 = vunpack.c.0.s8 %v959
        %v961 = vlaneseq
        %v962 = vshrl.u32 %v961, 7
        %v963 = vsub.s32 %v960, %v962
        %v964 = vrot.slane %v950, %v963
        %v965 = vcombine.high %v957, 0
        %v966 = vcombine.high %v964, 0
        %v969 = vunpack.c.l.s4 1983009808
        %v970 = vunpack.c.0.s8 %v969
        %v971 = vlaneseq
        %v972 = vshrl.u32 %v971, 7
        %v973 = vsub.s32 %v970, %v972
        %v974 = vrot.slane %v929, %v973
        %v977 = vunpack.c.l.s4 1983009808
        %v978 = vunpack.c.0.s8 %v977
        %v979 = vlaneseq
        %v980 = vshrl.u32 %v979, 7
        %v981 = vsub.s32 %v978, %v980
        %v982 = vrot.slane %v933, %v981
        %v983 = vcombine.low %v974, %v982
        %v984 = vcombine.high %v974, %v982
        %v986 = vunpack.c.l.s4 1934713408
        %v987 = vunpack.c.0.s8 %v986
        %v988 = vlaneseq
        %v989 = vshrl.u32 %v988, 7
        %v990 = vsub.s32 %v987, %v989
        %v991 = vrot.slane %v983, %v990
        %v993 = vunpack.c.l.s4 1934713408
        %v994 = vunpack.c.0.s8 %v993
        %v995 = vlaneseq
        %v996 = vshrl.u32 %v995, 7
        %v997 = vsub.s32 %v994, %v996
        %v998 = vrot.slane %v984, %v997
        %v999 = vcombine.high %v991, 0
        %v1000 = vcombine.high %v998, 0
        %v1003 = vpack.i.b16 %v991, %v957
        %v1005 = vshrl.u32 %v957, 16
        %v1006 = vshrl.u32 %v991, 16
        %v1007 = vpack.i.b16 %v1006, %v1005
        %v1011 = vpack.i.b16 %v999, %v965
        %v1013 = vshrl.u32 %v965, 16
        %v1014 = vshrl.u32 %v999, 16
        %v1015 = vpack.i.b16 %v1014, %v1013
        %v1019 = vpack.i.b16 %v998, %v964
        %v1021 = vshrl.u32 %v964, 16
        %v1022 = vshrl.u32 %v998, 16
        %v1023 = vpack.i.b16 %v1022, %v1021
        %v1027 = vpack.i.b16 %v1000, %v966
        %v1029 = vshrl.u32 %v966, 16
        %v1030 = vshrl.u32 %v1000, 16
        %v1031 = vpack.i.b16 %v1030, %v1029
        %v1033 = vcombine.low %v1003, %v1019
        %v1035 = vunpack.c.l.s4 1983009808
        %v1036 = vunpack.c.0.s8 %v1035
        %v1037 = vlaneseq
        %v1038 = vshrl.u32 %v1037, 7
        %v1039 = vsub.s32 %v1036, %v1038
        %v1040 = vrot.slane %v1033, %v1039
        %v1041 = vcombine.low %v1011, %v1027
        %v1043 = vunpack.c.l.s4 1983009808
        %v1044 = vunpack.c.0.s8 %v1043
        %v1045 = vlaneseq
        %v1046 = vshrl.u32 %v1045, 7
        %v1047 = vsub.s32 %v1044, %v1046
        %v1048 = vrot.slane %v1041, %v1047
        %v1049 = vcombine.low %v1040, %v1048
        %v1051 = vunpack.c.l.s4 1934713408
        %v1052 = vunpack.c.0.s8 %v1051
        %v1053 = vlaneseq
        %v1054 = vshrl.u32 %v1053, 7
        %v1055 = vsub.s32 %v1052, %v1054
        %v1056 = vrot.slane %v1049, %v1055
        %v1057 = vcombine.high %v1056, 0
        %v1058 = vcombine.low %v1007, %v1023
        %v1060 = vunpack.c.l.s4 1983009808
        %v1061 = vunpack.c.0.s8 %v1060
        %v1062 = vlaneseq
        %v1063 = vshrl.u32 %v1062, 7
        %v1064 = vsub.s32 %v1061, %v1063
        %v1065 = vrot.slane %v1058, %v1064
        %v1066 = vcombine.low %v1015, %v1031
        %v1068 = vunpack.c.l.s4 1983009808
        %v1069 = vunpack.c.0.s8 %v1068
        %v1070 = vlaneseq
        %v1071 = vshrl.u32 %v1070, 7
        %v1072 = vsub.s32 %v1069, %v1071
        %v1073 = vrot.slane %v1066, %v1072
        %v1074 = vcombine.low %v1065, %v1073
        %v1076 = vunpack.c.l.s4 1934713408
        %v1077 = vunpack.c.0.s8 %v1076
        %v1078 = vlaneseq
        %v1079 = vshrl.u32 %v1078, 7
        %v1080 = vsub.s32 %v1077, %v1079
        %v1081 = vrot.slane %v1074, %v1080
        %v1082 = vcombine.high %v1081, 0
        %v1085 = vpack.i.b16 %v1081, %v1056
        %v1086 = vshrl.u32 %v1056, 16
        %v1087 = vshrl.u32 %v1081, 16
        %v1088 = vpack.i.b16 %v1087, %v1086
        %v1091 = vpack.i.b16 %v1082, %v1057
        %v1092 = vshrl.u32 %v1057, 16
        %v1093 = vshrl.u32 %v1082, 16
        %v1094 = vpack.i.b16 %v1093, %v1092
        %1096 = vrot.lane.b32.xlu0 %v918, 120
        %v1097 = vpop.permute.xlu0 %1096
        %1098 = vrot.lane.b32.xlu0 %v918, 112
        %v1099 = vpop.permute.xlu0 %1098
        %1100 = vrot.lane.b32.xlu0 %v918, 104
        %v1101 = vpop.permute.xlu0 %1100
        %v1103 = vunpack.c.l.s4 1983009808
        %v1104 = vunpack.c.0.s8 %v1103
        %v1105 = vlaneseq
        %v1106 = vshrl.u32 %v1105, 7
        %v1107 = vsub.s32 %v1104, %v1106
        %v1108 = vrot.slane %v918, %v1107
        %v1111 = vunpack.c.l.s4 1983009808
        %v1112 = vunpack.c.0.s8 %v1111
        %v1113 = vlaneseq
        %v1114 = vshrl.u32 %v1113, 7
        %v1115 = vsub.s32 %v1112, %v1114
        %v1116 = vrot.slane %v1099, %v1115
        %v1117 = vcombine.low %v1108, %v1116
        %v1118 = vcombine.high %v1108, %v1116
        %v1120 = vunpack.c.l.s4 1934713408
        %v1121 = vunpack.c.0.s8 %v1120
        %v1122 = vlaneseq
        %v1123 = vshrl.u32 %v1122, 7
        %v1124 = vsub.s32 %v1121, %v1123
        %v1125 = vrot.slane %v1117, %v1124
        %v1127 = vunpack.c.l.s4 1934713408
        %v1128 = vunpack.c.0.s8 %v1127
        %v1129 = vlaneseq
        %v1130 = vshrl.u32 %v1129, 7
        %v1131 = vsub.s32 %v1128, %v1130
        %v1132 = vrot.slane %v1118, %v1131
        %v1133 = vcombine.high %v1125, 0
        %v1134 = vcombine.high %v1132, 0
        %v1137 = vunpack.c.l.s4 1983009808
        %v1138 = vunpack.c.0.s8 %v1137
        %v1139 = vlaneseq
        %v1140 = vshrl.u32 %v1139, 7
        %v1141 = vsub.s32 %v1138, %v1140
        %v1142 = vrot.slane %v1097, %v1141
        %v1145 = vunpack.c.l.s4 1983009808
        %v1146 = vunpack.c.0.s8 %v1145
        %v1147 = vlaneseq
        %v1148 = vshrl.u32 %v1147, 7
        %v1149 = vsub.s32 %v1146, %v1148
        %v1150 = vrot.slane %v1101, %v1149
        %v1151 = vcombine.low %v1142, %v1150
        %v1152 = vcombine.high %v1142, %v1150
        %v1154 = vunpack.c.l.s4 1934713408
        %v1155 = vunpack.c.0.s8 %v1154
        %v1156 = vlaneseq
        %v1157 = vshrl.u32 %v1156, 7
        %v1158 = vsub.s32 %v1155, %v1157
        %v1159 = vrot.slane %v1151, %v1158
        %v1161 = vunpack.c.l.s4 1934713408
        %v1162 = vunpack.c.0.s8 %v1161
        %v1163 = vlaneseq
        %v1164 = vshrl.u32 %v1163, 7
        %v1165 = vsub.s32 %v1162, %v1164
        %v1166 = vrot.slane %v1152, %v1165
        %v1167 = vcombine.high %v1159, 0
        %v1168 = vcombine.high %v1166, 0
        %v1171 = vpack.i.b16 %v1159, %v1125
        %v1173 = vshrl.u32 %v1125, 16
        %v1174 = vshrl.u32 %v1159, 16
        %v1175 = vpack.i.b16 %v1174, %v1173
        %v1179 = vpack.i.b16 %v1167, %v1133
        %v1181 = vshrl.u32 %v1133, 16
        %v1182 = vshrl.u32 %v1167, 16
        %v1183 = vpack.i.b16 %v1182, %v1181
        %v1187 = vpack.i.b16 %v1166, %v1132
        %v1189 = vshrl.u32 %v1132, 16
        %v1190 = vshrl.u32 %v1166, 16
        %v1191 = vpack.i.b16 %v1190, %v1189
        %v1195 = vpack.i.b16 %v1168, %v1134
        %v1197 = vshrl.u32 %v1134, 16
        %v1198 = vshrl.u32 %v1168, 16
        %v1199 = vpack.i.b16 %v1198, %v1197
        %v1201 = vcombine.low %v1171, %v1187
        %v1203 = vunpack.c.l.s4 1983009808
        %v1204 = vunpack.c.0.s8 %v1203
        %v1205 = vlaneseq
        %v1206 = vshrl.u32 %v1205, 7
        %v1207 = vsub.s32 %v1204, %v1206
        %v1208 = vrot.slane %v1201, %v1207
        %v1209 = vcombine.low %v1179, %v1195
        %v1211 = vunpack.c.l.s4 1983009808
        %v1212 = vunpack.c.0.s8 %v1211
        %v1213 = vlaneseq
        %v1214 = vshrl.u32 %v1213, 7
        %v1215 = vsub.s32 %v1212, %v1214
        %v1216 = vrot.slane %v1209, %v1215
        %v1217 = vcombine.low %v1208, %v1216
        %v1219 = vunpack.c.l.s4 1934713408
        %v1220 = vunpack.c.0.s8 %v1219
        %v1221 = vlaneseq
        %v1222 = vshrl.u32 %v1221, 7
        %v1223 = vsub.s32 %v1220, %v1222
        %v1224 = vrot.slane %v1217, %v1223
        %v1225 = vcombine.high %v1224, 0
        %v1226 = vcombine.low %v1175, %v1191
        %v1228 = vunpack.c.l.s4 1983009808
        %v1229 = vunpack.c.0.s8 %v1228
        %v1230 = vlaneseq
        %v1231 = vshrl.u32 %v1230, 7
        %v1232 = vsub.s32 %v1229, %v1231
        %v1233 = vrot.slane %v1226, %v1232
        %v1234 = vcombine.low %v1183, %v1199
        %v1236 = vunpack.c.l.s4 1983009808
        %v1237 = vunpack.c.0.s8 %v1236
        %v1238 = vlaneseq
        %v1239 = vshrl.u32 %v1238, 7
        %v1240 = vsub.s32 %v1237, %v1239
        %v1241 = vrot.slane %v1234, %v1240
        %v1242 = vcombine.low %v1233, %v1241
        %v1244 = vunpack.c.l.s4 1934713408
        %v1245 = vunpack.c.0.s8 %v1244
        %v1246 = vlaneseq
        %v1247 = vshrl.u32 %v1246, 7
        %v1248 = vsub.s32 %v1245, %v1247
        %v1249 = vrot.slane %v1242, %v1248
        %v1250 = vcombine.high %v1249, 0
        %v1253 = vpack.i.b16 %v1249, %v1224
        %v1254 = vshrl.u32 %v1224, 16
        %v1255 = vshrl.u32 %v1249, 16
        %v1256 = vpack.i.b16 %v1255, %v1254
        %v1259 = vpack.i.b16 %v1250, %v1225
        %v1260 = vshrl.u32 %v1225, 16
        %v1261 = vshrl.u32 %v1250, 16
        %v1262 = vpack.i.b16 %v1261, %v1260
        %1264 = vrot.lane.b32.xlu0 %v919, 120
        %v1265 = vpop.permute.xlu0 %1264
        %1266 = vrot.lane.b32.xlu0 %v919, 112
        %v1267 = vpop.permute.xlu0 %1266
        %1268 = vrot.lane.b32.xlu0 %v919, 104
        %v1269 = vpop.permute.xlu0 %1268
        %v1271 = vunpack.c.l.s4 1983009808
        %v1272 = vunpack.c.0.s8 %v1271
        %v1273 = vlaneseq
        %v1274 = vshrl.u32 %v1273, 7
        %v1275 = vsub.s32 %v1272, %v1274
        %v1276 = vrot.slane %v919, %v1275
        %v1279 = vunpack.c.l.s4 1983009808
        %v1280 = vunpack.c.0.s8 %v1279
        %v1281 = vlaneseq
        %v1282 = vshrl.u32 %v1281, 7
        %v1283 = vsub.s32 %v1280, %v1282
        %v1284 = vrot.slane %v1267, %v1283
        %v1285 = vcombine.low %v1276, %v1284
        %v1286 = vcombine.high %v1276, %v1284
        %v1288 = vunpack.c.l.s4 1934713408
        %v1289 = vunpack.c.0.s8 %v1288
        %v1290 = vlaneseq
        %v1291 = vshrl.u32 %v1290, 7
        %v1292 = vsub.s32 %v1289, %v1291
        %v1293 = vrot.slane %v1285, %v1292
        %v1295 = vunpack.c.l.s4 1934713408
        %v1296 = vunpack.c.0.s8 %v1295
        %v1297 = vlaneseq
        %v1298 = vshrl.u32 %v1297, 7
        %v1299 = vsub.s32 %v1296, %v1298
        %v1300 = vrot.slane %v1286, %v1299
        %v1301 = vcombine.high %v1293, 0
        %v1302 = vcombine.high %v1300, 0
        %v1305 = vunpack.c.l.s4 1983009808
        %v1306 = vunpack.c.0.s8 %v1305
        %v1307 = vlaneseq
        %v1308 = vshrl.u32 %v1307, 7
        %v1309 = vsub.s32 %v1306, %v1308
        %v1310 = vrot.slane %v1265, %v1309
        %v1313 = vunpack.c.l.s4 1983009808
        %v1314 = vunpack.c.0.s8 %v1313
        %v1315 = vlaneseq
        %v1316 = vshrl.u32 %v1315, 7
        %v1317 = vsub.s32 %v1314, %v1316
        %v1318 = vrot.slane %v1269, %v1317
        %v1319 = vcombine.low %v1310, %v1318
        %v1320 = vcombine.high %v1310, %v1318
        %v1322 = vunpack.c.l.s4 1934713408
        %v1323 = vunpack.c.0.s8 %v1322
        %v1324 = vlaneseq
        %v1325 = vshrl.u32 %v1324, 7
        %v1326 = vsub.s32 %v1323, %v1325
        %v1327 = vrot.slane %v1319, %v1326
        %v1329 = vunpack.c.l.s4 1934713408
        %v1330 = vunpack.c.0.s8 %v1329
        %v1331 = vlaneseq
        %v1332 = vshrl.u32 %v1331, 7
        %v1333 = vsub.s32 %v1330, %v1332
        %v1334 = vrot.slane %v1320, %v1333
        %v1335 = vcombine.high %v1327, 0
        %v1336 = vcombine.high %v1334, 0
        %v1339 = vpack.i.b16 %v1327, %v1293
        %v1341 = vshrl.u32 %v1293, 16
        %v1342 = vshrl.u32 %v1327, 16
        %v1343 = vpack.i.b16 %v1342, %v1341
        %v1347 = vpack.i.b16 %v1335, %v1301
        %v1349 = vshrl.u32 %v1301, 16
        %v1350 = vshrl.u32 %v1335, 16
        %v1351 = vpack.i.b16 %v1350, %v1349
        %v1355 = vpack.i.b16 %v1334, %v1300
        %v1357 = vshrl.u32 %v1300, 16
        %v1358 = vshrl.u32 %v1334, 16
        %v1359 = vpack.i.b16 %v1358, %v1357
        %v1363 = vpack.i.b16 %v1336, %v1302
        %v1365 = vshrl.u32 %v1302, 16
        %v1366 = vshrl.u32 %v1336, 16
        %v1367 = vpack.i.b16 %v1366, %v1365
        %v1369 = vcombine.low %v1339, %v1355
        %v1371 = vunpack.c.l.s4 1983009808
        %v1372 = vunpack.c.0.s8 %v1371
        %v1373 = vlaneseq
        %v1374 = vshrl.u32 %v1373, 7
        %v1375 = vsub.s32 %v1372, %v1374
        %v1376 = vrot.slane %v1369, %v1375
        %v1377 = vcombine.low %v1347, %v1363
        %v1379 = vunpack.c.l.s4 1983009808
        %v1380 = vunpack.c.0.s8 %v1379
        %v1381 = vlaneseq
        %v1382 = vshrl.u32 %v1381, 7
        %v1383 = vsub.s32 %v1380, %v1382
        %v1384 = vrot.slane %v1377, %v1383
        %v1385 = vcombine.low %v1376, %v1384
        %v1387 = vunpack.c.l.s4 1934713408
        %v1388 = vunpack.c.0.s8 %v1387
        %v1389 = vlaneseq
        %v1390 = vshrl.u32 %v1389, 7
        %v1391 = vsub.s32 %v1388, %v1390
        %v1392 = vrot.slane %v1385, %v1391
        %v1393 = vcombine.high %v1392, 0
        %v1394 = vcombine.low %v1343, %v1359
        %v1396 = vunpack.c.l.s4 1983009808
        %v1397 = vunpack.c.0.s8 %v1396
        %v1398 = vlaneseq
        %v1399 = vshrl.u32 %v1398, 7
        %v1400 = vsub.s32 %v1397, %v1399
        %v1401 = vrot.slane %v1394, %v1400
        %v1402 = vcombine.low %v1351, %v1367
        %v1404 = vunpack.c.l.s4 1983009808
        %v1405 = vunpack.c.0.s8 %v1404
        %v1406 = vlaneseq
        %v1407 = vshrl.u32 %v1406, 7
        %v1408 = vsub.s32 %v1405, %v1407
        %v1409 = vrot.slane %v1402, %v1408
        %v1410 = vcombine.low %v1401, %v1409
        %v1412 = vunpack.c.l.s4 1934713408
        %v1413 = vunpack.c.0.s8 %v1412
        %v1414 = vlaneseq
        %v1415 = vshrl.u32 %v1414, 7
        %v1416 = vsub.s32 %v1413, %v1415
        %v1417 = vrot.slane %v1410, %v1416
        %v1418 = vcombine.high %v1417, 0
        %v1421 = vpack.i.b16 %v1417, %v1392
        %v1422 = vshrl.u32 %v1392, 16
        %v1423 = vshrl.u32 %v1417, 16
        %v1424 = vpack.i.b16 %v1423, %v1422
        %v1427 = vpack.i.b16 %v1418, %v1393
        %v1428 = vshrl.u32 %v1393, 16
        %v1429 = vshrl.u32 %v1418, 16
        %v1430 = vpack.i.b16 %v1429, %v1428
        %vm1431 = vcmask 64512
        %v1433 = vsel %vm1431, %v1085, 0
        %v1436 = vsel %vm1431, %v1253, 0
        %1438 = vmatprep.subr.bf16.mxu0 0
        %1439 = vmatpush1.bf16.xpose.msra.mxu0 %v1436
        %1440 = vmatprep.subr.bf16.mxu0 0
        %1441 = vmatpush1.bf16.xpose.msra.mxu0 0
        %1442 = vmatprep.subr.bf16.mxu0 0
        %1443 = vmatpush1.bf16.xpose.msra.mxu0 0
        %1444 = vmatprep.subr.bf16.mxu0 0
        %1445 = vmatpush1.bf16.xpose.msra.mxu0 0
        %1446 = vmatprep.subr.bf16.mxu0 0
        %1447 = vmatpush1.bf16.xpose.msra.mxu0 0
        %1448 = vmatprep.subr.bf16.mxu0 0
        %1449 = vmatpush1.bf16.xpose.msra.mxu0 0
        %1450 = vmatprep.subr.bf16.mxu0 0
        %1451 = vmatpush1.bf16.xpose.msra.mxu0 0
        %1452 = vmatprep.subr.bf16.mxu0 0
        %1453 = vmatpush1.bf16.xpose.msra.mxu0 0
        %1454 = vmatprep.subr.bf16.mxu0 0
        %1455 = vmatpush1.bf16.xpose.msra.mxu0 0
        %1456 = vmatprep.subr.bf16.mxu0 0
        %1457 = vmatpush1.bf16.xpose.msra.mxu0 0
        %1458 = vmatprep.subr.bf16.mxu0 0
        %1459 = vmatpush1.bf16.xpose.msra.mxu0 0
        %1460 = vmatprep.subr.bf16.mxu0 0
        %1461 = vmatpush1.bf16.xpose.msra.mxu0 0
        %1462 = vmatprep.subr.bf16.mxu0 0
        %1463 = vmatpush1.bf16.xpose.msra.mxu0 0
        %1464 = vmatprep.subr.bf16.mxu0 0
        %1465 = vmatpush1.bf16.xpose.msra.mxu0 0
        %1466 = vmatprep.subr.bf16.mxu0 0
        %1467 = vmatpush1.bf16.xpose.msra.mxu0 0
        %1468 = vmatprep.subr.bf16.mxu0 0
        %1469 = vmatpush1.bf16.xpose.msra.mxu0 0
        %1470 = vmatprep.mubr.bf16.mxu0 0
        %1471 = vmatmul.mubr.bf16.gmra.mrb[0].mxu0 %v1433
        %v1472 = vpop.f32.mrb[0].mxu0
        %v1473 = vadd.f32 0.0, %v1472
        %v1474 = vpop.f32.mrb[0].mxu0
        %v1475 = vpop.f32.mrb[0].mxu0
        %v1476 = vpop.f32.mrb[0].mxu0
        %1477 = vdwg.mxu0
        %v1479 = vsel %vm1431, %v1088, 0
        %v1482 = vsel %vm1431, %v1256, 0
        %1484 = vmatprep.subr.bf16.mxu0 0
        %1485 = vmatpush1.bf16.xpose.msra.mxu0 %v1482
        %1486 = vmatprep.subr.bf16.mxu0 0
        %1487 = vmatpush1.bf16.xpose.msra.mxu0 0
        %1488 = vmatprep.subr.bf16.mxu0 0
        %1489 = vmatpush1.bf16.xpose.msra.mxu0 0
        %1490 = vmatprep.subr.bf16.mxu0 0
        %1491 = vmatpush1.bf16.xpose.msra.mxu0 0
        %1492 = vmatprep.subr.bf16.mxu0 0
        %1493 = vmatpush1.bf16.xpose.msra.mxu0 0
        %1494 = vmatprep.subr.bf16.mxu0 0
        %1495 = vmatpush1.bf16.xpose.msra.mxu0 0
        %1496 = vmatprep.subr.bf16.mxu0 0
        %1497 = vmatpush1.bf16.xpose.msra.mxu0 0
        %1498 = vmatprep.subr.bf16.mxu0 0
        %1499 = vmatpush1.bf16.xpose.msra.mxu0 0
        %1500 = vmatprep.subr.bf16.mxu0 0
        %1501 = vmatpush1.bf16.xpose.msra.mxu0 0
        %1502 = vmatprep.subr.bf16.mxu0 0
        %1503 = vmatpush1.bf16.xpose.msra.mxu0 0
        %1504 = vmatprep.subr.bf16.mxu0 0
        %1505 = vmatpush1.bf16.xpose.msra.mxu0 0
        %1506 = vmatprep.subr.bf16.mxu0 0
        %1507 = vmatpush1.bf16.xpose.msra.mxu0 0
        %1508 = vmatprep.subr.bf16.mxu0 0
        %1509 = vmatpush1.bf16.xpose.msra.mxu0 0
        %1510 = vmatprep.subr.bf16.mxu0 0
        %1511 = vmatpush1.bf16.xpose.msra.mxu0 0
        %1512 = vmatprep.subr.bf16.mxu0 0
        %1513 = vmatpush1.bf16.xpose.msra.mxu0 0
        %1514 = vmatprep.subr.bf16.mxu0 0
        %1515 = vmatpush1.bf16.xpose.msra.mxu0 0
        %1516 = vmatprep.mubr.bf16.mxu0 0
        %1517 = vmatmul.mubr.bf16.gmra.mrb[0].mxu0 %v1479
        %v1518 = vpop.f32.mrb[0].mxu0
        %v1519 = vadd.f32 0.0, %v1518
        %v1520 = vpop.f32.mrb[0].mxu0
        %v1521 = vpop.f32.mrb[0].mxu0
        %v1522 = vpop.f32.mrb[0].mxu0
        %1523 = vdwg.mxu0
        %v1525 = vsel %vm1431, %v1091, 0
        %v1528 = vsel %vm1431, %v1259, 0
        %1530 = vmatprep.subr.bf16.mxu0 0
        %1531 = vmatpush1.bf16.xpose.msra.mxu0 %v1528
        %1532 = vmatprep.subr.bf16.mxu0 0
        %1533 = vmatpush1.bf16.xpose.msra.mxu0 0
        %1534 = vmatprep.subr.bf16.mxu0 0
        %1535 = vmatpush1.bf16.xpose.msra.mxu0 0
        %1536 = vmatprep.subr.bf16.mxu0 0
        %1537 = vmatpush1.bf16.xpose.msra.mxu0 0
        %1538 = vmatprep.subr.bf16.mxu0 0
        %1539 = vmatpush1.bf16.xpose.msra.mxu0 0
        %1540 = vmatprep.subr.bf16.mxu0 0
        %1541 = vmatpush1.bf16.xpose.msra.mxu0 0
        %1542 = vmatprep.subr.bf16.mxu0 0
        %1543 = vmatpush1.bf16.xpose.msra.mxu0 0
        %1544 = vmatprep.subr.bf16.mxu0 0
        %1545 = vmatpush1.bf16.xpose.msra.mxu0 0
        %1546 = vmatprep.subr.bf16.mxu0 0
        %1547 = vmatpush1.bf16.xpose.msra.mxu0 0
        %1548 = vmatprep.subr.bf16.mxu0 0
        %1549 = vmatpush1.bf16.xpose.msra.mxu0 0
        %1550 = vmatprep.subr.bf16.mxu0 0
        %1551 = vmatpush1.bf16.xpose.msra.mxu0 0
        %1552 = vmatprep.subr.bf16.mxu0 0
        %1553 = vmatpush1.bf16.xpose.msra.mxu0 0
        %1554 = vmatprep.subr.bf16.mxu0 0
        %1555 = vmatpush1.bf16.xpose.msra.mxu0 0
        %1556 = vmatprep.subr.bf16.mxu0 0
        %1557 = vmatpush1.bf16.xpose.msra.mxu0 0
        %1558 = vmatprep.subr.bf16.mxu0 0
        %1559 = vmatpush1.bf16.xpose.msra.mxu0 0
        %1560 = vmatprep.subr.bf16.mxu0 0
        %1561 = vmatpush1.bf16.xpose.msra.mxu0 0
        %1562 = vmatprep.mubr.bf16.mxu0 0
        %1563 = vmatmul.mubr.bf16.gmra.mrb[0].mxu0 %v1525
        %v1564 = vpop.f32.mrb[0].mxu0
        %v1565 = vadd.f32 0.0, %v1564
        %v1566 = vpop.f32.mrb[0].mxu0
        %v1567 = vpop.f32.mrb[0].mxu0
        %v1568 = vpop.f32.mrb[0].mxu0
        %1569 = vdwg.mxu0
        %v1571 = vsel %vm1431, %v1094, 0
        %v1574 = vsel %vm1431, %v1262, 0
        %1576 = vmatprep.subr.bf16.mxu0 0
        %1577 = vmatpush1.bf16.xpose.msra.mxu0 %v1574
        %1578 = vmatprep.subr.bf16.mxu0 0
        %1579 = vmatpush1.bf16.xpose.msra.mxu0 0
        %1580 = vmatprep.subr.bf16.mxu0 0
        %1581 = vmatpush1.bf16.xpose.msra.mxu0 0
        %1582 = vmatprep.subr.bf16.mxu0 0
        %1583 = vmatpush1.bf16.xpose.msra.mxu0 0
        %1584 = vmatprep.subr.bf16.mxu0 0
        %1585 = vmatpush1.bf16.xpose.msra.mxu0 0
        %1586 = vmatprep.subr.bf16.mxu0 0
        %1587 = vmatpush1.bf16.xpose.msra.mxu0 0
        %1588 = vmatprep.subr.bf16.mxu0 0
        %1589 = vmatpush1.bf16.xpose.msra.mxu0 0
        %1590 = vmatprep.subr.bf16.mxu0 0
        %1591 = vmatpush1.bf16.xpose.msra.mxu0 0
        %1592 = vmatprep.subr.bf16.mxu0 0
        %1593 = vmatpush1.bf16.xpose.msra.mxu0 0
        %1594 = vmatprep.subr.bf16.mxu0 0
        %1595 = vmatpush1.bf16.xpose.msra.mxu0 0
        %1596 = vmatprep.subr.bf16.mxu0 0
        %1597 = vmatpush1.bf16.xpose.msra.mxu0 0
        %1598 = vmatprep.subr.bf16.mxu0 0
        %1599 = vmatpush1.bf16.xpose.msra.mxu0 0
        %1600 = vmatprep.subr.bf16.mxu0 0
        %1601 = vmatpush1.bf16.xpose.msra.mxu0 0
        %1602 = vmatprep.subr.bf16.mxu0 0
        %1603 = vmatpush1.bf16.xpose.msra.mxu0 0
        %1604 = vmatprep.subr.bf16.mxu0 0
        %1605 = vmatpush1.bf16.xpose.msra.mxu0 0
        %1606 = vmatprep.subr.bf16.mxu0 0
        %1607 = vmatpush1.bf16.xpose.msra.mxu0 0
        %1608 = vmatprep.mubr.bf16.mxu0 0
        %1609 = vmatmul.mubr.bf16.gmra.mrb[0].mxu0 %v1571
        %v1610 = vpop.f32.mrb[0].mxu0
        %v1611 = vadd.f32 0.0, %v1610
        %v1612 = vpop.f32.mrb[0].mxu0
        %v1613 = vpop.f32.mrb[0].mxu0
        %v1614 = vpop.f32.mrb[0].mxu0
        %1615 = vdwg.mxu0
        %v1616 = vsel %vm1431, %v1473, -inf
        %1617 = vmax.xlane.f32.xlu0 %v1616
        %v1618 = vpop.xlane.xlu0 %1617
        %v1619 = vsel %vm1431, %v1519, -inf
        %1620 = vmax.xlane.f32.xlu0 %v1619
        %v1621 = vpop.xlane.xlu0 %1620
        %v1622 = vsel %vm1431, %v1565, -inf
        %1623 = vmax.xlane.f32.xlu0 %v1622
        %v1624 = vpop.xlane.xlu0 %1623
        %v1625 = vsel %vm1431, %v1611, -inf
        %1626 = vmax.xlane.f32.xlu0 %v1625
        %v1627 = vpop.xlane.xlu0 %1626
        %v1628 = vsub.f32 %v1473, %v1618
        %v1629 = vsub.f32 %v1519, %v1621
        %v1630 = vsub.f32 %v1565, %v1624
        %v1631 = vsub.f32 %v1611, %v1627
        %v1632 = vmul.f32 %v1628, 1.442695
        %v1633 = vpow.pop %v1632
        %v1634 = vmul.f32 %v1629, 1.442695
        %v1635 = vpow.pop %v1634
        %v1636 = vmul.f32 %v1630, 1.442695
        %v1637 = vpow.pop %v1636
        %v1638 = vmul.f32 %v1631, 1.442695
        %v1639 = vpow.pop %v1638
        %v1640 = vsel %vm1431, %v1633, 0.0
        %1641 = vadd.xlane.f32.xlu0 %v1640
        %v1642 = vpop.xlane.xlu0 %1641
        %v1643 = vsel %vm1431, %v1635, 0.0
        %1644 = vadd.xlane.f32.xlu0 %v1643
        %v1645 = vpop.xlane.xlu0 %1644
        %v1646 = vsel %vm1431, %v1637, 0.0
        %1647 = vadd.xlane.f32.xlu0 %v1646
        %v1648 = vpop.xlane.xlu0 %1647
        %v1649 = vsel %vm1431, %v1639, 0.0
        %1650 = vadd.xlane.f32.xlu0 %v1649
        %v1651 = vpop.xlane.xlu0 %1650
        %v1652 = vrcp.pop %v1642
        %v1653 = vrcp.pop %v1645
        %v1654 = vrcp.pop %v1648
        %v1655 = vrcp.pop %v1651
        %v1656 = vmul.f32 %v1633, %v1652
        %v1657 = vmul.f32 %v1635, %v1653
        %v1658 = vmul.f32 %v1637, %v1654
        %v1659 = vmul.f32 %v1639, %v1655
        %v1660 = vpack.c.bf16 %v1656, %v1656
        %v1661 = vpack.c.bf16 %v1657, %v1657
        %v1662 = vpack.c.bf16 %v1658, %v1658
        %v1663 = vpack.c.bf16 %v1659, %v1659
        %v1665 = vsel %vm1431, %v1660, 0
        %vm1667 = vcmask 1043456
        %v1669 = vsel %vm1667, %v1421, 0
        %1671 = vmatprep.subr.bf16.mxu0 0
        %1672 = vmatpush1.bf16.msra.mxu0 %v1669
        %1673 = vmatprep.subr.bf16.mxu0 0
        %1674 = vmatpush1.bf16.msra.mxu0 0
        %1675 = vmatprep.subr.bf16.mxu0 0
        %1676 = vmatpush1.bf16.msra.mxu0 0
        %1677 = vmatprep.subr.bf16.mxu0 0
        %1678 = vmatpush1.bf16.msra.mxu0 0
        %1679 = vmatprep.subr.bf16.mxu0 0
        %1680 = vmatpush1.bf16.msra.mxu0 0
        %1681 = vmatprep.subr.bf16.mxu0 0
        %1682 = vmatpush1.bf16.msra.mxu0 0
        %1683 = vmatprep.subr.bf16.mxu0 0
        %1684 = vmatpush1.bf16.msra.mxu0 0
        %1685 = vmatprep.subr.bf16.mxu0 0
        %1686 = vmatpush1.bf16.msra.mxu0 0
        %1687 = vmatprep.subr.bf16.mxu0 0
        %1688 = vmatpush1.bf16.msra.mxu0 0
        %1689 = vmatprep.subr.bf16.mxu0 0
        %1690 = vmatpush1.bf16.msra.mxu0 0
        %1691 = vmatprep.subr.bf16.mxu0 0
        %1692 = vmatpush1.bf16.msra.mxu0 0
        %1693 = vmatprep.subr.bf16.mxu0 0
        %1694 = vmatpush1.bf16.msra.mxu0 0
        %1695 = vmatprep.subr.bf16.mxu0 0
        %1696 = vmatpush1.bf16.msra.mxu0 0
        %1697 = vmatprep.subr.bf16.mxu0 0
        %1698 = vmatpush1.bf16.msra.mxu0 0
        %1699 = vmatprep.subr.bf16.mxu0 0
        %1700 = vmatpush1.bf16.msra.mxu0 0
        %1701 = vmatprep.subr.bf16.mxu0 0
        %1702 = vmatpush1.bf16.msra.mxu0 0
        %1703 = vmatprep.mubr.bf16.mxu0 0
        %1704 = vmatmul.mubr.bf16.gmra.mrb[0].mxu0 %v1665
        %v1705 = vpop.f32.mrb[0].mxu0
        %v1706 = vadd.f32 0.0, %v1705
        %v1707 = vpop.f32.mrb[0].mxu0
        %v1708 = vpop.f32.mrb[0].mxu0
        %v1709 = vpop.f32.mrb[0].mxu0
        %1710 = vdwg.mxu0
        %v1712 = vsel %vm1431, %v1661, 0
        %v1715 = vsel %vm1667, %v1424, 0
        %1717 = vmatprep.subr.bf16.mxu0 0
        %1718 = vmatpush1.bf16.msra.mxu0 %v1715
        %1719 = vmatprep.subr.bf16.mxu0 0
        %1720 = vmatpush1.bf16.msra.mxu0 0
        %1721 = vmatprep.subr.bf16.mxu0 0
        %1722 = vmatpush1.bf16.msra.mxu0 0
        %1723 = vmatprep.subr.bf16.mxu0 0
        %1724 = vmatpush1.bf16.msra.mxu0 0
        %1725 = vmatprep.subr.bf16.mxu0 0
        %1726 = vmatpush1.bf16.msra.mxu0 0
        %1727 = vmatprep.subr.bf16.mxu0 0
        %1728 = vmatpush1.bf16.msra.mxu0 0
        %1729 = vmatprep.subr.bf16.mxu0 0
        %1730 = vmatpush1.bf16.msra.mxu0 0
        %1731 = vmatprep.subr.bf16.mxu0 0
        %1732 = vmatpush1.bf16.msra.mxu0 0
        %1733 = vmatprep.subr.bf16.mxu0 0
        %1734 = vmatpush1.bf16.msra.mxu0 0
        %1735 = vmatprep.subr.bf16.mxu0 0
        %1736 = vmatpush1.bf16.msra.mxu0 0
        %1737 = vmatprep.subr.bf16.mxu0 0
        %1738 = vmatpush1.bf16.msra.mxu0 0
        %1739 = vmatprep.subr.bf16.mxu0 0
        %1740 = vmatpush1.bf16.msra.mxu0 0
        %1741 = vmatprep.subr.bf16.mxu0 0
        %1742 = vmatpush1.bf16.msra.mxu0 0
        %1743 = vmatprep.subr.bf16.mxu0 0
        %1744 = vmatpush1.bf16.msra.mxu0 0
        %1745 = vmatprep.subr.bf16.mxu0 0
        %1746 = vmatpush1.bf16.msra.mxu0 0
        %1747 = vmatprep.subr.bf16.mxu0 0
        %1748 = vmatpush1.bf16.msra.mxu0 0
        %1749 = vmatprep.mubr.bf16.mxu0 0
        %1750 = vmatmul.mubr.bf16.gmra.mrb[0].mxu0 %v1712
        %v1751 = vpop.f32.mrb[0].mxu0
        %v1752 = vadd.f32 0.0, %v1751
        %v1753 = vpop.f32.mrb[0].mxu0
        %v1754 = vpop.f32.mrb[0].mxu0
        %v1755 = vpop.f32.mrb[0].mxu0
        %1756 = vdwg.mxu0
        %v1758 = vsel %vm1431, %v1662, 0
        %v1761 = vsel %vm1667, %v1427, 0
        %1763 = vmatprep.subr.bf16.mxu0 0
        %1764 = vmatpush1.bf16.msra.mxu0 %v1761
        %1765 = vmatprep.subr.bf16.mxu0 0
        %1766 = vmatpush1.bf16.msra.mxu0 0
        %1767 = vmatprep.subr.bf16.mxu0 0
        %1768 = vmatpush1.bf16.msra.mxu0 0
        %1769 = vmatprep.subr.bf16.mxu0 0
        %1770 = vmatpush1.bf16.msra.mxu0 0
        %1771 = vmatprep.subr.bf16.mxu0 0
        %1772 = vmatpush1.bf16.msra.mxu0 0
        %1773 = vmatprep.subr.bf16.mxu0 0
        %1774 = vmatpush1.bf16.msra.mxu0 0
        %1775 = vmatprep.subr.bf16.mxu0 0
        %1776 = vmatpush1.bf16.msra.mxu0 0
        %1777 = vmatprep.subr.bf16.mxu0 0
        %1778 = vmatpush1.bf16.msra.mxu0 0
        %1779 = vmatprep.subr.bf16.mxu0 0
        %1780 = vmatpush1.bf16.msra.mxu0 0
        %1781 = vmatprep.subr.bf16.mxu0 0
        %1782 = vmatpush1.bf16.msra.mxu0 0
        %1783 = vmatprep.subr.bf16.mxu0 0
        %1784 = vmatpush1.bf16.msra.mxu0 0
        %1785 = vmatprep.subr.bf16.mxu0 0
        %1786 = vmatpush1.bf16.msra.mxu0 0
        %1787 = vmatprep.subr.bf16.mxu0 0
        %1788 = vmatpush1.bf16.msra.mxu0 0
        %1789 = vmatprep.subr.bf16.mxu0 0
        %1790 = vmatpush1.bf16.msra.mxu0 0
        %1791 = vmatprep.subr.bf16.mxu0 0
        %1792 = vmatpush1.bf16.msra.mxu0 0
        %1793 = vmatprep.subr.bf16.mxu0 0
        %1794 = vmatpush1.bf16.msra.mxu0 0
        %1795 = vmatprep.mubr.bf16.mxu0 0
        %1796 = vmatmul.mubr.bf16.gmra.mrb[0].mxu0 %v1758
        %v1797 = vpop.f32.mrb[0].mxu0
        %v1798 = vadd.f32 0.0, %v1797
        %v1799 = vpop.f32.mrb[0].mxu0
        %v1800 = vpop.f32.mrb[0].mxu0
        %v1801 = vpop.f32.mrb[0].mxu0
        %1802 = vdwg.mxu0
        %v1804 = vsel %vm1431, %v1663, 0
        %v1807 = vsel %vm1667, %v1430, 0
        %1809 = vmatprep.subr.bf16.mxu0 0
        %1810 = vmatpush1.bf16.msra.mxu0 %v1807
        %1811 = vmatprep.subr.bf16.mxu0 0
        %1812 = vmatpush1.bf16.msra.mxu0 0
        %1813 = vmatprep.subr.bf16.mxu0 0
        %1814 = vmatpush1.bf16.msra.mxu0 0
        %1815 = vmatprep.subr.bf16.mxu0 0
        %1816 = vmatpush1.bf16.msra.mxu0 0
        %1817 = vmatprep.subr.bf16.mxu0 0
        %1818 = vmatpush1.bf16.msra.mxu0 0
        %1819 = vmatprep.subr.bf16.mxu0 0
        %1820 = vmatpush1.bf16.msra.mxu0 0
        %1821 = vmatprep.subr.bf16.mxu0 0
        %1822 = vmatpush1.bf16.msra.mxu0 0
        %1823 = vmatprep.subr.bf16.mxu0 0
        %1824 = vmatpush1.bf16.msra.mxu0 0
        %1825 = vmatprep.subr.bf16.mxu0 0
        %1826 = vmatpush1.bf16.msra.mxu0 0
        %1827 = vmatprep.subr.bf16.mxu0 0
        %1828 = vmatpush1.bf16.msra.mxu0 0
        %1829 = vmatprep.subr.bf16.mxu0 0
        %1830 = vmatpush1.bf16.msra.mxu0 0
        %1831 = vmatprep.subr.bf16.mxu0 0
        %1832 = vmatpush1.bf16.msra.mxu0 0
        %1833 = vmatprep.subr.bf16.mxu0 0
        %1834 = vmatpush1.bf16.msra.mxu0 0
        %1835 = vmatprep.subr.bf16.mxu0 0
        %1836 = vmatpush1.bf16.msra.mxu0 0
        %1837 = vmatprep.subr.bf16.mxu0 0
        %1838 = vmatpush1.bf16.msra.mxu0 0
        %1839 = vmatprep.subr.bf16.mxu0 0
        %1840 = vmatpush1.bf16.msra.mxu0 0
        %1841 = vmatprep.mubr.bf16.mxu0 0
        %1842 = vmatmul.mubr.bf16.gmra.mrb[0].mxu0 %v1804
        %v1843 = vpop.f32.mrb[0].mxu0
        %v1844 = vadd.f32 0.0, %v1843
        %v1845 = vpop.f32.mrb[0].mxu0
        %v1846 = vpop.f32.mrb[0].mxu0
        %v1847 = vpop.f32.mrb[0].mxu0
        %1848 = vdwg.mxu0
        %v1849 = vpack.c.bf16 %v1706, %v1706
        %v1850 = vld [vmem:[%s9] sm:$0xf]
        %v1852 = vsel %vm1431, %v1849, 0
        %v1855 = vsel %vm1667, %v1850, 0
        %1857 = vmatprep.subr.bf16.mxu0 0
        %1858 = vmatpush1.bf16.msra.mxu0 %v1855
        %1859 = vmatprep.subr.bf16.mxu0 0
        %1860 = vmatpush1.bf16.msra.mxu0 0
        %1861 = vmatprep.subr.bf16.mxu0 0
        %1862 = vmatpush1.bf16.msra.mxu0 0
        %1863 = vmatprep.subr.bf16.mxu0 0
        %1864 = vmatpush1.bf16.msra.mxu0 0
        %1865 = vmatprep.subr.bf16.mxu0 0
        %1866 = vmatpush1.bf16.msra.mxu0 0
        %1867 = vmatprep.subr.bf16.mxu0 0
        %1868 = vmatpush1.bf16.msra.mxu0 0
        %1869 = vmatprep.subr.bf16.mxu0 0
        %1870 = vmatpush1.bf16.msra.mxu0 0
        %1871 = vmatprep.subr.bf16.mxu0 0
        %1872 = vmatpush1.bf16.msra.mxu0 0
        %1873 = vmatprep.subr.bf16.mxu0 0
        %1874 = vmatpush1.bf16.msra.mxu0 0
        %1875 = vmatprep.subr.bf16.mxu0 0
        %1876 = vmatpush1.bf16.msra.mxu0 0
        %1877 = vmatprep.subr.bf16.mxu0 0
        %1878 = vmatpush1.bf16.msra.mxu0 0
        %1879 = vmatprep.subr.bf16.mxu0 0
        %1880 = vmatpush1.bf16.msra.mxu0 0
        %1881 = vmatprep.subr.bf16.mxu0 0
        %1882 = vmatpush1.bf16.msra.mxu0 0
        %1883 = vmatprep.subr.bf16.mxu0 0
        %1884 = vmatpush1.bf16.msra.mxu0 0
        %1885 = vmatprep.subr.bf16.mxu0 0
        %1886 = vmatpush1.bf16.msra.mxu0 0
        %1887 = vmatprep.subr.bf16.mxu0 0
        %1888 = vmatpush1.bf16.msra.mxu0 0
        %1889 = vmatprep.mubr.bf16.mxu0 0
        %1890 = vmatmul.mubr.bf16.gmra.mrb[0].mxu0 %v1852
        %v1891 = vpop.f32.mrb[0].mxu0
        %v1892 = vadd.f32 0.0, %v1891
        %v1893 = vpop.f32.mrb[0].mxu0
        %v1894 = vpop.f32.mrb[0].mxu0
        %v1895 = vpop.f32.mrb[0].mxu0
        %1896 = vdwg.mxu0
        %v1897 = vadd.f32 %v925, %v1892
        %v1898 = vpack.c.bf16 %v1752, %v1752
        %s1899 = scalar_lea.vmem %s9, 4
        %v1900 = vld [vmem:[%s1899] sm:$0xf]
        %v1902 = vsel %vm1431, %v1898, 0
        %v1905 = vsel %vm1667, %v1900, 0
        %1907 = vmatprep.subr.bf16.mxu0 0
        %1908 = vmatpush1.bf16.msra.mxu0 %v1905
        %1909 = vmatprep.subr.bf16.mxu0 0
        %1910 = vmatpush1.bf16.msra.mxu0 0
        %1911 = vmatprep.subr.bf16.mxu0 0
        %1912 = vmatpush1.bf16.msra.mxu0 0
        %1913 = vmatprep.subr.bf16.mxu0 0
        %1914 = vmatpush1.bf16.msra.mxu0 0
        %1915 = vmatprep.subr.bf16.mxu0 0
        %1916 = vmatpush1.bf16.msra.mxu0 0
        %1917 = vmatprep.subr.bf16.mxu0 0
        %1918 = vmatpush1.bf16.msra.mxu0 0
        %1919 = vmatprep.subr.bf16.mxu0 0
        %1920 = vmatpush1.bf16.msra.mxu0 0
        %1921 = vmatprep.subr.bf16.mxu0 0
        %1922 = vmatpush1.bf16.msra.mxu0 0
        %1923 = vmatprep.subr.bf16.mxu0 0
        %1924 = vmatpush1.bf16.msra.mxu0 0
        %1925 = vmatprep.subr.bf16.mxu0 0
        %1926 = vmatpush1.bf16.msra.mxu0 0
        %1927 = vmatprep.subr.bf16.mxu0 0
        %1928 = vmatpush1.bf16.msra.mxu0 0
        %1929 = vmatprep.subr.bf16.mxu0 0
        %1930 = vmatpush1.bf16.msra.mxu0 0
        %1931 = vmatprep.subr.bf16.mxu0 0
        %1932 = vmatpush1.bf16.msra.mxu0 0
        %1933 = vmatprep.subr.bf16.mxu0 0
        %1934 = vmatpush1.bf16.msra.mxu0 0
        %1935 = vmatprep.subr.bf16.mxu0 0
        %1936 = vmatpush1.bf16.msra.mxu0 0
        %1937 = vmatprep.subr.bf16.mxu0 0
        %1938 = vmatpush1.bf16.msra.mxu0 0
        %1939 = vmatprep.mubr.bf16.mxu0 0
        %1940 = vmatmul.mubr.bf16.gmra.mrb[0].mxu0 %v1902
        %v1941 = vpop.f32.mrb[0].mxu0
        %v1942 = vadd.f32 0.0, %v1941
        %v1943 = vpop.f32.mrb[0].mxu0
        %v1944 = vpop.f32.mrb[0].mxu0
        %v1945 = vpop.f32.mrb[0].mxu0
        %1946 = vdwg.mxu0
        %v1947 = vadd.f32 %v1897, %v1942
        %v1948 = vpack.c.bf16 %v1798, %v1798
        %s1949 = scalar_lea.vmem %s9, 8
        %v1950 = vld [vmem:[%s1949] sm:$0xf]
        %v1952 = vsel %vm1431, %v1948, 0
        %v1955 = vsel %vm1667, %v1950, 0
        %1957 = vmatprep.subr.bf16.mxu0 0
        %1958 = vmatpush1.bf16.msra.mxu0 %v1955
        %1959 = vmatprep.subr.bf16.mxu0 0
        %1960 = vmatpush1.bf16.msra.mxu0 0
        %1961 = vmatprep.subr.bf16.mxu0 0
        %1962 = vmatpush1.bf16.msra.mxu0 0
        %1963 = vmatprep.subr.bf16.mxu0 0
        %1964 = vmatpush1.bf16.msra.mxu0 0
        %1965 = vmatprep.subr.bf16.mxu0 0
        %1966 = vmatpush1.bf16.msra.mxu0 0
        %1967 = vmatprep.subr.bf16.mxu0 0
        %1968 = vmatpush1.bf16.msra.mxu0 0
        %1969 = vmatprep.subr.bf16.mxu0 0
        %1970 = vmatpush1.bf16.msra.mxu0 0
        %1971 = vmatprep.subr.bf16.mxu0 0
        %1972 = vmatpush1.bf16.msra.mxu0 0
        %1973 = vmatprep.subr.bf16.mxu0 0
        %1974 = vmatpush1.bf16.msra.mxu0 0
        %1975 = vmatprep.subr.bf16.mxu0 0
        %1976 = vmatpush1.bf16.msra.mxu0 0
        %1977 = vmatprep.subr.bf16.mxu0 0
        %1978 = vmatpush1.bf16.msra.mxu0 0
        %1979 = vmatprep.subr.bf16.mxu0 0
        %1980 = vmatpush1.bf16.msra.mxu0 0
        %1981 = vmatprep.subr.bf16.mxu0 0
        %1982 = vmatpush1.bf16.msra.mxu0 0
        %1983 = vmatprep.subr.bf16.mxu0 0
        %1984 = vmatpush1.bf16.msra.mxu0 0
        %1985 = vmatprep.subr.bf16.mxu0 0
        %1986 = vmatpush1.bf16.msra.mxu0 0
        %1987 = vmatprep.subr.bf16.mxu0 0
        %1988 = vmatpush1.bf16.msra.mxu0 0
        %1989 = vmatprep.mubr.bf16.mxu0 0
        %1990 = vmatmul.mubr.bf16.gmra.mrb[0].mxu0 %v1952
        %v1991 = vpop.f32.mrb[0].mxu0
        %v1992 = vadd.f32 0.0, %v1991
        %v1993 = vpop.f32.mrb[0].mxu0
        %v1994 = vpop.f32.mrb[0].mxu0
        %v1995 = vpop.f32.mrb[0].mxu0
        %1996 = vdwg.mxu0
        %v1997 = vadd.f32 %v1947, %v1992
        %v1998 = vpack.c.bf16 %v1844, %v1844
        %s1999 = scalar_lea.vmem %s9, 12
        %v2000 = vld [vmem:[%s1999] sm:$0xf]
        %v2002 = vsel %vm1431, %v1998, 0
        %v2005 = vsel %vm1667, %v2000, 0
        %2007 = vmatprep.subr.bf16.mxu0 0
        %2008 = vmatpush1.bf16.msra.mxu0 %v2005
        %2009 = vmatprep.subr.bf16.mxu0 0
        %2010 = vmatpush1.bf16.msra.mxu0 0
        %2011 = vmatprep.subr.bf16.mxu0 0
        %2012 = vmatpush1.bf16.msra.mxu0 0
        %2013 = vmatprep.subr.bf16.mxu0 0
        %2014 = vmatpush1.bf16.msra.mxu0 0
        %2015 = vmatprep.subr.bf16.mxu0 0
        %2016 = vmatpush1.bf16.msra.mxu0 0
        %2017 = vmatprep.subr.bf16.mxu0 0
        %2018 = vmatpush1.bf16.msra.mxu0 0
        %2019 = vmatprep.subr.bf16.mxu0 0
        %2020 = vmatpush1.bf16.msra.mxu0 0
        %2021 = vmatprep.subr.bf16.mxu0 0
        %2022 = vmatpush1.bf16.msra.mxu0 0
        %2023 = vmatprep.subr.bf16.mxu0 0
        %2024 = vmatpush1.bf16.msra.mxu0 0
        %2025 = vmatprep.subr.bf16.mxu0 0
        %2026 = vmatpush1.bf16.msra.mxu0 0
        %2027 = vmatprep.subr.bf16.mxu0 0
        %2028 = vmatpush1.bf16.msra.mxu0 0
        %2029 = vmatprep.subr.bf16.mxu0 0
        %2030 = vmatpush1.bf16.msra.mxu0 0
        %2031 = vmatprep.subr.bf16.mxu0 0
        %2032 = vmatpush1.bf16.msra.mxu0 0
        %2033 = vmatprep.subr.bf16.mxu0 0
        %2034 = vmatpush1.bf16.msra.mxu0 0
        %2035 = vmatprep.subr.bf16.mxu0 0
        %2036 = vmatpush1.bf16.msra.mxu0 0
        %2037 = vmatprep.subr.bf16.mxu0 0
        %2038 = vmatpush1.bf16.msra.mxu0 0
        %2039 = vmatprep.mubr.bf16.mxu0 0
        %2040 = vmatmul.mubr.bf16.gmra.mrb[0].mxu0 %v2002
        %v2041 = vpop.f32.mrb[0].mxu0
        %v2042 = vadd.f32 0.0, %v2041
        %v2043 = vpop.f32.mrb[0].mxu0
        %v2044 = vpop.f32.mrb[0].mxu0
        %v2045 = vpop.f32.mrb[0].mxu0
        %2046 = vdwg.mxu0
        %v2047 = vadd.f32 %v1997, %v2042
        %v2048 = vadd.f32 %v711, %v2047
        %v2049 = vld [vmem:[#allocation10] sm:$0x1]
        %v2050 = vld [vmem:[#allocation11] sm:$0x1]
        %v2051 = vsel %vm738, %v2048, 0.0
        %2052 = vadd.xlane.f32.xlu0 %v2051
        %v2053 = vpop.xlane.xlu0 %2052
        %v2054 = vrcp.pop 32.0
        %v2055 = vmul.f32 %v2053, %v2054
        %v2056 = vsub.f32 %v2048, %v2055
        %v2057 = vmul.f32 %v2056, %v2056
        %v2058 = vsel %vm738, %v2057, 0.0
        %2059 = vadd.xlane.f32.xlu0 %v2058
        %v2060 = vpop.xlane.xlu0 %2059
        %v2061 = vmul.f32 %v2060, %v2054
        %v2062 = vadd.f32 %v2061, 1e-05
        %v2063 = vrsqrt.pop %v2062
        %v2064 = vmul.f32 %v2056, %v2063
        %v2066 = vlaneseq
        %v2067 = vshrl.u32 %v2066, 7
        %v2068 = vsub.s32 0, %v2067
        %v2069 = vrot.slane %v2049, %v2068
        %v2071 = vmul.f32 %v2064, %v2069
        %v2073 = vlaneseq
        %v2074 = vshrl.u32 %v2073, 7
        %v2075 = vsub.s32 0, %v2074
        %v2076 = vrot.slane %v2050, %v2075
        %v2078 = vadd.f32 %v2071, %v2076
        %v2079 = vpack.c.bf16 %v2078, %v2078
        %v2080 = vld [vmem:[%s13] sm:$0xf]
        %v2081 = vld [vmem:[%s13 + $0x4] sm:$0xf]
        %v2082 = vld [vmem:[%s13 + $0x8] sm:$0xf]
        %v2083 = vld [vmem:[%s13 + $0xc] sm:$0xf]
        %v2084 = vld [vmem:[%s14] sm:$0x1]
        %v2086 = vlaneseq
        %v2087 = vshrl.u32 %v2086, 7
        %v2088 = vsub.s32 0, %v2087
        %v2089 = vrot.slane %v2084, %v2088
        %v2095 = vunpack.c.l.b16 %v2080
        %v2096 = vunpack.c.l.b16 %v2081
        %v2097 = vunpack.c.l.b16 %v2082
        %v2098 = vunpack.c.l.b16 %v2083
        %v2099 = vpack.c.b16 %v2096, %v2095
        %v2100 = vpack.c.b16 %v2098, %v2097
        %v2104 = vsel %vm738, %v2079, 0
        %2106 = vmatprep.subr.bf16.mxu0 0
        %2107 = vmatpush1.bf16.msra.mxu0 %v2099
        %2108 = vmatprep.subr.bf16.mxu0 0
        %2109 = vmatpush1.bf16.msra.mxu0 %v2100
        %2110 = vmatprep.subr.bf16.mxu0 0
        %2111 = vmatpush1.bf16.msra.mxu0 0
        %2112 = vmatprep.subr.bf16.mxu0 0
        %2113 = vmatpush1.bf16.msra.mxu0 0
        %2114 = vmatprep.subr.bf16.mxu0 0
        %2115 = vmatpush1.bf16.msra.mxu0 0
        %2116 = vmatprep.subr.bf16.mxu0 0
        %2117 = vmatpush1.bf16.msra.mxu0 0
        %2118 = vmatprep.subr.bf16.mxu0 0
        %2119 = vmatpush1.bf16.msra.mxu0 0
        %2120 = vmatprep.subr.bf16.mxu0 0
        %2121 = vmatpush1.bf16.msra.mxu0 0
        %2122 = vmatprep.subr.bf16.mxu0 0
        %2123 = vmatpush1.bf16.msra.mxu0 0
        %2124 = vmatprep.subr.bf16.mxu0 0
        %2125 = vmatpush1.bf16.msra.mxu0 0
        %2126 = vmatprep.subr.bf16.mxu0 0
        %2127 = vmatpush1.bf16.msra.mxu0 0
        %2128 = vmatprep.subr.bf16.mxu0 0
        %2129 = vmatpush1.bf16.msra.mxu0 0
        %2130 = vmatprep.subr.bf16.mxu0 0
        %2131 = vmatpush1.bf16.msra.mxu0 0
        %2132 = vmatprep.subr.bf16.mxu0 0
        %2133 = vmatpush1.bf16.msra.mxu0 0
        %2134 = vmatprep.subr.bf16.mxu0 0
        %2135 = vmatpush1.bf16.msra.mxu0 0
        %2136 = vmatprep.subr.bf16.mxu0 0
        %2137 = vmatpush1.bf16.msra.mxu0 0
        %2138 = vmatprep.mubr.bf16.mxu0 0
        %2139 = vmatmul.mubr.bf16.gmra.mrb[0].mxu0 %v2104
        %v2140 = vpop.f32.mrb[0].mxu0
        %v2141 = vadd.f32 %v2089, %v2140
        %v2142 = vpop.f32.mrb[0].mxu0
        %v2143 = vpop.f32.mrb[0].mxu0
        %v2144 = vpop.f32.mrb[0].mxu0
        %2145 = vdwg.mxu0
        %v2146 = vmax.f32 %v2141, 0.0
        %v2147 = vpack.c.bf16 %v2146, %v2146
        %v2148 = vld [vmem:[%s15] sm:$0xf]
        %v2149 = vld [vmem:[%s15 + $0x4] sm:$0xf]
        %v2150 = vld [vmem:[%s15 + $0x8] sm:$0xf]
        %v2151 = vld [vmem:[%s15 + $0xc] sm:$0xf]
        %v2152 = vld [vmem:[%s15 + $0x10] sm:$0xf]
        %v2153 = vld [vmem:[%s15 + $0x14] sm:$0xf]
        %v2154 = vld [vmem:[%s15 + $0x18] sm:$0xf]
        %v2155 = vld [vmem:[%s15 + $0x1c] sm:$0xf]
        %v2156 = vld [vmem:[%s15 + $0x20] sm:$0xf]
        %v2157 = vld [vmem:[%s15 + $0x24] sm:$0xf]
        %v2158 = vld [vmem:[%s15 + $0x28] sm:$0xf]
        %v2159 = vld [vmem:[%s15 + $0x2c] sm:$0xf]
        %v2160 = vld [vmem:[%s15 + $0x30] sm:$0xf]
        %v2161 = vld [vmem:[%s15 + $0x34] sm:$0xf]
        %v2162 = vld [vmem:[%s15 + $0x38] sm:$0xf]
        %v2163 = vld [vmem:[%s15 + $0x3c] sm:$0xf]
        %v2164 = vld [vmem:[%s16] sm:$0x1]
        %v2166 = vlaneseq
        %v2167 = vshrl.u32 %v2166, 7
        %v2168 = vsub.s32 0, %v2167
        %v2169 = vrot.slane %v2164, %v2168
        %v2187 = vunpack.c.l.b16 %v2148
        %v2188 = vunpack.c.l.b16 %v2149
        %v2189 = vunpack.c.l.b16 %v2150
        %v2190 = vunpack.c.l.b16 %v2151
        %v2191 = vunpack.c.l.b16 %v2152
        %v2192 = vunpack.c.l.b16 %v2153
        %v2193 = vunpack.c.l.b16 %v2154
        %v2194 = vunpack.c.l.b16 %v2155
        %v2195 = vunpack.c.l.b16 %v2156
        %v2196 = vunpack.c.l.b16 %v2157
        %v2197 = vunpack.c.l.b16 %v2158
        %v2198 = vunpack.c.l.b16 %v2159
        %v2199 = vunpack.c.l.b16 %v2160
        %v2200 = vunpack.c.l.b16 %v2161
        %v2201 = vunpack.c.l.b16 %v2162
        %v2202 = vunpack.c.l.b16 %v2163
        %v2203 = vpack.c.b16 %v2188, %v2187
        %v2204 = vpack.c.b16 %v2190, %v2189
        %v2205 = vpack.c.b16 %v2192, %v2191
        %v2206 = vpack.c.b16 %v2194, %v2193
        %v2207 = vpack.c.b16 %v2196, %v2195
        %v2208 = vpack.c.b16 %v2198, %v2197
        %v2209 = vpack.c.b16 %v2200, %v2199
        %v2210 = vpack.c.b16 %v2202, %v2201
        %2219 = vmatprep.subr.bf16.mxu0 0
        %2220 = vmatpush1.bf16.msra.mxu0 %v2203
        %2221 = vmatprep.subr.bf16.mxu0 0
        %2222 = vmatpush1.bf16.msra.mxu0 %v2204
        %2223 = vmatprep.subr.bf16.mxu0 0
        %2224 = vmatpush1.bf16.msra.mxu0 %v2205
        %2225 = vmatprep.subr.bf16.mxu0 0
        %2226 = vmatpush1.bf16.msra.mxu0 %v2206
        %2227 = vmatprep.subr.bf16.mxu0 0
        %2228 = vmatpush1.bf16.msra.mxu0 %v2207
        %2229 = vmatprep.subr.bf16.mxu0 0
        %2230 = vmatpush1.bf16.msra.mxu0 %v2208
        %2231 = vmatprep.subr.bf16.mxu0 0
        %2232 = vmatpush1.bf16.msra.mxu0 %v2209
        %2233 = vmatprep.subr.bf16.mxu0 0
        %2234 = vmatpush1.bf16.msra.mxu0 %v2210
        %2235 = vmatprep.subr.bf16.mxu0 0
        %2236 = vmatpush1.bf16.msra.mxu0 0
        %2237 = vmatprep.subr.bf16.mxu0 0
        %2238 = vmatpush1.bf16.msra.mxu0 0
        %2239 = vmatprep.subr.bf16.mxu0 0
        %2240 = vmatpush1.bf16.msra.mxu0 0
        %2241 = vmatprep.subr.bf16.mxu0 0
        %2242 = vmatpush1.bf16.msra.mxu0 0
        %2243 = vmatprep.subr.bf16.mxu0 0
        %2244 = vmatpush1.bf16.msra.mxu0 0
        %2245 = vmatprep.subr.bf16.mxu0 0
        %2246 = vmatpush1.bf16.msra.mxu0 0
        %2247 = vmatprep.subr.bf16.mxu0 0
        %2248 = vmatpush1.bf16.msra.mxu0 0
        %2249 = vmatprep.subr.bf16.mxu0 0
        %2250 = vmatpush1.bf16.msra.mxu0 0
        %2251 = vmatprep.mubr.bf16.mxu0 0
        %2252 = vmatmul.mubr.bf16.gmra.mrb[0].mxu0 %v2147
        %v2253 = vpop.f32.mrb[0].mxu0
        %v2254 = vadd.f32 %v2169, %v2253
        %v2255 = vpop.f32.mrb[0].mxu0
        %v2256 = vpop.f32.mrb[0].mxu0
        %v2257 = vpop.f32.mrb[0].mxu0
        %2258 = vdwg.mxu0
        %v2259 = vadd.f32 %v2078, %v2254
        %v2260 = vld [vmem:[%s17] sm:$0x1]
        %v2261 = vld [vmem:[%s18] sm:$0x1]
        %v2262 = vsel %vm738, %v2259, 0.0
        %2263 = vadd.xlane.f32.xlu0 %v2262
        %v2264 = vpop.xlane.xlu0 %2263
        %v2265 = vmul.f32 %v2264, %v2054
        %v2266 = vsub.f32 %v2259, %v2265
        %v2267 = vmul.f32 %v2266, %v2266
        %v2268 = vsel %vm738, %v2267, 0.0
        %2269 = vadd.xlane.f32.xlu0 %v2268
        %v2270 = vpop.xlane.xlu0 %2269
        %v2271 = vmul.f32 %v2270, %v2054
        %v2272 = vadd.f32 %v2271, 1e-05
        %v2273 = vrsqrt.pop %v2272
        %v2274 = vmul.f32 %v2266, %v2273
        %v2276 = vlaneseq
        %v2277 = vshrl.u32 %v2276, 7
        %v2278 = vsub.s32 0, %v2277
        %v2279 = vrot.slane %v2260, %v2278
        %v2281 = vmul.f32 %v2274, %v2279
        %v2283 = vlaneseq
        %v2284 = vshrl.u32 %v2283, 7
        %v2285 = vsub.s32 0, %v2284
        %v2286 = vrot.slane %v2261, %v2285
        %v2288 = vadd.f32 %v2281, %v2286
        %2289 = vst.msk [vmem:[%s697] sm:$0xff] %vm738, %v2288
        %s2290 = sand.u32 %s459, 1
        %s2291 = scalar_lea.sflag [#allocation4], %s2290
        %s2292 = sand.u32 %s459, 1
        %s2293 = smul.addr %s2292, 8
        %s2294 = scalar_lea.vmem [#allocation13], %s2293
        // Predicated region
        $region121: #{tpu_custom_call.1} parent=95 // pred_check
          %p2295 = pneg %p469
        $region122: #{tpu_custom_call.1} parent=95 // pred_check_branch
          %2297 = sbr.rel (%p2295) target = $region124
        $region123: #{tpu_custom_call.1} parent=95 // pred_region
          %s2299 = ssub.s32 128, 128
          %2300 = vsyncadd %s2291, %s2299
          %s2301 = smul.addr %s37, 128
          %s2302 = scalar_lea.hbm %s19, %s2301
          %s2304 = sshll.u32 %s2294, 4
          %s2305 = int_to_ptr.vmem [resolvable:$true] %s2304
          %2307 = dma.vmem_to_hbm [thread:$0]  %s2305, 128, %s2302, %s2291
        $region124: #{tpu_custom_call.1} parent=95 // pred_fallthru
          _
      $region96: #{tpu_custom_call.1} parent=5 // pred_fallthru
        _
      %p2308 = scmp.le.s32.totalorder 2, %s32
      // Predicated region
      $region125: #{tpu_custom_call.1} parent=5 // pred_check
        %p2309 = pneg %p2308
      $region126: #{tpu_custom_call.1} parent=5 // pred_check_branch
        %2311 = sbr.rel (%p2309) target = $region128
      $region127: #{tpu_custom_call.1} parent=5 // pred_region
        %s2312 = ssub.s32 %s32, 2
        // Predicated region
        $region129: #{tpu_custom_call.1} parent=127 // pred_check
          %p2313 = pneg %p475
        $region130: #{tpu_custom_call.1} parent=127 // pred_check_branch
          %2315 = sbr.rel (%p2313) target = $region132
        $region131: #{tpu_custom_call.1} parent=127 // pred_region
          %s2316 = sand.u32 %s460, 1
          %s2317 = scalar_lea.sflag [#allocation4], %s2316
          %s2318 = sand.u32 %s460, 1
          %s2319 = smul.addr %s2318, 8
          %s2320 = scalar_lea.vmem [#allocation13], %s2319
          %2321 = dma.done %s2317, 128
        $region132: #{tpu_custom_call.1} parent=127 // pred_fallthru
          _
      $region128: #{tpu_custom_call.1} parent=5 // pred_fallthru
        _
    $region6: #{tpu_custom_call.1} parent=1 // loop_footer
      %s36 = sadd.s32 1, %s32
    $region7: #{tpu_custom_call.1} parent=1 // loop_footer_branch
      %31 = sbr.rel target = $region3
    $region8: #{tpu_custom_call.1} parent=1 // loop_exit
      _
    %2322 = vsyncpa [#allocation3], 1
    %s2323 = scalar_lea.sflag [#allocation3], 1
    %2324 = vsyncpa %s2323, 1
    %2325 = vsyncpa [#allocation6], 1
    %2326 = vsyncpa [#allocation9], 1
    %2327 = vsyncpa [#allocation12], 1
    %2328 = vsyncpa [#allocation4], 1
    %s2329 = scalar_lea.sflag [#allocation4], 1
    %2330 = vsyncpa %s2329, 1

// kernel: tpu_custom_call.1
$region0: #{tpu_custom_call.1}
  #allocation0 [shape = 'u32[]', space=smem, size = 0x4, offset = 0x4, fixed_abs, tag = 'smem constant byte address 0x4 - core index']
  #allocation1 [shape = 'u32[144,128]{1,0:T(1,128)}', space=vmem, size = 0x12000, scoped, tag = 'internal scratch']
  %s0 = inlined_call_operand.vmem [shape: f32[16,32], index: 0, kind: input, shape index: {}]
  %s1 = inlined_call_operand.vmem [shape: f32[16,32], index: 1, kind: input, shape index: {}]
  %s2 = inlined_call_operand.vmem [shape: f32[16,32], index: 2, kind: input, shape index: {}]
  %s3 = inlined_call_operand.vmem [shape: bf16[32,32], index: 3, kind: input, shape index: {}]
  %s4 = inlined_call_operand.vmem [shape: bf16[32,32], index: 4, kind: input, shape index: {}]
  %s5 = inlined_call_operand.hbm [shape: bf16[32,32], index: 5, kind: input, shape index: {}]
  %s6 = inlined_call_operand.vmem [shape: f32[1,32], index: 6, kind: input, shape index: {}]
  %s7 = inlined_call_operand.hbm [shape: f32[1,32], index: 7, kind: input, shape index: {}]
  %s8 = inlined_call_operand.hbm [shape: f32[1,32], index: 8, kind: input, shape index: {}]
  %s9 = inlined_call_operand.vmem [shape: bf16[4,8,32], index: 9, kind: input, shape index: {}]
  %s10 = inlined_call_operand.hbm [shape: f32[1,32], index: 10, kind: input, shape index: {}]
  %s11 = inlined_call_operand.hbm [shape: f32[1,32], index: 11, kind: input, shape index: {}]
  %s12 = inlined_call_operand.hbm [shape: f32[1,32], index: 12, kind: input, shape index: {}]
  %s13 = inlined_call_operand.vmem [shape: bf16[32,128], index: 13, kind: input, shape index: {}]
  %s14 = inlined_call_operand.vmem [shape: f32[1,128], index: 14, kind: input, shape index: {}]
  %s15 = inlined_call_operand.vmem [shape: bf16[128,32], index: 15, kind: input, shape index: {}]
  %s16 = inlined_call_operand.vmem [shape: f32[1,32], index: 16, kind: input, shape index: {}]
  %s17 = inlined_call_operand.vmem [shape: f32[1,32], index: 17, kind: input, shape index: {}]
  %s18 = inlined_call_operand.vmem [shape: f32[1,32], index: 18, kind: input, shape index: {}]
  %s19 = inlined_call_operand.hbm [shape: f32[16,32], index: 19, kind: output, shape index: {}]
  %s20 = sld [smem:[#allocation0]]
  $region133: #{tpu_custom_call.1} parent=0
    _
  %s22 = ssub.s32 1, %s20
  %s23 = scalar_select 0, %s22, %s20
  $region1: #{tpu_custom_call.1} parent=0
    #allocation2 [shape = 'u8[8192]{0}', space=vmem, size = 0x2000, scoped, tag = 'input window, operand 5, single buffered']
    #allocation3 [shape = 's32[2]{0}', space=sflag, size = 0x8, scoped, tag = 'scoped memory for tpu_custom_call.1']
    #allocation4 [shape = 's32[2]{0}', space=sflag, size = 0x8, scoped, tag = 'scoped memory for tpu_custom_call.1']
    #allocation5 [shape = 'u8[512]{0}', space=vmem, size = 0x400, scoped, tag = 'input window, operand 7, single buffered']
    #allocation6 [shape = 's32[1]{0}', space=sflag, size = 0x4, scoped, tag = 'scoped memory for tpu_custom_call.1']
    #allocation7 [shape = 'u8[512]{0}', space=vmem, size = 0x400, scoped, tag = 'input window, operand 8, single buffered']
    #allocation8 [shape = 'u8[512]{0}', space=vmem, size = 0x400, scoped, tag = 'input window, operand 10, single buffered']
    #allocation9 [shape = 's32[1]{0}', space=sflag, size = 0x4, scoped, tag = 'scoped memory for tpu_custom_call.1']
    #allocation10 [shape = 'u8[512]{0}', space=vmem, size = 0x400, scoped, tag = 'input window, operand 11, single buffered']
    #allocation11 [shape = 'u8[512]{0}', space=vmem, size = 0x400, scoped, tag = 'input window, operand 12, single buffered']
    #allocation12 [shape = 's32[1]{0}', space=sflag, size = 0x4, scoped, tag = 'scoped memory for tpu_custom_call.1']
    #allocation13 [shape = 'u8[8192]{0}', space=vmem, size = 0x2000, scoped, tag = 'output window, operand 0']
    %24 = vsyncpa [#allocation3], 0
    %25 = vsyncpa [#allocation6], 0
    %26 = vsyncpa [#allocation9], 0
    %27 = vsyncpa [#allocation12], 0
    %28 = vsyncpa [#allocation4], 0
    %s29 = scalar_lea.sflag [#allocation4], 1
    %30 = vsyncpa %s29, 0
    loop: start=0, step=1, limit=4
    $region2: #{tpu_custom_call.1} parent=1 // loop_pre_header
      _
    $region3: #{tpu_custom_call.1} parent=1 // loop_header
      %s32 = sphi 0, %s36
      %p33 = scmp.ge.s32.totalorder %s32, 4
      %s42 = sphi 0, %s44
      %s45 = sphi 0, %s42
      %s46 = sphi 0, %s45
      %s62 = sphi 0, %s46
      %s68 = sphi 0, %s70
      %s71 = sphi 0, %s68
      %s72 = sphi 0, %s71
      %s88 = sphi 0, %s72
      %s94 = sphi 0, %s96
      %s97 = sphi 0, %s94
      %s98 = sphi 0, %s97
      %s114 = sphi 0, %s98
      %s118 = sphi 0, %s118
      %s120 = sphi 0, %s118
      %s121 = sphi 0, %s120
      %s135 = sphi 0, %s121
      %s139 = sphi 0, %s139
      %s141 = sphi 0, %s139
      %s142 = sphi 0, %s141
      %s156 = sphi 0, %s142
      %s160 = sphi 0, %s160
      %s162 = sphi 0, %s160
      %s163 = sphi 0, %s162
      %s177 = sphi 0, %s163
      %s181 = sphi 0, %s181
      %s183 = sphi 0, %s181
      %s184 = sphi 0, %s183
      %s198 = sphi 0, %s184
      %s202 = sphi 0, %s202
      %s204 = sphi 0, %s202
      %s205 = sphi 0, %s204
      %s219 = sphi 0, %s205
      %s223 = sphi 0, %s223
      %s225 = sphi 0, %s223
      %s226 = sphi 0, %s225
      %s240 = sphi 0, %s226
      %s244 = sphi 0, %s244
      %s246 = sphi 0, %s244
      %s247 = sphi 0, %s246
      %s261 = sphi 0, %s247
      %s265 = sphi 0, %s265
      %s267 = sphi 0, %s265
      %s268 = sphi 0, %s267
      %s282 = sphi 0, %s268
      %s286 = sphi 0, %s286
      %s288 = sphi 0, %s286
      %s289 = sphi 0, %s288
      %s303 = sphi 0, %s289
      %s307 = sphi 0, %s307
      %s309 = sphi 0, %s307
      %s310 = sphi 0, %s309
      %s324 = sphi 0, %s310
      %s328 = sphi 0, %s328
      %s330 = sphi 0, %s328
      %s331 = sphi 0, %s330
      %s345 = sphi 0, %s331
      %s349 = sphi 0, %s349
      %s351 = sphi 0, %s349
      %s352 = sphi 0, %s351
      %s366 = sphi 0, %s352
      %s370 = sphi 0, %s370
      %s372 = sphi 0, %s370
      %s373 = sphi 0, %s372
      %s387 = sphi 0, %s373
      %s391 = sphi 0, %s391
      %s393 = sphi 0, %s391
      %s394 = sphi 0, %s393
      %s408 = sphi 0, %s394
      %s412 = sphi 0, %s412
      %s414 = sphi 0, %s412
      %s415 = sphi 0, %s414
      %s429 = sphi 0, %s415
      %s433 = sphi 0, %s433
      %s435 = sphi 0, %s433
      %s436 = sphi 0, %s435
      %s450 = sphi 0, %s436
      %s456 = sphi 0, %s458
      %s459 = sphi 0, %s456
      %s460 = sphi 0, %s459
      %s476 = sphi 0, %s460
    $region4: #{tpu_custom_call.1} parent=1 // loop_header_branch
      %35 = sbr.rel (%p33) target = $region8
    $region5: #{tpu_custom_call.1} parent=1 // loop_body
      %s37 = ssub.s32 %s32, 1
      %s38 = ssub.s32 %s32, 2
      %s39 = sadd.s32 %s32, 1
      %s40 = ssub.s32 %s32, %s39
      %p41 = scmp.eq.s32.totalorder %s40, 0
      %s43 = sadd.s32 %s42, 1
      %s44 = scalar_select %p41, %s42, %s43
      %p47 = pneg %p41
      %p48 = scmp.eq.s32.totalorder %s32, 1
      %p49 = por %p47, %p48
      %p50 = scmp.ne.s32.totalorder %s42, %s45
      %p51 = scmp.eq.s32.totalorder %s32, 0
      %p52 = por %p50, %p51
      %p53 = scmp.ne.s32.totalorder %s42, %s45
      %p54 = scmp.eq.s32.totalorder %s37, 1
      %p55 = por %p53, %p54
      %p56 = scmp.ne.s32.totalorder %s45, %s46
      %p57 = scmp.eq.s32.totalorder %s37, 0
      %p58 = por %p56, %p57
      %p59 = scmp.ne.s32.totalorder %s45, %s46
      %p60 = scmp.eq.s32.totalorder %s38, 1
      %p61 = por %p59, %p60
      %p63 = scmp.ne.s32.totalorder %s46, %s62
      %p64 = scmp.eq.s32.totalorder %s38, 0
      %p65 = por %p63, %p64
      %s66 = ssub.s32 %s32, %s39
      %p67 = scmp.eq.s32.totalorder %s66, 0
      %s69 = sadd.s32 %s68, 1
      %s70 = scalar_select %p67, %s68, %s69
      %p73 = pneg %p67
      %p74 = scmp.eq.s32.totalorder %s32, 1
      %p75 = por %p73, %p74
      %p76 = scmp.ne.s32.totalorder %s68, %s71
      %p77 = scmp.eq.s32.totalorder %s32, 0
      %p78 = por %p76, %p77
      %p79 = scmp.ne.s32.totalorder %s68, %s71
      %p80 = scmp.eq.s32.totalorder %s37, 1
      %p81 = por %p79, %p80
      %p82 = scmp.ne.s32.totalorder %s71, %s72
      %p83 = scmp.eq.s32.totalorder %s37, 0
      %p84 = por %p82, %p83
      %p85 = scmp.ne.s32.totalorder %s71, %s72
      %p86 = scmp.eq.s32.totalorder %s38, 1
      %p87 = por %p85, %p86
      %p89 = scmp.ne.s32.totalorder %s72, %s88
      %p90 = scmp.eq.s32.totalorder %s38, 0
      %p91 = por %p89, %p90
      %s92 = ssub.s32 %s32, %s39
      %p93 = scmp.eq.s32.totalorder %s92, 0
      %s95 = sadd.s32 %s94, 1
      %s96 = scalar_select %p93, %s94, %s95
      %p99 = pneg %p93
      %p100 = scmp.eq.s32.totalorder %s32, 1
      %p101 = por %p99, %p100
      %p102 = scmp.ne.s32.totalorder %s94, %s97
      %p103 = scmp.eq.s32.totalorder %s32, 0
      %p104 = por %p102, %p103
      %p105 = scmp.ne.s32.totalorder %s94, %s97
      %p106 = scmp.eq.s32.totalorder %s37, 1
      %p107 = por %p105, %p106
      %p108 = scmp.ne.s32.totalorder %s97, %s98
      %p109 = scmp.eq.s32.totalorder %s37, 0
      %p110 = por %p108, %p109
      %p111 = scmp.ne.s32.totalorder %s97, %s98
      %p112 = scmp.eq.s32.totalorder %s38, 1
      %p113 = por %p111, %p112
      %p115 = scmp.ne.s32.totalorder %s98, %s114
      %p116 = scmp.eq.s32.totalorder %s38, 0
      %p117 = por %p115, %p116
      %s119 = sadd.s32 %s118, 1
      %p122 = scmp.eq.s32.totalorder %s32, 1
      %p123 = scmp.ne.s32.totalorder %s118, %s120
      %p124 = scmp.eq.s32.totalorder %s32, 0
      %p125 = por %p123, %p124
      %p126 = scmp.ne.s32.totalorder %s118, %s120
      %p127 = scmp.eq.s32.totalorder %s37, 1
      %p128 = por %p126, %p127
      %p129 = scmp.ne.s32.totalorder %s120, %s121
      %p130 = scmp.eq.s32.totalorder %s37, 0
      %p131 = por %p129, %p130
      %p132 = scmp.ne.s32.totalorder %s120, %s121
      %p133 = scmp.eq.s32.totalorder %s38, 1
      %p134 = por %p132, %p133
      %p136 = scmp.ne.s32.totalorder %s121, %s135
      %p137 = scmp.eq.s32.totalorder %s38, 0
      %p138 = por %p136, %p137
      %s140 = sadd.s32 %s139, 1
      %p143 = scmp.eq.s32.totalorder %s32, 1
      %p144 = scmp.ne.s32.totalorder %s139, %s141
      %p145 = scmp.eq.s32.totalorder %s32, 0
      %p146 = por %p144, %p145
      %p147 = scmp.ne.s32.totalorder %s139, %s141
      %p148 = scmp.eq.s32.totalorder %s37, 1
      %p149 = por %p147, %p148
      %p150 = scmp.ne.s32.totalorder %s141, %s142
      %p151 = scmp.eq.s32.totalorder %s37, 0
      %p152 = por %p150, %p151
      %p153 = scmp.ne.s32.totalorder %s141, %s142
      %p154 = scmp.eq.s32.totalorder %s38, 1
      %p155 = por %p153, %p154
      %p157 = scmp.ne.s32.totalorder %s142, %s156
      %p158 = scmp.eq.s32.totalorder %s38, 0
      %p159 = por %p157, %p158
      %s161 = sadd.s32 %s160, 1
      %p164 = scmp.eq.s32.totalorder %s32, 1
      %p165 = scmp.ne.s32.totalorder %s160, %s162
      %p166 = scmp.eq.s32.totalorder %s32, 0
      %p167 = por %p165, %p166
      %p168 = scmp.ne.s32.totalorder %s160, %s162
      %p169 = scmp.eq.s32.totalorder %s37, 1
      %p170 = por %p168, %p169
      %p171 = scmp.ne.s32.totalorder %s162, %s163
      %p172 = scmp.eq.s32.totalorder %s37, 0
      %p173 = por %p171, %p172
      %p174 = scmp.ne.s32.totalorder %s162, %s163
      %p175 = scmp.eq.s32.totalorder %s38, 1
      %p176 = por %p174, %p175
      %p178 = scmp.ne.s32.totalorder %s163, %s177
      %p179 = scmp.eq.s32.totalorder %s38, 0
      %p180 = por %p178, %p179
      %s182 = sadd.s32 %s181, 1
      %p185 = scmp.eq.s32.totalorder %s32, 1
      %p186 = scmp.ne.s32.totalorder %s181, %s183
      %p187 = scmp.eq.s32.totalorder %s32, 0
      %p188 = por %p186, %p187
      %p189 = scmp.ne.s32.totalorder %s181, %s183
      %p190 = scmp.eq.s32.totalorder %s37, 1
      %p191 = por %p189, %p190
      %p192 = scmp.ne.s32.totalorder %s183, %s184
      %p193 = scmp.eq.s32.totalorder %s37, 0
      %p194 = por %p192, %p193
      %p195 = scmp.ne.s32.totalorder %s183, %s184
      %p196 = scmp.eq.s32.totalorder %s38, 1
      %p197 = por %p195, %p196
      %p199 = scmp.ne.s32.totalorder %s184, %s198
      %p200 = scmp.eq.s32.totalorder %s38, 0
      %p201 = por %p199, %p200
      %s203 = sadd.s32 %s202, 1
      %p206 = scmp.eq.s32.totalorder %s32, 1
      %p207 = scmp.ne.s32.totalorder %s202, %s204
      %p208 = scmp.eq.s32.totalorder %s32, 0
      %p209 = por %p207, %p208
      %p210 = scmp.ne.s32.totalorder %s202, %s204
      %p211 = scmp.eq.s32.totalorder %s37, 1
      %p212 = por %p210, %p211
      %p213 = scmp.ne.s32.totalorder %s204, %s205
      %p214 = scmp.eq.s32.totalorder %s37, 0
      %p215 = por %p213, %p214
      %p216 = scmp.ne.s32.totalorder %s204, %s205
      %p217 = scmp.eq.s32.totalorder %s38, 1
      %p218 = por %p216, %p217
      %p220 = scmp.ne.s32.totalorder %s205, %s219
      %p221 = scmp.eq.s32.totalorder %s38, 0
      %p222 = por %p220, %p221
      %s224 = sadd.s32 %s223, 1
      %p227 = scmp.eq.s32.totalorder %s32, 1
      %p228 = scmp.ne.s32.totalorder %s223, %s225
      %p229 = scmp.eq.s32.totalorder %s32, 0
      %p230 = por %p228, %p229
      %p231 = scmp.ne.s32.totalorder %s223, %s225
      %p232 = scmp.eq.s32.totalorder %s37, 1
      %p233 = por %p231, %p232
      %p234 = scmp.ne.s32.totalorder %s225, %s226
      %p235 = scmp.eq.s32.totalorder %s37, 0
      %p236 = por %p234, %p235
      %p237 = scmp.ne.s32.totalorder %s225, %s226
      %p238 = scmp.eq.s32.totalorder %s38, 1
      %p239 = por %p237, %p238
      %p241 = scmp.ne.s32.totalorder %s226, %s240
      %p242 = scmp.eq.s32.totalorder %s38, 0
      %p243 = por %p241, %p242
      %s245 = sadd.s32 %s244, 1
      %p248 = scmp.eq.s32.totalorder %s32, 1
      %p249 = scmp.ne.s32.totalorder %s244, %s246
      %p250 = scmp.eq.s32.totalorder %s32, 0
      %p251 = por %p249, %p250
      %p252 = scmp.ne.s32.totalorder %s244, %s246
      %p253 = scmp.eq.s32.totalorder %s37, 1
      %p254 = por %p252, %p253
      %p255 = scmp.ne.s32.totalorder %s246, %s247
      %p256 = scmp.eq.s32.totalorder %s37, 0
      %p257 = por %p255, %p256
      %p258 = scmp.ne.s32.totalorder %s246, %s247
      %p259 = scmp.eq.s32.totalorder %s38, 1
      %p260 = por %p258, %p259
      %p262 = scmp.ne.s32.totalorder %s247, %s261
      %p263 = scmp.eq.s32.totalorder %s38, 0
      %p264 = por %p262, %p263
      %s266 = sadd.s32 %s265, 1
      %p269 = scmp.eq.s32.totalorder %s32, 1
      %p270 = scmp.ne.s32.totalorder %s265, %s267
      %p271 = scmp.eq.s32.totalorder %s32, 0
      %p272 = por %p270, %p271
      %p273 = scmp.ne.s32.totalorder %s265, %s267
      %p274 = scmp.eq.s32.totalorder %s37, 1
      %p275 = por %p273, %p274
      %p276 = scmp.ne.s32.totalorder %s267, %s268
      %p277 = scmp.eq.s32.totalorder %s37, 0
      %p278 = por %p276, %p277
      %p279 = scmp.ne.s32.totalorder %s267, %s268
      %p280 = scmp.eq.s32.totalorder %s38, 1
      %p281 = por %p279, %p280
      %p283 = scmp.ne.s32.totalorder %s268, %s282
      %p284 = scmp.eq.s32.totalorder %s38, 0
      %p285 = por %p283, %p284
      %s287 = sadd.s32 %s286, 1
      %p290 = scmp.eq.s32.totalorder %s32, 1
      %p291 = scmp.ne.s32.totalorder %s286, %s288
      %p292 = scmp.eq.s32.totalorder %s32, 0
      %p293 = por %p291, %p292
      %p294 = scmp.ne.s32.totalorder %s286, %s288
      %p295 = scmp.eq.s32.totalorder %s37, 1
      %p296 = por %p294, %p295
      %p297 = scmp.ne.s32.totalorder %s288, %s289
      %p298 = scmp.eq.s32.totalorder %s37, 0
      %p299 = por %p297, %p298
      %p300 = scmp.ne.s32.totalorder %s288, %s289
      %p301 = scmp.eq.s32.totalorder %s38, 1
      %p302 = por %p300, %p301
      %p304 = scmp.ne.s32.totalorder %s289, %s303
      %p305 = scmp.eq.s32.totalorder %s38, 0
      %p306 = por %p304, %p305
      %s308 = sadd.s32 %s307, 1
      %p311 = scmp.eq.s32.totalorder %s32, 1
      %p312 = scmp.ne.s32.totalorder %s307, %s309
      %p313 = scmp.eq.s32.totalorder %s32, 0
      %p314 = por %p312, %p313
      %p315 = scmp.ne.s32.totalorder %s307, %s309
      %p316 = scmp.eq.s32.totalorder %s37, 1
      %p317 = por %p315, %p316
      %p318 = scmp.ne.s32.totalorder %s309, %s310
      %p319 = scmp.eq.s32.totalorder %s37, 0
      %p320 = por %p318, %p319
      %p321 = scmp.ne.s32.totalorder %s309, %s310
      %p322 = scmp.eq.s32.totalorder %s38, 1
      %p323 = por %p321, %p322
      %p325 = scmp.ne.s32.totalorder %s310, %s324
      %p326 = scmp.eq.s32.totalorder %s38, 0
      %p327 = por %p325, %p326
      %s329 = sadd.s32 %s328, 1
      %p332 = scmp.eq.s32.totalorder %s32, 1
      %p333 = scmp.ne.s32.totalorder %s328, %s330
      %p334 = scmp.eq.s32.totalorder %s32, 0
      %p335 = por %p333, %p334
      %p336 = scmp.ne.s32.totalorder %s328, %s330
      %p337 = scmp.eq.s32.totalorder %s37, 1
      %p338 = por %p336, %p337
      %p339 = scmp.ne.s32.totalorder %s330, %s331
      %p340 = scmp.eq.s32.totalorder %s37, 0
      %p341 = por %p339, %p340
      %p342 = scmp.ne.s32.totalorder %s330, %s331
      %p343 = scmp.eq.s32.totalorder %s38, 1
      %p344 = por %p342, %p343
      %p346 = scmp.ne.s32.totalorder %s331, %s345
      %p347 = scmp.eq.s32.totalorder %s38, 0
      %p348 = por %p346, %p347
      %s350 = sadd.s32 %s349, 1
      %p353 = scmp.eq.s32.totalorder %s32, 1
      %p354 = scmp.ne.s32.totalorder %s349, %s351
      %p355 = scmp.eq.s32.totalorder %s32, 0
      %p356 = por %p354, %p355
      %p357 = scmp.ne.s32.totalorder %s349, %s351
      %p358 = scmp.eq.s32.totalorder %s37, 1
      %p359 = por %p357, %p358
      %p360 = scmp.ne.s32.totalorder %s351, %s352
      %p361 = scmp.eq.s32.totalorder %s37, 0
      %p362 = por %p360, %p361
      %p363 = scmp.ne.s32.totalorder %s351, %s352
      %p364 = scmp.eq.s32.totalorder %s38, 1
      %p365 = por %p363, %p364
      %p367 = scmp.ne.s32.totalorder %s352, %s366
      %p368 = scmp.eq.s32.totalorder %s38, 0
      %p369 = por %p367, %p368
      %s371 = sadd.s32 %s370, 1
      %p374 = scmp.eq.s32.totalorder %s32, 1
      %p375 = scmp.ne.s32.totalorder %s370, %s372
      %p376 = scmp.eq.s32.totalorder %s32, 0
      %p377 = por %p375, %p376
      %p378 = scmp.ne.s32.totalorder %s370, %s372
      %p379 = scmp.eq.s32.totalorder %s37, 1
      %p380 = por %p378, %p379
      %p381 = scmp.ne.s32.totalorder %s372, %s373
      %p382 = scmp.eq.s32.totalorder %s37, 0
      %p383 = por %p381, %p382
      %p384 = scmp.ne.s32.totalorder %s372, %s373
      %p385 = scmp.eq.s32.totalorder %s38, 1
      %p386 = por %p384, %p385
      %p388 = scmp.ne.s32.totalorder %s373, %s387
      %p389 = scmp.eq.s32.totalorder %s38, 0
      %p390 = por %p388, %p389
      %s392 = sadd.s32 %s391, 1
      %p395 = scmp.eq.s32.totalorder %s32, 1
      %p396 = scmp.ne.s32.totalorder %s391, %s393
      %p397 = scmp.eq.s32.totalorder %s32, 0
      %p398 = por %p396, %p397
      %p399 = scmp.ne.s32.totalorder %s391, %s393
      %p400 = scmp.eq.s32.totalorder %s37, 1
      %p401 = por %p399, %p400
      %p402 = scmp.ne.s32.totalorder %s393, %s394
      %p403 = scmp.eq.s32.totalorder %s37, 0
      %p404 = por %p402, %p403
      %p405 = scmp.ne.s32.totalorder %s393, %s394
      %p406 = scmp.eq.s32.totalorder %s38, 1
      %p407 = por %p405, %p406
      %p409 = scmp.ne.s32.totalorder %s394, %s408
      %p410 = scmp.eq.s32.totalorder %s38, 0
      %p411 = por %p409, %p410
      %s413 = sadd.s32 %s412, 1
      %p416 = scmp.eq.s32.totalorder %s32, 1
      %p417 = scmp.ne.s32.totalorder %s412, %s414
      %p418 = scmp.eq.s32.totalorder %s32, 0
      %p419 = por %p417, %p418
      %p420 = scmp.ne.s32.totalorder %s412, %s414
      %p421 = scmp.eq.s32.totalorder %s37, 1
      %p422 = por %p420, %p421
      %p423 = scmp.ne.s32.totalorder %s414, %s415
      %p424 = scmp.eq.s32.totalorder %s37, 0
      %p425 = por %p423, %p424
      %p426 = scmp.ne.s32.totalorder %s414, %s415
      %p427 = scmp.eq.s32.totalorder %s38, 1
      %p428 = por %p426, %p427
      %p430 = scmp.ne.s32.totalorder %s415, %s429
      %p431 = scmp.eq.s32.totalorder %s38, 0
      %p432 = por %p430, %p431
      %s434 = sadd.s32 %s433, 1
      %p437 = scmp.eq.s32.totalorder %s32, 1
      %p438 = scmp.ne.s32.totalorder %s433, %s435
      %p439 = scmp.eq.s32.totalorder %s32, 0
      %p440 = por %p438, %p439
      %p441 = scmp.ne.s32.totalorder %s433, %s435
      %p442 = scmp.eq.s32.totalorder %s37, 1
      %p443 = por %p441, %p442
      %p444 = scmp.ne.s32.totalorder %s435, %s436
      %p445 = scmp.eq.s32.totalorder %s37, 0
      %p446 = por %p444, %p445
      %p447 = scmp.ne.s32.totalorder %s435, %s436
      %p448 = scmp.eq.s32.totalorder %s38, 1
      %p449 = por %p447, %p448
      %p451 = scmp.ne.s32.totalorder %s436, %s450
      %p452 = scmp.eq.s32.totalorder %s38, 0
      %p453 = por %p451, %p452
      %s454 = ssub.s32 %s32, %s39
      %p455 = scmp.eq.s32.totalorder %s454, 0
      %s457 = sadd.s32 %s456, 1
      %s458 = scalar_select %p455, %s456, %s457
      %p461 = pneg %p455
      %p462 = scmp.eq.s32.totalorder %s32, 1
      %p463 = por %p461, %p462
      %p464 = scmp.ne.s32.totalorder %s456, %s459
      %p465 = scmp.eq.s32.totalorder %s32, 0
      %p466 = por %p464, %p465
      %p467 = scmp.ne.s32.totalorder %s456, %s459
      %p468 = scmp.eq.s32.totalorder %s37, 1
      %p469 = por %p467, %p468
      %p470 = scmp.ne.s32.totalorder %s459, %s460
      %p471 = scmp.eq.s32.totalorder %s37, 0
      %p472 = por %p470, %p471
      %p473 = scmp.ne.s32.totalorder %s459, %s460
      %p474 = scmp.eq.s32.totalorder %s38, 1
      %p475 = por %p473, %p474
      %p477 = scmp.ne.s32.totalorder %s460, %s476
      %p478 = scmp.eq.s32.totalorder %s38, 0
      %p479 = por %p477, %p478
      %p480 = scmp.le.s32.totalorder 1, %s32
      %p481 = scmp.lt.s32.totalorder %s32, 3
      %p482 = pnand %p480, %p481
      %p483 = pneg %p482
      // Predicated region
      $region9: #{tpu_custom_call.1} parent=5 // pred_check
        _
      $region10: #{tpu_custom_call.1} parent=5 // pred_check_branch
        %485 = sbr.rel (%p482) target = $region12
      $region11: #{tpu_custom_call.1} parent=5 // pred_region
        %s486 = ssub.s32 %s32, 1
        // Predicated region
        $region13: #{tpu_custom_call.1} parent=11 // pred_check
          %p487 = pneg %p131
        $region14: #{tpu_custom_call.1} parent=11 // pred_check_branch
          %489 = sbr.rel (%p487) target = $region16
        $region15: #{tpu_custom_call.1} parent=11 // pred_region
          _
        $region16: #{tpu_custom_call.1} parent=11 // pred_fallthru
          _
        // Predicated region
        $region17: #{tpu_custom_call.1} parent=11 // pred_check
          %p490 = pneg %p152
        $region18: #{tpu_custom_call.1} parent=11 // pred_check_branch
          %492 = sbr.rel (%p490) target = $region20
        $region19: #{tpu_custom_call.1} parent=11 // pred_region
          _
        $region20: #{tpu_custom_call.1} parent=11 // pred_fallthru
          _
        // Predicated region
        $region21: #{tpu_custom_call.1} parent=11 // pred_check
          %p493 = pneg %p173
        $region22: #{tpu_custom_call.1} parent=11 // pred_check_branch
          %495 = sbr.rel (%p493) target = $region24
        $region23: #{tpu_custom_call.1} parent=11 // pred_region
          %s497 = ssub.s32 256, 256
          %498 = vsyncadd [#allocation3], %s497
          %s499 = sshll.u32 [#allocation2], 4
          %s500 = int_to_ptr.vmem [resolvable:$true] %s499
          %505 = dma.hbm_to_vmem [thread:$0]  %s5, 256, %s500, [#allocation3], 64, 64, 4
        $region24: #{tpu_custom_call.1} parent=11 // pred_fallthru
          _
        // Predicated region
        $region25: #{tpu_custom_call.1} parent=11 // pred_check
          %p506 = pneg %p194
        $region26: #{tpu_custom_call.1} parent=11 // pred_check_branch
          %508 = sbr.rel (%p506) target = $region28
        $region27: #{tpu_custom_call.1} parent=11 // pred_region
          _
        $region28: #{tpu_custom_call.1} parent=11 // pred_fallthru
          _
        // Predicated region
        $region29: #{tpu_custom_call.1} parent=11 // pred_check
          %p509 = pneg %p215
        $region30: #{tpu_custom_call.1} parent=11 // pred_check_branch
          %511 = sbr.rel (%p509) target = $region32
        $region31: #{tpu_custom_call.1} parent=11 // pred_region
          %s513 = ssub.s32 16, 16
          %514 = vsyncadd [#allocation6], %s513
          %s516 = sshll.u32 [#allocation5], 4
          %s517 = int_to_ptr.vmem [resolvable:$true] %s516
          %519 = dma.hbm_to_vmem [thread:$0]  %s7, 16, %s517, [#allocation6]
        $region32: #{tpu_custom_call.1} parent=11 // pred_fallthru
          _
        // Predicated region
        $region33: #{tpu_custom_call.1} parent=11 // pred_check
          %p520 = pneg %p236
        $region34: #{tpu_custom_call.1} parent=11 // pred_check_branch
          %522 = sbr.rel (%p520) target = $region36
        $region35: #{tpu_custom_call.1} parent=11 // pred_region
          %s524 = ssub.s32 16, 16
          %525 = vsyncadd [#allocation6], %s524
          %s527 = sshll.u32 [#allocation7], 4
          %s528 = int_to_ptr.vmem [resolvable:$true] %s527
          %530 = dma.hbm_to_vmem [thread:$0]  %s8, 16, %s528, [#allocation6]
        $region36: #{tpu_custom_call.1} parent=11 // pred_fallthru
          _
        // Predicated region
        $region37: #{tpu_custom_call.1} parent=11 // pred_check
          %p531 = pneg %p257
        $region38: #{tpu_custom_call.1} parent=11 // pred_check_branch
          %533 = sbr.rel (%p531) target = $region40
        $region39: #{tpu_custom_call.1} parent=11 // pred_region
          _
        $region40: #{tpu_custom_call.1} parent=11 // pred_fallthru
          _
        // Predicated region
        $region41: #{tpu_custom_call.1} parent=11 // pred_check
          %p534 = pneg %p278
        $region42: #{tpu_custom_call.1} parent=11 // pred_check_branch
          %536 = sbr.rel (%p534) target = $region44
        $region43: #{tpu_custom_call.1} parent=11 // pred_region
          %s538 = ssub.s32 16, 16
          %539 = vsyncadd [#allocation9], %s538
          %s541 = sshll.u32 [#allocation8], 4
          %s542 = int_to_ptr.vmem [resolvable:$true] %s541
          %544 = dma.hbm_to_vmem [thread:$0]  %s10, 16, %s542, [#allocation9]
        $region44: #{tpu_custom_call.1} parent=11 // pred_fallthru
          _
        // Predicated region
        $region45: #{tpu_custom_call.1} parent=11 // pred_check
          %p545 = pneg %p299
        $region46: #{tpu_custom_call.1} parent=11 // pred_check_branch
          %547 = sbr.rel (%p545) target = $region48
        $region47: #{tpu_custom_call.1} parent=11 // pred_region
          %s549 = ssub.s32 16, 16
          %550 = vsyncadd [#allocation9], %s549
          %s552 = sshll.u32 [#allocation10], 4
          %s553 = int_to_ptr.vmem [resolvable:$true] %s552
          %555 = dma.hbm_to_vmem [thread:$0]  %s11, 16, %s553, [#allocation9]
        $region48: #{tpu_custom_call.1} parent=11 // pred_fallthru
          _
        // Predicated region
        $region49: #{tpu_custom_call.1} parent=11 // pred_check
          %p556 = pneg %p320
        $region50: #{tpu_custom_call.1} parent=11 // pred_check_branch
          %558 = sbr.rel (%p556) target = $region52
        $region51: #{tpu_custom_call.1} parent=11 // pred_region
          %s560 = ssub.s32 16, 16
          %561 = vsyncadd [#allocation12], %s560
          %s563 = sshll.u32 [#allocation11], 4
          %s564 = int_to_ptr.vmem [resolvable:$true] %s563
          %566 = dma.hbm_to_vmem [thread:$0]  %s12, 16, %s564, [#allocation12]
        $region52: #{tpu_custom_call.1} parent=11 // pred_fallthru
          _
        // Predicated region
        $region53: #{tpu_custom_call.1} parent=11 // pred_check
          %p567 = pneg %p341
        $region54: #{tpu_custom_call.1} parent=11 // pred_check_branch
          %569 = sbr.rel (%p567) target = $region56
        $region55: #{tpu_custom_call.1} parent=11 // pred_region
          _
        $region56: #{tpu_custom_call.1} parent=11 // pred_fallthru
          _
        // Predicated region
        $region57: #{tpu_custom_call.1} parent=11 // pred_check
          %p570 = pneg %p362
        $region58: #{tpu_custom_call.1} parent=11 // pred_check_branch
          %572 = sbr.rel (%p570) target = $region60
        $region59: #{tpu_custom_call.1} parent=11 // pred_region
          _
        $region60: #{tpu_custom_call.1} parent=11 // pred_fallthru
          _
        // Predicated region
        $region61: #{tpu_custom_call.1} parent=11 // pred_check
          %p573 = pneg %p383
        $region62: #{tpu_custom_call.1} parent=11 // pred_check_branch
          %575 = sbr.rel (%p573) target = $region64
        $region63: #{tpu_custom_call.1} parent=11 // pred_region
          _
        $region64: #{tpu_custom_call.1} parent=11 // pred_fallthru
          _
        // Predicated region
        $region65: #{tpu_custom_call.1} parent=11 // pred_check
          %p576 = pneg %p404
        $region66: #{tpu_custom_call.1} parent=11 // pred_check_branch
          %578 = sbr.rel (%p576) target = $region68
        $region67: #{tpu_custom_call.1} parent=11 // pred_region
          _
        $region68: #{tpu_custom_call.1} parent=11 // pred_fallthru
          _
        // Predicated region
        $region69: #{tpu_custom_call.1} parent=11 // pred_check
          %p579 = pneg %p425
        $region70: #{tpu_custom_call.1} parent=11 // pred_check_branch
          %581 = sbr.rel (%p579) target = $region72
        $region71: #{tpu_custom_call.1} parent=11 // pred_region
          _
        $region72: #{tpu_custom_call.1} parent=11 // pred_fallthru
          _
        // Predicated region
        $region73: #{tpu_custom_call.1} parent=11 // pred_check
          %p582 = pneg %p446
        $region74: #{tpu_custom_call.1} parent=11 // pred_check_branch
          %584 = sbr.rel (%p582) target = $region76
        $region75: #{tpu_custom_call.1} parent=11 // pred_region
          _
        $region76: #{tpu_custom_call.1} parent=11 // pred_fallthru
          _
      $region12: #{tpu_custom_call.1} parent=5 // pred_fallthru
        _
      %p585 = scmp.lt.s32.totalorder %s32, 2
      // Predicated region
      $region77: #{tpu_custom_call.1} parent=5 // pred_check
        %p586 = pneg %p585
      $region78: #{tpu_custom_call.1} parent=5 // pred_check_branch
        %588 = sbr.rel (%p586) target = $region80
      $region79: #{tpu_custom_call.1} parent=5 // pred_region
        // Predicated region
        $region81: #{tpu_custom_call.1} parent=79 // pred_check
          %p589 = pneg %p52
        $region82: #{tpu_custom_call.1} parent=79 // pred_check_branch
          %591 = sbr.rel (%p589) target = $region84
        $region83: #{tpu_custom_call.1} parent=79 // pred_region
          %p592 = scmp.lt.s32.totalorder %s32, 1
          %s593 = scalar_select %p592, %s32, 1
          %s594 = smul.addr %s593, 8
          %s595 = scalar_lea.vmem %s0, %s594
        $region84: #{tpu_custom_call.1} parent=79 // pred_fallthru
          _
        // Predicated region
        $region85: #{tpu_custom_call.1} parent=79 // pred_check
          %p596 = pneg %p78
        $region86: #{tpu_custom_call.1} parent=79 // pred_check_branch
          %598 = sbr.rel (%p596) target = $region88
        $region87: #{tpu_custom_call.1} parent=79 // pred_region
          %p599 = scmp.lt.s32.totalorder %s32, 1
          %s600 = scalar_select %p599, %s32, 1
          %s601 = smul.addr %s600, 8
          %s602 = scalar_lea.vmem %s1, %s601
        $region88: #{tpu_custom_call.1} parent=79 // pred_fallthru
          _
        // Predicated region
        $region89: #{tpu_custom_call.1} parent=79 // pred_check
          %p603 = pneg %p104
        $region90: #{tpu_custom_call.1} parent=79 // pred_check_branch
          %605 = sbr.rel (%p603) target = $region92
        $region91: #{tpu_custom_call.1} parent=79 // pred_region
          %p606 = scmp.lt.s32.totalorder %s32, 1
          %s607 = scalar_select %p606, %s32, 1
          %s608 = smul.addr %s607, 8
          %s609 = scalar_lea.vmem %s2, %s608
        $region92: #{tpu_custom_call.1} parent=79 // pred_fallthru
          _
      $region80: #{tpu_custom_call.1} parent=5 // pred_fallthru
        _
      %p610 = scmp.le.s32.totalorder 1, %s32
      %p611 = scmp.lt.s32.totalorder %s32, 3
      %p612 = pnand %p610, %p611
      %p613 = pneg %p612
      // Predicated region
      $region93: #{tpu_custom_call.1} parent=5 // pred_check
        _
      $region94: #{tpu_custom_call.1} parent=5 // pred_check_branch
        %615 = sbr.rel (%p612) target = $region96
      $region95: #{tpu_custom_call.1} parent=5 // pred_region
        %s616 = ssub.s32 %s32, 1
        // Predicated region
        $region97: #{tpu_custom_call.1} parent=95 // pred_check
          %p617 = pneg %p173
        $region98: #{tpu_custom_call.1} parent=95 // pred_check_branch
          %619 = sbr.rel (%p617) target = $region100
        $region99: #{tpu_custom_call.1} parent=95 // pred_region
          %620 = dma.done [#allocation3], 256
        $region100: #{tpu_custom_call.1} parent=95 // pred_fallthru
          _
        // Predicated region
        $region101: #{tpu_custom_call.1} parent=95 // pred_check
          %p621 = pneg %p215
        $region102: #{tpu_custom_call.1} parent=95 // pred_check_branch
          %623 = sbr.rel (%p621) target = $region104
        $region103: #{tpu_custom_call.1} parent=95 // pred_region
          %624 = dma.done [#allocation6], 16
        $region104: #{tpu_custom_call.1} parent=95 // pred_fallthru
          _
        // Predicated region
        $region105: #{tpu_custom_call.1} parent=95 // pred_check
          %p625 = pneg %p236
        $region106: #{tpu_custom_call.1} parent=95 // pred_check_branch
          %627 = sbr.rel (%p625) target = $region108
        $region107: #{tpu_custom_call.1} parent=95 // pred_region
          %628 = dma.done [#allocation6], 16
        $region108: #{tpu_custom_call.1} parent=95 // pred_fallthru
          _
        // Predicated region
        $region109: #{tpu_custom_call.1} parent=95 // pred_check
          %p629 = pneg %p278
        $region110: #{tpu_custom_call.1} parent=95 // pred_check_branch
          %631 = sbr.rel (%p629) target = $region112
        $region111: #{tpu_custom_call.1} parent=95 // pred_region
          %632 = dma.done [#allocation9], 16
        $region112: #{tpu_custom_call.1} parent=95 // pred_fallthru
          _
        // Predicated region
        $region113: #{tpu_custom_call.1} parent=95 // pred_check
          %p633 = pneg %p299
        $region114: #{tpu_custom_call.1} parent=95 // pred_check_branch
          %635 = sbr.rel (%p633) target = $region116
        $region115: #{tpu_custom_call.1} parent=95 // pred_region
          %636 = dma.done [#allocation9], 16
        $region116: #{tpu_custom_call.1} parent=95 // pred_fallthru
          _
        // Predicated region
        $region117: #{tpu_custom_call.1} parent=95 // pred_check
          %p637 = pneg %p320
        $region118: #{tpu_custom_call.1} parent=95 // pred_check_branch
          %639 = sbr.rel (%p637) target = $region120
        $region119: #{tpu_custom_call.1} parent=95 // pred_region
          %640 = dma.done [#allocation12], 16
        $region120: #{tpu_custom_call.1} parent=95 // pred_fallthru
          _
        %p641 = scmp.lt.s32.totalorder %s37, 1
        %s642 = scalar_select %p641, %s37, 1
        %s643 = smul.addr %s642, 8
        %s644 = scalar_lea.vmem %s0, %s643
        %p645 = pneg %p58
        %p646 = pneg %p55
        %p647 = scmp.lt.s32.totalorder %s37, 1
        %s648 = scalar_select %p647, %s37, 1
        %s649 = smul.addr %s648, 8
        %s650 = scalar_lea.vmem %s1, %s649
        %p651 = pneg %p84
        %p652 = pneg %p81
        %p653 = scmp.lt.s32.totalorder %s37, 1
        %s654 = scalar_select %p653, %s37, 1
        %s655 = smul.addr %s654, 8
        %s656 = scalar_lea.vmem %s2, %s655
        %p657 = pneg %p110
        %p658 = pneg %p107
        %p659 = pneg %p131
        %p660 = pneg %p128
        %p661 = pneg %p152
        %p662 = pneg %p149
        %p663 = pneg %p173
        %p664 = pneg %p170
        %p665 = pneg %p194
        %p666 = pneg %p191
        %p667 = pneg %p215
        %p668 = pneg %p212
        %p669 = pneg %p236
        %p670 = pneg %p233
        %p671 = pneg %p257
        %p672 = pneg %p254
        %p673 = pneg %p278
        %p674 = pneg %p275
        %p675 = pneg %p299
        %p676 = pneg %p296
        %p677 = pneg %p320
        %p678 = pneg %p317
        %p679 = pneg %p341
        %p680 = pneg %p338
        %p681 = pneg %p362
        %p682 = pneg %p359
        %p683 = pneg %p383
        %p684 = pneg %p380
        %p685 = pneg %p404
        %p686 = pneg %p401
        %p687 = pneg %p425
        %p688 = pneg %p422
        %p689 = pneg %p446
        %p690 = pneg %p443
        %p691 = pneg %p472
        %p692 = pneg %p469
        %s693 = sand.u32 %s459, 1
        %s694 = scalar_lea.sflag [#allocation4], %s693
        %s695 = sand.u32 %s459, 1
        %s696 = smul.addr %s695, 8
        %s697 = scalar_lea.vmem [#allocation13], %s696
        %p698 = scmp.lt.s32.totalorder %s37, 1
        %s699 = scalar_select %p698, %s37, 1
        %s700 = smul.addr %s699, 8
        %s701 = scalar_lea.vmem %s0, %s700
        %p702 = scmp.lt.s32.totalorder %s37, 1
        %s703 = scalar_select %p702, %s37, 1
        %s704 = smul.addr %s703, 8
        %s705 = scalar_lea.vmem %s1, %s704
        %p706 = scmp.lt.s32.totalorder %s37, 1
        %s707 = scalar_select %p706, %s37, 1
        %s708 = smul.addr %s707, 8
        %s709 = scalar_lea.vmem %s2, %s708
        %v711 = vld [vmem:[%s701] sm:$0xff]
        %v712 = vld [vmem:[%s705] sm:$0xff]
        %v713 = vld [vmem:[%s709] sm:$0xff]
        %v714 = vpack.c.bf16 %v711, %v711
        %v715 = vld [vmem:[%s3] sm:$0xf]
        %v716 = vld [vmem:[%s3 + $0x4] sm:$0xf]
        %v717 = vld [vmem:[%s3 + $0x8] sm:$0xf]
        %v718 = vld [vmem:[%s3 + $0xc] sm:$0xf]
        %v719 = vld [vmem:[%s6] sm:$0x1]
        %v721 = vlaneseq
        %v722 = vshrl.u32 %v721, 7
        %v723 = vsub.s32 0, %v722
        %v724 = vrot.slane %v719, %v723
        %v730 = vunpack.c.l.b16 %v715
        %v731 = vunpack.c.l.b16 %v716
        %v732 = vunpack.c.l.b16 %v717
        %v733 = vunpack.c.l.b16 %v718
        %v734 = vpack.c.b16 %v731, %v730
        %v735 = vpack.c.b16 %v733, %v732
        %vm738 = vcmask 261120
        %v740 = vsel %vm738, %v714, 0
        %742 = vmatprep.subr.bf16.mxu0 0
        %743 = vmatpush1.bf16.msra.mxu0 %v734
        %744 = vmatprep.subr.bf16.mxu0 0
        %745 = vmatpush1.bf16.msra.mxu0 %v735
        %746 = vmatprep.subr.bf16.mxu0 0
        %747 = vmatpush1.bf16.msra.mxu0 0
        %748 = vmatprep.subr.bf16.mxu0 0
        %749 = vmatpush1.bf16.msra.mxu0 0
        %750 = vmatprep.subr.bf16.mxu0 0
        %751 = vmatpush1.bf16.msra.mxu0 0
        %752 = vmatprep.subr.bf16.mxu0 0
        %753 = vmatpush1.bf16.msra.mxu0 0
        %754 = vmatprep.subr.bf16.mxu0 0
        %755 = vmatpush1.bf16.msra.mxu0 0
        %756 = vmatprep.subr.bf16.mxu0 0
        %757 = vmatpush1.bf16.msra.mxu0 0
        %758 = vmatprep.subr.bf16.mxu0 0
        %759 = vmatpush1.bf16.msra.mxu0 0
        %760 = vmatprep.subr.bf16.mxu0 0
        %761 = vmatpush1.bf16.msra.mxu0 0
        %762 = vmatprep.subr.bf16.mxu0 0
        %763 = vmatpush1.bf16.msra.mxu0 0
        %764 = vmatprep.subr.bf16.mxu0 0
        %765 = vmatpush1.bf16.msra.mxu0 0
        %766 = vmatprep.subr.bf16.mxu0 0
        %767 = vmatpush1.bf16.msra.mxu0 0
        %768 = vmatprep.subr.bf16.mxu0 0
        %769 = vmatpush1.bf16.msra.mxu0 0
        %770 = vmatprep.subr.bf16.mxu0 0
        %771 = vmatpush1.bf16.msra.mxu0 0
        %772 = vmatprep.subr.bf16.mxu0 0
        %773 = vmatpush1.bf16.msra.mxu0 0
        %774 = vmatprep.mubr.bf16.mxu0 0
        %775 = vmatmul.mubr.bf16.gmra.mrb[0].mxu0 %v740
        %v776 = vpop.f32.mrb[0].mxu0
        %v777 = vadd.f32 %v724, %v776
        %v778 = vpop.f32.mrb[0].mxu0
        %v779 = vpop.f32.mrb[0].mxu0
        %v780 = vpop.f32.mrb[0].mxu0
        %781 = vdwg.mxu0
        %v782 = vpack.c.bf16 %v712, %v712
        %v783 = vld [vmem:[%s4] sm:$0xf]
        %v784 = vld [vmem:[%s4 + $0x4] sm:$0xf]
        %v785 = vld [vmem:[%s4 + $0x8] sm:$0xf]
        %v786 = vld [vmem:[%s4 + $0xc] sm:$0xf]
        %v787 = vld [vmem:[#allocation5] sm:$0x1]
        %v789 = vlaneseq
        %v790 = vshrl.u32 %v789, 7
        %v791 = vsub.s32 0, %v790
        %v792 = vrot.slane %v787, %v791
        %v798 = vunpack.c.l.b16 %v783
        %v799 = vunpack.c.l.b16 %v784
        %v800 = vunpack.c.l.b16 %v785
        %v801 = vunpack.c.l.b16 %v786
        %v802 = vpack.c.b16 %v799, %v798
        %v803 = vpack.c.b16 %v801, %v800
        %v807 = vsel %vm738, %v782, 0
        %809 = vmatprep.subr.bf16.mxu0 0
        %810 = vmatpush1.bf16.msra.mxu0 %v802
        %811 = vmatprep.subr.bf16.mxu0 0
        %812 = vmatpush1.bf16.msra.mxu0 %v803
        %813 = vmatprep.subr.bf16.mxu0 0
        %814 = vmatpush1.bf16.msra.mxu0 0
        %815 = vmatprep.subr.bf16.mxu0 0
        %816 = vmatpush1.bf16.msra.mxu0 0
        %817 = vmatprep.subr.bf16.mxu0 0
        %818 = vmatpush1.bf16.msra.mxu0 0
        %819 = vmatprep.subr.bf16.mxu0 0
        %820 = vmatpush1.bf16.msra.mxu0 0
        %821 = vmatprep.subr.bf16.mxu0 0
        %822 = vmatpush1.bf16.msra.mxu0 0
        %823 = vmatprep.subr.bf16.mxu0 0
        %824 = vmatpush1.bf16.msra.mxu0 0
        %825 = vmatprep.subr.bf16.mxu0 0
        %826 = vmatpush1.bf16.msra.mxu0 0
        %827 = vmatprep.subr.bf16.mxu0 0
        %828 = vmatpush1.bf16.msra.mxu0 0
        %829 = vmatprep.subr.bf16.mxu0 0
        %830 = vmatpush1.bf16.msra.mxu0 0
        %831 = vmatprep.subr.bf16.mxu0 0
        %832 = vmatpush1.bf16.msra.mxu0 0
        %833 = vmatprep.subr.bf16.mxu0 0
        %834 = vmatpush1.bf16.msra.mxu0 0
        %835 = vmatprep.subr.bf16.mxu0 0
        %836 = vmatpush1.bf16.msra.mxu0 0
        %837 = vmatprep.subr.bf16.mxu0 0
        %838 = vmatpush1.bf16.msra.mxu0 0
        %839 = vmatprep.subr.bf16.mxu0 0
        %840 = vmatpush1.bf16.msra.mxu0 0
        %841 = vmatprep.mubr.bf16.mxu0 0
        %842 = vmatmul.mubr.bf16.gmra.mrb[0].mxu0 %v807
        %v843 = vpop.f32.mrb[0].mxu0
        %v844 = vadd.f32 %v792, %v843
        %v845 = vpop.f32.mrb[0].mxu0
        %v846 = vpop.f32.mrb[0].mxu0
        %v847 = vpop.f32.mrb[0].mxu0
        %848 = vdwg.mxu0
        %v849 = vpack.c.bf16 %v713, %v713
        %v850 = vld [vmem:[#allocation2] sm:$0xf]
        %v851 = vld [vmem:[#allocation2 + $0x4] sm:$0xf]
        %v852 = vld [vmem:[#allocation2 + $0x8] sm:$0xf]
        %v853 = vld [vmem:[#allocation2 + $0xc] sm:$0xf]
        %v854 = vld [vmem:[#allocation7] sm:$0x1]
        %v856 = vlaneseq
        %v857 = vshrl.u32 %v856, 7
        %v858 = vsub.s32 0, %v857
        %v859 = vrot.slane %v854, %v858
        %v865 = vunpack.c.l.b16 %v850
        %v866 = vunpack.c.l.b16 %v851
        %v867 = vunpack.c.l.b16 %v852
        %v868 = vunpack.c.l.b16 %v853
        %v869 = vpack.c.b16 %v866, %v865
        %v870 = vpack.c.b16 %v868, %v867
        %v874 = vsel %vm738, %v849, 0
        %876 = vmatprep.subr.bf16.mxu0 0
        %877 = vmatpush1.bf16.msra.mxu0 %v869
        %878 = vmatprep.subr.bf16.mxu0 0
        %879 = vmatpush1.bf16.msra.mxu0 %v870
        %880 = vmatprep.subr.bf16.mxu0 0
        %881 = vmatpush1.bf16.msra.mxu0 0
        %882 = vmatprep.subr.bf16.mxu0 0
        %883 = vmatpush1.bf16.msra.mxu0 0
        %884 = vmatprep.subr.bf16.mxu0 0
        %885 = vmatpush1.bf16.msra.mxu0 0
        %886 = vmatprep.subr.bf16.mxu0 0
        %887 = vmatpush1.bf16.msra.mxu0 0
        %888 = vmatprep.subr.bf16.mxu0 0
        %889 = vmatpush1.bf16.msra.mxu0 0
        %890 = vmatprep.subr.bf16.mxu0 0
        %891 = vmatpush1.bf16.msra.mxu0 0
        %892 = vmatprep.subr.bf16.mxu0 0
        %893 = vmatpush1.bf16.msra.mxu0 0
        %894 = vmatprep.subr.bf16.mxu0 0
        %895 = vmatpush1.bf16.msra.mxu0 0
        %896 = vmatprep.subr.bf16.mxu0 0
        %897 = vmatpush1.bf16.msra.mxu0 0
        %898 = vmatprep.subr.bf16.mxu0 0
        %899 = vmatpush1.bf16.msra.mxu0 0
        %900 = vmatprep.subr.bf16.mxu0 0
        %901 = vmatpush1.bf16.msra.mxu0 0
        %902 = vmatprep.subr.bf16.mxu0 0
        %903 = vmatpush1.bf16.msra.mxu0 0
        %904 = vmatprep.subr.bf16.mxu0 0
        %905 = vmatpush1.bf16.msra.mxu0 0
        %906 = vmatprep.subr.bf16.mxu0 0
        %907 = vmatpush1.bf16.msra.mxu0 0
        %908 = vmatprep.mubr.bf16.mxu0 0
        %909 = vmatmul.mubr.bf16.gmra.mrb[0].mxu0 %v874
        %v910 = vpop.f32.mrb[0].mxu0
        %v911 = vadd.f32 %v859, %v910
        %v912 = vpop.f32.mrb[0].mxu0
        %v913 = vpop.f32.mrb[0].mxu0
        %v914 = vpop.f32.mrb[0].mxu0
        %915 = vdwg.mxu0
        %v916 = vmul.f32 %v777, 0.35355338
        %v917 = vpack.c.bf16 %v916, %v916
        %v918 = vpack.c.bf16 %v844, %v844
        %v919 = vpack.c.bf16 %v911, %v911
        %v920 = vld [vmem:[#allocation8] sm:$0x1]
        %v922 = vlaneseq
        %v923 = vshrl.u32 %v922, 7
        %v924 = vsub.s32 0, %v923
        %v925 = vrot.slane %v920, %v924
        %928 = vrot.lane.b32.xlu0 %v917, 120
        %v929 = vpop.permute.xlu0 %928
        %930 = vrot.lane.b32.xlu0 %v917, 112
        %v931 = vpop.permute.xlu0 %930
        %932 = vrot.lane.b32.xlu0 %v917, 104
        %v933 = vpop.permute.xlu0 %932
        %v935 = vunpack.c.l.s4 1983009808
        %v936 = vunpack.c.0.s8 %v935
        %v937 = vlaneseq
        %v938 = vshrl.u32 %v937, 7
        %v939 = vsub.s32 %v936, %v938
        %v940 = vrot.slane %v917, %v939
        %v943 = vunpack.c.l.s4 1983009808
        %v944 = vunpack.c.0.s8 %v943
        %v945 = vlaneseq
        %v946 = vshrl.u32 %v945, 7
        %v947 = vsub.s32 %v944, %v946
        %v948 = vrot.slane %v931, %v947
        %v949 = vcombine.low %v940, %v948
        %v950 = vcombine.high %v940, %v948
        %v952 = vunpack.c.l.s4 1934713408
        %v953 = vunpack.c.0.s8 %v952
        %v954 = vlaneseq
        %v955 = vshrl.u32 %v954, 7
        %v956 = vsub.s32 %v953, %v955
        %v957 = vrot.slane %v949, %v956
        %v959 = vunpack.c.l.s4 1934713408
        %v960 = vunpack.c.0.s8 %v959
        %v961 = vlaneseq
        %v962 = vshrl.u32 %v961, 7
        %v963 = vsub.s32 %v960, %v962
        %v964 = vrot.slane %v950, %v963
        %v965 = vcombine.high %v957, 0
        %v966 = vcombine.high %v964, 0
        %v969 = vunpack.c.l.s4 1983009808
        %v970 = vunpack.c.0.s8 %v969
        %v971 = vlaneseq
        %v972 = vshrl.u32 %v971, 7
        %v973 = vsub.s32 %v970, %v972
        %v974 = vrot.slane %v929, %v973
        %v977 = vunpack.c.l.s4 1983009808
        %v978 = vunpack.c.0.s8 %v977
        %v979 = vlaneseq
        %v980 = vshrl.u32 %v979, 7
        %v981 = vsub.s32 %v978, %v980
        %v982 = vrot.slane %v933, %v981
        %v983 = vcombine.low %v974, %v982
        %v984 = vcombine.high %v974, %v982
        %v986 = vunpack.c.l.s4 1934713408
        %v987 = vunpack.c.0.s8 %v986
        %v988 = vlaneseq
        %v989 = vshrl.u32 %v988, 7
        %v990 = vsub.s32 %v987, %v989
        %v991 = vrot.slane %v983, %v990
        %v993 = vunpack.c.l.s4 1934713408
        %v994 = vunpack.c.0.s8 %v993
        %v995 = vlaneseq
        %v996 = vshrl.u32 %v995, 7
        %v997 = vsub.s32 %v994, %v996
        %v998 = vrot.slane %v984, %v997
        %v999 = vcombine.high %v991, 0
        %v1000 = vcombine.high %v998, 0
        %v1003 = vpack.i.b16 %v991, %v957
        %v1005 = vshrl.u32 %v957, 16
        %v1006 = vshrl.u32 %v991, 16
        %v1007 = vpack.i.b16 %v1006, %v1005
        %v1011 = vpack.i.b16 %v999, %v965
        %v1013 = vshrl.u32 %v965, 16
        %v1014 = vshrl.u32 %v999, 16
        %v1015 = vpack.i.b16 %v1014, %v1013
        %v1019 = vpack.i.b16 %v998, %v964
        %v1021 = vshrl.u32 %v964, 16
        %v1022 = vshrl.u32 %v998, 16
        %v1023 = vpack.i.b16 %v1022, %v1021
        %v1027 = vpack.i.b16 %v1000, %v966
        %v1029 = vshrl.u32 %v966, 16
        %v1030 = vshrl.u32 %v1000, 16
        %v1031 = vpack.i.b16 %v1030, %v1029
        %v1033 = vcombine.low %v1003, %v1019
        %v1035 = vunpack.c.l.s4 1983009808
        %v1036 = vunpack.c.0.s8 %v1035
        %v1037 = vlaneseq
        %v1038 = vshrl.u32 %v1037, 7
        %v1039 = vsub.s32 %v1036, %v1038
        %v1040 = vrot.slane %v1033, %v1039
        %v1041 = vcombine.low %v1011, %v1027
        %v1043 = vunpack.c.l.s4 1983009808
        %v1044 = vunpack.c.0.s8 %v1043
        %v1045 = vlaneseq
        %v1046 = vshrl.u32 %v1045, 7
        %v1047 = vsub.s32 %v1044, %v1046
        %v1048 = vrot.slane %v1041, %v1047
        %v1049 = vcombine.low %v1040, %v1048
        %v1051 = vunpack.c.l.s4 1934713408
        %v1052 = vunpack.c.0.s8 %v1051
        %v1053 = vlaneseq
        %v1054 = vshrl.u32 %v1053, 7
        %v1055 = vsub.s32 %v1052, %v1054
        %v1056 = vrot.slane %v1049, %v1055
        %v1057 = vcombine.high %v1056, 0
        %v1058 = vcombine.low %v1007, %v1023
        %v1060 = vunpack.c.l.s4 1983009808
        %v1061 = vunpack.c.0.s8 %v1060
        %v1062 = vlaneseq
        %v1063 = vshrl.u32 %v1062, 7
        %v1064 = vsub.s32 %v1061, %v1063
        %v1065 = vrot.slane %v1058, %v1064
        %v1066 = vcombine.low %v1015, %v1031
        %v1068 = vunpack.c.l.s4 1983009808
        %v1069 = vunpack.c.0.s8 %v1068
        %v1070 = vlaneseq
        %v1071 = vshrl.u32 %v1070, 7
        %v1072 = vsub.s32 %v1069, %v1071
        %v1073 = vrot.slane %v1066, %v1072
        %v1074 = vcombine.low %v1065, %v1073
        %v1076 = vunpack.c.l.s4 1934713408
        %v1077 = vunpack.c.0.s8 %v1076
        %v1078 = vlaneseq
        %v1079 = vshrl.u32 %v1078, 7
        %v1080 = vsub.s32 %v1077, %v1079
        %v1081 = vrot.slane %v1074, %v1080
        %v1082 = vcombine.high %v1081, 0
        %v1085 = vpack.i.b16 %v1081, %v1056
        %v1086 = vshrl.u32 %v1056, 16
        %v1087 = vshrl.u32 %v1081, 16
        %v1088 = vpack.i.b16 %v1087, %v1086
        %v1091 = vpack.i.b16 %v1082, %v1057
        %v1092 = vshrl.u32 %v1057, 16
        %v1093 = vshrl.u32 %v1082, 16
        %v1094 = vpack.i.b16 %v1093, %v1092
        %1096 = vrot.lane.b32.xlu0 %v918, 120
        %v1097 = vpop.permute.xlu0 %1096
        %1098 = vrot.lane.b32.xlu0 %v918, 112
        %v1099 = vpop.permute.xlu0 %1098
        %1100 = vrot.lane.b32.xlu0 %v918, 104
        %v1101 = vpop.permute.xlu0 %1100
        %v1103 = vunpack.c.l.s4 1983009808
        %v1104 = vunpack.c.0.s8 %v1103
        %v1105 = vlaneseq
        %v1106 = vshrl.u32 %v1105, 7
        %v1107 = vsub.s32 %v1104, %v1106
        %v1108 = vrot.slane %v918, %v1107
        %v1111 = vunpack.c.l.s4 1983009808
        %v1112 = vunpack.c.0.s8 %v1111
        %v1113 = vlaneseq
        %v1114 = vshrl.u32 %v1113, 7
        %v1115 = vsub.s32 %v1112, %v1114
        %v1116 = vrot.slane %v1099, %v1115
        %v1117 = vcombine.low %v1108, %v1116
        %v1118 = vcombine.high %v1108, %v1116
        %v1120 = vunpack.c.l.s4 1934713408
        %v1121 = vunpack.c.0.s8 %v1120
        %v1122 = vlaneseq
        %v1123 = vshrl.u32 %v1122, 7
        %v1124 = vsub.s32 %v1121, %v1123
        %v1125 = vrot.slane %v1117, %v1124
        %v1127 = vunpack.c.l.s4 1934713408
        %v1128 = vunpack.c.0.s8 %v1127
        %v1129 = vlaneseq
        %v1130 = vshrl.u32 %v1129, 7
        %v1131 = vsub.s32 %v1128, %v1130
        %v1132 = vrot.slane %v1118, %v1131
        %v1133 = vcombine.high %v1125, 0
        %v1134 = vcombine.high %v1132, 0
        %v1137 = vunpack.c.l.s4 1983009808
        %v1138 = vunpack.c.0.s8 %v1137
        %v1139 = vlaneseq
        %v1140 = vshrl.u32 %v1139, 7
        %v1141 = vsub.s32 %v1138, %v1140
        %v1142 = vrot.slane %v1097, %v1141
        %v1145 = vunpack.c.l.s4 1983009808
        %v1146 = vunpack.c.0.s8 %v1145
        %v1147 = vlaneseq
        %v1148 = vshrl.u32 %v1147, 7
        %v1149 = vsub.s32 %v1146, %v1148
        %v1150 = vrot.slane %v1101, %v1149
        %v1151 = vcombine.low %v1142, %v1150
        %v1152 = vcombine.high %v1142, %v1150
        %v1154 = vunpack.c.l.s4 1934713408
        %v1155 = vunpack.c.0.s8 %v1154
        %v1156 = vlaneseq
        %v1157 = vshrl.u32 %v1156, 7
        %v1158 = vsub.s32 %v1155, %v1157
        %v1159 = vrot.slane %v1151, %v1158
        %v1161 = vunpack.c.l.s4 1934713408
        %v1162 = vunpack.c.0.s8 %v1161
        %v1163 = vlaneseq
        %v1164 = vshrl.u32 %v1163, 7
        %v1165 = vsub.s32 %v1162, %v1164
        %v1166 = vrot.slane %v1152, %v1165
        %v1167 = vcombine.high %v1159, 0
        %v1168 = vcombine.high %v1166, 0
        %v1171 = vpack.i.b16 %v1159, %v1125
        %v1173 = vshrl.u32 %v1125, 16
        %v1174 = vshrl.u32 %v1159, 16
        %v1175 = vpack.i.b16 %v1174, %v1173
        %v1179 = vpack.i.b16 %v1167, %v1133
        %v1181 = vshrl.u32 %v1133, 16
        %v1182 = vshrl.u32 %v1167, 16
        %v1183 = vpack.i.b16 %v1182, %v1181
        %v1187 = vpack.i.b16 %v1166, %v1132
        %v1189 = vshrl.u32 %v1132, 16
        %v1190 = vshrl.u32 %v1166, 16
        %v1191 = vpack.i.b16 %v1190, %v1189
        %v1195 = vpack.i.b16 %v1168, %v1134
        %v1197 = vshrl.u32 %v1134, 16
        %v1198 = vshrl.u32 %v1168, 16
        %v1199 = vpack.i.b16 %v1198, %v1197
        %v1201 = vcombine.low %v1171, %v1187
        %v1203 = vunpack.c.l.s4 1983009808
        %v1204 = vunpack.c.0.s8 %v1203
        %v1205 = vlaneseq
        %v1206 = vshrl.u32 %v1205, 7
        %v1207 = vsub.s32 %v1204, %v1206
        %v1208 = vrot.slane %v1201, %v1207
        %v1209 = vcombine.low %v1179, %v1195
        %v1211 = vunpack.c.l.s4 1983009808
        %v1212 = vunpack.c.0.s8 %v1211
        %v1213 = vlaneseq
        %v1214 = vshrl.u32 %v1213, 7
        %v1215 = vsub.s32 %v1212, %v1214
        %v1216 = vrot.slane %v1209, %v1215
        %v1217 = vcombine.low %v1208, %v1216
        %v1219 = vunpack.c.l.s4 1934713408
        %v1220 = vunpack.c.0.s8 %v1219
        %v1221 = vlaneseq
        %v1222 = vshrl.u32 %v1221, 7
        %v1223 = vsub.s32 %v1220, %v1222
        %v1224 = vrot.slane %v1217, %v1223
        %v1225 = vcombine.high %v1224, 0
        %v1226 = vcombine.low %v1175, %v1191
        %v1228 = vunpack.c.l.s4 1983009808
        %v1229 = vunpack.c.0.s8 %v1228
        %v1230 = vlaneseq
        %v1231 = vshrl.u32 %v1230, 7
        %v1232 = vsub.s32 %v1229, %v1231
        %v1233 = vrot.slane %v1226, %v1232
        %v1234 = vcombine.low %v1183, %v1199
        %v1236 = vunpack.c.l.s4 1983009808
        %v1237 = vunpack.c.0.s8 %v1236
        %v1238 = vlaneseq
        %v1239 = vshrl.u32 %v1238, 7
        %v1240 = vsub.s32 %v1237, %v1239
        %v1241 = vrot.slane %v1234, %v1240
        %v1242 = vcombine.low %v1233, %v1241
        %v1244 = vunpack.c.l.s4 1934713408
        %v1245 = vunpack.c.0.s8 %v1244
        %v1246 = vlaneseq
        %v1247 = vshrl.u32 %v1246, 7
        %v1248 = vsub.s32 %v1245, %v1247
        %v1249 = vrot.slane %v1242, %v1248
        %v1250 = vcombine.high %v1249, 0
        %v1253 = vpack.i.b16 %v1249, %v1224
        %v1254 = vshrl.u32 %v1224, 16
        %v1255 = vshrl.u32 %v1249, 16
        %v1256 = vpack.i.b16 %v1255, %v1254
        %v1259 = vpack.i.b16 %v1250, %v1225
        %v1260 = vshrl.u32 %v1225, 16
        %v1261 = vshrl.u32 %v1250, 16
        %v1262 = vpack.i.b16 %v1261, %v1260
        %1264 = vrot.lane.b32.xlu0 %v919, 120
        %v1265 = vpop.permute.xlu0 %1264
        %1266 = vrot.lane.b32.xlu0 %v919, 112
        %v1267 = vpop.permute.xlu0 %1266
        %1268 = vrot.lane.b32.xlu0 %v919, 104
        %v1269 = vpop.permute.xlu0 %1268
        %v1271 = vunpack.c.l.s4 1983009808
        %v1272 = vunpack.c.0.s8 %v1271
        %v1273 = vlaneseq
        %v1274 = vshrl.u32 %v1273, 7
        %v1275 = vsub.s32 %v1272, %v1274
        %v1276 = vrot.slane %v919, %v1275
        %v1279 = vunpack.c.l.s4 1983009808
        %v1280 = vunpack.c.0.s8 %v1279
        %v1281 = vlaneseq
        %v1282 = vshrl.u32 %v1281, 7
        %v1283 = vsub.s32 %v1280, %v1282
        %v1284 = vrot.slane %v1267, %v1283
        %v1285 = vcombine.low %v1276, %v1284
        %v1286 = vcombine.high %v1276, %v1284
        %v1288 = vunpack.c.l.s4 1934713408
        %v1289 = vunpack.c.0.s8 %v1288
        %v1290 = vlaneseq
        %v1291 = vshrl.u32 %v1290, 7
        %v1292 = vsub.s32 %v1289, %v1291
        %v1293 = vrot.slane %v1285, %v1292
        %v1295 = vunpack.c.l.s4 1934713408
        %v1296 = vunpack.c.0.s8 %v1295
        %v1297 = vlaneseq
        %v1298 = vshrl.u32 %v1297, 7
        %v1299 = vsub.s32 %v1296, %v1298
        %v1300 = vrot.slane %v1286, %v1299
        %v1301 = vcombine.high %v1293, 0
        %v1302 = vcombine.high %v1300, 0
        %v1305 = vunpack.c.l.s4 1983009808
        %v1306 = vunpack.c.0.s8 %v1305
        %v1307 = vlaneseq
        %v1308 = vshrl.u32 %v1307, 7
        %v1309 = vsub.s32 %v1306, %v1308
        %v1310 = vrot.slane %v1265, %v1309
        %v1313 = vunpack.c.l.s4 1983009808
        %v1314 = vunpack.c.0.s8 %v1313
        %v1315 = vlaneseq
        %v1316 = vshrl.u32 %v1315, 7
        %v1317 = vsub.s32 %v1314, %v1316
        %v1318 = vrot.slane %v1269, %v1317
        %v1319 = vcombine.low %v1310, %v1318
        %v1320 = vcombine.high %v1310, %v1318
        %v1322 = vunpack.c.l.s4 1934713408
        %v1323 = vunpack.c.0.s8 %v1322
        %v1324 = vlaneseq
        %v1325 = vshrl.u32 %v1324, 7
        %v1326 = vsub.s32 %v1323, %v1325
        %v1327 = vrot.slane %v1319, %v1326
        %v1329 = vunpack.c.l.s4 1934713408
        %v1330 = vunpack.c.0.s8 %v1329
        %v1331 = vlaneseq
        %v1332 = vshrl.u32 %v1331, 7
        %v1333 = vsub.s32 %v1330, %v1332
        %v1334 = vrot.slane %v1320, %v1333
        %v1335 = vcombine.high %v1327, 0
        %v1336 = vcombine.high %v1334, 0
        %v1339 = vpack.i.b16 %v1327, %v1293
        %v1341 = vshrl.u32 %v1293, 16
        %v1342 = vshrl.u32 %v1327, 16
        %v1343 = vpack.i.b16 %v1342, %v1341
        %v1347 = vpack.i.b16 %v1335, %v1301
        %v1349 = vshrl.u32 %v1301, 16
        %v1350 = vshrl.u32 %v1335, 16
        %v1351 = vpack.i.b16 %v1350, %v1349
        %v1355 = vpack.i.b16 %v1334, %v1300
        %v1357 = vshrl.u32 %v1300, 16
        %v1358 = vshrl.u32 %v1334, 16
        %v1359 = vpack.i.b16 %v1358, %v1357
        %v1363 = vpack.i.b16 %v1336, %v1302
        %v1365 = vshrl.u32 %v1302, 16
        %v1366 = vshrl.u32 %v1336, 16
        %v1367 = vpack.i.b16 %v1366, %v1365
        %v1369 = vcombine.low %v1339, %v1355
        %v1371 = vunpack.c.l.s4 1983009808
        %v1372 = vunpack.c.0.s8 %v1371
        %v1373 = vlaneseq
        %v1374 = vshrl.u32 %v1373, 7
        %v1375 = vsub.s32 %v1372, %v1374
        %v1376 = vrot.slane %v1369, %v1375
        %v1377 = vcombine.low %v1347, %v1363
        %v1379 = vunpack.c.l.s4 1983009808
        %v1380 = vunpack.c.0.s8 %v1379
        %v1381 = vlaneseq
        %v1382 = vshrl.u32 %v1381, 7
        %v1383 = vsub.s32 %v1380, %v1382
        %v1384 = vrot.slane %v1377, %v1383
        %v1385 = vcombine.low %v1376, %v1384
        %v1387 = vunpack.c.l.s4 1934713408
        %v1388 = vunpack.c.0.s8 %v1387
        %v1389 = vlaneseq
        %v1390 = vshrl.u32 %v1389, 7
        %v1391 = vsub.s32 %v1388, %v1390
        %v1392 = vrot.slane %v1385, %v1391
        %v1393 = vcombine.high %v1392, 0
        %v1394 = vcombine.low %v1343, %v1359
        %v1396 = vunpack.c.l.s4 1983009808
        %v1397 = vunpack.c.0.s8 %v1396
        %v1398 = vlaneseq
        %v1399 = vshrl.u32 %v1398, 7
        %v1400 = vsub.s32 %v1397, %v1399
        %v1401 = vrot.slane %v1394, %v1400
        %v1402 = vcombine.low %v1351, %v1367
        %v1404 = vunpack.c.l.s4 1983009808
        %v1405 = vunpack.c.0.s8 %v1404
        %v1406 = vlaneseq
        %v1407 = vshrl.u32 %v1406, 7
        %v1408 = vsub.s32 %v1405, %v1407
        %v1409 = vrot.slane %v1402, %v1408
        %v1410 = vcombine.low %v1401, %v1409
        %v1412 = vunpack.c.l.s4 1934713408
        %v1413 = vunpack.c.0.s8 %v1412
        %v1414 = vlaneseq
        %v1415 = vshrl.u32 %v1414, 7
        %v1416 = vsub.s32 %v1413, %v1415
        %v1417 = vrot.slane %v1410, %v1416
        %v1418 = vcombine.high %v1417, 0
        %v1421 = vpack.i.b16 %v1417, %v1392
        %v1422 = vshrl.u32 %v1392, 16
        %v1423 = vshrl.u32 %v1417, 16
        %v1424 = vpack.i.b16 %v1423, %v1422
        %v1427 = vpack.i.b16 %v1418, %v1393
        %v1428 = vshrl.u32 %v1393, 16
        %v1429 = vshrl.u32 %v1418, 16
        %v1430 = vpack.i.b16 %v1429, %v1428
        %vm1431 = vcmask 64512
        %v1433 = vsel %vm1431, %v1085, 0
        %v1436 = vsel %vm1431, %v1253, 0
        %1438 = vmatprep.subr.bf16.mxu0 0
        %1439 = vmatpush1.bf16.xpose.msra.mxu0 %v1436
        %1440 = vmatprep.subr.bf16.mxu0 0
        %1441 = vmatpush1.bf16.xpose.msra.mxu0 0
        %1442 = vmatprep.subr.bf16.mxu0 0
        %1443 = vmatpush1.bf16.xpose.msra.mxu0 0
        %1444 = vmatprep.subr.bf16.mxu0 0
        %1445 = vmatpush1.bf16.xpose.msra.mxu0 0
        %1446 = vmatprep.subr.bf16.mxu0 0
        %1447 = vmatpush1.bf16.xpose.msra.mxu0 0
        %1448 = vmatprep.subr.bf16.mxu0 0
        %1449 = vmatpush1.bf16.xpose.msra.mxu0 0
        %1450 = vmatprep.subr.bf16.mxu0 0
        %1451 = vmatpush1.bf16.xpose.msra.mxu0 0
        %1452 = vmatprep.subr.bf16.mxu0 0
        %1453 = vmatpush1.bf16.xpose.msra.mxu0 0
        %1454 = vmatprep.subr.bf16.mxu0 0
        %1455 = vmatpush1.bf16.xpose.msra.mxu0 0
        %1456 = vmatprep.subr.bf16.mxu0 0
        %1457 = vmatpush1.bf16.xpose.msra.mxu0 0
        %1458 = vmatprep.subr.bf16.mxu0 0
        %1459 = vmatpush1.bf16.xpose.msra.mxu0 0
        %1460 = vmatprep.subr.bf16.mxu0 0
        %1461 = vmatpush1.bf16.xpose.msra.mxu0 0
        %1462 = vmatprep.subr.bf16.mxu0 0
        %1463 = vmatpush1.bf16.xpose.msra.mxu0 0
        %1464 = vmatprep.subr.bf16.mxu0 0
        %1465 = vmatpush1.bf16.xpose.msra.mxu0 0
        %1466 = vmatprep.subr.bf16.mxu0 0
        %1467 = vmatpush1.bf16.xpose.msra.mxu0 0
        %1468 = vmatprep.subr.bf16.mxu0 0
        %1469 = vmatpush1.bf16.xpose.msra.mxu0 0
        %1470 = vmatprep.mubr.bf16.mxu0 0
        %1471 = vmatmul.mubr.bf16.gmra.mrb[0].mxu0 %v1433
        %v1472 = vpop.f32.mrb[0].mxu0
        %v1473 = vadd.f32 0.0, %v1472
        %v1474 = vpop.f32.mrb[0].mxu0
        %v1475 = vpop.f32.mrb[0].mxu0
        %v1476 = vpop.f32.mrb[0].mxu0
        %1477 = vdwg.mxu0
        %v1479 = vsel %vm1431, %v1088, 0
        %v1482 = vsel %vm1431, %v1256, 0
        %1484 = vmatprep.subr.bf16.mxu0 0
        %1485 = vmatpush1.bf16.xpose.msra.mxu0 %v1482
        %1486 = vmatprep.subr.bf16.mxu0 0
        %1487 = vmatpush1.bf16.xpose.msra.mxu0 0
        %1488 = vmatprep.subr.bf16.mxu0 0
        %1489 = vmatpush1.bf16.xpose.msra.mxu0 0
        %1490 = vmatprep.subr.bf16.mxu0 0
        %1491 = vmatpush1.bf16.xpose.msra.mxu0 0
        %1492 = vmatprep.subr.bf16.mxu0 0
        %1493 = vmatpush1.bf16.xpose.msra.mxu0 0
        %1494 = vmatprep.subr.bf16.mxu0 0
        %1495 = vmatpush1.bf16.xpose.msra.mxu0 0
        %1496 = vmatprep.subr.bf16.mxu0 0
        %1497 = vmatpush1.bf16.xpose.msra.mxu0 0
        %1498 = vmatprep.subr.bf16.mxu0 0
        %1499 = vmatpush1.bf16.xpose.msra.mxu0 0
        %1500 = vmatprep.subr.bf16.mxu0 0
        %1501 = vmatpush1.bf16.xpose.msra.mxu0 0
        %1502 = vmatprep.subr.bf16.mxu0 0
        %1503 = vmatpush1.bf16.xpose.msra.mxu0 0
        %1504 = vmatprep.subr.bf16.mxu0 0
        %1505 = vmatpush1.bf16.xpose.msra.mxu0 0
        %1506 = vmatprep.subr.bf16.mxu0 0
        %1507 = vmatpush1.bf16.xpose.msra.mxu0 0
        %1508 = vmatprep.subr.bf16.mxu0 0
        %1509 = vmatpush1.bf16.xpose.msra.mxu0 0
        %1510 = vmatprep.subr.bf16.mxu0 0
        %1511 = vmatpush1.bf16.xpose.msra.mxu0 0
        %1512 = vmatprep.subr.bf16.mxu0 0
        %1513 = vmatpush1.bf16.xpose.msra.mxu0 0
        %1514 = vmatprep.subr.bf16.mxu0 0
        %1515 = vmatpush1.bf16.xpose.msra.mxu0 0
        %1516 = vmatprep.mubr.bf16.mxu0 0
        %1517 = vmatmul.mubr.bf16.gmra.mrb[0].mxu0 %v1479
        %v1518 = vpop.f32.mrb[0].mxu0
        %v1519 = vadd.f32 0.0, %v1518
        %v1520 = vpop.f32.mrb[0].mxu0
        %v1521 = vpop.f32.mrb[0].mxu0
        %v1522 = vpop.f32.mrb[0].mxu0
        %1523 = vdwg.mxu0
        %v1525 = vsel %vm1431, %v1091, 0
        %v1528 = vsel %vm1431, %v1259, 0
        %1530 = vmatprep.subr.bf16.mxu0 0
        %1531 = vmatpush1.bf16.xpose.msra.mxu0 %v1528
        %1532 = vmatprep.subr.bf16.mxu0 0
        %1533 = vmatpush1.bf16.xpose.msra.mxu0 0
        %1534 = vmatprep.subr.bf16.mxu0 0
        %1535 = vmatpush1.bf16.xpose.msra.mxu0 0
        %1536 = vmatprep.subr.bf16.mxu0 0
        %1537 = vmatpush1.bf16.xpose.msra.mxu0 0
        %1538 = vmatprep.subr.bf16.mxu0 0
        %1539 = vmatpush1.bf16.xpose.msra.mxu0 0
        %1540 = vmatprep.subr.bf16.mxu0 0
        %1541 = vmatpush1.bf16.xpose.msra.mxu0 0
        %1542 = vmatprep.subr.bf16.mxu0 0
        %1543 = vmatpush1.bf16.xpose.msra.mxu0 0
        %1544 = vmatprep.subr.bf16.mxu0 0
        %1545 = vmatpush1.bf16.xpose.msra.mxu0 0
        %1546 = vmatprep.subr.bf16.mxu0 0
        %1547 = vmatpush1.bf16.xpose.msra.mxu0 0
        %1548 = vmatprep.subr.bf16.mxu0 0
        %1549 = vmatpush1.bf16.xpose.msra.mxu0 0
        %1550 = vmatprep.subr.bf16.mxu0 0
        %1551 = vmatpush1.bf16.xpose.msra.mxu0 0
        %1552 = vmatprep.subr.bf16.mxu0 0
        %1553 = vmatpush1.bf16.xpose.msra.mxu0 0
        %1554 = vmatprep.subr.bf16.mxu0 0
        %1555 = vmatpush1.bf16.xpose.msra.mxu0 0
        %1556 = vmatprep.subr.bf16.mxu0 0
        %1557 = vmatpush1.bf16.xpose.msra.mxu0 0
        %1558 = vmatprep.subr.bf16.mxu0 0
        %1559 = vmatpush1.bf16.xpose.msra.mxu0 0
        %1560 = vmatprep.subr.bf16.mxu0 0
        %1561 = vmatpush1.bf16.xpose.msra.mxu0 0
        %1562 = vmatprep.mubr.bf16.mxu0 0
        %1563 = vmatmul.mubr.bf16.gmra.mrb[0].mxu0 %v1525
        %v1564 = vpop.f32.mrb[0].mxu0
        %v1565 = vadd.f32 0.0, %v1564
        %v1566 = vpop.f32.mrb[0].mxu0
        %v1567 = vpop.f32.mrb[0].mxu0
        %v1568 = vpop.f32.mrb[0].mxu0
        %1569 = vdwg.mxu0
        %v1571 = vsel %vm1431, %v1094, 0
        %v1574 = vsel %vm1431, %v1262, 0
        %1576 = vmatprep.subr.bf16.mxu0 0
        %1577 = vmatpush1.bf16.xpose.msra.mxu0 %v1574
        %1578 = vmatprep.subr.bf16.mxu0 0
        %1579 = vmatpush1.bf16.xpose.msra.mxu0 0
        %1580 = vmatprep.subr.bf16.mxu0 0
        %1581 = vmatpush1.bf16.xpose.msra.mxu0 0
        %1582 = vmatprep.subr.bf16.mxu0 0
        %1583 = vmatpush1.bf16.xpose.msra.mxu0 0
        %1584 = vmatprep.subr.bf16.mxu0 0
        %1585 = vmatpush1.bf16.xpose.msra.mxu0 0
        %1586 = vmatprep.subr.bf16.mxu0 0
        %1587 = vmatpush1.bf16.xpose.msra.mxu0 0
        %1588 = vmatprep.subr.bf16.mxu0 0
        %1589 = vmatpush1.bf16.xpose.msra.mxu0 0
        %1590 = vmatprep.subr.bf16.mxu0 0
        %1591 = vmatpush1.bf16.xpose.msra.mxu0 0
        %1592 = vmatprep.subr.bf16.mxu0 0
        %1593 = vmatpush1.bf16.xpose.msra.mxu0 0
        %1594 = vmatprep.subr.bf16.mxu0 0
        %1595 = vmatpush1.bf16.xpose.msra.mxu0 0
        %1596 = vmatprep.subr.bf16.mxu0 0
        %1597 = vmatpush1.bf16.xpose.msra.mxu0 0
        %1598 = vmatprep.subr.bf16.mxu0 0
        %1599 = vmatpush1.bf16.xpose.msra.mxu0 0
        %1600 = vmatprep.subr.bf16.mxu0 0
        %1601 = vmatpush1.bf16.xpose.msra.mxu0 0
        %1602 = vmatprep.subr.bf16.mxu0 0
        %1603 = vmatpush1.bf16.xpose.msra.mxu0 0
        %1604 = vmatprep.subr.bf16.mxu0 0
        %1605 = vmatpush1.bf16.xpose.msra.mxu0 0
        %1606 = vmatprep.subr.bf16.mxu0 0
        %1607 = vmatpush1.bf16.xpose.msra.mxu0 0
        %1608 = vmatprep.mubr.bf16.mxu0 0
        %1609 = vmatmul.mubr.bf16.gmra.mrb[0].mxu0 %v1571
        %v1610 = vpop.f32.mrb[0].mxu0
        %v1611 = vadd.f32 0.0, %v1610
        %v1612 = vpop.f32.mrb[0].mxu0
        %v1613 = vpop.f32.mrb[0].mxu0
        %v1614 = vpop.f32.mrb[0].mxu0
        %1615 = vdwg.mxu0
        %v1616 = vsel %vm1431, %v1473, -inf
        %1617 = vmax.xlane.f32.xlu0 %v1616
        %v1618 = vpop.xlane.xlu0 %1617
        %v1619 = vsel %vm1431, %v1519, -inf
        %1620 = vmax.xlane.f32.xlu0 %v1619
        %v1621 = vpop.xlane.xlu0 %1620
        %v1622 = vsel %vm1431, %v1565, -inf
        %1623 = vmax.xlane.f32.xlu0 %v1622
        %v1624 = vpop.xlane.xlu0 %1623
        %v1625 = vsel %vm1431, %v1611, -inf
        %1626 = vmax.xlane.f32.xlu0 %v1625
        %v1627 = vpop.xlane.xlu0 %1626
        %v1628 = vsub.f32 %v1473, %v1618
        %v1629 = vsub.f32 %v1519, %v1621
        %v1630 = vsub.f32 %v1565, %v1624
        %v1631 = vsub.f32 %v1611, %v1627
        %v1632 = vmul.f32 %v1628, 1.442695
        %v1633 = vpow.pop %v1632
        %v1634 = vmul.f32 %v1629, 1.442695
        %v1635 = vpow.pop %v1634
        %v1636 = vmul.f32 %v1630, 1.442695
        %v1637 = vpow.pop %v1636
        %v1638 = vmul.f32 %v1631, 1.442695
        %v1639 = vpow.pop %v1638
        %v1640 = vsel %vm1431, %v1633, 0.0
        %1641 = vadd.xlane.f32.xlu0 %v1640
        %v1642 = vpop.xlane.xlu0 %1641
        %v1643 = vsel %vm1431, %v1635, 0.0
        %1644 = vadd.xlane.f32.xlu0 %v1643
        %v1645 = vpop.xlane.xlu0 %1644
        %v1646 = vsel %vm1431, %v1637, 0.0
        %1647 = vadd.xlane.f32.xlu0 %v1646
        %v1648 = vpop.xlane.xlu0 %1647
        %v1649 = vsel %vm1431, %v1639, 0.0
        %1650 = vadd.xlane.f32.xlu0 %v1649
        %v1651 = vpop.xlane.xlu0 %1650
        %v1652 = vrcp.pop %v1642
        %v1653 = vrcp.pop %v1645
        %v1654 = vrcp.pop %v1648
        %v1655 = vrcp.pop %v1651
        %v1656 = vmul.f32 %v1633, %v1652
        %v1657 = vmul.f32 %v1635, %v1653
        %v1658 = vmul.f32 %v1637, %v1654
        %v1659 = vmul.f32 %v1639, %v1655
        %v1660 = vpack.c.bf16 %v1656, %v1656
        %v1661 = vpack.c.bf16 %v1657, %v1657
        %v1662 = vpack.c.bf16 %v1658, %v1658
        %v1663 = vpack.c.bf16 %v1659, %v1659
        %v1665 = vsel %vm1431, %v1660, 0
        %vm1667 = vcmask 1043456
        %v1669 = vsel %vm1667, %v1421, 0
        %1671 = vmatprep.subr.bf16.mxu0 0
        %1672 = vmatpush1.bf16.msra.mxu0 %v1669
        %1673 = vmatprep.subr.bf16.mxu0 0
        %1674 = vmatpush1.bf16.msra.mxu0 0
        %1675 = vmatprep.subr.bf16.mxu0 0
        %1676 = vmatpush1.bf16.msra.mxu0 0
        %1677 = vmatprep.subr.bf16.mxu0 0
        %1678 = vmatpush1.bf16.msra.mxu0 0
        %1679 = vmatprep.subr.bf16.mxu0 0
        %1680 = vmatpush1.bf16.msra.mxu0 0
        %1681 = vmatprep.subr.bf16.mxu0 0
        %1682 = vmatpush1.bf16.msra.mxu0 0
        %1683 = vmatprep.subr.bf16.mxu0 0
        %1684 = vmatpush1.bf16.msra.mxu0 0
        %1685 = vmatprep.subr.bf16.mxu0 0
        %1686 = vmatpush1.bf16.msra.mxu0 0
        %1687 = vmatprep.subr.bf16.mxu0 0
        %1688 = vmatpush1.bf16.msra.mxu0 0
        %1689 = vmatprep.subr.bf16.mxu0 0
        %1690 = vmatpush1.bf16.msra.mxu0 0
        %1691 = vmatprep.subr.bf16.mxu0 0
        %1692 = vmatpush1.bf16.msra.mxu0 0
        %1693 = vmatprep.subr.bf16.mxu0 0
        %1694 = vmatpush1.bf16.msra.mxu0 0
        %1695 = vmatprep.subr.bf16.mxu0 0
        %1696 = vmatpush1.bf16.msra.mxu0 0
        %1697 = vmatprep.subr.bf16.mxu0 0
        %1698 = vmatpush1.bf16.msra.mxu0 0
        %1699 = vmatprep.subr.bf16.mxu0 0
        %1700 = vmatpush1.bf16.msra.mxu0 0
        %1701 = vmatprep.subr.bf16.mxu0 0
        %1702 = vmatpush1.bf16.msra.mxu0 0
        %1703 = vmatprep.mubr.bf16.mxu0 0
        %1704 = vmatmul.mubr.bf16.gmra.mrb[0].mxu0 %v1665
        %v1705 = vpop.f32.mrb[0].mxu0
        %v1706 = vadd.f32 0.0, %v1705
        %v1707 = vpop.f32.mrb[0].mxu0
        %v1708 = vpop.f32.mrb[0].mxu0
        %v1709 = vpop.f32.mrb[0].mxu0
        %1710 = vdwg.mxu0
        %v1712 = vsel %vm1431, %v1661, 0
        %v1715 = vsel %vm1667, %v1424, 0
        %1717 = vmatprep.subr.bf16.mxu0 0
        %1718 = vmatpush1.bf16.msra.mxu0 %v1715
        %1719 = vmatprep.subr.bf16.mxu0 0
        %1720 = vmatpush1.bf16.msra.mxu0 0
        %1721 = vmatprep.subr.bf16.mxu0 0
        %1722 = vmatpush1.bf16.msra.mxu0 0
        %1723 = vmatprep.subr.bf16.mxu0 0
        %1724 = vmatpush1.bf16.msra.mxu0 0
        %1725 = vmatprep.subr.bf16.mxu0 0
        %1726 = vmatpush1.bf16.msra.mxu0 0
        %1727 = vmatprep.subr.bf16.mxu0 0
        %1728 = vmatpush1.bf16.msra.mxu0 0
        %1729 = vmatprep.subr.bf16.mxu0 0
        %1730 = vmatpush1.bf16.msra.mxu0 0
        %1731 = vmatprep.subr.bf16.mxu0 0
        %1732 = vmatpush1.bf16.msra.mxu0 0
        %1733 = vmatprep.subr.bf16.mxu0 0
        %1734 = vmatpush1.bf16.msra.mxu0 0
        %1735 = vmatprep.subr.bf16.mxu0 0
        %1736 = vmatpush1.bf16.msra.mxu0 0
        %1737 = vmatprep.subr.bf16.mxu0 0
        %1738 = vmatpush1.bf16.msra.mxu0 0
        %1739 = vmatprep.subr.bf16.mxu0 0
        %1740 = vmatpush1.bf16.msra.mxu0 0
        %1741 = vmatprep.subr.bf16.mxu0 0
        %1742 = vmatpush1.bf16.msra.mxu0 0
        %1743 = vmatprep.subr.bf16.mxu0 0
        %1744 = vmatpush1.bf16.msra.mxu0 0
        %1745 = vmatprep.subr.bf16.mxu0 0
        %1746 = vmatpush1.bf16.msra.mxu0 0
        %1747 = vmatprep.subr.bf16.mxu0 0
        %1748 = vmatpush1.bf16.msra.mxu0 0
        %1749 = vmatprep.mubr.bf16.mxu0 0
        %1750 = vmatmul.mubr.bf16.gmra.mrb[0].mxu0 %v1712
        %v1751 = vpop.f32.mrb[0].mxu0
        %v1752 = vadd.f32 0.0, %v1751
        %v1753 = vpop.f32.mrb[0].mxu0
        %v1754 = vpop.f32.mrb[0].mxu0
        %v1755 = vpop.f32.mrb[0].mxu0
        %1756 = vdwg.mxu0
        %v1758 = vsel %vm1431, %v1662, 0
        %v1761 = vsel %vm1667, %v1427, 0
        %1763 = vmatprep.subr.bf16.mxu0 0
        %1764 = vmatpush1.bf16.msra.mxu0 %v1761
        %1765 = vmatprep.subr.bf16.mxu0 0
        %1766 = vmatpush1.bf16.msra.mxu0 0
        %1767 = vmatprep.subr.bf16.mxu0 0
        %1768 = vmatpush1.bf16.msra.mxu0 0
        %1769 = vmatprep.subr.bf16.mxu0 0
        %1770 = vmatpush1.bf16.msra.mxu0 0
        %1771 = vmatprep.subr.bf16.mxu0 0
        %1772 = vmatpush1.bf16.msra.mxu0 0
        %1773 = vmatprep.subr.bf16.mxu0 0
        %1774 = vmatpush1.bf16.msra.mxu0 0
        %1775 = vmatprep.subr.bf16.mxu0 0
        %1776 = vmatpush1.bf16.msra.mxu0 0
        %1777 = vmatprep.subr.bf16.mxu0 0
        %1778 = vmatpush1.bf16.msra.mxu0 0
        %1779 = vmatprep.subr.bf16.mxu0 0
        %1780 = vmatpush1.bf16.msra.mxu0 0
        %1781 = vmatprep.subr.bf16.mxu0 0
        %1782 = vmatpush1.bf16.msra.mxu0 0
        %1783 = vmatprep.subr.bf16.mxu0 0
        %1784 = vmatpush1.bf16.msra.mxu0 0
        %1785 = vmatprep.subr.bf16.mxu0 0
        %1786 = vmatpush1.bf16.msra.mxu0 0
        %1787 = vmatprep.subr.bf16.mxu0 0
        %1788 = vmatpush1.bf16.msra.mxu0 0
        %1789 = vmatprep.subr.bf16.mxu0 0
        %1790 = vmatpush1.bf16.msra.mxu0 0
        %1791 = vmatprep.subr.bf16.mxu0 0
        %1792 = vmatpush1.bf16.msra.mxu0 0
        %1793 = vmatprep.subr.bf16.mxu0 0
        %1794 = vmatpush1.bf16.msra.mxu0 0
        %1795 = vmatprep.mubr.bf16.mxu0 0
        %1796 = vmatmul.mubr.bf16.gmra.mrb[0].mxu0 %v1758
        %v1797 = vpop.f32.mrb[0].mxu0
        %v1798 = vadd.f32 0.0, %v1797
        %v1799 = vpop.f32.mrb[0].mxu0
        %v1800 = vpop.f32.mrb[0].mxu0
        %v1801 = vpop.f32.mrb[0].mxu0
        %1802 = vdwg.mxu0
        %v1804 = vsel %vm1431, %v1663, 0
        %v1807 = vsel %vm1667, %v1430, 0
        %1809 = vmatprep.subr.bf16.mxu0 0
        %1810 = vmatpush1.bf16.msra.mxu0 %v1807
        %1811 = vmatprep.subr.bf16.mxu0 0
        %1812 = vmatpush1.bf16.msra.mxu0 0
        %1813 = vmatprep.subr.bf16.mxu0 0
        %1814 = vmatpush1.bf16.msra.mxu0 0
        %1815 = vmatprep.subr.bf16.mxu0 0
        %1816 = vmatpush1.bf16.msra.mxu0 0
        %1817 = vmatprep.subr.bf16.mxu0 0
        %1818 = vmatpush1.bf16.msra.mxu0 0
        %1819 = vmatprep.subr.bf16.mxu0 0
        %1820 = vmatpush1.bf16.msra.mxu0 0
        %1821 = vmatprep.subr.bf16.mxu0 0
        %1822 = vmatpush1.bf16.msra.mxu0 0
        %1823 = vmatprep.subr.bf16.mxu0 0
        %1824 = vmatpush1.bf16.msra.mxu0 0
        %1825 = vmatprep.subr.bf16.mxu0 0
        %1826 = vmatpush1.bf16.msra.mxu0 0
        %1827 = vmatprep.subr.bf16.mxu0 0
        %1828 = vmatpush1.bf16.msra.mxu0 0
        %1829 = vmatprep.subr.bf16.mxu0 0
        %1830 = vmatpush1.bf16.msra.mxu0 0
        %1831 = vmatprep.subr.bf16.mxu0 0
        %1832 = vmatpush1.bf16.msra.mxu0 0
        %1833 = vmatprep.subr.bf16.mxu0 0
        %1834 = vmatpush1.bf16.msra.mxu0 0
        %1835 = vmatprep.subr.bf16.mxu0 0
        %1836 = vmatpush1.bf16.msra.mxu0 0
        %1837 = vmatprep.subr.bf16.mxu0 0
        %1838 = vmatpush1.bf16.msra.mxu0 0
        %1839 = vmatprep.subr.bf16.mxu0 0
        %1840 = vmatpush1.bf16.msra.mxu0 0
        %1841 = vmatprep.mubr.bf16.mxu0 0
        %1842 = vmatmul.mubr.bf16.gmra.mrb[0].mxu0 %v1804
        %v1843 = vpop.f32.mrb[0].mxu0
        %v1844 = vadd.f32 0.0, %v1843
        %v1845 = vpop.f32.mrb[0].mxu0
        %v1846 = vpop.f32.mrb[0].mxu0
        %v1847 = vpop.f32.mrb[0].mxu0
        %1848 = vdwg.mxu0
        %v1849 = vpack.c.bf16 %v1706, %v1706
        %v1850 = vld [vmem:[%s9] sm:$0xf]
        %v1852 = vsel %vm1431, %v1849, 0
        %v1855 = vsel %vm1667, %v1850, 0
        %1857 = vmatprep.subr.bf16.mxu0 0
        %1858 = vmatpush1.bf16.msra.mxu0 %v1855
        %1859 = vmatprep.subr.bf16.mxu0 0
        %1860 = vmatpush1.bf16.msra.mxu0 0
        %1861 = vmatprep.subr.bf16.mxu0 0
        %1862 = vmatpush1.bf16.msra.mxu0 0
        %1863 = vmatprep.subr.bf16.mxu0 0
        %1864 = vmatpush1.bf16.msra.mxu0 0
        %1865 = vmatprep.subr.bf16.mxu0 0
        %1866 = vmatpush1.bf16.msra.mxu0 0
        %1867 = vmatprep.subr.bf16.mxu0 0
        %1868 = vmatpush1.bf16.msra.mxu0 0
        %1869 = vmatprep.subr.bf16.mxu0 0
        %1870 = vmatpush1.bf16.msra.mxu0 0
        %1871 = vmatprep.subr.bf16.mxu0 0
        %1872 = vmatpush1.bf16.msra.mxu0 0
        %1873 = vmatprep.subr.bf16.mxu0 0
        %1874 = vmatpush1.bf16.msra.mxu0 0
        %1875 = vmatprep.subr.bf16.mxu0 0
        %1876 = vmatpush1.bf16.msra.mxu0 0
        %1877 = vmatprep.subr.bf16.mxu0 0
        %1878 = vmatpush1.bf16.msra.mxu0 0
        %1879 = vmatprep.subr.bf16.mxu0 0
        %1880 = vmatpush1.bf16.msra.mxu0 0
        %1881 = vmatprep.subr.bf16.mxu0 0
        %1882 = vmatpush1.bf16.msra.mxu0 0
        %1883 = vmatprep.subr.bf16.mxu0 0
        %1884 = vmatpush1.bf16.msra.mxu0 0
        %1885 = vmatprep.subr.bf16.mxu0 0
        %1886 = vmatpush1.bf16.msra.mxu0 0
        %1887 = vmatprep.subr.bf16.mxu0 0
        %1888 = vmatpush1.bf16.msra.mxu0 0
        %1889 = vmatprep.mubr.bf16.mxu0 0
        %1890 = vmatmul.mubr.bf16.gmra.mrb[0].mxu0 %v1852
        %v1891 = vpop.f32.mrb[0].mxu0
        %v1892 = vadd.f32 0.0, %v1891
        %v1893 = vpop.f32.mrb[0].mxu0
        %v1894 = vpop.f32.mrb[0].mxu0
        %v1895 = vpop.f32.mrb[0].mxu0
        %1896 = vdwg.mxu0
        %v1897 = vadd.f32 %v925, %v1892
        %v1898 = vpack.c.bf16 %v1752, %v1752
        %s1899 = scalar_lea.vmem %s9, 4
        %v1900 = vld [vmem:[%s1899] sm:$0xf]
        %v1902 = vsel %vm1431, %v1898, 0
        %v1905 = vsel %vm1667, %v1900, 0
        %1907 = vmatprep.subr.bf16.mxu0 0
        %1908 = vmatpush1.bf16.msra.mxu0 %v1905
        %1909 = vmatprep.subr.bf16.mxu0 0
        %1910 = vmatpush1.bf16.msra.mxu0 0
        %1911 = vmatprep.subr.bf16.mxu0 0
        %1912 = vmatpush1.bf16.msra.mxu0 0
        %1913 = vmatprep.subr.bf16.mxu0 0
        %1914 = vmatpush1.bf16.msra.mxu0 0
        %1915 = vmatprep.subr.bf16.mxu0 0
        %1916 = vmatpush1.bf16.msra.mxu0 0
        %1917 = vmatprep.subr.bf16.mxu0 0
        %1918 = vmatpush1.bf16.msra.mxu0 0
        %1919 = vmatprep.subr.bf16.mxu0 0
        %1920 = vmatpush1.bf16.msra.mxu0 0
        %1921 = vmatprep.subr.bf16.mxu0 0
        %1922 = vmatpush1.bf16.msra.mxu0 0
        %1923 = vmatprep.subr.bf16.mxu0 0
        %1924 = vmatpush1.bf16.msra.mxu0 0
        %1925 = vmatprep.subr.bf16.mxu0 0
        %1926 = vmatpush1.bf16.msra.mxu0 0
        %1927 = vmatprep.subr.bf16.mxu0 0
        %1928 = vmatpush1.bf16.msra.mxu0 0
        %1929 = vmatprep.subr.bf16.mxu0 0
        %1930 = vmatpush1.bf16.msra.mxu0 0
        %1931 = vmatprep.subr.bf16.mxu0 0
        %1932 = vmatpush1.bf16.msra.mxu0 0
        %1933 = vmatprep.subr.bf16.mxu0 0
        %1934 = vmatpush1.bf16.msra.mxu0 0
        %1935 = vmatprep.subr.bf16.mxu0 0
        %1936 = vmatpush1.bf16.msra.mxu0 0
        %1937 = vmatprep.subr.bf16.mxu0 0
        %1938 = vmatpush1.bf16.msra.mxu0 0
        %1939 = vmatprep.mubr.bf16.mxu0 0
        %1940 = vmatmul.mubr.bf16.gmra.mrb[0].mxu0 %v1902
        %v1941 = vpop.f32.mrb[0].mxu0
        %v1942 = vadd.f32 0.0, %v1941
        %v1943 = vpop.f32.mrb[0].mxu0
        %v1944 = vpop.f32.mrb[0].mxu0
        %v1945 = vpop.f32.mrb[0].mxu0
        %1946 = vdwg.mxu0
        %v1947 = vadd.f32 %v1897, %v1942
        %v1948 = vpack.c.bf16 %v1798, %v1798
        %s1949 = scalar_lea.vmem %s9, 8
        %v1950 = vld [vmem:[%s1949] sm:$0xf]
        %v1952 = vsel %vm1431, %v1948, 0
        %v1955 = vsel %vm1667, %v1950, 0
        %1957 = vmatprep.subr.bf16.mxu0 0
        %1958 = vmatpush1.bf16.msra.mxu0 %v1955
        %1959 = vmatprep.subr.bf16.mxu0 0
        %1960 = vmatpush1.bf16.msra.mxu0 0
        %1961 = vmatprep.subr.bf16.mxu0 0
        %1962 = vmatpush1.bf16.msra.mxu0 0
        %1963 = vmatprep.subr.bf16.mxu0 0
        %1964 = vmatpush1.bf16.msra.mxu0 0
        %1965 = vmatprep.subr.bf16.mxu0 0
        %1966 = vmatpush1.bf16.msra.mxu0 0
        %1967 = vmatprep.subr.bf16.mxu0 0
        %1968 = vmatpush1.bf16.msra.mxu0 0
        %1969 = vmatprep.subr.bf16.mxu0 0
        %1970 = vmatpush1.bf16.msra.mxu0 0
        %1971 = vmatprep.subr.bf16.mxu0 0
        %1972 = vmatpush1.bf16.msra.mxu0 0
        %1973 = vmatprep.subr.bf16.mxu0 0
        %1974 = vmatpush1.bf16.msra.mxu0 0
        %1975 = vmatprep.subr.bf16.mxu0 0
        %1976 = vmatpush1.bf16.msra.mxu0 0
        %1977 = vmatprep.subr.bf16.mxu0 0
        %1978 = vmatpush1.bf16.msra.mxu0 0
        %1979 = vmatprep.subr.bf16.mxu0 0
        %1980 = vmatpush1.bf16.msra.mxu0 0
        %1981 = vmatprep.subr.bf16.mxu0 0
        %1982 = vmatpush1.bf16.msra.mxu0 0
        %1983 = vmatprep.subr.bf16.mxu0 0
        %1984 = vmatpush1.bf16.msra.mxu0 0
        %1985 = vmatprep.subr.bf16.mxu0 0
        %1986 = vmatpush1.bf16.msra.mxu0 0
        %1987 = vmatprep.subr.bf16.mxu0 0
        %1988 = vmatpush1.bf16.msra.mxu0 0
        %1989 = vmatprep.mubr.bf16.mxu0 0
        %1990 = vmatmul.mubr.bf16.gmra.mrb[0].mxu0 %v1952
        %v1991 = vpop.f32.mrb[0].mxu0
        %v1992 = vadd.f32 0.0, %v1991
        %v1993 = vpop.f32.mrb[0].mxu0
        %v1994 = vpop.f32.mrb[0].mxu0
        %v1995 = vpop.f32.mrb[0].mxu0
        %1996 = vdwg.mxu0
        %v1997 = vadd.f32 %v1947, %v1992
        %v1998 = vpack.c.bf16 %v1844, %v1844
        %s1999 = scalar_lea.vmem %s9, 12
        %v2000 = vld [vmem:[%s1999] sm:$0xf]
        %v2002 = vsel %vm1431, %v1998, 0
        %v2005 = vsel %vm1667, %v2000, 0
        %2007 = vmatprep.subr.bf16.mxu0 0
        %2008 = vmatpush1.bf16.msra.mxu0 %v2005
        %2009 = vmatprep.subr.bf16.mxu0 0
        %2010 = vmatpush1.bf16.msra.mxu0 0
        %2011 = vmatprep.subr.bf16.mxu0 0
        %2012 = vmatpush1.bf16.msra.mxu0 0
        %2013 = vmatprep.subr.bf16.mxu0 0
        %2014 = vmatpush1.bf16.msra.mxu0 0
        %2015 = vmatprep.subr.bf16.mxu0 0
        %2016 = vmatpush1.bf16.msra.mxu0 0
        %2017 = vmatprep.subr.bf16.mxu0 0
        %2018 = vmatpush1.bf16.msra.mxu0 0
        %2019 = vmatprep.subr.bf16.mxu0 0
        %2020 = vmatpush1.bf16.msra.mxu0 0
        %2021 = vmatprep.subr.bf16.mxu0 0
        %2022 = vmatpush1.bf16.msra.mxu0 0
        %2023 = vmatprep.subr.bf16.mxu0 0
        %2024 = vmatpush1.bf16.msra.mxu0 0
        %2025 = vmatprep.subr.bf16.mxu0 0
        %2026 = vmatpush1.bf16.msra.mxu0 0
        %2027 = vmatprep.subr.bf16.mxu0 0
        %2028 = vmatpush1.bf16.msra.mxu0 0
        %2029 = vmatprep.subr.bf16.mxu0 0
        %2030 = vmatpush1.bf16.msra.mxu0 0
        %2031 = vmatprep.subr.bf16.mxu0 0
        %2032 = vmatpush1.bf16.msra.mxu0 0
        %2033 = vmatprep.subr.bf16.mxu0 0
        %2034 = vmatpush1.bf16.msra.mxu0 0
        %2035 = vmatprep.subr.bf16.mxu0 0
        %2036 = vmatpush1.bf16.msra.mxu0 0
        %2037 = vmatprep.subr.bf16.mxu0 0
        %2038 = vmatpush1.bf16.msra.mxu0 0
        %2039 = vmatprep.mubr.bf16.mxu0 0
        %2040 = vmatmul.mubr.bf16.gmra.mrb[0].mxu0 %v2002
        %v2041 = vpop.f32.mrb[0].mxu0
        %v2042 = vadd.f32 0.0, %v2041
        %v2043 = vpop.f32.mrb[0].mxu0
        %v2044 = vpop.f32.mrb[0].mxu0
        %v2045 = vpop.f32.mrb[0].mxu0
        %2046 = vdwg.mxu0
        %v2047 = vadd.f32 %v1997, %v2042
        %v2048 = vadd.f32 %v711, %v2047
        %v2049 = vld [vmem:[#allocation10] sm:$0x1]
        %v2050 = vld [vmem:[#allocation11] sm:$0x1]
        %v2051 = vsel %vm738, %v2048, 0.0
        %2052 = vadd.xlane.f32.xlu0 %v2051
        %v2053 = vpop.xlane.xlu0 %2052
        %v2054 = vrcp.pop 32.0
        %v2055 = vmul.f32 %v2053, %v2054
        %v2056 = vsub.f32 %v2048, %v2055
        %v2057 = vmul.f32 %v2056, %v2056
        %v2058 = vsel %vm738, %v2057, 0.0
        %2059 = vadd.xlane.f32.xlu0 %v2058
        %v2060 = vpop.xlane.xlu0 %2059
        %v2061 = vmul.f32 %v2060, %v2054
        %v2062 = vadd.f32 %v2061, 1e-05
        %v2063 = vrsqrt.pop %v2062
        %v2064 = vmul.f32 %v2056, %v2063
        %v2066 = vlaneseq
        %v2067 = vshrl.u32 %v2066, 7
        %v2068 = vsub.s32 0, %v2067
        %v2069 = vrot.slane %v2049, %v2068
        %v2071 = vmul.f32 %v2064, %v2069
        %v2073 = vlaneseq
        %v2074 = vshrl.u32 %v2073, 7
        %v2075 = vsub.s32 0, %v2074
        %v2076 = vrot.slane %v2050, %v2075
        %v2078 = vadd.f32 %v2071, %v2076
        %v2079 = vpack.c.bf16 %v2078, %v2078
        %v2080 = vld [vmem:[%s13] sm:$0xf]
        %v2081 = vld [vmem:[%s13 + $0x4] sm:$0xf]
        %v2082 = vld [vmem:[%s13 + $0x8] sm:$0xf]
        %v2083 = vld [vmem:[%s13 + $0xc] sm:$0xf]
        %v2084 = vld [vmem:[%s14] sm:$0x1]
        %v2086 = vlaneseq
        %v2087 = vshrl.u32 %v2086, 7
        %v2088 = vsub.s32 0, %v2087
        %v2089 = vrot.slane %v2084, %v2088
        %v2095 = vunpack.c.l.b16 %v2080
        %v2096 = vunpack.c.l.b16 %v2081
        %v2097 = vunpack.c.l.b16 %v2082
        %v2098 = vunpack.c.l.b16 %v2083
        %v2099 = vpack.c.b16 %v2096, %v2095
        %v2100 = vpack.c.b16 %v2098, %v2097
        %v2104 = vsel %vm738, %v2079, 0
        %2106 = vmatprep.subr.bf16.mxu0 0
        %2107 = vmatpush1.bf16.msra.mxu0 %v2099
        %2108 = vmatprep.subr.bf16.mxu0 0
        %2109 = vmatpush1.bf16.msra.mxu0 %v2100
        %2110 = vmatprep.subr.bf16.mxu0 0
        %2111 = vmatpush1.bf16.msra.mxu0 0
        %2112 = vmatprep.subr.bf16.mxu0 0
        %2113 = vmatpush1.bf16.msra.mxu0 0
        %2114 = vmatprep.subr.bf16.mxu0 0
        %2115 = vmatpush1.bf16.msra.mxu0 0
        %2116 = vmatprep.subr.bf16.mxu0 0
        %2117 = vmatpush1.bf16.msra.mxu0 0
        %2118 = vmatprep.subr.bf16.mxu0 0
        %2119 = vmatpush1.bf16.msra.mxu0 0
        %2120 = vmatprep.subr.bf16.mxu0 0
        %2121 = vmatpush1.bf16.msra.mxu0 0
        %2122 = vmatprep.subr.bf16.mxu0 0
        %2123 = vmatpush1.bf16.msra.mxu0 0
        %2124 = vmatprep.subr.bf16.mxu0 0
        %2125 = vmatpush1.bf16.msra.mxu0 0
        %2126 = vmatprep.subr.bf16.mxu0 0
        %2127 = vmatpush1.bf16.msra.mxu0 0
        %2128 = vmatprep.subr.bf16.mxu0 0
        %2129 = vmatpush1.bf16.msra.mxu0 0
        %2130 = vmatprep.subr.bf16.mxu0 0
        %2131 = vmatpush1.bf16.msra.mxu0 0
        %2132 = vmatprep.subr.bf16.mxu0 0
        %2133 = vmatpush1.bf16.msra.mxu0 0
        %2134 = vmatprep.subr.bf16.mxu0 0
        %2135 = vmatpush1.bf16.msra.mxu0 0
        %2136 = vmatprep.subr.bf16.mxu0 0
        %2137 = vmatpush1.bf16.msra.mxu0 0
        %2138 = vmatprep.mubr.bf16.mxu0 0
        %2139 = vmatmul.mubr.bf16.gmra.mrb[0].mxu0 %v2104
        %v2140 = vpop.f32.mrb[0].mxu0
        %v2141 = vadd.f32 %v2089, %v2140
        %v2142 = vpop.f32.mrb[0].mxu0
        %v2143 = vpop.f32.mrb[0].mxu0
        %v2144 = vpop.f32.mrb[0].mxu0
        %2145 = vdwg.mxu0
        %v2146 = vmax.f32 %v2141, 0.0
        %v2147 = vpack.c.bf16 %v2146, %v2146
        %v2148 = vld [vmem:[%s15] sm:$0xf]
        %v2149 = vld [vmem:[%s15 + $0x4] sm:$0xf]
        %v2150 = vld [vmem:[%s15 + $0x8] sm:$0xf]
        %v2151 = vld [vmem:[%s15 + $0xc] sm:$0xf]
        %v2152 = vld [vmem:[%s15 + $0x10] sm:$0xf]
        %v2153 = vld [vmem:[%s15 + $0x14] sm:$0xf]
        %v2154 = vld [vmem:[%s15 + $0x18] sm:$0xf]
        %v2155 = vld [vmem:[%s15 + $0x1c] sm:$0xf]
        %v2156 = vld [vmem:[%s15 + $0x20] sm:$0xf]
        %v2157 = vld [vmem:[%s15 + $0x24] sm:$0xf]
        %v2158 = vld [vmem:[%s15 + $0x28] sm:$0xf]
        %v2159 = vld [vmem:[%s15 + $0x2c] sm:$0xf]
        %v2160 = vld [vmem:[%s15 + $0x30] sm:$0xf]
        %v2161 = vld [vmem:[%s15 + $0x34] sm:$0xf]
        %v2162 = vld [vmem:[%s15 + $0x38] sm:$0xf]
        %v2163 = vld [vmem:[%s15 + $0x3c] sm:$0xf]
        %v2164 = vld [vmem:[%s16] sm:$0x1]
        %v2166 = vlaneseq
        %v2167 = vshrl.u32 %v2166, 7
        %v2168 = vsub.s32 0, %v2167
        %v2169 = vrot.slane %v2164, %v2168
        %v2187 = vunpack.c.l.b16 %v2148
        %v2188 = vunpack.c.l.b16 %v2149
        %v2189 = vunpack.c.l.b16 %v2150
        %v2190 = vunpack.c.l.b16 %v2151
        %v2191 = vunpack.c.l.b16 %v2152
        %v2192 = vunpack.c.l.b16 %v2153
        %v2193 = vunpack.c.l.b16 %v2154
        %v2194 = vunpack.c.l.b16 %v2155
        %v2195 = vunpack.c.l.b16 %v2156
        %v2196 = vunpack.c.l.b16 %v2157
        %v2197 = vunpack.c.l.b16 %v2158
        %v2198 = vunpack.c.l.b16 %v2159
        %v2199 = vunpack.c.l.b16 %v2160
        %v2200 = vunpack.c.l.b16 %v2161
        %v2201 = vunpack.c.l.b16 %v2162
        %v2202 = vunpack.c.l.b16 %v2163
        %v2203 = vpack.c.b16 %v2188, %v2187
        %v2204 = vpack.c.b16 %v2190, %v2189
        %v2205 = vpack.c.b16 %v2192, %v2191
        %v2206 = vpack.c.b16 %v2194, %v2193
        %v2207 = vpack.c.b16 %v2196, %v2195
        %v2208 = vpack.c.b16 %v2198, %v2197
        %v2209 = vpack.c.b16 %v2200, %v2199
        %v2210 = vpack.c.b16 %v2202, %v2201
        %2219 = vmatprep.subr.bf16.mxu0 0
        %2220 = vmatpush1.bf16.msra.mxu0 %v2203
        %2221 = vmatprep.subr.bf16.mxu0 0
        %2222 = vmatpush1.bf16.msra.mxu0 %v2204
        %2223 = vmatprep.subr.bf16.mxu0 0
        %2224 = vmatpush1.bf16.msra.mxu0 %v2205
        %2225 = vmatprep.subr.bf16.mxu0 0
        %2226 = vmatpush1.bf16.msra.mxu0 %v2206
        %2227 = vmatprep.subr.bf16.mxu0 0
        %2228 = vmatpush1.bf16.msra.mxu0 %v2207
        %2229 = vmatprep.subr.bf16.mxu0 0
        %2230 = vmatpush1.bf16.msra.mxu0 %v2208
        %2231 = vmatprep.subr.bf16.mxu0 0
        %2232 = vmatpush1.bf16.msra.mxu0 %v2209
        %2233 = vmatprep.subr.bf16.mxu0 0
        %2234 = vmatpush1.bf16.msra.mxu0 %v2210
        %2235 = vmatprep.subr.bf16.mxu0 0
        %2236 = vmatpush1.bf16.msra.mxu0 0
        %2237 = vmatprep.subr.bf16.mxu0 0
        %2238 = vmatpush1.bf16.msra.mxu0 0
        %2239 = vmatprep.subr.bf16.mxu0 0
        %2240 = vmatpush1.bf16.msra.mxu0 0
        %2241 = vmatprep.subr.bf16.mxu0 0
        %2242 = vmatpush1.bf16.msra.mxu0 0
        %2243 = vmatprep.subr.bf16.mxu0 0
        %2244 = vmatpush1.bf16.msra.mxu0 0
        %2245 = vmatprep.subr.bf16.mxu0 0
        %2246 = vmatpush1.bf16.msra.mxu0 0
        %2247 = vmatprep.subr.bf16.mxu0 0
        %2248 = vmatpush1.bf16.msra.mxu0 0
        %2249 = vmatprep.subr.bf16.mxu0 0
        %2250 = vmatpush1.bf16.msra.mxu0 0
        %2251 = vmatprep.mubr.bf16.mxu0 0
        %2252 = vmatmul.mubr.bf16.gmra.mrb[0].mxu0 %v2147
        %v2253 = vpop.f32.mrb[0].mxu0
        %v2254 = vadd.f32 %v2169, %v2253
        %v2255 = vpop.f32.mrb[0].mxu0
        %v2256 = vpop.f32.mrb[0].mxu0
        %v2257 = vpop.f32.mrb[0].mxu0
        %2258 = vdwg.mxu0
        %v2259 = vadd.f32 %v2078, %v2254
        %v2260 = vld [vmem:[%s17] sm:$0x1]
        %v2261 = vld [vmem:[%s18] sm:$0x1]
        %v2262 = vsel %vm738, %v2259, 0.0
        %2263 = vadd.xlane.f32.xlu0 %v2262
        %v2264 = vpop.xlane.xlu0 %2263
        %v2265 = vmul.f32 %v2264, %v2054
        %v2266 = vsub.f32 %v2259, %v2265
        %v2267 = vmul.f32 %v2266, %v2266
        %v2268 = vsel %vm738, %v2267, 0.0
        %2269 = vadd.xlane.f32.xlu0 %v2268
        %v2270 = vpop.xlane.xlu0 %2269
        %v2271 = vmul.f32 %v2270, %v2054
        %v2272 = vadd.f32 %v2271, 1e-05
        %v2273 = vrsqrt.pop %v2272
        %v2274 = vmul.f32 %v2266, %v2273
        %v2276 = vlaneseq
        %v2277 = vshrl.u32 %v2276, 7
        %v2278 = vsub.s32 0, %v2277
        %v2279 = vrot.slane %v2260, %v2278
        %v2281 = vmul.f32 %v2274, %v2279
        %v2283 = vlaneseq
        %v2284 = vshrl.u32 %v2283, 7
        %v2285 = vsub.s32 0, %v2284
        %v2286 = vrot.slane %v2261, %v2285
        %v2288 = vadd.f32 %v2281, %v2286
        %2289 = vst.msk [vmem:[%s697] sm:$0xff] %vm738, %v2288
        %s2290 = sand.u32 %s459, 1
        %s2291 = scalar_lea.sflag [#allocation4], %s2290
        %s2292 = sand.u32 %s459, 1
        %s2293 = smul.addr %s2292, 8
        %s2294 = scalar_lea.vmem [#allocation13], %s2293
        // Predicated region
        $region121: #{tpu_custom_call.1} parent=95 // pred_check
          %p2295 = pneg %p469
        $region122: #{tpu_custom_call.1} parent=95 // pred_check_branch
          %2297 = sbr.rel (%p2295) target = $region124
        $region123: #{tpu_custom_call.1} parent=95 // pred_region
          %s2299 = ssub.s32 128, 128
          %2300 = vsyncadd %s2291, %s2299
          %s2301 = smul.addr %s37, 128
          %s2302 = scalar_lea.hbm %s19, %s2301
          %s2304 = sshll.u32 %s2294, 4
          %s2305 = int_to_ptr.vmem [resolvable:$true] %s2304
          %2307 = dma.vmem_to_hbm [thread:$0]  %s2305, 128, %s2302, %s2291
        $region124: #{tpu_custom_call.1} parent=95 // pred_fallthru
          _
      $region96: #{tpu_custom_call.1} parent=5 // pred_fallthru
        _
      %p2308 = scmp.le.s32.totalorder 2, %s32
      // Predicated region
      $region125: #{tpu_custom_call.1} parent=5 // pred_check
        %p2309 = pneg %p2308
      $region126: #{tpu_custom_call.1} parent=5 // pred_check_branch
        %2311 = sbr.rel (%p2309) target = $region128
      $region127: #{tpu_custom_call.1} parent=5 // pred_region
        %s2312 = ssub.s32 %s32, 2
        // Predicated region
        $region129: #{tpu_custom_call.1} parent=127 // pred_check
          %p2313 = pneg %p475
        $region130: #{tpu_custom_call.1} parent=127 // pred_check_branch
          %2315 = sbr.rel (%p2313) target = $region132
        $region131: #{tpu_custom_call.1} parent=127 // pred_region
          %s2316 = sand.u32 %s460, 1
          %s2317 = scalar_lea.sflag [#allocation4], %s2316
          %s2318 = sand.u32 %s460, 1
          %s2319 = smul.addr %s2318, 8
          %s2320 = scalar_lea.vmem [#allocation13], %s2319
          %2321 = dma.done %s2317, 128
        $region132: #{tpu_custom_call.1} parent=127 // pred_fallthru
          _
      $region128: #{tpu_custom_call.1} parent=5 // pred_fallthru
        _
    $region6: #{tpu_custom_call.1} parent=1 // loop_footer
      %s36 = sadd.s32 1, %s32
    $region7: #{tpu_custom_call.1} parent=1 // loop_footer_branch
      %31 = sbr.rel target = $region3
    $region8: #{tpu_custom_call.1} parent=1 // loop_exit
      _
    %2322 = vsyncpa [#allocation3], 1
    %s2323 = scalar_lea.sflag [#allocation3], 1
    %2324 = vsyncpa %s2323, 1
    %2325 = vsyncpa [#allocation6], 1
    %2326 = vsyncpa [#allocation9], 1
    %2327 = vsyncpa [#allocation12], 1
    %2328 = vsyncpa [#allocation4], 1
    %s2329 = scalar_lea.sflag [#allocation4], 1
    %2330 = vsyncpa %s2329, 1

// kernel: tpu_custom_call.1
$region0: #{tpu_custom_call.1}
  #allocation0 [shape = 'u32[]', space=smem, size = 0x4, offset = 0x4, fixed_abs, tag = 'smem constant byte address 0x4 - core index']
  #allocation1 [shape = 'u32[144,128]{1,0:T(1,128)}', space=vmem, size = 0x12000, scoped, tag = 'internal scratch']
  %s0 = inlined_call_operand.vmem [shape: f32[16,32], index: 0, kind: input, shape index: {}]
  %s1 = inlined_call_operand.vmem [shape: f32[16,32], index: 1, kind: input, shape index: {}]
  %s2 = inlined_call_operand.vmem [shape: f32[16,32], index: 2, kind: input, shape index: {}]
  %s3 = inlined_call_operand.vmem [shape: bf16[32,32], index: 3, kind: input, shape index: {}]
  %s4 = inlined_call_operand.vmem [shape: bf16[32,32], index: 4, kind: input, shape index: {}]
  %s5 = inlined_call_operand.hbm [shape: bf16[32,32], index: 5, kind: input, shape index: {}]
  %s6 = inlined_call_operand.vmem [shape: f32[1,32], index: 6, kind: input, shape index: {}]
  %s7 = inlined_call_operand.hbm [shape: f32[1,32], index: 7, kind: input, shape index: {}]
  %s8 = inlined_call_operand.hbm [shape: f32[1,32], index: 8, kind: input, shape index: {}]
  %s9 = inlined_call_operand.vmem [shape: bf16[4,8,32], index: 9, kind: input, shape index: {}]
  %s10 = inlined_call_operand.hbm [shape: f32[1,32], index: 10, kind: input, shape index: {}]
  %s11 = inlined_call_operand.hbm [shape: f32[1,32], index: 11, kind: input, shape index: {}]
  %s12 = inlined_call_operand.hbm [shape: f32[1,32], index: 12, kind: input, shape index: {}]
  %s13 = inlined_call_operand.vmem [shape: bf16[32,128], index: 13, kind: input, shape index: {}]
  %s14 = inlined_call_operand.vmem [shape: f32[1,128], index: 14, kind: input, shape index: {}]
  %s15 = inlined_call_operand.vmem [shape: bf16[128,32], index: 15, kind: input, shape index: {}]
  %s16 = inlined_call_operand.vmem [shape: f32[1,32], index: 16, kind: input, shape index: {}]
  %s17 = inlined_call_operand.vmem [shape: f32[1,32], index: 17, kind: input, shape index: {}]
  %s18 = inlined_call_operand.vmem [shape: f32[1,32], index: 18, kind: input, shape index: {}]
  %s19 = inlined_call_operand.hbm [shape: f32[16,32], index: 19, kind: output, shape index: {}]
  %s20 = sld [smem:[#allocation0]]
  $region133: #{tpu_custom_call.1} parent=0
    _
  %s22 = ssub.s32 1, %s20
  %s23 = scalar_select 0, %s22, %s20
  $region1: #{tpu_custom_call.1} parent=0
    #allocation2 [shape = 'u8[8192]{0}', space=vmem, size = 0x2000, scoped, tag = 'input window, operand 5, single buffered']
    #allocation3 [shape = 's32[2]{0}', space=sflag, size = 0x8, scoped, tag = 'scoped memory for tpu_custom_call.1']
    #allocation4 [shape = 's32[2]{0}', space=sflag, size = 0x8, scoped, tag = 'scoped memory for tpu_custom_call.1']
    #allocation5 [shape = 'u8[512]{0}', space=vmem, size = 0x400, scoped, tag = 'input window, operand 7, single buffered']
    #allocation6 [shape = 's32[1]{0}', space=sflag, size = 0x4, scoped, tag = 'scoped memory for tpu_custom_call.1']
    #allocation7 [shape = 'u8[512]{0}', space=vmem, size = 0x400, scoped, tag = 'input window, operand 8, single buffered']
    #allocation8 [shape = 'u8[512]{0}', space=vmem, size = 0x400, scoped, tag = 'input window, operand 10, single buffered']
    #allocation9 [shape = 's32[1]{0}', space=sflag, size = 0x4, scoped, tag = 'scoped memory for tpu_custom_call.1']
    #allocation10 [shape = 'u8[512]{0}', space=vmem, size = 0x400, scoped, tag = 'input window, operand 11, single buffered']
    #allocation11 [shape = 'u8[512]{0}', space=vmem, size = 0x400, scoped, tag = 'input window, operand 12, single buffered']
    #allocation12 [shape = 's32[1]{0}', space=sflag, size = 0x4, scoped, tag = 'scoped memory for tpu_custom_call.1']
    #allocation13 [shape = 'u8[8192]{0}', space=vmem, size = 0x2000, scoped, tag = 'output window, operand 0']
    %24 = vsyncpa [#allocation3], 0
    %25 = vsyncpa [#allocation6], 0
    %26 = vsyncpa [#allocation9], 0
    %27 = vsyncpa [#allocation12], 0
    %28 = vsyncpa [#allocation4], 0
    %s29 = scalar_lea.sflag [#allocation4], 1
    %30 = vsyncpa %s29, 0
    loop: start=0, step=1, limit=4
    $region2: #{tpu_custom_call.1} parent=1 // loop_pre_header
      _
    $region3: #{tpu_custom_call.1} parent=1 // loop_header
      %s32 = sphi 0, %s36
      %p33 = scmp.ge.s32.totalorder %s32, 4
      %s42 = sphi 0, %s44
      %s45 = sphi 0, %s42
      %s46 = sphi 0, %s45
      %s62 = sphi 0, %s46
      %s68 = sphi 0, %s70
      %s71 = sphi 0, %s68
      %s72 = sphi 0, %s71
      %s88 = sphi 0, %s72
      %s94 = sphi 0, %s96
      %s97 = sphi 0, %s94
      %s98 = sphi 0, %s97
      %s114 = sphi 0, %s98
      %s118 = sphi 0, %s118
      %s120 = sphi 0, %s118
      %s121 = sphi 0, %s120
      %s135 = sphi 0, %s121
      %s139 = sphi 0, %s139
      %s141 = sphi 0, %s139
      %s142 = sphi 0, %s141
      %s156 = sphi 0, %s142
      %s160 = sphi 0, %s160
      %s162 = sphi 0, %s160
      %s163 = sphi 0, %s162
      %s177 = sphi 0, %s163
      %s181 = sphi 0, %s181
      %s183 = sphi 0, %s181
      %s184 = sphi 0, %s183
      %s198 = sphi 0, %s184
      %s202 = sphi 0, %s202
      %s204 = sphi 0, %s202
      %s205 = sphi 0, %s204
      %s219 = sphi 0, %s205
      %s223 = sphi 0, %s223
      %s225 = sphi 0, %s223
      %s226 = sphi 0, %s225
      %s240 = sphi 0, %s226
      %s244 = sphi 0, %s244
      %s246 = sphi 0, %s244
      %s247 = sphi 0, %s246
      %s261 = sphi 0, %s247
      %s265 = sphi 0, %s265
      %s267 = sphi 0, %s265
      %s268 = sphi 0, %s267
      %s282 = sphi 0, %s268
      %s286 = sphi 0, %s286
      %s288 = sphi 0, %s286
      %s289 = sphi 0, %s288
      %s303 = sphi 0, %s289
      %s307 = sphi 0, %s307
      %s309 = sphi 0, %s307
      %s310 = sphi 0, %s309
      %s324 = sphi 0, %s310
      %s328 = sphi 0, %s328
      %s330 = sphi 0, %s328
      %s331 = sphi 0, %s330
      %s345 = sphi 0, %s331
      %s349 = sphi 0, %s349
      %s351 = sphi 0, %s349
      %s352 = sphi 0, %s351
      %s366 = sphi 0, %s352
      %s370 = sphi 0, %s370
      %s372 = sphi 0, %s370
      %s373 = sphi 0, %s372
      %s387 = sphi 0, %s373
      %s391 = sphi 0, %s391
      %s393 = sphi 0, %s391
      %s394 = sphi 0, %s393
      %s408 = sphi 0, %s394
      %s412 = sphi 0, %s412
      %s414 = sphi 0, %s412
      %s415 = sphi 0, %s414
      %s429 = sphi 0, %s415
      %s433 = sphi 0, %s433
      %s435 = sphi 0, %s433
      %s436 = sphi 0, %s435
      %s450 = sphi 0, %s436
      %s456 = sphi 0, %s458
      %s459 = sphi 0, %s456
      %s460 = sphi 0, %s459
      %s476 = sphi 0, %s460
    $region4: #{tpu_custom_call.1} parent=1 // loop_header_branch
      %35 = sbr.rel (%p33) target = $region8
    $region5: #{tpu_custom_call.1} parent=1 // loop_body
      %s37 = ssub.s32 %s32, 1
      %s38 = ssub.s32 %s32, 2
      %s39 = sadd.s32 %s32, 1
      %s40 = ssub.s32 %s32, %s39
      %p41 = scmp.eq.s32.totalorder %s40, 0
      %s43 = sadd.s32 %s42, 1
      %s44 = scalar_select %p41, %s42, %s43
      %p47 = pneg %p41
      %p48 = scmp.eq.s32.totalorder %s32, 1
      %p49 = por %p47, %p48
      %p50 = scmp.ne.s32.totalorder %s42, %s45
      %p51 = scmp.eq.s32.totalorder %s32, 0
      %p52 = por %p50, %p51
      %p53 = scmp.ne.s32.totalorder %s42, %s45
      %p54 = scmp.eq.s32.totalorder %s37, 1
      %p55 = por %p53, %p54
      %p56 = scmp.ne.s32.totalorder %s45, %s46
      %p57 = scmp.eq.s32.totalorder %s37, 0
      %p58 = por %p56, %p57
      %p59 = scmp.ne.s32.totalorder %s45, %s46
      %p60 = scmp.eq.s32.totalorder %s38, 1
      %p61 = por %p59, %p60
      %p63 = scmp.ne.s32.totalorder %s46, %s62
      %p64 = scmp.eq.s32.totalorder %s38, 0
      %p65 = por %p63, %p64
      %s66 = ssub.s32 %s32, %s39
      %p67 = scmp.eq.s32.totalorder %s66, 0
      %s69 = sadd.s32 %s68, 1
      %s70 = scalar_select %p67, %s68, %s69
      %p73 = pneg %p67
      %p74 = scmp.eq.s32.totalorder %s32, 1
      %p75 = por %p73, %p74
      %p76 = scmp.ne.s32.totalorder %s68, %s71
      %p77 = scmp.eq.s32.totalorder %s32, 0
      %p78 = por %p76, %p77
      %p79 = scmp.ne.s32.totalorder %s68, %s71
      %p80 = scmp.eq.s32.totalorder %s37, 1
      %p81 = por %p79, %p80
      %p82 = scmp.ne.s32.totalorder %s71, %s72
      %p83 = scmp.eq.s32.totalorder %s37, 0
      %p84 = por %p82, %p83
      %p85 = scmp.ne.s32.totalorder %s71, %s72
      %p86 = scmp.eq.s32.totalorder %s38, 1
      %p87 = por %p85, %p86
      %p89 = scmp.ne.s32.totalorder %s72, %s88
      %p90 = scmp.eq.s32.totalorder %s38, 0
      %p91 = por %p89, %p90
      %s92 = ssub.s32 %s32, %s39
      %p93 = scmp.eq.s32.totalorder %s92, 0
      %s95 = sadd.s32 %s94, 1
      %s96 = scalar_select %p93, %s94, %s95
      %p99 = pneg %p93
      %p100 = scmp.eq.s32.totalorder %s32, 1
      %p101 = por %p99, %p100
      %p102 = scmp.ne.s32.totalorder %s94, %s97
      %p103 = scmp.eq.s32.totalorder %s32, 0
      %p104 = por %p102, %p103
      %p105 = scmp.ne.s32.totalorder %s94, %s97
      %p106 = scmp.eq.s32.totalorder %s37, 1
      %p107 = por %p105, %p106
      %p108 = scmp.ne.s32.totalorder %s97, %s98
      %p109 = scmp.eq.s32.totalorder %s37, 0
      %p110 = por %p108, %p109
      %p111 = scmp.ne.s32.totalorder %s97, %s98
      %p112 = scmp.eq.s32.totalorder %s38, 1
      %p113 = por %p111, %p112
      %p115 = scmp.ne.s32.totalorder %s98, %s114
      %p116 = scmp.eq.s32.totalorder %s38, 0
      %p117 = por %p115, %p116
      %s119 = sadd.s32 %s118, 1
      %p122 = scmp.eq.s32.totalorder %s32, 1
      %p123 = scmp.ne.s32.totalorder %s118, %s120
      %p124 = scmp.eq.s32.totalorder %s32, 0
      %p125 = por %p123, %p124
      %p126 = scmp.ne.s32.totalorder %s118, %s120
      %p127 = scmp.eq.s32.totalorder %s37, 1
      %p128 = por %p126, %p127
      %p129 = scmp.ne.s32.totalorder %s120, %s121
      %p130 = scmp.eq.s32.totalorder %s37, 0
      %p131 = por %p129, %p130
      %p132 = scmp.ne.s32.totalorder %s120, %s121
      %p133 = scmp.eq.s32.totalorder %s38, 1
      %p134 = por %p132, %p133
      %p136 = scmp.ne.s32.totalorder %s121, %s135
      %p137 = scmp.eq.s32.totalorder %s38, 0
      %p138 = por %p136, %p137
      %s140 = sadd.s32 %s139, 1
      %p143 = scmp.eq.s32.totalorder %s32, 1
      %p144 = scmp.ne.s32.totalorder %s139, %s141
      %p145 = scmp.eq.s32.totalorder %s32, 0
      %p146 = por %p144, %p145
      %p147 = scmp.ne.s32.totalorder %s139, %s141
      %p148 = scmp.eq.s32.totalorder %s37, 1
      %p149 = por %p147, %p148
      %p150 = scmp.ne.s32.totalorder %s141, %s142
      %p151 = scmp.eq.s32.totalorder %s37, 0
      %p152 = por %p150, %p151
      %p153 = scmp.ne.s32.totalorder %s141, %s142
      %p154 = scmp.eq.s32.totalorder %s38, 1
      %p155 = por %p153, %p154
      %p157 = scmp.ne.s32.totalorder %s142, %s156
      %p158 = scmp.eq.s32.totalorder %s38, 0
      %p159 = por %p157, %p158
      %s161 = sadd.s32 %s160, 1
      %p164 = scmp.eq.s32.totalorder %s32, 1
      %p165 = scmp.ne.s32.totalorder %s160, %s162
      %p166 = scmp.eq.s32.totalorder %s32, 0
      %p167 = por %p165, %p166
      %p168 = scmp.ne.s32.totalorder %s160, %s162
      %p169 = scmp.eq.s32.totalorder %s37, 1
      %p170 = por %p168, %p169
      %p171 = scmp.ne.s32.totalorder %s162, %s163
      %p172 = scmp.eq.s32.totalorder %s37, 0
      %p173 = por %p171, %p172
      %p174 = scmp.ne.s32.totalorder %s162, %s163
      %p175 = scmp.eq.s32.totalorder %s38, 1
      %p176 = por %p174, %p175
      %p178 = scmp.ne.s32.totalorder %s163, %s177
      %p179 = scmp.eq.s32.totalorder %s38, 0
      %p180 = por %p178, %p179
      %s182 = sadd.s32 %s181, 1
      %p185 = scmp.eq.s32.totalorder %s32, 1
      %p186 = scmp.ne.s32.totalorder %s181, %s183
      %p187 = scmp.eq.s32.totalorder %s32, 0
      %p188 = por %p186, %p187
      %p189 = scmp.ne.s32.totalorder %s181, %s183
      %p190 = scmp.eq.s32.totalorder %s37, 1
      %p191 = por %p189, %p190
      %p192 = scmp.ne.s32.totalorder %s183, %s184
      %p193 = scmp.eq.s32.totalorder %s37, 0
      %p194 = por %p192, %p193
      %p195 = scmp.ne.s32.totalorder %s183, %s184
      %p196 = scmp.eq.s32.totalorder %s38, 1
      %p197 = por %p195, %p196
      %p199 = scmp.ne.s32.totalorder %s184, %s198
      %p200 = scmp.eq.s32.totalorder %s38, 0
      %p201 = por %p199, %p200
      %s203 = sadd.s32 %s202, 1
      %p206 = scmp.eq.s32.totalorder %s32, 1
      %p207 = scmp.ne.s32.totalorder %s202, %s204
      %p208 = scmp.eq.s32.totalorder %s32, 0
      %p209 = por %p207, %p208
      %p210 = scmp.ne.s32.totalorder %s202, %s204
      %p211 = scmp.eq.s32.totalorder %s37, 1
      %p212 = por %p210, %p211
      %p213 = scmp.ne.s32.totalorder %s204, %s205
      %p214 = scmp.eq.s32.totalorder %s37, 0
      %p215 = por %p213, %p214
      %p216 = scmp.ne.s32.totalorder %s204, %s205
      %p217 = scmp.eq.s32.totalorder %s38, 1
      %p218 = por %p216, %p217
      %p220 = scmp.ne.s32.totalorder %s205, %s219
      %p221 = scmp.eq.s32.totalorder %s38, 0
      %p222 = por %p220, %p221
      %s224 = sadd.s32 %s223, 1
      %p227 = scmp.eq.s32.totalorder %s32, 1
      %p228 = scmp.ne.s32.totalorder %s223, %s225
      %p229 = scmp.eq.s32.totalorder %s32, 0
      %p230 = por %p228, %p229
      %p231 = scmp.ne.s32.totalorder %s223, %s225
      %p232 = scmp.eq.s32.totalorder %s37, 1
      %p233 = por %p231, %p232
      %p234 = scmp.ne.s32.totalorder %s225, %s226
      %p235 = scmp.eq.s32.totalorder %s37, 0
      %p236 = por %p234, %p235
      %p237 = scmp.ne.s32.totalorder %s225, %s226
      %p238 = scmp.eq.s32.totalorder %s38, 1
      %p239 = por %p237, %p238
      %p241 = scmp.ne.s32.totalorder %s226, %s240
      %p242 = scmp.eq.s32.totalorder %s38, 0
      %p243 = por %p241, %p242
      %s245 = sadd.s32 %s244, 1
      %p248 = scmp.eq.s32.totalorder %s32, 1
      %p249 = scmp.ne.s32.totalorder %s244, %s246
      %p250 = scmp.eq.s32.totalorder %s32, 0
      %p251 = por %p249, %p250
      %p252 = scmp.ne.s32.totalorder %s244, %s246
      %p253 = scmp.eq.s32.totalorder %s37, 1
      %p254 = por %p252, %p253
      %p255 = scmp.ne.s32.totalorder %s246, %s247
      %p256 = scmp.eq.s32.totalorder %s37, 0
      %p257 = por %p255, %p256
      %p258 = scmp.ne.s32.totalorder %s246, %s247
      %p259 = scmp.eq.s32.totalorder %s38, 1
      %p260 = por %p258, %p259
      %p262 = scmp.ne.s32.totalorder %s247, %s261
      %p263 = scmp.eq.s32.totalorder %s38, 0
      %p264 = por %p262, %p263
      %s266 = sadd.s32 %s265, 1
      %p269 = scmp.eq.s32.totalorder %s32, 1
      %p270 = scmp.ne.s32.totalorder %s265, %s267
      %p271 = scmp.eq.s32.totalorder %s32, 0
      %p272 = por %p270, %p271
      %p273 = scmp.ne.s32.totalorder %s265, %s267
      %p274 = scmp.eq.s32.totalorder %s37, 1
      %p275 = por %p273, %p274
      %p276 = scmp.ne.s32.totalorder %s267, %s268
      %p277 = scmp.eq.s32.totalorder %s37, 0
      %p278 = por %p276, %p277
      %p279 = scmp.ne.s32.totalorder %s267, %s268
      %p280 = scmp.eq.s32.totalorder %s38, 1
      %p281 = por %p279, %p280
      %p283 = scmp.ne.s32.totalorder %s268, %s282
      %p284 = scmp.eq.s32.totalorder %s38, 0
      %p285 = por %p283, %p284
      %s287 = sadd.s32 %s286, 1
      %p290 = scmp.eq.s32.totalorder %s32, 1
      %p291 = scmp.ne.s32.totalorder %s286, %s288
      %p292 = scmp.eq.s32.totalorder %s32, 0
      %p293 = por %p291, %p292
      %p294 = scmp.ne.s32.totalorder %s286, %s288
      %p295 = scmp.eq.s32.totalorder %s37, 1
      %p296 = por %p294, %p295
      %p297 = scmp.ne.s32.totalorder %s288, %s289
      %p298 = scmp.eq.s32.totalorder %s37, 0
      %p299 = por %p297, %p298
      %p300 = scmp.ne.s32.totalorder %s288, %s289
      %p301 = scmp.eq.s32.totalorder %s38, 1
      %p302 = por %p300, %p301
      %p304 = scmp.ne.s32.totalorder %s289, %s303
      %p305 = scmp.eq.s32.totalorder %s38, 0
      %p306 = por %p304, %p305
      %s308 = sadd.s32 %s307, 1
      %p311 = scmp.eq.s32.totalorder %s32, 1
      %p312 = scmp.ne.s32.totalorder %s307, %s309
      %p313 = scmp.eq.s32.totalorder %s32, 0
      %p314 = por %p312, %p313
      %p315 = scmp.ne.s32.totalorder %s307, %s309
      %p316 = scmp.eq.s32.totalorder %s37, 1
      %p317 = por %p315, %p316
      %p318 = scmp.ne.s32.totalorder %s309, %s310
      %p319 = scmp.eq.s32.totalorder %s37, 0
      %p320 = por %p318, %p319
      %p321 = scmp.ne.s32.totalorder %s309, %s310
      %p322 = scmp.eq.s32.totalorder %s38, 1
      %p323 = por %p321, %p322
      %p325 = scmp.ne.s32.totalorder %s310, %s324
      %p326 = scmp.eq.s32.totalorder %s38, 0
      %p327 = por %p325, %p326
      %s329 = sadd.s32 %s328, 1
      %p332 = scmp.eq.s32.totalorder %s32, 1
      %p333 = scmp.ne.s32.totalorder %s328, %s330
      %p334 = scmp.eq.s32.totalorder %s32, 0
      %p335 = por %p333, %p334
      %p336 = scmp.ne.s32.totalorder %s328, %s330
      %p337 = scmp.eq.s32.totalorder %s37, 1
      %p338 = por %p336, %p337
      %p339 = scmp.ne.s32.totalorder %s330, %s331
      %p340 = scmp.eq.s32.totalorder %s37, 0
      %p341 = por %p339, %p340
      %p342 = scmp.ne.s32.totalorder %s330, %s331
      %p343 = scmp.eq.s32.totalorder %s38, 1
      %p344 = por %p342, %p343
      %p346 = scmp.ne.s32.totalorder %s331, %s345
      %p347 = scmp.eq.s32.totalorder %s38, 0
      %p348 = por %p346, %p347
      %s350 = sadd.s32 %s349, 1
      %p353 = scmp.eq.s32.totalorder %s32, 1
      %p354 = scmp.ne.s32.totalorder %s349, %s351
      %p355 = scmp.eq.s32.totalorder %s32, 0
      %p356 = por %p354, %p355
      %p357 = scmp.ne.s32.totalorder %s349, %s351
      %p358 = scmp.eq.s32.totalorder %s37, 1
      %p359 = por %p357, %p358
      %p360 = scmp.ne.s32.totalorder %s351, %s352
      %p361 = scmp.eq.s32.totalorder %s37, 0
      %p362 = por %p360, %p361
      %p363 = scmp.ne.s32.totalorder %s351, %s352
      %p364 = scmp.eq.s32.totalorder %s38, 1
      %p365 = por %p363, %p364
      %p367 = scmp.ne.s32.totalorder %s352, %s366
      %p368 = scmp.eq.s32.totalorder %s38, 0
      %p369 = por %p367, %p368
      %s371 = sadd.s32 %s370, 1
      %p374 = scmp.eq.s32.totalorder %s32, 1
      %p375 = scmp.ne.s32.totalorder %s370, %s372
      %p376 = scmp.eq.s32.totalorder %s32, 0
      %p377 = por %p375, %p376
      %p378 = scmp.ne.s32.totalorder %s370, %s372
      %p379 = scmp.eq.s32.totalorder %s37, 1
      %p380 = por %p378, %p379
      %p381 = scmp.ne.s32.totalorder %s372, %s373
      %p382 = scmp.eq.s32.totalorder %s37, 0
      %p383 = por %p381, %p382
      %p384 = scmp.ne.s32.totalorder %s372, %s373
      %p385 = scmp.eq.s32.totalorder %s38, 1
      %p386 = por %p384, %p385
      %p388 = scmp.ne.s32.totalorder %s373, %s387
      %p389 = scmp.eq.s32.totalorder %s38, 0
      %p390 = por %p388, %p389
      %s392 = sadd.s32 %s391, 1
      %p395 = scmp.eq.s32.totalorder %s32, 1
      %p396 = scmp.ne.s32.totalorder %s391, %s393
      %p397 = scmp.eq.s32.totalorder %s32, 0
      %p398 = por %p396, %p397
      %p399 = scmp.ne.s32.totalorder %s391, %s393
      %p400 = scmp.eq.s32.totalorder %s37, 1
      %p401 = por %p399, %p400
      %p402 = scmp.ne.s32.totalorder %s393, %s394
      %p403 = scmp.eq.s32.totalorder %s37, 0
      %p404 = por %p402, %p403
      %p405 = scmp.ne.s32.totalorder %s393, %s394
      %p406 = scmp.eq.s32.totalorder %s38, 1
      %p407 = por %p405, %p406
      %p409 = scmp.ne.s32.totalorder %s394, %s408
      %p410 = scmp.eq.s32.totalorder %s38, 0
      %p411 = por %p409, %p410
      %s413 = sadd.s32 %s412, 1
      %p416 = scmp.eq.s32.totalorder %s32, 1
      %p417 = scmp.ne.s32.totalorder %s412, %s414
      %p418 = scmp.eq.s32.totalorder %s32, 0
      %p419 = por %p417, %p418
      %p420 = scmp.ne.s32.totalorder %s412, %s414
      %p421 = scmp.eq.s32.totalorder %s37, 1
      %p422 = por %p420, %p421
      %p423 = scmp.ne.s32.totalorder %s414, %s415
      %p424 = scmp.eq.s32.totalorder %s37, 0
      %p425 = por %p423, %p424
      %p426 = scmp.ne.s32.totalorder %s414, %s415
      %p427 = scmp.eq.s32.totalorder %s38, 1
      %p428 = por %p426, %p427
      %p430 = scmp.ne.s32.totalorder %s415, %s429
      %p431 = scmp.eq.s32.totalorder %s38, 0
      %p432 = por %p430, %p431
      %s434 = sadd.s32 %s433, 1
      %p437 = scmp.eq.s32.totalorder %s32, 1
      %p438 = scmp.ne.s32.totalorder %s433, %s435
      %p439 = scmp.eq.s32.totalorder %s32, 0
      %p440 = por %p438, %p439
      %p441 = scmp.ne.s32.totalorder %s433, %s435
      %p442 = scmp.eq.s32.totalorder %s37, 1
      %p443 = por %p441, %p442
      %p444 = scmp.ne.s32.totalorder %s435, %s436
      %p445 = scmp.eq.s32.totalorder %s37, 0
      %p446 = por %p444, %p445
      %p447 = scmp.ne.s32.totalorder %s435, %s436
      %p448 = scmp.eq.s32.totalorder %s38, 1
      %p449 = por %p447, %p448
      %p451 = scmp.ne.s32.totalorder %s436, %s450
      %p452 = scmp.eq.s32.totalorder %s38, 0
      %p453 = por %p451, %p452
      %s454 = ssub.s32 %s32, %s39
      %p455 = scmp.eq.s32.totalorder %s454, 0
      %s457 = sadd.s32 %s456, 1
      %s458 = scalar_select %p455, %s456, %s457
      %p461 = pneg %p455
      %p462 = scmp.eq.s32.totalorder %s32, 1
      %p463 = por %p461, %p462
      %p464 = scmp.ne.s32.totalorder %s456, %s459
      %p465 = scmp.eq.s32.totalorder %s32, 0
      %p466 = por %p464, %p465
      %p467 = scmp.ne.s32.totalorder %s456, %s459
      %p468 = scmp.eq.s32.totalorder %s37, 1
      %p469 = por %p467, %p468
      %p470 = scmp.ne.s32.totalorder %s459, %s460
      %p471 = scmp.eq.s32.totalorder %s37, 0
      %p472 = por %p470, %p471
      %p473 = scmp.ne.s32.totalorder %s459, %s460
      %p474 = scmp.eq.s32.totalorder %s38, 1
      %p475 = por %p473, %p474
      %p477 = scmp.ne.s32.totalorder %s460, %s476
      %p478 = scmp.eq.s32.totalorder %s38, 0
      %p479 = por %p477, %p478
      %p480 = scmp.le.s32.totalorder 1, %s32
      %p481 = scmp.lt.s32.totalorder %s32, 3
      %p482 = pnand %p480, %p481
      %p483 = pneg %p482
      // Predicated region
      $region9: #{tpu_custom_call.1} parent=5 // pred_check
        _
      $region10: #{tpu_custom_call.1} parent=5 // pred_check_branch
        %485 = sbr.rel (%p482) target = $region12
      $region11: #{tpu_custom_call.1} parent=5 // pred_region
        %s486 = ssub.s32 %s32, 1
        // Predicated region
        $region13: #{tpu_custom_call.1} parent=11 // pred_check
          %p487 = pneg %p131
        $region14: #{tpu_custom_call.1} parent=11 // pred_check_branch
          %489 = sbr.rel (%p487) target = $region16
        $region15: #{tpu_custom_call.1} parent=11 // pred_region
          _
        $region16: #{tpu_custom_call.1} parent=11 // pred_fallthru
          _
        // Predicated region
        $region17: #{tpu_custom_call.1} parent=11 // pred_check
          %p490 = pneg %p152
        $region18: #{tpu_custom_call.1} parent=11 // pred_check_branch
          %492 = sbr.rel (%p490) target = $region20
        $region19: #{tpu_custom_call.1} parent=11 // pred_region
          _
        $region20: #{tpu_custom_call.1} parent=11 // pred_fallthru
          _
        // Predicated region
        $region21: #{tpu_custom_call.1} parent=11 // pred_check
          %p493 = pneg %p173
        $region22: #{tpu_custom_call.1} parent=11 // pred_check_branch
          %495 = sbr.rel (%p493) target = $region24
        $region23: #{tpu_custom_call.1} parent=11 // pred_region
          %s497 = ssub.s32 256, 256
          %498 = vsyncadd [#allocation3], %s497
          %s499 = sshll.u32 [#allocation2], 4
          %s500 = int_to_ptr.vmem [resolvable:$true] %s499
          %505 = dma.hbm_to_vmem [thread:$0]  %s5, 256, %s500, [#allocation3], 64, 64, 4
        $region24: #{tpu_custom_call.1} parent=11 // pred_fallthru
          _
        // Predicated region
        $region25: #{tpu_custom_call.1} parent=11 // pred_check
          %p506 = pneg %p194
        $region26: #{tpu_custom_call.1} parent=11 // pred_check_branch
          %508 = sbr.rel (%p506) target = $region28
        $region27: #{tpu_custom_call.1} parent=11 // pred_region
          _
        $region28: #{tpu_custom_call.1} parent=11 // pred_fallthru
          _
        // Predicated region
        $region29: #{tpu_custom_call.1} parent=11 // pred_check
          %p509 = pneg %p215
        $region30: #{tpu_custom_call.1} parent=11 // pred_check_branch
          %511 = sbr.rel (%p509) target = $region32
        $region31: #{tpu_custom_call.1} parent=11 // pred_region
          %s513 = ssub.s32 16, 16
          %514 = vsyncadd [#allocation6], %s513
          %s516 = sshll.u32 [#allocation5], 4
          %s517 = int_to_ptr.vmem [resolvable:$true] %s516
          %519 = dma.hbm_to_vmem [thread:$0]  %s7, 16, %s517, [#allocation6]
        $region32: #{tpu_custom_call.1} parent=11 // pred_fallthru
          _
        // Predicated region
        $region33: #{tpu_custom_call.1} parent=11 // pred_check
          %p520 = pneg %p236
        $region34: #{tpu_custom_call.1} parent=11 // pred_check_branch
          %522 = sbr.rel (%p520) target = $region36
        $region35: #{tpu_custom_call.1} parent=11 // pred_region
          %s524 = ssub.s32 16, 16
          %525 = vsyncadd [#allocation6], %s524
          %s527 = sshll.u32 [#allocation7], 4
          %s528 = int_to_ptr.vmem [resolvable:$true] %s527
          %530 = dma.hbm_to_vmem [thread:$0]  %s8, 16, %s528, [#allocation6]
        $region36: #{tpu_custom_call.1} parent=11 // pred_fallthru
          _
        // Predicated region
        $region37: #{tpu_custom_call.1} parent=11 // pred_check
          %p531 = pneg %p257
        $region38: #{tpu_custom_call.1} parent=11 // pred_check_branch
          %533 = sbr.rel (%p531) target = $region40
        $region39: #{tpu_custom_call.1} parent=11 // pred_region
          _
        $region40: #{tpu_custom_call.1} parent=11 // pred_fallthru
          _
        // Predicated region
        $region41: #{tpu_custom_call.1} parent=11 // pred_check
          %p534 = pneg %p278
        $region42: #{tpu_custom_call.1} parent=11 // pred_check_branch
          %536 = sbr.rel (%p534) target = $region44
        $region43: #{tpu_custom_call.1} parent=11 // pred_region
          %s538 = ssub.s32 16, 16
          %539 = vsyncadd [#allocation9], %s538
          %s541 = sshll.u32 [#allocation8], 4
          %s542 = int_to_ptr.vmem [resolvable:$true] %s541
          %544 = dma.hbm_to_vmem [thread:$0]  %s10, 16, %s542, [#allocation9]
        $region44: #{tpu_custom_call.1} parent=11 // pred_fallthru
          _
        // Predicated region
        $region45: #{tpu_custom_call.1} parent=11 // pred_check
          %p545 = pneg %p299
        $region46: #{tpu_custom_call.1} parent=11 // pred_check_branch
          %547 = sbr.rel (%p545) target = $region48
        $region47: #{tpu_custom_call.1} parent=11 // pred_region
          %s549 = ssub.s32 16, 16
          %550 = vsyncadd [#allocation9], %s549
          %s552 = sshll.u32 [#allocation10], 4
          %s553 = int_to_ptr.vmem [resolvable:$true] %s552
          %555 = dma.hbm_to_vmem [thread:$0]  %s11, 16, %s553, [#allocation9]
        $region48: #{tpu_custom_call.1} parent=11 // pred_fallthru
          _
        // Predicated region
        $region49: #{tpu_custom_call.1} parent=11 // pred_check
          %p556 = pneg %p320
        $region50: #{tpu_custom_call.1} parent=11 // pred_check_branch
          %558 = sbr.rel (%p556) target = $region52
        $region51: #{tpu_custom_call.1} parent=11 // pred_region
          %s560 = ssub.s32 16, 16
          %561 = vsyncadd [#allocation12], %s560
          %s563 = sshll.u32 [#allocation11], 4
          %s564 = int_to_ptr.vmem [resolvable:$true] %s563
          %566 = dma.hbm_to_vmem [thread:$0]  %s12, 16, %s564, [#allocation12]
        $region52: #{tpu_custom_call.1} parent=11 // pred_fallthru
          _
        // Predicated region
        $region53: #{tpu_custom_call.1} parent=11 // pred_check
          %p567 = pneg %p341
        $region54: #{tpu_custom_call.1} parent=11 // pred_check_branch
          %569 = sbr.rel (%p567) target = $region56
        $region55: #{tpu_custom_call.1} parent=11 // pred_region
          _
        $region56: #{tpu_custom_call.1} parent=11 // pred_fallthru
          _
        // Predicated region
        $region57: #{tpu_custom_call.1} parent=11 // pred_check
          %p570 = pneg %p362
        $region58: #{tpu_custom_call.1} parent=11 // pred_check_branch
          %572 = sbr.rel (%p570) target = $region60
        $region59: #{tpu_custom_call.1} parent=11 // pred_region
          _
        $region60: #{tpu_custom_call.1} parent=11 // pred_fallthru
          _
        // Predicated region
        $region61: #{tpu_custom_call.1} parent=11 // pred_check
          %p573 = pneg %p383
        $region62: #{tpu_custom_call.1} parent=11 // pred_check_branch
          %575 = sbr.rel (%p573) target = $region64
        $region63: #{tpu_custom_call.1} parent=11 // pred_region
          _
        $region64: #{tpu_custom_call.1} parent=11 // pred_fallthru
          _
        // Predicated region
        $region65: #{tpu_custom_call.1} parent=11 // pred_check
          %p576 = pneg %p404
        $region66: #{tpu_custom_call.1} parent=11 // pred_check_branch
          %578 = sbr.rel (%p576) target = $region68
        $region67: #{tpu_custom_call.1} parent=11 // pred_region
          _
        $region68: #{tpu_custom_call.1} parent=11 // pred_fallthru
          _
        // Predicated region
        $region69: #{tpu_custom_call.1} parent=11 // pred_check
          %p579 = pneg %p425
        $region70: #{tpu_custom_call.1} parent=11 // pred_check_branch
          %581 = sbr.rel (%p579) target = $region72
        $region71: #{tpu_custom_call.1} parent=11 // pred_region
          _
        $region72: #{tpu_custom_call.1} parent=11 // pred_fallthru
          _
        // Predicated region
        $region73: #{tpu_custom_call.1} parent=11 // pred_check
          %p582 = pneg %p446
        $region74: #{tpu_custom_call.1} parent=11 // pred_check_branch
          %584 = sbr.rel (%p582) target = $region76
        $region75: #{tpu_custom_call.1} parent=11 // pred_region
          _
        $region76: #{tpu_custom_call.1} parent=11 // pred_fallthru
          _
      $region12: #{tpu_custom_call.1} parent=5 // pred_fallthru
        _
      %p585 = scmp.lt.s32.totalorder %s32, 2
      // Predicated region
      $region77: #{tpu_custom_call.1} parent=5 // pred_check
        %p586 = pneg %p585
      $region78: #{tpu_custom_call.1} parent=5 // pred_check_branch
        %588 = sbr.rel (%p586) target = $region80
      $region79: #{tpu_custom_call.1} parent=5 // pred_region
        // Predicated region
        $region81: #{tpu_custom_call.1} parent=79 // pred_check
          %p589 = pneg %p52
        $region82: #{tpu_custom_call.1} parent=79 // pred_check_branch
          %591 = sbr.rel (%p589) target = $region84
        $region83: #{tpu_custom_call.1} parent=79 // pred_region
          %p592 = scmp.lt.s32.totalorder %s32, 1
          %s593 = scalar_select %p592, %s32, 1
          %s594 = smul.addr %s593, 8
          %s595 = scalar_lea.vmem %s0, %s594
        $region84: #{tpu_custom_call.1} parent=79 // pred_fallthru
          _
        // Predicated region
        $region85: #{tpu_custom_call.1} parent=79 // pred_check
          %p596 = pneg %p78
        $region86: #{tpu_custom_call.1} parent=79 // pred_check_branch
          %598 = sbr.rel (%p596) target = $region88
        $region87: #{tpu_custom_call.1} parent=79 // pred_region
          %p599 = scmp.lt.s32.totalorder %s32, 1
          %s600 = scalar_select %p599, %s32, 1
          %s601 = smul.addr %s600, 8
          %s602 = scalar_lea.vmem %s1, %s601
        $region88: #{tpu_custom_call.1} parent=79 // pred_fallthru
          _
        // Predicated region
        $region89: #{tpu_custom_call.1} parent=79 // pred_check
          %p603 = pneg %p104
        $region90: #{tpu_custom_call.1} parent=79 // pred_check_branch
          %605 = sbr.rel (%p603) target = $region92
        $region91: #{tpu_custom_call.1} parent=79 // pred_region
          %p606 = scmp.lt.s32.totalorder %s32, 1
          %s607 = scalar_select %p606, %s32, 1
          %s608 = smul.addr %s607, 8
          %s609 = scalar_lea.vmem %s2, %s608
        $region92: #{tpu_custom_call.1} parent=79 // pred_fallthru
          _
      $region80: #{tpu_custom_call.1} parent=5 // pred_fallthru
        _
      %p610 = scmp.le.s32.totalorder 1, %s32
      %p611 = scmp.lt.s32.totalorder %s32, 3
      %p612 = pnand %p610, %p611
      %p613 = pneg %p612
      // Predicated region
      $region93: #{tpu_custom_call.1} parent=5 // pred_check
        _
      $region94: #{tpu_custom_call.1} parent=5 // pred_check_branch
        %615 = sbr.rel (%p612) target = $region96
      $region95: #{tpu_custom_call.1} parent=5 // pred_region
        %s616 = ssub.s32 %s32, 1
        // Predicated region
        $region97: #{tpu_custom_call.1} parent=95 // pred_check
          %p617 = pneg %p173
        $region98: #{tpu_custom_call.1} parent=95 // pred_check_branch
          %619 = sbr.rel (%p617) target = $region100
        $region99: #{tpu_custom_call.1} parent=95 // pred_region
          %620 = dma.done [#allocation3], 256
        $region100: #{tpu_custom_call.1} parent=95 // pred_fallthru
          _
        // Predicated region
        $region101: #{tpu_custom_call.1} parent=95 // pred_check
          %p621 = pneg %p215
        $region102: #{tpu_custom_call.1} parent=95 // pred_check_branch
          %623 = sbr.rel (%p621) target = $region104
        $region103: #{tpu_custom_call.1} parent=95 // pred_region
          %624 = dma.done [#allocation6], 16
        $region104: #{tpu_custom_call.1} parent=95 // pred_fallthru
          _
        // Predicated region
        $region105: #{tpu_custom_call.1} parent=95 // pred_check
          %p625 = pneg %p236
        $region106: #{tpu_custom_call.1} parent=95 // pred_check_branch
          %627 = sbr.rel (%p625) target = $region108
        $region107: #{tpu_custom_call.1} parent=95 // pred_region
          %628 = dma.done [#allocation6], 16
        $region108: #{tpu_custom_call.1} parent=95 // pred_fallthru
          _
        // Predicated region
        $region109: #{tpu_custom_call.1} parent=95 // pred_check
          %p629 = pneg %p278
        $region110: #{tpu_custom_call.1} parent=95 // pred_check_branch
          %631 = sbr.rel (%p629) target = $region112
        $region111: #{tpu_custom_call.1} parent=95 // pred_region
          %632 = dma.done [#allocation9], 16
        $region112: #{tpu_custom_call.1} parent=95 // pred_fallthru
          _
        // Predicated region
        $region113: #{tpu_custom_call.1} parent=95 // pred_check
          %p633 = pneg %p299
        $region114: #{tpu_custom_call.1} parent=95 // pred_check_branch
          %635 = sbr.rel (%p633) target = $region116
        $region115: #{tpu_custom_call.1} parent=95 // pred_region
          %636 = dma.done [#allocation9], 16
        $region116: #{tpu_custom_call.1} parent=95 // pred_fallthru
          _
        // Predicated region
        $region117: #{tpu_custom_call.1} parent=95 // pred_check
          %p637 = pneg %p320
        $region118: #{tpu_custom_call.1} parent=95 // pred_check_branch
          %639 = sbr.rel (%p637) target = $region120
        $region119: #{tpu_custom_call.1} parent=95 // pred_region
          %640 = dma.done [#allocation12], 16
        $region120: #{tpu_custom_call.1} parent=95 // pred_fallthru
          _
        %p641 = scmp.lt.s32.totalorder %s37, 1
        %s642 = scalar_select %p641, %s37, 1
        %s643 = smul.addr %s642, 8
        %s644 = scalar_lea.vmem %s0, %s643
        %p645 = pneg %p58
        %p646 = pneg %p55
        %p647 = scmp.lt.s32.totalorder %s37, 1
        %s648 = scalar_select %p647, %s37, 1
        %s649 = smul.addr %s648, 8
        %s650 = scalar_lea.vmem %s1, %s649
        %p651 = pneg %p84
        %p652 = pneg %p81
        %p653 = scmp.lt.s32.totalorder %s37, 1
        %s654 = scalar_select %p653, %s37, 1
        %s655 = smul.addr %s654, 8
        %s656 = scalar_lea.vmem %s2, %s655
        %p657 = pneg %p110
        %p658 = pneg %p107
        %p659 = pneg %p131
        %p660 = pneg %p128
        %p661 = pneg %p152
        %p662 = pneg %p149
        %p663 = pneg %p173
        %p664 = pneg %p170
        %p665 = pneg %p194
        %p666 = pneg %p191
        %p667 = pneg %p215
        %p668 = pneg %p212
        %p669 = pneg %p236
        %p670 = pneg %p233
        %p671 = pneg %p257
        %p672 = pneg %p254
        %p673 = pneg %p278
        %p674 = pneg %p275
        %p675 = pneg %p299
        %p676 = pneg %p296
        %p677 = pneg %p320
        %p678 = pneg %p317
        %p679 = pneg %p341
        %p680 = pneg %p338
        %p681 = pneg %p362
        %p682 = pneg %p359
        %p683 = pneg %p383
        %p684 = pneg %p380
        %p685 = pneg %p404
        %p686 = pneg %p401
        %p687 = pneg %p425
        %p688 = pneg %p422
        %p689 = pneg %p446
        %p690 = pneg %p443
        %p691 = pneg %p472
        %p692 = pneg %p469
        %s693 = sand.u32 %s459, 1
        %s694 = scalar_lea.sflag [#allocation4], %s693
        %s695 = sand.u32 %s459, 1
        %s696 = smul.addr %s695, 8
        %s697 = scalar_lea.vmem [#allocation13], %s696
        %p698 = scmp.lt.s32.totalorder %s37, 1
        %s699 = scalar_select %p698, %s37, 1
        %s700 = smul.addr %s699, 8
        %s701 = scalar_lea.vmem %s0, %s700
        %p702 = scmp.lt.s32.totalorder %s37, 1
        %s703 = scalar_select %p702, %s37, 1
        %s704 = smul.addr %s703, 8
        %s705 = scalar_lea.vmem %s1, %s704
        %p706 = scmp.lt.s32.totalorder %s37, 1
        %s707 = scalar_select %p706, %s37, 1
        %s708 = smul.addr %s707, 8
        %s709 = scalar_lea.vmem %s2, %s708
        %v711 = vld [vmem:[%s701] sm:$0xff]
        %v712 = vld [vmem:[%s705] sm:$0xff]
        %v713 = vld [vmem:[%s709] sm:$0xff]
        %v714 = vpack.c.bf16 %v711, %v711
        %v715 = vld [vmem:[%s3] sm:$0xf]
        %v716 = vld [vmem:[%s3 + $0x4] sm:$0xf]
        %v717 = vld [vmem:[%s3 + $0x8] sm:$0xf]
        %v718 = vld [vmem:[%s3 + $0xc] sm:$0xf]
        %v719 = vld [vmem:[%s6] sm:$0x1]
        %v721 = vlaneseq
        %v722 = vshrl.u32 %v721, 7
        %v723 = vsub.s32 0, %v722
        %v724 = vrot.slane %v719, %v723
        %v730 = vunpack.c.l.b16 %v715
        %v731 = vunpack.c.l.b16 %v716
        %v732 = vunpack.c.l.b16 %v717
        %v733 = vunpack.c.l.b16 %v718
        %v734 = vpack.c.b16 %v731, %v730
        %v735 = vpack.c.b16 %v733, %v732
        %vm738 = vcmask 261120
        %v740 = vsel %vm738, %v714, 0
        %742 = vmatprep.subr.bf16.mxu0 0
        %743 = vmatpush1.bf16.msra.mxu0 %v734
        %744 = vmatprep.subr.bf16.mxu0 0
        %745 = vmatpush1.bf16.msra.mxu0 %v735
        %746 = vmatprep.subr.bf16.mxu0 0
        %747 = vmatpush1.bf16.msra.mxu0 0
        %748 = vmatprep.subr.bf16.mxu0 0
        %749 = vmatpush1.bf16.msra.mxu0 0
        %750 = vmatprep.subr.bf16.mxu0 0
        %751 = vmatpush1.bf16.msra.mxu0 0
        %752 = vmatprep.subr.bf16.mxu0 0
        %753 = vmatpush1.bf16.msra.mxu0 0
        %754 = vmatprep.subr.bf16.mxu0 0
        %755 = vmatpush1.bf16.msra.mxu0 0
        %756 = vmatprep.subr.bf16.mxu0 0
        %757 = vmatpush1.bf16.msra.mxu0 0
        %758 = vmatprep.subr.bf16.mxu0 0
        %759 = vmatpush1.bf16.msra.mxu0 0
        %760 = vmatprep.subr.bf16.mxu0 0
        %761 = vmatpush1.bf16.msra.mxu0 0
        %762 = vmatprep.subr.bf16.mxu0 0
        %763 = vmatpush1.bf16.msra.mxu0 0
        %764 = vmatprep.subr.bf16.mxu0 0
        %765 = vmatpush1.bf16.msra.mxu0 0
        %766 = vmatprep.subr.bf16.mxu0 0
        %767 = vmatpush1.bf16.msra.mxu0 0
        %768 = vmatprep.subr.bf16.mxu0 0
        %769 = vmatpush1.bf16.msra.mxu0 0
        %770 = vmatprep.subr.bf16.mxu0 0
        %771 = vmatpush1.bf16.msra.mxu0 0
        %772 = vmatprep.subr.bf16.mxu0 0
        %773 = vmatpush1.bf16.msra.mxu0 0
        %774 = vmatprep.mubr.bf16.mxu0 0
        %775 = vmatmul.mubr.bf16.gmra.mrb[0].mxu0 %v740
        %v776 = vpop.f32.mrb[0].mxu0
        %v777 = vadd.f32 %v724, %v776
        %v778 = vpop.f32.mrb[0].mxu0
        %v779 = vpop.f32.mrb[0].mxu0
        %v780 = vpop.f32.mrb[0].mxu0
        %781 = vdwg.mxu0
        %v782 = vpack.c.bf16 %v712, %v712
        %v783 = vld [vmem:[%s4] sm:$0xf]
        %v784 = vld [vmem:[%s4 + $0x4] sm:$0xf]
        %v785 = vld [vmem:[%s4 + $0x8] sm:$0xf]
        %v786 = vld [vmem:[%s4 + $0xc] sm:$0xf]
        %v787 = vld [vmem:[#allocation5] sm:$0x1]
        %v789 = vlaneseq
        %v790 = vshrl.u32 %v789, 7
        %v791 = vsub.s32 0, %v790
        %v792 = vrot.slane %v787, %v791
        %v798 = vunpack.c.l.b16 %v783
        %v799 = vunpack.c.l.b16 %v784
        %v800 = vunpack.c.l.b16 %v785
        %v801 = vunpack.c.l.b16 %v786
        %v802 = vpack.c.b16 %v799, %v798
        %v803 = vpack.c.b16 %v801, %v800
        %v807 = vsel %vm738, %v782, 0
        %809 = vmatprep.subr.bf16.mxu0 0
        %810 = vmatpush1.bf16.msra.mxu0 %v802
        %811 = vmatprep.subr.bf16.mxu0 0
        %812 = vmatpush1.bf16.msra.mxu0 %v803
        %813 = vmatprep.subr.bf16.mxu0 0
        %814 = vmatpush1.bf16.msra.mxu0 0
        %815 = vmatprep.subr.bf16.mxu0 0
        %816 = vmatpush1.bf16.msra.mxu0 0
        %817 = vmatprep.subr.bf16.mxu0 0
        %818 = vmatpush1.bf16.msra.mxu0 0
        %819 = vmatprep.subr.bf16.mxu0 0
        %820 = vmatpush1.bf16.msra.mxu0 0
        %821 = vmatprep.subr.bf16.mxu0 0
        %822 = vmatpush1.bf16.msra.mxu0 0
        %823 = vmatprep.subr.bf16.mxu0 0
        %824 = vmatpush1.bf16.msra.mxu0 0
        %825 = vmatprep.subr.bf16.mxu0 0
        %826 = vmatpush1.bf16.msra.mxu0 0
        %827 = vmatprep.subr.bf16.mxu0 0
        %828 = vmatpush1.bf16.msra.mxu0 0
        %829 = vmatprep.subr.bf16.mxu0 0
        %830 = vmatpush1.bf16.msra.mxu0 0
        %831 = vmatprep.subr.bf16.mxu0 0
        %832 = vmatpush1.bf16.msra.mxu0 0
        %833 = vmatprep.subr.bf16.mxu0 0
        %834 = vmatpush1.bf16.msra.mxu0 0
        %835 = vmatprep.subr.bf16.mxu0 0
        %836 = vmatpush1.bf16.msra.mxu0 0
        %837 = vmatprep.subr.bf16.mxu0 0
        %838 = vmatpush1.bf16.msra.mxu0 0
        %839 = vmatprep.subr.bf16.mxu0 0
        %840 = vmatpush1.bf16.msra.mxu0 0
        %841 = vmatprep.mubr.bf16.mxu0 0
        %842 = vmatmul.mubr.bf16.gmra.mrb[0].mxu0 %v807
        %v843 = vpop.f32.mrb[0].mxu0
        %v844 = vadd.f32 %v792, %v843
        %v845 = vpop.f32.mrb[0].mxu0
        %v846 = vpop.f32.mrb[0].mxu0
        %v847 = vpop.f32.mrb[0].mxu0
        %848 = vdwg.mxu0
        %v849 = vpack.c.bf16 %v713, %v713
        %v850 = vld [vmem:[#allocation2] sm:$0xf]
        %v851 = vld [vmem:[#allocation2 + $0x4] sm:$0xf]
        %v852 = vld [vmem:[#allocation2 + $0x8] sm:$0xf]
        %v853 = vld [vmem:[#allocation2 + $0xc] sm:$0xf]
        %v854 = vld [vmem:[#allocation7] sm:$0x1]
        %v856 = vlaneseq
        %v857 = vshrl.u32 %v856, 7
        %v858 = vsub.s32 0, %v857
        %v859 = vrot.slane %v854, %v858
        %v865 = vunpack.c.l.b16 %v850
        %v866 = vunpack.c.l.b16 %v851
        %v867 = vunpack.c.l.b16 %v852
        %v868 = vunpack.c.l.b16 %v853
        %v869 = vpack.c.b16 %v866, %v865
        %v870 = vpack.c.b16 %v868, %v867
        %v874 = vsel %vm738, %v849, 0
        %876 = vmatprep.subr.bf16.mxu0 0
        %877 = vmatpush1.bf16.msra.mxu0 %v869
        %878 = vmatprep.subr.bf16.mxu0 0
        %879 = vmatpush1.bf16.msra.mxu0 %v870
        %880 = vmatprep.subr.bf16.mxu0 0
        %881 = vmatpush1.bf16.msra.mxu0 0
        %882 = vmatprep.subr.bf16.mxu0 0
        %883 = vmatpush1.bf16.msra.mxu0 0
        %884 = vmatprep.subr.bf16.mxu0 0
        %885 = vmatpush1.bf16.msra.mxu0 0
        %886 = vmatprep.subr.bf16.mxu0 0
        %887 = vmatpush1.bf16.msra.mxu0 0
        %888 = vmatprep.subr.bf16.mxu0 0
        %889 = vmatpush1.bf16.msra.mxu0 0
        %890 = vmatprep.subr.bf16.mxu0 0
        %891 = vmatpush1.bf16.msra.mxu0 0
        %892 = vmatprep.subr.bf16.mxu0 0
        %893 = vmatpush1.bf16.msra.mxu0 0
        %894 = vmatprep.subr.bf16.mxu0 0
        %895 = vmatpush1.bf16.msra.mxu0 0
        %896 = vmatprep.subr.bf16.mxu0 0
        %897 = vmatpush1.bf16.msra.mxu0 0
        %898 = vmatprep.subr.bf16.mxu0 0
        %899 = vmatpush1.bf16.msra.mxu0 0
        %900 = vmatprep.subr.bf16.mxu0 0
        %901 = vmatpush1.bf16.msra.mxu0 0
        %902 = vmatprep.subr.bf16.mxu0 0
        %903 = vmatpush1.bf16.msra.mxu0 0
        %904 = vmatprep.subr.bf16.mxu0 0
        %905 = vmatpush1.bf16.msra.mxu0 0
        %906 = vmatprep.subr.bf16.mxu0 0
        %907 = vmatpush1.bf16.msra.mxu0 0
        %908 = vmatprep.mubr.bf16.mxu0 0
        %909 = vmatmul.mubr.bf16.gmra.mrb[0].mxu0 %v874
        %v910 = vpop.f32.mrb[0].mxu0
        %v911 = vadd.f32 %v859, %v910
        %v912 = vpop.f32.mrb[0].mxu0
        %v913 = vpop.f32.mrb[0].mxu0
        %v914 = vpop.f32.mrb[0].mxu0
        %915 = vdwg.mxu0
        %v916 = vmul.f32 %v777, 0.35355338
        %v917 = vpack.c.bf16 %v916, %v916
        %v918 = vpack.c.bf16 %v844, %v844
        %v919 = vpack.c.bf16 %v911, %v911
        %v920 = vld [vmem:[#allocation8] sm:$0x1]
        %v922 = vlaneseq
        %v923 = vshrl.u32 %v922, 7
        %v924 = vsub.s32 0, %v923
        %v925 = vrot.slane %v920, %v924
        %vm927 = vcmask 64512
        %v929 = vsel %vm927, %v917, 0
        %v932 = vsel %vm927, %v918, 0
        %934 = vmatprep.subr.bf16.mxu0 0
        %935 = vmatpush1.bf16.xpose.msra.mxu0 %v932
        %936 = vmatprep.subr.bf16.mxu0 0
        %937 = vmatpush1.bf16.xpose.msra.mxu0 0
        %938 = vmatprep.subr.bf16.mxu0 0
        %939 = vmatpush1.bf16.xpose.msra.mxu0 0
        %940 = vmatprep.subr.bf16.mxu0 0
        %941 = vmatpush1.bf16.xpose.msra.mxu0 0
        %942 = vmatprep.subr.bf16.mxu0 0
        %943 = vmatpush1.bf16.xpose.msra.mxu0 0
        %944 = vmatprep.subr.bf16.mxu0 0
        %945 = vmatpush1.bf16.xpose.msra.mxu0 0
        %946 = vmatprep.subr.bf16.mxu0 0
        %947 = vmatpush1.bf16.xpose.msra.mxu0 0
        %948 = vmatprep.subr.bf16.mxu0 0
        %949 = vmatpush1.bf16.xpose.msra.mxu0 0
        %950 = vmatprep.subr.bf16.mxu0 0
        %951 = vmatpush1.bf16.xpose.msra.mxu0 0
        %952 = vmatprep.subr.bf16.mxu0 0
        %953 = vmatpush1.bf16.xpose.msra.mxu0 0
        %954 = vmatprep.subr.bf16.mxu0 0
        %955 = vmatpush1.bf16.xpose.msra.mxu0 0
        %956 = vmatprep.subr.bf16.mxu0 0
        %957 = vmatpush1.bf16.xpose.msra.mxu0 0
        %958 = vmatprep.subr.bf16.mxu0 0
        %959 = vmatpush1.bf16.xpose.msra.mxu0 0
        %960 = vmatprep.subr.bf16.mxu0 0
        %961 = vmatpush1.bf16.xpose.msra.mxu0 0
        %962 = vmatprep.subr.bf16.mxu0 0
        %963 = vmatpush1.bf16.xpose.msra.mxu0 0
        %964 = vmatprep.subr.bf16.mxu0 0
        %965 = vmatpush1.bf16.xpose.msra.mxu0 0
        %966 = vmatprep.mubr.bf16.mxu0 0
        %967 = vmatmul.mubr.bf16.gmra.mrb[0].mxu0 %v929
        %v968 = vpop.f32.mrb[0].mxu0
        %v969 = vadd.f32 0.0, %v968
        %v970 = vpop.f32.mrb[0].mxu0
        %v971 = vpop.f32.mrb[0].mxu0
        %v972 = vpop.f32.mrb[0].mxu0
        %973 = vdwg.mxu0
        %v974 = vsel %vm927, %v969, -inf
        %975 = vmax.xlane.f32.xlu0 %v974
        %v976 = vpop.xlane.xlu0 %975
        %v977 = vsub.f32 %v969, %v976
        %v978 = vmul.f32 %v977, 1.442695
        %v979 = vpow.pop %v978
        %v980 = vsel %vm927, %v979, 0.0
        %981 = vadd.xlane.f32.xlu0 %v980
        %v982 = vpop.xlane.xlu0 %981
        %v983 = vrcp.pop %v982
        %v984 = vmul.f32 %v979, %v983
        %v985 = vpack.c.bf16 %v984, %v984
        %v987 = vsel %vm927, %v985, 0
        %vm989 = vcmask 1043456
        %v991 = vsel %vm989, %v919, 0
        %993 = vmatprep.subr.bf16.mxu0 0
        %994 = vmatpush1.bf16.msra.mxu0 %v991
        %995 = vmatprep.subr.bf16.mxu0 0
        %996 = vmatpush1.bf16.msra.mxu0 0
        %997 = vmatprep.subr.bf16.mxu0 0
        %998 = vmatpush1.bf16.msra.mxu0 0
        %999 = vmatprep.subr.bf16.mxu0 0
        %1000 = vmatpush1.bf16.msra.mxu0 0
        %1001 = vmatprep.subr.bf16.mxu0 0
        %1002 = vmatpush1.bf16.msra.mxu0 0
        %1003 = vmatprep.subr.bf16.mxu0 0
        %1004 = vmatpush1.bf16.msra.mxu0 0
        %1005 = vmatprep.subr.bf16.mxu0 0
        %1006 = vmatpush1.bf16.msra.mxu0 0
        %1007 = vmatprep.subr.bf16.mxu0 0
        %1008 = vmatpush1.bf16.msra.mxu0 0
        %1009 = vmatprep.subr.bf16.mxu0 0
        %1010 = vmatpush1.bf16.msra.mxu0 0
        %1011 = vmatprep.subr.bf16.mxu0 0
        %1012 = vmatpush1.bf16.msra.mxu0 0
        %1013 = vmatprep.subr.bf16.mxu0 0
        %1014 = vmatpush1.bf16.msra.mxu0 0
        %1015 = vmatprep.subr.bf16.mxu0 0
        %1016 = vmatpush1.bf16.msra.mxu0 0
        %1017 = vmatprep.subr.bf16.mxu0 0
        %1018 = vmatpush1.bf16.msra.mxu0 0
        %1019 = vmatprep.subr.bf16.mxu0 0
        %1020 = vmatpush1.bf16.msra.mxu0 0
        %1021 = vmatprep.subr.bf16.mxu0 0
        %1022 = vmatpush1.bf16.msra.mxu0 0
        %1023 = vmatprep.subr.bf16.mxu0 0
        %1024 = vmatpush1.bf16.msra.mxu0 0
        %1025 = vmatprep.mubr.bf16.mxu0 0
        %1026 = vmatmul.mubr.bf16.gmra.mrb[0].mxu0 %v987
        %v1027 = vpop.f32.mrb[0].mxu0
        %v1028 = vadd.f32 0.0, %v1027
        %v1029 = vpop.f32.mrb[0].mxu0
        %v1030 = vpop.f32.mrb[0].mxu0
        %v1031 = vpop.f32.mrb[0].mxu0
        %1032 = vdwg.mxu0
        %v1033 = vpack.c.bf16 %v1028, %v1028
        %v1034 = vld [vmem:[%s9] sm:$0xf]
        %v1036 = vsel %vm927, %v1033, 0
        %v1039 = vsel %vm989, %v1034, 0
        %1041 = vmatprep.subr.bf16.mxu0 0
        %1042 = vmatpush1.bf16.msra.mxu0 %v1039
        %1043 = vmatprep.subr.bf16.mxu0 0
        %1044 = vmatpush1.bf16.msra.mxu0 0
        %1045 = vmatprep.subr.bf16.mxu0 0
        %1046 = vmatpush1.bf16.msra.mxu0 0
        %1047 = vmatprep.subr.bf16.mxu0 0
        %1048 = vmatpush1.bf16.msra.mxu0 0
        %1049 = vmatprep.subr.bf16.mxu0 0
        %1050 = vmatpush1.bf16.msra.mxu0 0
        %1051 = vmatprep.subr.bf16.mxu0 0
        %1052 = vmatpush1.bf16.msra.mxu0 0
        %1053 = vmatprep.subr.bf16.mxu0 0
        %1054 = vmatpush1.bf16.msra.mxu0 0
        %1055 = vmatprep.subr.bf16.mxu0 0
        %1056 = vmatpush1.bf16.msra.mxu0 0
        %1057 = vmatprep.subr.bf16.mxu0 0
        %1058 = vmatpush1.bf16.msra.mxu0 0
        %1059 = vmatprep.subr.bf16.mxu0 0
        %1060 = vmatpush1.bf16.msra.mxu0 0
        %1061 = vmatprep.subr.bf16.mxu0 0
        %1062 = vmatpush1.bf16.msra.mxu0 0
        %1063 = vmatprep.subr.bf16.mxu0 0
        %1064 = vmatpush1.bf16.msra.mxu0 0
        %1065 = vmatprep.subr.bf16.mxu0 0
        %1066 = vmatpush1.bf16.msra.mxu0 0
        %1067 = vmatprep.subr.bf16.mxu0 0
        %1068 = vmatpush1.bf16.msra.mxu0 0
        %1069 = vmatprep.subr.bf16.mxu0 0
        %1070 = vmatpush1.bf16.msra.mxu0 0
        %1071 = vmatprep.subr.bf16.mxu0 0
        %1072 = vmatpush1.bf16.msra.mxu0 0
        %1073 = vmatprep.mubr.bf16.mxu0 0
        %1074 = vmatmul.mubr.bf16.gmra.mrb[0].mxu0 %v1036
        %v1075 = vpop.f32.mrb[0].mxu0
        %v1076 = vadd.f32 0.0, %v1075
        %v1077 = vpop.f32.mrb[0].mxu0
        %v1078 = vpop.f32.mrb[0].mxu0
        %v1079 = vpop.f32.mrb[0].mxu0
        %1080 = vdwg.mxu0
        %v1081 = vadd.f32 %v925, %v1076
        %1083 = vrot.lane.b32.xlu0 %v917, 120
        %v1084 = vpop.permute.xlu0 %1083
        %1086 = vrot.lane.b32.xlu0 %v918, 120
        %v1087 = vpop.permute.xlu0 %1086
        %v1089 = vsel %vm927, %v1084, 0
        %v1092 = vsel %vm927, %v1087, 0
        %1094 = vmatprep.subr.bf16.mxu0 0
        %1095 = vmatpush1.bf16.xpose.msra.mxu0 %v1092
        %1096 = vmatprep.subr.bf16.mxu0 0
        %1097 = vmatpush1.bf16.xpose.msra.mxu0 0
        %1098 = vmatprep.subr.bf16.mxu0 0
        %1099 = vmatpush1.bf16.xpose.msra.mxu0 0
        %1100 = vmatprep.subr.bf16.mxu0 0
        %1101 = vmatpush1.bf16.xpose.msra.mxu0 0
        %1102 = vmatprep.subr.bf16.mxu0 0
        %1103 = vmatpush1.bf16.xpose.msra.mxu0 0
        %1104 = vmatprep.subr.bf16.mxu0 0
        %1105 = vmatpush1.bf16.xpose.msra.mxu0 0
        %1106 = vmatprep.subr.bf16.mxu0 0
        %1107 = vmatpush1.bf16.xpose.msra.mxu0 0
        %1108 = vmatprep.subr.bf16.mxu0 0
        %1109 = vmatpush1.bf16.xpose.msra.mxu0 0
        %1110 = vmatprep.subr.bf16.mxu0 0
        %1111 = vmatpush1.bf16.xpose.msra.mxu0 0
        %1112 = vmatprep.subr.bf16.mxu0 0
        %1113 = vmatpush1.bf16.xpose.msra.mxu0 0
        %1114 = vmatprep.subr.bf16.mxu0 0
        %1115 = vmatpush1.bf16.xpose.msra.mxu0 0
        %1116 = vmatprep.subr.bf16.mxu0 0
        %1117 = vmatpush1.bf16.xpose.msra.mxu0 0
        %1118 = vmatprep.subr.bf16.mxu0 0
        %1119 = vmatpush1.bf16.xpose.msra.mxu0 0
        %1120 = vmatprep.subr.bf16.mxu0 0
        %1121 = vmatpush1.bf16.xpose.msra.mxu0 0
        %1122 = vmatprep.subr.bf16.mxu0 0
        %1123 = vmatpush1.bf16.xpose.msra.mxu0 0
        %1124 = vmatprep.subr.bf16.mxu0 0
        %1125 = vmatpush1.bf16.xpose.msra.mxu0 0
        %1126 = vmatprep.mubr.bf16.mxu0 0
        %1127 = vmatmul.mubr.bf16.gmra.mrb[0].mxu0 %v1089
        %v1128 = vpop.f32.mrb[0].mxu0
        %v1129 = vadd.f32 0.0, %v1128
        %v1130 = vpop.f32.mrb[0].mxu0
        %v1131 = vpop.f32.mrb[0].mxu0
        %v1132 = vpop.f32.mrb[0].mxu0
        %1133 = vdwg.mxu0
        %v1134 = vsel %vm927, %v1129, -inf
        %1135 = vmax.xlane.f32.xlu0 %v1134
        %v1136 = vpop.xlane.xlu0 %1135
        %v1137 = vsub.f32 %v1129, %v1136
        %v1138 = vmul.f32 %v1137, 1.442695
        %v1139 = vpow.pop %v1138
        %v1140 = vsel %vm927, %v1139, 0.0
        %1141 = vadd.xlane.f32.xlu0 %v1140
        %v1142 = vpop.xlane.xlu0 %1141
        %v1143 = vrcp.pop %v1142
        %v1144 = vmul.f32 %v1139, %v1143
        %v1145 = vpack.c.bf16 %v1144, %v1144
        %1147 = vrot.lane.b32.xlu0 %v919, 120
        %v1148 = vpop.permute.xlu0 %1147
        %v1150 = vsel %vm927, %v1145, 0
        %v1153 = vsel %vm989, %v1148, 0
        %1155 = vmatprep.subr.bf16.mxu0 0
        %1156 = vmatpush1.bf16.msra.mxu0 %v1153
        %1157 = vmatprep.subr.bf16.mxu0 0
        %1158 = vmatpush1.bf16.msra.mxu0 0
        %1159 = vmatprep.subr.bf16.mxu0 0
        %1160 = vmatpush1.bf16.msra.mxu0 0
        %1161 = vmatprep.subr.bf16.mxu0 0
        %1162 = vmatpush1.bf16.msra.mxu0 0
        %1163 = vmatprep.subr.bf16.mxu0 0
        %1164 = vmatpush1.bf16.msra.mxu0 0
        %1165 = vmatprep.subr.bf16.mxu0 0
        %1166 = vmatpush1.bf16.msra.mxu0 0
        %1167 = vmatprep.subr.bf16.mxu0 0
        %1168 = vmatpush1.bf16.msra.mxu0 0
        %1169 = vmatprep.subr.bf16.mxu0 0
        %1170 = vmatpush1.bf16.msra.mxu0 0
        %1171 = vmatprep.subr.bf16.mxu0 0
        %1172 = vmatpush1.bf16.msra.mxu0 0
        %1173 = vmatprep.subr.bf16.mxu0 0
        %1174 = vmatpush1.bf16.msra.mxu0 0
        %1175 = vmatprep.subr.bf16.mxu0 0
        %1176 = vmatpush1.bf16.msra.mxu0 0
        %1177 = vmatprep.subr.bf16.mxu0 0
        %1178 = vmatpush1.bf16.msra.mxu0 0
        %1179 = vmatprep.subr.bf16.mxu0 0
        %1180 = vmatpush1.bf16.msra.mxu0 0
        %1181 = vmatprep.subr.bf16.mxu0 0
        %1182 = vmatpush1.bf16.msra.mxu0 0
        %1183 = vmatprep.subr.bf16.mxu0 0
        %1184 = vmatpush1.bf16.msra.mxu0 0
        %1185 = vmatprep.subr.bf16.mxu0 0
        %1186 = vmatpush1.bf16.msra.mxu0 0
        %1187 = vmatprep.mubr.bf16.mxu0 0
        %1188 = vmatmul.mubr.bf16.gmra.mrb[0].mxu0 %v1150
        %v1189 = vpop.f32.mrb[0].mxu0
        %v1190 = vadd.f32 0.0, %v1189
        %v1191 = vpop.f32.mrb[0].mxu0
        %v1192 = vpop.f32.mrb[0].mxu0
        %v1193 = vpop.f32.mrb[0].mxu0
        %1194 = vdwg.mxu0
        %v1195 = vpack.c.bf16 %v1190, %v1190
        %s1196 = scalar_lea.vmem %s9, 4
        %v1197 = vld [vmem:[%s1196] sm:$0xf]
        %v1199 = vsel %vm927, %v1195, 0
        %v1202 = vsel %vm989, %v1197, 0
        %1204 = vmatprep.subr.bf16.mxu0 0
        %1205 = vmatpush1.bf16.msra.mxu0 %v1202
        %1206 = vmatprep.subr.bf16.mxu0 0
        %1207 = vmatpush1.bf16.msra.mxu0 0
        %1208 = vmatprep.subr.bf16.mxu0 0
        %1209 = vmatpush1.bf16.msra.mxu0 0
        %1210 = vmatprep.subr.bf16.mxu0 0
        %1211 = vmatpush1.bf16.msra.mxu0 0
        %1212 = vmatprep.subr.bf16.mxu0 0
        %1213 = vmatpush1.bf16.msra.mxu0 0
        %1214 = vmatprep.subr.bf16.mxu0 0
        %1215 = vmatpush1.bf16.msra.mxu0 0
        %1216 = vmatprep.subr.bf16.mxu0 0
        %1217 = vmatpush1.bf16.msra.mxu0 0
        %1218 = vmatprep.subr.bf16.mxu0 0
        %1219 = vmatpush1.bf16.msra.mxu0 0
        %1220 = vmatprep.subr.bf16.mxu0 0
        %1221 = vmatpush1.bf16.msra.mxu0 0
        %1222 = vmatprep.subr.bf16.mxu0 0
        %1223 = vmatpush1.bf16.msra.mxu0 0
        %1224 = vmatprep.subr.bf16.mxu0 0
        %1225 = vmatpush1.bf16.msra.mxu0 0
        %1226 = vmatprep.subr.bf16.mxu0 0
        %1227 = vmatpush1.bf16.msra.mxu0 0
        %1228 = vmatprep.subr.bf16.mxu0 0
        %1229 = vmatpush1.bf16.msra.mxu0 0
        %1230 = vmatprep.subr.bf16.mxu0 0
        %1231 = vmatpush1.bf16.msra.mxu0 0
        %1232 = vmatprep.subr.bf16.mxu0 0
        %1233 = vmatpush1.bf16.msra.mxu0 0
        %1234 = vmatprep.subr.bf16.mxu0 0
        %1235 = vmatpush1.bf16.msra.mxu0 0
        %1236 = vmatprep.mubr.bf16.mxu0 0
        %1237 = vmatmul.mubr.bf16.gmra.mrb[0].mxu0 %v1199
        %v1238 = vpop.f32.mrb[0].mxu0
        %v1239 = vadd.f32 0.0, %v1238
        %v1240 = vpop.f32.mrb[0].mxu0
        %v1241 = vpop.f32.mrb[0].mxu0
        %v1242 = vpop.f32.mrb[0].mxu0
        %1243 = vdwg.mxu0
        %v1244 = vadd.f32 %v1081, %v1239
        %1245 = vrot.lane.b32.xlu0 %v917, 112
        %v1246 = vpop.permute.xlu0 %1245
        %1247 = vrot.lane.b32.xlu0 %v918, 112
        %v1248 = vpop.permute.xlu0 %1247
        %v1250 = vsel %vm927, %v1246, 0
        %v1253 = vsel %vm927, %v1248, 0
        %1255 = vmatprep.subr.bf16.mxu0 0
        %1256 = vmatpush1.bf16.xpose.msra.mxu0 %v1253
        %1257 = vmatprep.subr.bf16.mxu0 0
        %1258 = vmatpush1.bf16.xpose.msra.mxu0 0
        %1259 = vmatprep.subr.bf16.mxu0 0
        %1260 = vmatpush1.bf16.xpose.msra.mxu0 0
        %1261 = vmatprep.subr.bf16.mxu0 0
        %1262 = vmatpush1.bf16.xpose.msra.mxu0 0
        %1263 = vmatprep.subr.bf16.mxu0 0
        %1264 = vmatpush1.bf16.xpose.msra.mxu0 0
        %1265 = vmatprep.subr.bf16.mxu0 0
        %1266 = vmatpush1.bf16.xpose.msra.mxu0 0
        %1267 = vmatprep.subr.bf16.mxu0 0
        %1268 = vmatpush1.bf16.xpose.msra.mxu0 0
        %1269 = vmatprep.subr.bf16.mxu0 0
        %1270 = vmatpush1.bf16.xpose.msra.mxu0 0
        %1271 = vmatprep.subr.bf16.mxu0 0
        %1272 = vmatpush1.bf16.xpose.msra.mxu0 0
        %1273 = vmatprep.subr.bf16.mxu0 0
        %1274 = vmatpush1.bf16.xpose.msra.mxu0 0
        %1275 = vmatprep.subr.bf16.mxu0 0
        %1276 = vmatpush1.bf16.xpose.msra.mxu0 0
        %1277 = vmatprep.subr.bf16.mxu0 0
        %1278 = vmatpush1.bf16.xpose.msra.mxu0 0
        %1279 = vmatprep.subr.bf16.mxu0 0
        %1280 = vmatpush1.bf16.xpose.msra.mxu0 0
        %1281 = vmatprep.subr.bf16.mxu0 0
        %1282 = vmatpush1.bf16.xpose.msra.mxu0 0
        %1283 = vmatprep.subr.bf16.mxu0 0
        %1284 = vmatpush1.bf16.xpose.msra.mxu0 0
        %1285 = vmatprep.subr.bf16.mxu0 0
        %1286 = vmatpush1.bf16.xpose.msra.mxu0 0
        %1287 = vmatprep.mubr.bf16.mxu0 0
        %1288 = vmatmul.mubr.bf16.gmra.mrb[0].mxu0 %v1250
        %v1289 = vpop.f32.mrb[0].mxu0
        %v1290 = vadd.f32 0.0, %v1289
        %v1291 = vpop.f32.mrb[0].mxu0
        %v1292 = vpop.f32.mrb[0].mxu0
        %v1293 = vpop.f32.mrb[0].mxu0
        %1294 = vdwg.mxu0
        %v1295 = vsel %vm927, %v1290, -inf
        %1296 = vmax.xlane.f32.xlu0 %v1295
        %v1297 = vpop.xlane.xlu0 %1296
        %v1298 = vsub.f32 %v1290, %v1297
        %v1299 = vmul.f32 %v1298, 1.442695
        %v1300 = vpow.pop %v1299
        %v1301 = vsel %vm927, %v1300, 0.0
        %1302 = vadd.xlane.f32.xlu0 %v1301
        %v1303 = vpop.xlane.xlu0 %1302
        %v1304 = vrcp.pop %v1303
        %v1305 = vmul.f32 %v1300, %v1304
        %v1306 = vpack.c.bf16 %v1305, %v1305
        %1307 = vrot.lane.b32.xlu0 %v919, 112
        %v1308 = vpop.permute.xlu0 %1307
        %v1310 = vsel %vm927, %v1306, 0
        %v1313 = vsel %vm989, %v1308, 0
        %1315 = vmatprep.subr.bf16.mxu0 0
        %1316 = vmatpush1.bf16.msra.mxu0 %v1313
        %1317 = vmatprep.subr.bf16.mxu0 0
        %1318 = vmatpush1.bf16.msra.mxu0 0
        %1319 = vmatprep.subr.bf16.mxu0 0
        %1320 = vmatpush1.bf16.msra.mxu0 0
        %1321 = vmatprep.subr.bf16.mxu0 0
        %1322 = vmatpush1.bf16.msra.mxu0 0
        %1323 = vmatprep.subr.bf16.mxu0 0
        %1324 = vmatpush1.bf16.msra.mxu0 0
        %1325 = vmatprep.subr.bf16.mxu0 0
        %1326 = vmatpush1.bf16.msra.mxu0 0
        %1327 = vmatprep.subr.bf16.mxu0 0
        %1328 = vmatpush1.bf16.msra.mxu0 0
        %1329 = vmatprep.subr.bf16.mxu0 0
        %1330 = vmatpush1.bf16.msra.mxu0 0
        %1331 = vmatprep.subr.bf16.mxu0 0
        %1332 = vmatpush1.bf16.msra.mxu0 0
        %1333 = vmatprep.subr.bf16.mxu0 0
        %1334 = vmatpush1.bf16.msra.mxu0 0
        %1335 = vmatprep.subr.bf16.mxu0 0
        %1336 = vmatpush1.bf16.msra.mxu0 0
        %1337 = vmatprep.subr.bf16.mxu0 0
        %1338 = vmatpush1.bf16.msra.mxu0 0
        %1339 = vmatprep.subr.bf16.mxu0 0
        %1340 = vmatpush1.bf16.msra.mxu0 0
        %1341 = vmatprep.subr.bf16.mxu0 0
        %1342 = vmatpush1.bf16.msra.mxu0 0
        %1343 = vmatprep.subr.bf16.mxu0 0
        %1344 = vmatpush1.bf16.msra.mxu0 0
        %1345 = vmatprep.subr.bf16.mxu0 0
        %1346 = vmatpush1.bf16.msra.mxu0 0
        %1347 = vmatprep.mubr.bf16.mxu0 0
        %1348 = vmatmul.mubr.bf16.gmra.mrb[0].mxu0 %v1310
        %v1349 = vpop.f32.mrb[0].mxu0
        %v1350 = vadd.f32 0.0, %v1349
        %v1351 = vpop.f32.mrb[0].mxu0
        %v1352 = vpop.f32.mrb[0].mxu0
        %v1353 = vpop.f32.mrb[0].mxu0
        %1354 = vdwg.mxu0
        %v1355 = vpack.c.bf16 %v1350, %v1350
        %s1356 = scalar_lea.vmem %s9, 8
        %v1357 = vld [vmem:[%s1356] sm:$0xf]
        %v1359 = vsel %vm927, %v1355, 0
        %v1362 = vsel %vm989, %v1357, 0
        %1364 = vmatprep.subr.bf16.mxu0 0
        %1365 = vmatpush1.bf16.msra.mxu0 %v1362
        %1366 = vmatprep.subr.bf16.mxu0 0
        %1367 = vmatpush1.bf16.msra.mxu0 0
        %1368 = vmatprep.subr.bf16.mxu0 0
        %1369 = vmatpush1.bf16.msra.mxu0 0
        %1370 = vmatprep.subr.bf16.mxu0 0
        %1371 = vmatpush1.bf16.msra.mxu0 0
        %1372 = vmatprep.subr.bf16.mxu0 0
        %1373 = vmatpush1.bf16.msra.mxu0 0
        %1374 = vmatprep.subr.bf16.mxu0 0
        %1375 = vmatpush1.bf16.msra.mxu0 0
        %1376 = vmatprep.subr.bf16.mxu0 0
        %1377 = vmatpush1.bf16.msra.mxu0 0
        %1378 = vmatprep.subr.bf16.mxu0 0
        %1379 = vmatpush1.bf16.msra.mxu0 0
        %1380 = vmatprep.subr.bf16.mxu0 0
        %1381 = vmatpush1.bf16.msra.mxu0 0
        %1382 = vmatprep.subr.bf16.mxu0 0
        %1383 = vmatpush1.bf16.msra.mxu0 0
        %1384 = vmatprep.subr.bf16.mxu0 0
        %1385 = vmatpush1.bf16.msra.mxu0 0
        %1386 = vmatprep.subr.bf16.mxu0 0
        %1387 = vmatpush1.bf16.msra.mxu0 0
        %1388 = vmatprep.subr.bf16.mxu0 0
        %1389 = vmatpush1.bf16.msra.mxu0 0
        %1390 = vmatprep.subr.bf16.mxu0 0
        %1391 = vmatpush1.bf16.msra.mxu0 0
        %1392 = vmatprep.subr.bf16.mxu0 0
        %1393 = vmatpush1.bf16.msra.mxu0 0
        %1394 = vmatprep.subr.bf16.mxu0 0
        %1395 = vmatpush1.bf16.msra.mxu0 0
        %1396 = vmatprep.mubr.bf16.mxu0 0
        %1397 = vmatmul.mubr.bf16.gmra.mrb[0].mxu0 %v1359
        %v1398 = vpop.f32.mrb[0].mxu0
        %v1399 = vadd.f32 0.0, %v1398
        %v1400 = vpop.f32.mrb[0].mxu0
        %v1401 = vpop.f32.mrb[0].mxu0
        %v1402 = vpop.f32.mrb[0].mxu0
        %1403 = vdwg.mxu0
        %v1404 = vadd.f32 %v1244, %v1399
        %1405 = vrot.lane.b32.xlu0 %v917, 104
        %v1406 = vpop.permute.xlu0 %1405
        %1407 = vrot.lane.b32.xlu0 %v918, 104
        %v1408 = vpop.permute.xlu0 %1407
        %v1410 = vsel %vm927, %v1406, 0
        %v1413 = vsel %vm927, %v1408, 0
        %1415 = vmatprep.subr.bf16.mxu0 0
        %1416 = vmatpush1.bf16.xpose.msra.mxu0 %v1413
        %1417 = vmatprep.subr.bf16.mxu0 0
        %1418 = vmatpush1.bf16.xpose.msra.mxu0 0
        %1419 = vmatprep.subr.bf16.mxu0 0
        %1420 = vmatpush1.bf16.xpose.msra.mxu0 0
        %1421 = vmatprep.subr.bf16.mxu0 0
        %1422 = vmatpush1.bf16.xpose.msra.mxu0 0
        %1423 = vmatprep.subr.bf16.mxu0 0
        %1424 = vmatpush1.bf16.xpose.msra.mxu0 0
        %1425 = vmatprep.subr.bf16.mxu0 0
        %1426 = vmatpush1.bf16.xpose.msra.mxu0 0
        %1427 = vmatprep.subr.bf16.mxu0 0
        %1428 = vmatpush1.bf16.xpose.msra.mxu0 0
        %1429 = vmatprep.subr.bf16.mxu0 0
        %1430 = vmatpush1.bf16.xpose.msra.mxu0 0
        %1431 = vmatprep.subr.bf16.mxu0 0
        %1432 = vmatpush1.bf16.xpose.msra.mxu0 0
        %1433 = vmatprep.subr.bf16.mxu0 0
        %1434 = vmatpush1.bf16.xpose.msra.mxu0 0
        %1435 = vmatprep.subr.bf16.mxu0 0
        %1436 = vmatpush1.bf16.xpose.msra.mxu0 0
        %1437 = vmatprep.subr.bf16.mxu0 0
        %1438 = vmatpush1.bf16.xpose.msra.mxu0 0
        %1439 = vmatprep.subr.bf16.mxu0 0
        %1440 = vmatpush1.bf16.xpose.msra.mxu0 0
        %1441 = vmatprep.subr.bf16.mxu0 0
        %1442 = vmatpush1.bf16.xpose.msra.mxu0 0
        %1443 = vmatprep.subr.bf16.mxu0 0
        %1444 = vmatpush1.bf16.xpose.msra.mxu0 0
        %1445 = vmatprep.subr.bf16.mxu0 0
        %1446 = vmatpush1.bf16.xpose.msra.mxu0 0
        %1447 = vmatprep.mubr.bf16.mxu0 0
        %1448 = vmatmul.mubr.bf16.gmra.mrb[0].mxu0 %v1410
        %v1449 = vpop.f32.mrb[0].mxu0
        %v1450 = vadd.f32 0.0, %v1449
        %v1451 = vpop.f32.mrb[0].mxu0
        %v1452 = vpop.f32.mrb[0].mxu0
        %v1453 = vpop.f32.mrb[0].mxu0
        %1454 = vdwg.mxu0
        %v1455 = vsel %vm927, %v1450, -inf
        %1456 = vmax.xlane.f32.xlu0 %v1455
        %v1457 = vpop.xlane.xlu0 %1456
        %v1458 = vsub.f32 %v1450, %v1457
        %v1459 = vmul.f32 %v1458, 1.442695
        %v1460 = vpow.pop %v1459
        %v1461 = vsel %vm927, %v1460, 0.0
        %1462 = vadd.xlane.f32.xlu0 %v1461
        %v1463 = vpop.xlane.xlu0 %1462
        %v1464 = vrcp.pop %v1463
        %v1465 = vmul.f32 %v1460, %v1464
        %v1466 = vpack.c.bf16 %v1465, %v1465
        %1467 = vrot.lane.b32.xlu0 %v919, 104
        %v1468 = vpop.permute.xlu0 %1467
        %v1470 = vsel %vm927, %v1466, 0
        %v1473 = vsel %vm989, %v1468, 0
        %1475 = vmatprep.subr.bf16.mxu0 0
        %1476 = vmatpush1.bf16.msra.mxu0 %v1473
        %1477 = vmatprep.subr.bf16.mxu0 0
        %1478 = vmatpush1.bf16.msra.mxu0 0
        %1479 = vmatprep.subr.bf16.mxu0 0
        %1480 = vmatpush1.bf16.msra.mxu0 0
        %1481 = vmatprep.subr.bf16.mxu0 0
        %1482 = vmatpush1.bf16.msra.mxu0 0
        %1483 = vmatprep.subr.bf16.mxu0 0
        %1484 = vmatpush1.bf16.msra.mxu0 0
        %1485 = vmatprep.subr.bf16.mxu0 0
        %1486 = vmatpush1.bf16.msra.mxu0 0
        %1487 = vmatprep.subr.bf16.mxu0 0
        %1488 = vmatpush1.bf16.msra.mxu0 0
        %1489 = vmatprep.subr.bf16.mxu0 0
        %1490 = vmatpush1.bf16.msra.mxu0 0
        %1491 = vmatprep.subr.bf16.mxu0 0
        %1492 = vmatpush1.bf16.msra.mxu0 0
        %1493 = vmatprep.subr.bf16.mxu0 0
        %1494 = vmatpush1.bf16.msra.mxu0 0
        %1495 = vmatprep.subr.bf16.mxu0 0
        %1496 = vmatpush1.bf16.msra.mxu0 0
        %1497 = vmatprep.subr.bf16.mxu0 0
        %1498 = vmatpush1.bf16.msra.mxu0 0
        %1499 = vmatprep.subr.bf16.mxu0 0
        %1500 = vmatpush1.bf16.msra.mxu0 0
        %1501 = vmatprep.subr.bf16.mxu0 0
        %1502 = vmatpush1.bf16.msra.mxu0 0
        %1503 = vmatprep.subr.bf16.mxu0 0
        %1504 = vmatpush1.bf16.msra.mxu0 0
        %1505 = vmatprep.subr.bf16.mxu0 0
        %1506 = vmatpush1.bf16.msra.mxu0 0
        %1507 = vmatprep.mubr.bf16.mxu0 0
        %1508 = vmatmul.mubr.bf16.gmra.mrb[0].mxu0 %v1470
        %v1509 = vpop.f32.mrb[0].mxu0
        %v1510 = vadd.f32 0.0, %v1509
        %v1511 = vpop.f32.mrb[0].mxu0
        %v1512 = vpop.f32.mrb[0].mxu0
        %v1513 = vpop.f32.mrb[0].mxu0
        %1514 = vdwg.mxu0
        %v1515 = vpack.c.bf16 %v1510, %v1510
        %s1516 = scalar_lea.vmem %s9, 12
        %v1517 = vld [vmem:[%s1516] sm:$0xf]
        %v1519 = vsel %vm927, %v1515, 0
        %v1522 = vsel %vm989, %v1517, 0
        %1524 = vmatprep.subr.bf16.mxu0 0
        %1525 = vmatpush1.bf16.msra.mxu0 %v1522
        %1526 = vmatprep.subr.bf16.mxu0 0
        %1527 = vmatpush1.bf16.msra.mxu0 0
        %1528 = vmatprep.subr.bf16.mxu0 0
        %1529 = vmatpush1.bf16.msra.mxu0 0
        %1530 = vmatprep.subr.bf16.mxu0 0
        %1531 = vmatpush1.bf16.msra.mxu0 0
        %1532 = vmatprep.subr.bf16.mxu0 0
        %1533 = vmatpush1.bf16.msra.mxu0 0
        %1534 = vmatprep.subr.bf16.mxu0 0
        %1535 = vmatpush1.bf16.msra.mxu0 0
        %1536 = vmatprep.subr.bf16.mxu0 0
        %1537 = vmatpush1.bf16.msra.mxu0 0
        %1538 = vmatprep.subr.bf16.mxu0 0
        %1539 = vmatpush1.bf16.msra.mxu0 0
        %1540 = vmatprep.subr.bf16.mxu0 0
        %1541 = vmatpush1.bf16.msra.mxu0 0
        %1542 = vmatprep.subr.bf16.mxu0 0
        %1543 = vmatpush1.bf16.msra.mxu0 0
        %1544 = vmatprep.subr.bf16.mxu0 0
        %1545 = vmatpush1.bf16.msra.mxu0 0
        %1546 = vmatprep.subr.bf16.mxu0 0
        %1547 = vmatpush1.bf16.msra.mxu0 0
        %1548 = vmatprep.subr.bf16.mxu0 0
        %1549 = vmatpush1.bf16.msra.mxu0 0
        %1550 = vmatprep.subr.bf16.mxu0 0
        %1551 = vmatpush1.bf16.msra.mxu0 0
        %1552 = vmatprep.subr.bf16.mxu0 0
        %1553 = vmatpush1.bf16.msra.mxu0 0
        %1554 = vmatprep.subr.bf16.mxu0 0
        %1555 = vmatpush1.bf16.msra.mxu0 0
        %1556 = vmatprep.mubr.bf16.mxu0 0
        %1557 = vmatmul.mubr.bf16.gmra.mrb[0].mxu0 %v1519
        %v1558 = vpop.f32.mrb[0].mxu0
        %v1559 = vadd.f32 0.0, %v1558
        %v1560 = vpop.f32.mrb[0].mxu0
        %v1561 = vpop.f32.mrb[0].mxu0
        %v1562 = vpop.f32.mrb[0].mxu0
        %1563 = vdwg.mxu0
        %v1564 = vadd.f32 %v1404, %v1559
        %v1565 = vadd.f32 %v711, %v1564
        %v1566 = vld [vmem:[#allocation10] sm:$0x1]
        %v1567 = vld [vmem:[#allocation11] sm:$0x1]
        %v1568 = vsel %vm738, %v1565, 0.0
        %1569 = vadd.xlane.f32.xlu0 %v1568
        %v1570 = vpop.xlane.xlu0 %1569
        %v1571 = vrcp.pop 32.0
        %v1572 = vmul.f32 %v1570, %v1571
        %v1573 = vsub.f32 %v1565, %v1572
        %v1574 = vmul.f32 %v1573, %v1573
        %v1575 = vsel %vm738, %v1574, 0.0
        %1576 = vadd.xlane.f32.xlu0 %v1575
        %v1577 = vpop.xlane.xlu0 %1576
        %v1578 = vmul.f32 %v1577, %v1571
        %v1579 = vadd.f32 %v1578, 1e-05
        %v1580 = vrsqrt.pop %v1579
        %v1581 = vmul.f32 %v1573, %v1580
        %v1583 = vlaneseq
        %v1584 = vshrl.u32 %v1583, 7
        %v1585 = vsub.s32 0, %v1584
        %v1586 = vrot.slane %v1566, %v1585
        %v1588 = vmul.f32 %v1581, %v1586
        %v1590 = vlaneseq
        %v1591 = vshrl.u32 %v1590, 7
        %v1592 = vsub.s32 0, %v1591
        %v1593 = vrot.slane %v1567, %v1592
        %v1595 = vadd.f32 %v1588, %v1593
        %v1596 = vpack.c.bf16 %v1595, %v1595
        %v1597 = vld [vmem:[%s13] sm:$0xf]
        %v1598 = vld [vmem:[%s13 + $0x4] sm:$0xf]
        %v1599 = vld [vmem:[%s13 + $0x8] sm:$0xf]
        %v1600 = vld [vmem:[%s13 + $0xc] sm:$0xf]
        %v1601 = vld [vmem:[%s14] sm:$0x1]
        %v1603 = vlaneseq
        %v1604 = vshrl.u32 %v1603, 7
        %v1605 = vsub.s32 0, %v1604
        %v1606 = vrot.slane %v1601, %v1605
        %v1612 = vunpack.c.l.b16 %v1597
        %v1613 = vunpack.c.l.b16 %v1598
        %v1614 = vunpack.c.l.b16 %v1599
        %v1615 = vunpack.c.l.b16 %v1600
        %v1616 = vpack.c.b16 %v1613, %v1612
        %v1617 = vpack.c.b16 %v1615, %v1614
        %v1621 = vsel %vm738, %v1596, 0
        %1623 = vmatprep.subr.bf16.mxu0 0
        %1624 = vmatpush1.bf16.msra.mxu0 %v1616
        %1625 = vmatprep.subr.bf16.mxu0 0
        %1626 = vmatpush1.bf16.msra.mxu0 %v1617
        %1627 = vmatprep.subr.bf16.mxu0 0
        %1628 = vmatpush1.bf16.msra.mxu0 0
        %1629 = vmatprep.subr.bf16.mxu0 0
        %1630 = vmatpush1.bf16.msra.mxu0 0
        %1631 = vmatprep.subr.bf16.mxu0 0
        %1632 = vmatpush1.bf16.msra.mxu0 0
        %1633 = vmatprep.subr.bf16.mxu0 0
        %1634 = vmatpush1.bf16.msra.mxu0 0
        %1635 = vmatprep.subr.bf16.mxu0 0
        %1636 = vmatpush1.bf16.msra.mxu0 0
        %1637 = vmatprep.subr.bf16.mxu0 0
        %1638 = vmatpush1.bf16.msra.mxu0 0
        %1639 = vmatprep.subr.bf16.mxu0 0
        %1640 = vmatpush1.bf16.msra.mxu0 0
        %1641 = vmatprep.subr.bf16.mxu0 0
        %1642 = vmatpush1.bf16.msra.mxu0 0
        %1643 = vmatprep.subr.bf16.mxu0 0
        %1644 = vmatpush1.bf16.msra.mxu0 0
        %1645 = vmatprep.subr.bf16.mxu0 0
        %1646 = vmatpush1.bf16.msra.mxu0 0
        %1647 = vmatprep.subr.bf16.mxu0 0
        %1648 = vmatpush1.bf16.msra.mxu0 0
        %1649 = vmatprep.subr.bf16.mxu0 0
        %1650 = vmatpush1.bf16.msra.mxu0 0
        %1651 = vmatprep.subr.bf16.mxu0 0
        %1652 = vmatpush1.bf16.msra.mxu0 0
        %1653 = vmatprep.subr.bf16.mxu0 0
        %1654 = vmatpush1.bf16.msra.mxu0 0
        %1655 = vmatprep.mubr.bf16.mxu0 0
        %1656 = vmatmul.mubr.bf16.gmra.mrb[0].mxu0 %v1621
        %v1657 = vpop.f32.mrb[0].mxu0
        %v1658 = vadd.f32 %v1606, %v1657
        %v1659 = vpop.f32.mrb[0].mxu0
        %v1660 = vpop.f32.mrb[0].mxu0
        %v1661 = vpop.f32.mrb[0].mxu0
        %1662 = vdwg.mxu0
        %v1663 = vmax.f32 %v1658, 0.0
        %v1664 = vpack.c.bf16 %v1663, %v1663
        %v1665 = vld [vmem:[%s15] sm:$0xf]
        %v1666 = vld [vmem:[%s15 + $0x4] sm:$0xf]
        %v1667 = vld [vmem:[%s15 + $0x8] sm:$0xf]
        %v1668 = vld [vmem:[%s15 + $0xc] sm:$0xf]
        %v1669 = vld [vmem:[%s15 + $0x10] sm:$0xf]
        %v1670 = vld [vmem:[%s15 + $0x14] sm:$0xf]
        %v1671 = vld [vmem:[%s15 + $0x18] sm:$0xf]
        %v1672 = vld [vmem:[%s15 + $0x1c] sm:$0xf]
        %v1673 = vld [vmem:[%s15 + $0x20] sm:$0xf]
        %v1674 = vld [vmem:[%s15 + $0x24] sm:$0xf]
        %v1675 = vld [vmem:[%s15 + $0x28] sm:$0xf]
        %v1676 = vld [vmem:[%s15 + $0x2c] sm:$0xf]
        %v1677 = vld [vmem:[%s15 + $0x30] sm:$0xf]
        %v1678 = vld [vmem:[%s15 + $0x34] sm:$0xf]
        %v1679 = vld [vmem:[%s15 + $0x38] sm:$0xf]
        %v1680 = vld [vmem:[%s15 + $0x3c] sm:$0xf]
        %v1681 = vld [vmem:[%s16] sm:$0x1]
        %v1683 = vlaneseq
        %v1684 = vshrl.u32 %v1683, 7
        %v1685 = vsub.s32 0, %v1684
        %v1686 = vrot.slane %v1681, %v1685
        %v1704 = vunpack.c.l.b16 %v1665
        %v1705 = vunpack.c.l.b16 %v1666
        %v1706 = vunpack.c.l.b16 %v1667
        %v1707 = vunpack.c.l.b16 %v1668
        %v1708 = vunpack.c.l.b16 %v1669
        %v1709 = vunpack.c.l.b16 %v1670
        %v1710 = vunpack.c.l.b16 %v1671
        %v1711 = vunpack.c.l.b16 %v1672
        %v1712 = vunpack.c.l.b16 %v1673
        %v1713 = vunpack.c.l.b16 %v1674
        %v1714 = vunpack.c.l.b16 %v1675
        %v1715 = vunpack.c.l.b16 %v1676
        %v1716 = vunpack.c.l.b16 %v1677
        %v1717 = vunpack.c.l.b16 %v1678
        %v1718 = vunpack.c.l.b16 %v1679
        %v1719 = vunpack.c.l.b16 %v1680
        %v1720 = vpack.c.b16 %v1705, %v1704
        %v1721 = vpack.c.b16 %v1707, %v1706
        %v1722 = vpack.c.b16 %v1709, %v1708
        %v1723 = vpack.c.b16 %v1711, %v1710
        %v1724 = vpack.c.b16 %v1713, %v1712
        %v1725 = vpack.c.b16 %v1715, %v1714
        %v1726 = vpack.c.b16 %v1717, %v1716
        %v1727 = vpack.c.b16 %v1719, %v1718
        %1736 = vmatprep.subr.bf16.mxu0 0
        %1737 = vmatpush1.bf16.msra.mxu0 %v1720
        %1738 = vmatprep.subr.bf16.mxu0 0
        %1739 = vmatpush1.bf16.msra.mxu0 %v1721
        %1740 = vmatprep.subr.bf16.mxu0 0
        %1741 = vmatpush1.bf16.msra.mxu0 %v1722
        %1742 = vmatprep.subr.bf16.mxu0 0
        %1743 = vmatpush1.bf16.msra.mxu0 %v1723
        %1744 = vmatprep.subr.bf16.mxu0 0
        %1745 = vmatpush1.bf16.msra.mxu0 %v1724
        %1746 = vmatprep.subr.bf16.mxu0 0
        %1747 = vmatpush1.bf16.msra.mxu0 %v1725
        %1748 = vmatprep.subr.bf16.mxu0 0
        %1749 = vmatpush1.bf16.msra.mxu0 %v1726
        %1750 = vmatprep.subr.bf16.mxu0 0
        %1751 = vmatpush1.bf16.msra.mxu0 %v1727
        %1752 = vmatprep.subr.bf16.mxu0 0
        %1753 = vmatpush1.bf16.msra.mxu0 0
        %1754 = vmatprep.subr.bf16.mxu0 0
        %1755 = vmatpush1.bf16.msra.mxu0 0
        %1756 = vmatprep.subr.bf16.mxu0 0
        %1757 = vmatpush1.bf16.msra.mxu0 0
        %1758 = vmatprep.subr.bf16.mxu0 0
        %1759 = vmatpush1.bf16.msra.mxu0 0
        %1760 = vmatprep.subr.bf16.mxu0 0
        %1761 = vmatpush1.bf16.msra.mxu0 0
        %1762 = vmatprep.subr.bf16.mxu0 0
        %1763 = vmatpush1.bf16.msra.mxu0 0
        %1764 = vmatprep.subr.bf16.mxu0 0
        %1765 = vmatpush1.bf16.msra.mxu0 0
        %1766 = vmatprep.subr.bf16.mxu0 0
        %1767 = vmatpush1.bf16.msra.mxu0 0
        %1768 = vmatprep.mubr.bf16.mxu0 0
        %1769 = vmatmul.mubr.bf16.gmra.mrb[0].mxu0 %v1664
        %v1770 = vpop.f32.mrb[0].mxu0
        %v1771 = vadd.f32 %v1686, %v1770
        %v1772 = vpop.f32.mrb[0].mxu0
        %v1773 = vpop.f32.mrb[0].mxu0
        %v1774 = vpop.f32.mrb[0].mxu0
        %1775 = vdwg.mxu0
        %v1776 = vadd.f32 %v1595, %v1771
        %v1777 = vld [vmem:[%s17] sm:$0x1]
        %v1778 = vld [vmem:[%s18] sm:$0x1]
        %v1779 = vsel %vm738, %v1776, 0.0
        %1780 = vadd.xlane.f32.xlu0 %v1779
        %v1781 = vpop.xlane.xlu0 %1780
        %v1782 = vmul.f32 %v1781, %v1571
        %v1783 = vsub.f32 %v1776, %v1782
        %v1784 = vmul.f32 %v1783, %v1783
        %v1785 = vsel %vm738, %v1784, 0.0
        %1786 = vadd.xlane.f32.xlu0 %v1785
        %v1787 = vpop.xlane.xlu0 %1786
        %v1788 = vmul.f32 %v1787, %v1571
        %v1789 = vadd.f32 %v1788, 1e-05
        %v1790 = vrsqrt.pop %v1789
        %v1791 = vmul.f32 %v1783, %v1790
        %v1793 = vlaneseq
        %v1794 = vshrl.u32 %v1793, 7
        %v1795 = vsub.s32 0, %v1794
        %v1796 = vrot.slane %v1777, %v1795
        %v1798 = vmul.f32 %v1791, %v1796
        %v1800 = vlaneseq
        %v1801 = vshrl.u32 %v1800, 7
        %v1802 = vsub.s32 0, %v1801
        %v1803 = vrot.slane %v1778, %v1802
        %v1805 = vadd.f32 %v1798, %v1803
        %1806 = vst.msk [vmem:[%s697] sm:$0xff] %vm738, %v1805
        %s1807 = sand.u32 %s459, 1
        %s1808 = scalar_lea.sflag [#allocation4], %s1807
        %s1809 = sand.u32 %s459, 1
        %s1810 = smul.addr %s1809, 8
        %s1811 = scalar_lea.vmem [#allocation13], %s1810
        // Predicated region
        $region121: #{tpu_custom_call.1} parent=95 // pred_check
          %p1812 = pneg %p469
        $region122: #{tpu_custom_call.1} parent=95 // pred_check_branch
          %1814 = sbr.rel (%p1812) target = $region124
        $region123: #{tpu_custom_call.1} parent=95 // pred_region
          %s1816 = ssub.s32 128, 128
          %1817 = vsyncadd %s1808, %s1816
          %s1818 = smul.addr %s37, 128
          %s1819 = scalar_lea.hbm %s19, %s1818
          %s1821 = sshll.u32 %s1811, 4
          %s1822 = int_to_ptr.vmem [resolvable:$true] %s1821
          %1824 = dma.vmem_to_hbm [thread:$0]  %s1822, 128, %s1819, %s1808
        $region124: #{tpu_custom_call.1} parent=95 // pred_fallthru
          _
      $region96: #{tpu_custom_call.1} parent=5 // pred_fallthru
        _
      %p1825 = scmp.le.s32.totalorder 2, %s32
      // Predicated region
      $region125: #{tpu_custom_call.1} parent=5 // pred_check
        %p1826 = pneg %p1825
      $region126: #{tpu_custom_call.1} parent=5 // pred_check_branch
        %1828 = sbr.rel (%p1826) target = $region128
      $region127: #{tpu_custom_call.1} parent=5 // pred_region
        %s1829 = ssub.s32 %s32, 2
        // Predicated region
        $region129: #{tpu_custom_call.1} parent=127 // pred_check
          %p1830 = pneg %p475
        $region130: #{tpu_custom_call.1} parent=127 // pred_check_branch
          %1832 = sbr.rel (%p1830) target = $region132
        $region131: #{tpu_custom_call.1} parent=127 // pred_region
          %s1833 = sand.u32 %s460, 1
          %s1834 = scalar_lea.sflag [#allocation4], %s1833
          %s1835 = sand.u32 %s460, 1
          %s1836 = smul.addr %s1835, 8
          %s1837 = scalar_lea.vmem [#allocation13], %s1836
          %1838 = dma.done %s1834, 128
        $region132: #{tpu_custom_call.1} parent=127 // pred_fallthru
          _
      $region128: #{tpu_custom_call.1} parent=5 // pred_fallthru
        _
    $region6: #{tpu_custom_call.1} parent=1 // loop_footer
      %s36 = sadd.s32 1, %s32
    $region7: #{tpu_custom_call.1} parent=1 // loop_footer_branch
      %31 = sbr.rel target = $region3
    $region8: #{tpu_custom_call.1} parent=1 // loop_exit
      _
    %1839 = vsyncpa [#allocation3], 1
    %s1840 = scalar_lea.sflag [#allocation3], 1
    %1841 = vsyncpa %s1840, 1
    %1842 = vsyncpa [#allocation6], 1
    %1843 = vsyncpa [#allocation9], 1
    %1844 = vsyncpa [#allocation12], 1
    %1845 = vsyncpa [#allocation4], 1
    %s1846 = scalar_lea.sflag [#allocation4], 1
    %1847 = vsyncpa %s1846, 1

// kernel: tpu_custom_call.1
$region0: #{tpu_custom_call.1}
  #allocation0 [shape = 'u32[]', space=smem, size = 0x4, offset = 0x4, fixed_abs, tag = 'smem constant byte address 0x4 - core index']
  #allocation1 [shape = 'u32[144,128]{1,0:T(1,128)}', space=vmem, size = 0x12000, scoped, tag = 'internal scratch']
  %s0 = inlined_call_operand.vmem [shape: f32[16,32], index: 0, kind: input, shape index: {}]
  %s1 = inlined_call_operand.vmem [shape: f32[16,32], index: 1, kind: input, shape index: {}]
  %s2 = inlined_call_operand.vmem [shape: f32[16,32], index: 2, kind: input, shape index: {}]
  %s3 = inlined_call_operand.vmem [shape: bf16[32,32], index: 3, kind: input, shape index: {}]
  %s4 = inlined_call_operand.vmem [shape: bf16[32,32], index: 4, kind: input, shape index: {}]
  %s5 = inlined_call_operand.hbm [shape: bf16[32,32], index: 5, kind: input, shape index: {}]
  %s6 = inlined_call_operand.vmem [shape: f32[1,32], index: 6, kind: input, shape index: {}]
  %s7 = inlined_call_operand.hbm [shape: f32[1,32], index: 7, kind: input, shape index: {}]
  %s8 = inlined_call_operand.hbm [shape: f32[1,32], index: 8, kind: input, shape index: {}]
  %s9 = inlined_call_operand.vmem [shape: bf16[4,8,32], index: 9, kind: input, shape index: {}]
  %s10 = inlined_call_operand.hbm [shape: f32[1,32], index: 10, kind: input, shape index: {}]
  %s11 = inlined_call_operand.hbm [shape: f32[1,32], index: 11, kind: input, shape index: {}]
  %s12 = inlined_call_operand.hbm [shape: f32[1,32], index: 12, kind: input, shape index: {}]
  %s13 = inlined_call_operand.vmem [shape: bf16[32,128], index: 13, kind: input, shape index: {}]
  %s14 = inlined_call_operand.vmem [shape: f32[1,128], index: 14, kind: input, shape index: {}]
  %s15 = inlined_call_operand.vmem [shape: bf16[128,32], index: 15, kind: input, shape index: {}]
  %s16 = inlined_call_operand.vmem [shape: f32[1,32], index: 16, kind: input, shape index: {}]
  %s17 = inlined_call_operand.vmem [shape: f32[1,32], index: 17, kind: input, shape index: {}]
  %s18 = inlined_call_operand.vmem [shape: f32[1,32], index: 18, kind: input, shape index: {}]
  %s19 = inlined_call_operand.hbm [shape: f32[16,32], index: 19, kind: output, shape index: {}]
  %s20 = sld [smem:[#allocation0]]
  $region133: #{tpu_custom_call.1} parent=0
    _
  %s22 = ssub.s32 1, %s20
  %s23 = scalar_select 0, %s22, %s20
  $region1: #{tpu_custom_call.1} parent=0
    #allocation2 [shape = 'u8[8192]{0}', space=vmem, size = 0x2000, scoped, tag = 'input window, operand 5, single buffered']
    #allocation3 [shape = 's32[2]{0}', space=sflag, size = 0x8, scoped, tag = 'scoped memory for tpu_custom_call.1']
    #allocation4 [shape = 's32[2]{0}', space=sflag, size = 0x8, scoped, tag = 'scoped memory for tpu_custom_call.1']
    #allocation5 [shape = 'u8[512]{0}', space=vmem, size = 0x400, scoped, tag = 'input window, operand 7, single buffered']
    #allocation6 [shape = 's32[1]{0}', space=sflag, size = 0x4, scoped, tag = 'scoped memory for tpu_custom_call.1']
    #allocation7 [shape = 'u8[512]{0}', space=vmem, size = 0x400, scoped, tag = 'input window, operand 8, single buffered']
    #allocation8 [shape = 'u8[512]{0}', space=vmem, size = 0x400, scoped, tag = 'input window, operand 10, single buffered']
    #allocation9 [shape = 's32[1]{0}', space=sflag, size = 0x4, scoped, tag = 'scoped memory for tpu_custom_call.1']
    #allocation10 [shape = 'u8[512]{0}', space=vmem, size = 0x400, scoped, tag = 'input window, operand 11, single buffered']
    #allocation11 [shape = 'u8[512]{0}', space=vmem, size = 0x400, scoped, tag = 'input window, operand 12, single buffered']
    #allocation12 [shape = 's32[1]{0}', space=sflag, size = 0x4, scoped, tag = 'scoped memory for tpu_custom_call.1']
    #allocation13 [shape = 'u8[8192]{0}', space=vmem, size = 0x2000, scoped, tag = 'output window, operand 0']
    %24 = vsyncpa [#allocation3], 0
    %25 = vsyncpa [#allocation6], 0
    %26 = vsyncpa [#allocation9], 0
    %27 = vsyncpa [#allocation12], 0
    %28 = vsyncpa [#allocation4], 0
    %s29 = scalar_lea.sflag [#allocation4], 1
    %30 = vsyncpa %s29, 0
    loop: start=0, step=1, limit=4
    $region2: #{tpu_custom_call.1} parent=1 // loop_pre_header
      _
    $region3: #{tpu_custom_call.1} parent=1 // loop_header
      %s32 = sphi 0, %s36
      %p33 = scmp.ge.s32.totalorder %s32, 4
      %s42 = sphi 0, %s44
      %s45 = sphi 0, %s42
      %s46 = sphi 0, %s45
      %s62 = sphi 0, %s46
      %s68 = sphi 0, %s70
      %s71 = sphi 0, %s68
      %s72 = sphi 0, %s71
      %s88 = sphi 0, %s72
      %s94 = sphi 0, %s96
      %s97 = sphi 0, %s94
      %s98 = sphi 0, %s97
      %s114 = sphi 0, %s98
      %s118 = sphi 0, %s118
      %s120 = sphi 0, %s118
      %s121 = sphi 0, %s120
      %s135 = sphi 0, %s121
      %s139 = sphi 0, %s139
      %s141 = sphi 0, %s139
      %s142 = sphi 0, %s141
      %s156 = sphi 0, %s142
      %s160 = sphi 0, %s160
      %s162 = sphi 0, %s160
      %s163 = sphi 0, %s162
      %s177 = sphi 0, %s163
      %s181 = sphi 0, %s181
      %s183 = sphi 0, %s181
      %s184 = sphi 0, %s183
      %s198 = sphi 0, %s184
      %s202 = sphi 0, %s202
      %s204 = sphi 0, %s202
      %s205 = sphi 0, %s204
      %s219 = sphi 0, %s205
      %s223 = sphi 0, %s223
      %s225 = sphi 0, %s223
      %s226 = sphi 0, %s225
      %s240 = sphi 0, %s226
      %s244 = sphi 0, %s244
      %s246 = sphi 0, %s244
      %s247 = sphi 0, %s246
      %s261 = sphi 0, %s247
      %s265 = sphi 0, %s265
      %s267 = sphi 0, %s265
      %s268 = sphi 0, %s267
      %s282 = sphi 0, %s268
      %s286 = sphi 0, %s286
      %s288 = sphi 0, %s286
      %s289 = sphi 0, %s288
      %s303 = sphi 0, %s289
      %s307 = sphi 0, %s307
      %s309 = sphi 0, %s307
      %s310 = sphi 0, %s309
      %s324 = sphi 0, %s310
      %s328 = sphi 0, %s328
      %s330 = sphi 0, %s328
      %s331 = sphi 0, %s330
      %s345 = sphi 0, %s331
      %s349 = sphi 0, %s349
      %s351 = sphi 0, %s349
      %s352 = sphi 0, %s351
      %s366 = sphi 0, %s352
      %s370 = sphi 0, %s370
      %s372 = sphi 0, %s370
      %s373 = sphi 0, %s372
      %s387 = sphi 0, %s373
      %s391 = sphi 0, %s391
      %s393 = sphi 0, %s391
      %s394 = sphi 0, %s393
      %s408 = sphi 0, %s394
      %s412 = sphi 0, %s412
      %s414 = sphi 0, %s412
      %s415 = sphi 0, %s414
      %s429 = sphi 0, %s415
      %s433 = sphi 0, %s433
      %s435 = sphi 0, %s433
      %s436 = sphi 0, %s435
      %s450 = sphi 0, %s436
      %s456 = sphi 0, %s458
      %s459 = sphi 0, %s456
      %s460 = sphi 0, %s459
      %s476 = sphi 0, %s460
    $region4: #{tpu_custom_call.1} parent=1 // loop_header_branch
      %35 = sbr.rel (%p33) target = $region8
    $region5: #{tpu_custom_call.1} parent=1 // loop_body
      %s37 = ssub.s32 %s32, 1
      %s38 = ssub.s32 %s32, 2
      %s39 = sadd.s32 %s32, 1
      %s40 = ssub.s32 %s32, %s39
      %p41 = scmp.eq.s32.totalorder %s40, 0
      %s43 = sadd.s32 %s42, 1
      %s44 = scalar_select %p41, %s42, %s43
      %p47 = pneg %p41
      %p48 = scmp.eq.s32.totalorder %s32, 1
      %p49 = por %p47, %p48
      %p50 = scmp.ne.s32.totalorder %s42, %s45
      %p51 = scmp.eq.s32.totalorder %s32, 0
      %p52 = por %p50, %p51
      %p53 = scmp.ne.s32.totalorder %s42, %s45
      %p54 = scmp.eq.s32.totalorder %s37, 1
      %p55 = por %p53, %p54
      %p56 = scmp.ne.s32.totalorder %s45, %s46
      %p57 = scmp.eq.s32.totalorder %s37, 0
      %p58 = por %p56, %p57
      %p59 = scmp.ne.s32.totalorder %s45, %s46
      %p60 = scmp.eq.s32.totalorder %s38, 1
      %p61 = por %p59, %p60
      %p63 = scmp.ne.s32.totalorder %s46, %s62
      %p64 = scmp.eq.s32.totalorder %s38, 0
      %p65 = por %p63, %p64
      %s66 = ssub.s32 %s32, %s39
      %p67 = scmp.eq.s32.totalorder %s66, 0
      %s69 = sadd.s32 %s68, 1
      %s70 = scalar_select %p67, %s68, %s69
      %p73 = pneg %p67
      %p74 = scmp.eq.s32.totalorder %s32, 1
      %p75 = por %p73, %p74
      %p76 = scmp.ne.s32.totalorder %s68, %s71
      %p77 = scmp.eq.s32.totalorder %s32, 0
      %p78 = por %p76, %p77
      %p79 = scmp.ne.s32.totalorder %s68, %s71
      %p80 = scmp.eq.s32.totalorder %s37, 1
      %p81 = por %p79, %p80
      %p82 = scmp.ne.s32.totalorder %s71, %s72
      %p83 = scmp.eq.s32.totalorder %s37, 0
      %p84 = por %p82, %p83
      %p85 = scmp.ne.s32.totalorder %s71, %s72
      %p86 = scmp.eq.s32.totalorder %s38, 1
      %p87 = por %p85, %p86
      %p89 = scmp.ne.s32.totalorder %s72, %s88
      %p90 = scmp.eq.s32.totalorder %s38, 0
      %p91 = por %p89, %p90
      %s92 = ssub.s32 %s32, %s39
      %p93 = scmp.eq.s32.totalorder %s92, 0
      %s95 = sadd.s32 %s94, 1
      %s96 = scalar_select %p93, %s94, %s95
      %p99 = pneg %p93
      %p100 = scmp.eq.s32.totalorder %s32, 1
      %p101 = por %p99, %p100
      %p102 = scmp.ne.s32.totalorder %s94, %s97
      %p103 = scmp.eq.s32.totalorder %s32, 0
      %p104 = por %p102, %p103
      %p105 = scmp.ne.s32.totalorder %s94, %s97
      %p106 = scmp.eq.s32.totalorder %s37, 1
      %p107 = por %p105, %p106
      %p108 = scmp.ne.s32.totalorder %s97, %s98
      %p109 = scmp.eq.s32.totalorder %s37, 0
      %p110 = por %p108, %p109
      %p111 = scmp.ne.s32.totalorder %s97, %s98
      %p112 = scmp.eq.s32.totalorder %s38, 1
      %p113 = por %p111, %p112
      %p115 = scmp.ne.s32.totalorder %s98, %s114
      %p116 = scmp.eq.s32.totalorder %s38, 0
      %p117 = por %p115, %p116
      %s119 = sadd.s32 %s118, 1
      %p122 = scmp.eq.s32.totalorder %s32, 1
      %p123 = scmp.ne.s32.totalorder %s118, %s120
      %p124 = scmp.eq.s32.totalorder %s32, 0
      %p125 = por %p123, %p124
      %p126 = scmp.ne.s32.totalorder %s118, %s120
      %p127 = scmp.eq.s32.totalorder %s37, 1
      %p128 = por %p126, %p127
      %p129 = scmp.ne.s32.totalorder %s120, %s121
      %p130 = scmp.eq.s32.totalorder %s37, 0
      %p131 = por %p129, %p130
      %p132 = scmp.ne.s32.totalorder %s120, %s121
      %p133 = scmp.eq.s32.totalorder %s38, 1
      %p134 = por %p132, %p133
      %p136 = scmp.ne.s32.totalorder %s121, %s135
      %p137 = scmp.eq.s32.totalorder %s38, 0
      %p138 = por %p136, %p137
      %s140 = sadd.s32 %s139, 1
      %p143 = scmp.eq.s32.totalorder %s32, 1
      %p144 = scmp.ne.s32.totalorder %s139, %s141
      %p145 = scmp.eq.s32.totalorder %s32, 0
      %p146 = por %p144, %p145
      %p147 = scmp.ne.s32.totalorder %s139, %s141
      %p148 = scmp.eq.s32.totalorder %s37, 1
      %p149 = por %p147, %p148
      %p150 = scmp.ne.s32.totalorder %s141, %s142
      %p151 = scmp.eq.s32.totalorder %s37, 0
      %p152 = por %p150, %p151
      %p153 = scmp.ne.s32.totalorder %s141, %s142
      %p154 = scmp.eq.s32.totalorder %s38, 1
      %p155 = por %p153, %p154
      %p157 = scmp.ne.s32.totalorder %s142, %s156
      %p158 = scmp.eq.s32.totalorder %s38, 0
      %p159 = por %p157, %p158
      %s161 = sadd.s32 %s160, 1
      %p164 = scmp.eq.s32.totalorder %s32, 1
      %p165 = scmp.ne.s32.totalorder %s160, %s162
      %p166 = scmp.eq.s32.totalorder %s32, 0
      %p167 = por %p165, %p166
      %p168 = scmp.ne.s32.totalorder %s160, %s162
      %p169 = scmp.eq.s32.totalorder %s37, 1
      %p170 = por %p168, %p169
      %p171 = scmp.ne.s32.totalorder %s162, %s163
      %p172 = scmp.eq.s32.totalorder %s37, 0
      %p173 = por %p171, %p172
      %p174 = scmp.ne.s32.totalorder %s162, %s163
      %p175 = scmp.eq.s32.totalorder %s38, 1
      %p176 = por %p174, %p175
      %p178 = scmp.ne.s32.totalorder %s163, %s177
      %p179 = scmp.eq.s32.totalorder %s38, 0
      %p180 = por %p178, %p179
      %s182 = sadd.s32 %s181, 1
      %p185 = scmp.eq.s32.totalorder %s32, 1
      %p186 = scmp.ne.s32.totalorder %s181, %s183
      %p187 = scmp.eq.s32.totalorder %s32, 0
      %p188 = por %p186, %p187
      %p189 = scmp.ne.s32.totalorder %s181, %s183
      %p190 = scmp.eq.s32.totalorder %s37, 1
      %p191 = por %p189, %p190
      %p192 = scmp.ne.s32.totalorder %s183, %s184
      %p193 = scmp.eq.s32.totalorder %s37, 0
      %p194 = por %p192, %p193
      %p195 = scmp.ne.s32.totalorder %s183, %s184
      %p196 = scmp.eq.s32.totalorder %s38, 1
      %p197 = por %p195, %p196
      %p199 = scmp.ne.s32.totalorder %s184, %s198
      %p200 = scmp.eq.s32.totalorder %s38, 0
      %p201 = por %p199, %p200
      %s203 = sadd.s32 %s202, 1
      %p206 = scmp.eq.s32.totalorder %s32, 1
      %p207 = scmp.ne.s32.totalorder %s202, %s204
      %p208 = scmp.eq.s32.totalorder %s32, 0
      %p209 = por %p207, %p208
      %p210 = scmp.ne.s32.totalorder %s202, %s204
      %p211 = scmp.eq.s32.totalorder %s37, 1
      %p212 = por %p210, %p211
      %p213 = scmp.ne.s32.totalorder %s204, %s205
      %p214 = scmp.eq.s32.totalorder %s37, 0
      %p215 = por %p213, %p214
      %p216 = scmp.ne.s32.totalorder %s204, %s205
      %p217 = scmp.eq.s32.totalorder %s38, 1
      %p218 = por %p216, %p217
      %p220 = scmp.ne.s32.totalorder %s205, %s219
      %p221 = scmp.eq.s32.totalorder %s38, 0
      %p222 = por %p220, %p221
      %s224 = sadd.s32 %s223, 1
      %p227 = scmp.eq.s32.totalorder %s32, 1
      %p228 = scmp.ne.s32.totalorder %s223, %s225
      %p229 = scmp.eq.s32.totalorder %s32, 0
      %p230 = por %p228, %p229
      %p231 = scmp.ne.s32.totalorder %s223, %s225
      %p232 = scmp.eq.s32.totalorder %s37, 1
      %p233 = por %p231, %p232
      %p234 = scmp.ne.s32.totalorder %s225, %s226
      %p235 = scmp.eq.s32.totalorder %s37, 0
      %p236 = por %p234, %p235
      %p237 = scmp.ne.s32.totalorder %s225, %s226
      %p238 = scmp.eq.s32.totalorder %s38, 1
      %p239 = por %p237, %p238
      %p241 = scmp.ne.s32.totalorder %s226, %s240
      %p242 = scmp.eq.s32.totalorder %s38, 0
      %p243 = por %p241, %p242
      %s245 = sadd.s32 %s244, 1
      %p248 = scmp.eq.s32.totalorder %s32, 1
      %p249 = scmp.ne.s32.totalorder %s244, %s246
      %p250 = scmp.eq.s32.totalorder %s32, 0
      %p251 = por %p249, %p250
      %p252 = scmp.ne.s32.totalorder %s244, %s246
      %p253 = scmp.eq.s32.totalorder %s37, 1
      %p254 = por %p252, %p253
      %p255 = scmp.ne.s32.totalorder %s246, %s247
      %p256 = scmp.eq.s32.totalorder %s37, 0
      %p257 = por %p255, %p256
      %p258 = scmp.ne.s32.totalorder %s246, %s247
      %p259 = scmp.eq.s32.totalorder %s38, 1
      %p260 = por %p258, %p259
      %p262 = scmp.ne.s32.totalorder %s247, %s261
      %p263 = scmp.eq.s32.totalorder %s38, 0
      %p264 = por %p262, %p263
      %s266 = sadd.s32 %s265, 1
      %p269 = scmp.eq.s32.totalorder %s32, 1
      %p270 = scmp.ne.s32.totalorder %s265, %s267
      %p271 = scmp.eq.s32.totalorder %s32, 0
      %p272 = por %p270, %p271
      %p273 = scmp.ne.s32.totalorder %s265, %s267
      %p274 = scmp.eq.s32.totalorder %s37, 1
      %p275 = por %p273, %p274
      %p276 = scmp.ne.s32.totalorder %s267, %s268
      %p277 = scmp.eq.s32.totalorder %s37, 0
      %p278 = por %p276, %p277
      %p279 = scmp.ne.s32.totalorder %s267, %s268
      %p280 = scmp.eq.s32.totalorder %s38, 1
      %p281 = por %p279, %p280
      %p283 = scmp.ne.s32.totalorder %s268, %s282
      %p284 = scmp.eq.s32.totalorder %s38, 0
      %p285 = por %p283, %p284
      %s287 = sadd.s32 %s286, 1
      %p290 = scmp.eq.s32.totalorder %s32, 1
      %p291 = scmp.ne.s32.totalorder %s286, %s288
      %p292 = scmp.eq.s32.totalorder %s32, 0
      %p293 = por %p291, %p292
      %p294 = scmp.ne.s32.totalorder %s286, %s288
      %p295 = scmp.eq.s32.totalorder %s37, 1
      %p296 = por %p294, %p295
      %p297 = scmp.ne.s32.totalorder %s288, %s289
      %p298 = scmp.eq.s32.totalorder %s37, 0
      %p299 = por %p297, %p298
      %p300 = scmp.ne.s32.totalorder %s288, %s289
      %p301 = scmp.eq.s32.totalorder %s38, 1
      %p302 = por %p300, %p301
      %p304 = scmp.ne.s32.totalorder %s289, %s303
      %p305 = scmp.eq.s32.totalorder %s38, 0
      %p306 = por %p304, %p305
      %s308 = sadd.s32 %s307, 1
      %p311 = scmp.eq.s32.totalorder %s32, 1
      %p312 = scmp.ne.s32.totalorder %s307, %s309
      %p313 = scmp.eq.s32.totalorder %s32, 0
      %p314 = por %p312, %p313
      %p315 = scmp.ne.s32.totalorder %s307, %s309
      %p316 = scmp.eq.s32.totalorder %s37, 1
      %p317 = por %p315, %p316
      %p318 = scmp.ne.s32.totalorder %s309, %s310
      %p319 = scmp.eq.s32.totalorder %s37, 0
      %p320 = por %p318, %p319
      %p321 = scmp.ne.s32.totalorder %s309, %s310
      %p322 = scmp.eq.s32.totalorder %s38, 1
      %p323 = por %p321, %p322
      %p325 = scmp.ne.s32.totalorder %s310, %s324
      %p326 = scmp.eq.s32.totalorder %s38, 0
      %p327 = por %p325, %p326
      %s329 = sadd.s32 %s328, 1
      %p332 = scmp.eq.s32.totalorder %s32, 1
      %p333 = scmp.ne.s32.totalorder %s328, %s330
      %p334 = scmp.eq.s32.totalorder %s32, 0
      %p335 = por %p333, %p334
      %p336 = scmp.ne.s32.totalorder %s328, %s330
      %p337 = scmp.eq.s32.totalorder %s37, 1
      %p338 = por %p336, %p337
      %p339 = scmp.ne.s32.totalorder %s330, %s331
      %p340 = scmp.eq.s32.totalorder %s37, 0
      %p341 = por %p339, %p340
      %p342 = scmp.ne.s32.totalorder %s330, %s331
      %p343 = scmp.eq.s32.totalorder %s38, 1
      %p344 = por %p342, %p343
      %p346 = scmp.ne.s32.totalorder %s331, %s345
      %p347 = scmp.eq.s32.totalorder %s38, 0
      %p348 = por %p346, %p347
      %s350 = sadd.s32 %s349, 1
      %p353 = scmp.eq.s32.totalorder %s32, 1
      %p354 = scmp.ne.s32.totalorder %s349, %s351
      %p355 = scmp.eq.s32.totalorder %s32, 0
      %p356 = por %p354, %p355
      %p357 = scmp.ne.s32.totalorder %s349, %s351
      %p358 = scmp.eq.s32.totalorder %s37, 1
      %p359 = por %p357, %p358
      %p360 = scmp.ne.s32.totalorder %s351, %s352
      %p361 = scmp.eq.s32.totalorder %s37, 0
      %p362 = por %p360, %p361
      %p363 = scmp.ne.s32.totalorder %s351, %s352
      %p364 = scmp.eq.s32.totalorder %s38, 1
      %p365 = por %p363, %p364
      %p367 = scmp.ne.s32.totalorder %s352, %s366
      %p368 = scmp.eq.s32.totalorder %s38, 0
      %p369 = por %p367, %p368
      %s371 = sadd.s32 %s370, 1
      %p374 = scmp.eq.s32.totalorder %s32, 1
      %p375 = scmp.ne.s32.totalorder %s370, %s372
      %p376 = scmp.eq.s32.totalorder %s32, 0
      %p377 = por %p375, %p376
      %p378 = scmp.ne.s32.totalorder %s370, %s372
      %p379 = scmp.eq.s32.totalorder %s37, 1
      %p380 = por %p378, %p379
      %p381 = scmp.ne.s32.totalorder %s372, %s373
      %p382 = scmp.eq.s32.totalorder %s37, 0
      %p383 = por %p381, %p382
      %p384 = scmp.ne.s32.totalorder %s372, %s373
      %p385 = scmp.eq.s32.totalorder %s38, 1
      %p386 = por %p384, %p385
      %p388 = scmp.ne.s32.totalorder %s373, %s387
      %p389 = scmp.eq.s32.totalorder %s38, 0
      %p390 = por %p388, %p389
      %s392 = sadd.s32 %s391, 1
      %p395 = scmp.eq.s32.totalorder %s32, 1
      %p396 = scmp.ne.s32.totalorder %s391, %s393
      %p397 = scmp.eq.s32.totalorder %s32, 0
      %p398 = por %p396, %p397
      %p399 = scmp.ne.s32.totalorder %s391, %s393
      %p400 = scmp.eq.s32.totalorder %s37, 1
      %p401 = por %p399, %p400
      %p402 = scmp.ne.s32.totalorder %s393, %s394
      %p403 = scmp.eq.s32.totalorder %s37, 0
      %p404 = por %p402, %p403
      %p405 = scmp.ne.s32.totalorder %s393, %s394
      %p406 = scmp.eq.s32.totalorder %s38, 1
      %p407 = por %p405, %p406
      %p409 = scmp.ne.s32.totalorder %s394, %s408
      %p410 = scmp.eq.s32.totalorder %s38, 0
      %p411 = por %p409, %p410
      %s413 = sadd.s32 %s412, 1
      %p416 = scmp.eq.s32.totalorder %s32, 1
      %p417 = scmp.ne.s32.totalorder %s412, %s414
      %p418 = scmp.eq.s32.totalorder %s32, 0
      %p419 = por %p417, %p418
      %p420 = scmp.ne.s32.totalorder %s412, %s414
      %p421 = scmp.eq.s32.totalorder %s37, 1
      %p422 = por %p420, %p421
      %p423 = scmp.ne.s32.totalorder %s414, %s415
      %p424 = scmp.eq.s32.totalorder %s37, 0
      %p425 = por %p423, %p424
      %p426 = scmp.ne.s32.totalorder %s414, %s415
      %p427 = scmp.eq.s32.totalorder %s38, 1
      %p428 = por %p426, %p427
      %p430 = scmp.ne.s32.totalorder %s415, %s429
      %p431 = scmp.eq.s32.totalorder %s38, 0
      %p432 = por %p430, %p431
      %s434 = sadd.s32 %s433, 1
      %p437 = scmp.eq.s32.totalorder %s32, 1
      %p438 = scmp.ne.s32.totalorder %s433, %s435
      %p439 = scmp.eq.s32.totalorder %s32, 0
      %p440 = por %p438, %p439
      %p441 = scmp.ne.s32.totalorder %s433, %s435
      %p442 = scmp.eq.s32.totalorder %s37, 1
      %p443 = por %p441, %p442
      %p444 = scmp.ne.s32.totalorder %s435, %s436
      %p445 = scmp.eq.s32.totalorder %s37, 0
      %p446 = por %p444, %p445
      %p447 = scmp.ne.s32.totalorder %s435, %s436
      %p448 = scmp.eq.s32.totalorder %s38, 1
      %p449 = por %p447, %p448
      %p451 = scmp.ne.s32.totalorder %s436, %s450
      %p452 = scmp.eq.s32.totalorder %s38, 0
      %p453 = por %p451, %p452
      %s454 = ssub.s32 %s32, %s39
      %p455 = scmp.eq.s32.totalorder %s454, 0
      %s457 = sadd.s32 %s456, 1
      %s458 = scalar_select %p455, %s456, %s457
      %p461 = pneg %p455
      %p462 = scmp.eq.s32.totalorder %s32, 1
      %p463 = por %p461, %p462
      %p464 = scmp.ne.s32.totalorder %s456, %s459
      %p465 = scmp.eq.s32.totalorder %s32, 0
      %p466 = por %p464, %p465
      %p467 = scmp.ne.s32.totalorder %s456, %s459
      %p468 = scmp.eq.s32.totalorder %s37, 1
      %p469 = por %p467, %p468
      %p470 = scmp.ne.s32.totalorder %s459, %s460
      %p471 = scmp.eq.s32.totalorder %s37, 0
      %p472 = por %p470, %p471
      %p473 = scmp.ne.s32.totalorder %s459, %s460
      %p474 = scmp.eq.s32.totalorder %s38, 1
      %p475 = por %p473, %p474
      %p477 = scmp.ne.s32.totalorder %s460, %s476
      %p478 = scmp.eq.s32.totalorder %s38, 0
      %p479 = por %p477, %p478
      %p480 = scmp.le.s32.totalorder 1, %s32
      %p481 = scmp.lt.s32.totalorder %s32, 3
      %p482 = pnand %p480, %p481
      %p483 = pneg %p482
      // Predicated region
      $region9: #{tpu_custom_call.1} parent=5 // pred_check
        _
      $region10: #{tpu_custom_call.1} parent=5 // pred_check_branch
        %485 = sbr.rel (%p482) target = $region12
      $region11: #{tpu_custom_call.1} parent=5 // pred_region
        %s486 = ssub.s32 %s32, 1
        // Predicated region
        $region13: #{tpu_custom_call.1} parent=11 // pred_check
          %p487 = pneg %p131
        $region14: #{tpu_custom_call.1} parent=11 // pred_check_branch
          %489 = sbr.rel (%p487) target = $region16
        $region15: #{tpu_custom_call.1} parent=11 // pred_region
          _
        $region16: #{tpu_custom_call.1} parent=11 // pred_fallthru
          _
        // Predicated region
        $region17: #{tpu_custom_call.1} parent=11 // pred_check
          %p490 = pneg %p152
        $region18: #{tpu_custom_call.1} parent=11 // pred_check_branch
          %492 = sbr.rel (%p490) target = $region20
        $region19: #{tpu_custom_call.1} parent=11 // pred_region
          _
        $region20: #{tpu_custom_call.1} parent=11 // pred_fallthru
          _
        // Predicated region
        $region21: #{tpu_custom_call.1} parent=11 // pred_check
          %p493 = pneg %p173
        $region22: #{tpu_custom_call.1} parent=11 // pred_check_branch
          %495 = sbr.rel (%p493) target = $region24
        $region23: #{tpu_custom_call.1} parent=11 // pred_region
          %s497 = ssub.s32 256, 256
          %498 = vsyncadd [#allocation3], %s497
          %s499 = sshll.u32 [#allocation2], 4
          %s500 = int_to_ptr.vmem [resolvable:$true] %s499
          %505 = dma.hbm_to_vmem [thread:$0]  %s5, 256, %s500, [#allocation3], 64, 64, 4
        $region24: #{tpu_custom_call.1} parent=11 // pred_fallthru
          _
        // Predicated region
        $region25: #{tpu_custom_call.1} parent=11 // pred_check
          %p506 = pneg %p194
        $region26: #{tpu_custom_call.1} parent=11 // pred_check_branch
          %508 = sbr.rel (%p506) target = $region28
        $region27: #{tpu_custom_call.1} parent=11 // pred_region
          _
        $region28: #{tpu_custom_call.1} parent=11 // pred_fallthru
          _
        // Predicated region
        $region29: #{tpu_custom_call.1} parent=11 // pred_check
          %p509 = pneg %p215
        $region30: #{tpu_custom_call.1} parent=11 // pred_check_branch
          %511 = sbr.rel (%p509) target = $region32
        $region31: #{tpu_custom_call.1} parent=11 // pred_region
          %s513 = ssub.s32 16, 16
          %514 = vsyncadd [#allocation6], %s513
          %s516 = sshll.u32 [#allocation5], 4
          %s517 = int_to_ptr.vmem [resolvable:$true] %s516
          %519 = dma.hbm_to_vmem [thread:$0]  %s7, 16, %s517, [#allocation6]
        $region32: #{tpu_custom_call.1} parent=11 // pred_fallthru
          _
        // Predicated region
        $region33: #{tpu_custom_call.1} parent=11 // pred_check
          %p520 = pneg %p236
        $region34: #{tpu_custom_call.1} parent=11 // pred_check_branch
          %522 = sbr.rel (%p520) target = $region36
        $region35: #{tpu_custom_call.1} parent=11 // pred_region
          %s524 = ssub.s32 16, 16
          %525 = vsyncadd [#allocation6], %s524
          %s527 = sshll.u32 [#allocation7], 4
          %s528 = int_to_ptr.vmem [resolvable:$true] %s527
          %530 = dma.hbm_to_vmem [thread:$0]  %s8, 16, %s528, [#allocation6]
        $region36: #{tpu_custom_call.1} parent=11 // pred_fallthru
          _
        // Predicated region
        $region37: #{tpu_custom_call.1} parent=11 // pred_check
          %p531 = pneg %p257
        $region38: #{tpu_custom_call.1} parent=11 // pred_check_branch
          %533 = sbr.rel (%p531) target = $region40
        $region39: #{tpu_custom_call.1} parent=11 // pred_region
          _
        $region40: #{tpu_custom_call.1} parent=11 // pred_fallthru
          _
        // Predicated region
        $region41: #{tpu_custom_call.1} parent=11 // pred_check
          %p534 = pneg %p278
        $region42: #{tpu_custom_call.1} parent=11 // pred_check_branch
          %536 = sbr.rel (%p534) target = $region44
        $region43: #{tpu_custom_call.1} parent=11 // pred_region
          %s538 = ssub.s32 16, 16
          %539 = vsyncadd [#allocation9], %s538
          %s541 = sshll.u32 [#allocation8], 4
          %s542 = int_to_ptr.vmem [resolvable:$true] %s541
          %544 = dma.hbm_to_vmem [thread:$0]  %s10, 16, %s542, [#allocation9]
        $region44: #{tpu_custom_call.1} parent=11 // pred_fallthru
          _
        // Predicated region
        $region45: #{tpu_custom_call.1} parent=11 // pred_check
          %p545 = pneg %p299
        $region46: #{tpu_custom_call.1} parent=11 // pred_check_branch
          %547 = sbr.rel (%p545) target = $region48
        $region47: #{tpu_custom_call.1} parent=11 // pred_region
          %s549 = ssub.s32 16, 16
          %550 = vsyncadd [#allocation9], %s549
          %s552 = sshll.u32 [#allocation10], 4
          %s553 = int_to_ptr.vmem [resolvable:$true] %s552
          %555 = dma.hbm_to_vmem [thread:$0]  %s11, 16, %s553, [#allocation9]
        $region48: #{tpu_custom_call.1} parent=11 // pred_fallthru
          _
        // Predicated region
        $region49: #{tpu_custom_call.1} parent=11 // pred_check
          %p556 = pneg %p320
        $region50: #{tpu_custom_call.1} parent=11 // pred_check_branch
          %558 = sbr.rel (%p556) target = $region52
        $region51: #{tpu_custom_call.1} parent=11 // pred_region
          %s560 = ssub.s32 16, 16
          %561 = vsyncadd [#allocation12], %s560
          %s563 = sshll.u32 [#allocation11], 4
          %s564 = int_to_ptr.vmem [resolvable:$true] %s563
          %566 = dma.hbm_to_vmem [thread:$0]  %s12, 16, %s564, [#allocation12]
        $region52: #{tpu_custom_call.1} parent=11 // pred_fallthru
          _
        // Predicated region
        $region53: #{tpu_custom_call.1} parent=11 // pred_check
          %p567 = pneg %p341
        $region54: #{tpu_custom_call.1} parent=11 // pred_check_branch
          %569 = sbr.rel (%p567) target = $region56
        $region55: #{tpu_custom_call.1} parent=11 // pred_region
          _
        $region56: #{tpu_custom_call.1} parent=11 // pred_fallthru
          _
        // Predicated region
        $region57: #{tpu_custom_call.1} parent=11 // pred_check
          %p570 = pneg %p362
        $region58: #{tpu_custom_call.1} parent=11 // pred_check_branch
          %572 = sbr.rel (%p570) target = $region60
        $region59: #{tpu_custom_call.1} parent=11 // pred_region
          _
        $region60: #{tpu_custom_call.1} parent=11 // pred_fallthru
          _
        // Predicated region
        $region61: #{tpu_custom_call.1} parent=11 // pred_check
          %p573 = pneg %p383
        $region62: #{tpu_custom_call.1} parent=11 // pred_check_branch
          %575 = sbr.rel (%p573) target = $region64
        $region63: #{tpu_custom_call.1} parent=11 // pred_region
          _
        $region64: #{tpu_custom_call.1} parent=11 // pred_fallthru
          _
        // Predicated region
        $region65: #{tpu_custom_call.1} parent=11 // pred_check
          %p576 = pneg %p404
        $region66: #{tpu_custom_call.1} parent=11 // pred_check_branch
          %578 = sbr.rel (%p576) target = $region68
        $region67: #{tpu_custom_call.1} parent=11 // pred_region
          _
        $region68: #{tpu_custom_call.1} parent=11 // pred_fallthru
          _
        // Predicated region
        $region69: #{tpu_custom_call.1} parent=11 // pred_check
          %p579 = pneg %p425
        $region70: #{tpu_custom_call.1} parent=11 // pred_check_branch
          %581 = sbr.rel (%p579) target = $region72
        $region71: #{tpu_custom_call.1} parent=11 // pred_region
          _
        $region72: #{tpu_custom_call.1} parent=11 // pred_fallthru
          _
        // Predicated region
        $region73: #{tpu_custom_call.1} parent=11 // pred_check
          %p582 = pneg %p446
        $region74: #{tpu_custom_call.1} parent=11 // pred_check_branch
          %584 = sbr.rel (%p582) target = $region76
        $region75: #{tpu_custom_call.1} parent=11 // pred_region
          _
        $region76: #{tpu_custom_call.1} parent=11 // pred_fallthru
          _
      $region12: #{tpu_custom_call.1} parent=5 // pred_fallthru
        _
      %p585 = scmp.lt.s32.totalorder %s32, 2
      // Predicated region
      $region77: #{tpu_custom_call.1} parent=5 // pred_check
        %p586 = pneg %p585
      $region78: #{tpu_custom_call.1} parent=5 // pred_check_branch
        %588 = sbr.rel (%p586) target = $region80
      $region79: #{tpu_custom_call.1} parent=5 // pred_region
        // Predicated region
        $region81: #{tpu_custom_call.1} parent=79 // pred_check
          %p589 = pneg %p52
        $region82: #{tpu_custom_call.1} parent=79 // pred_check_branch
          %591 = sbr.rel (%p589) target = $region84
        $region83: #{tpu_custom_call.1} parent=79 // pred_region
          %p592 = scmp.lt.s32.totalorder %s32, 1
          %s593 = scalar_select %p592, %s32, 1
          %s594 = smul.addr %s593, 8
          %s595 = scalar_lea.vmem %s0, %s594
        $region84: #{tpu_custom_call.1} parent=79 // pred_fallthru
          _
        // Predicated region
        $region85: #{tpu_custom_call.1} parent=79 // pred_check
          %p596 = pneg %p78
        $region86: #{tpu_custom_call.1} parent=79 // pred_check_branch
          %598 = sbr.rel (%p596) target = $region88
        $region87: #{tpu_custom_call.1} parent=79 // pred_region
          %p599 = scmp.lt.s32.totalorder %s32, 1
          %s600 = scalar_select %p599, %s32, 1
          %s601 = smul.addr %s600, 8
          %s602 = scalar_lea.vmem %s1, %s601
        $region88: #{tpu_custom_call.1} parent=79 // pred_fallthru
          _
        // Predicated region
        $region89: #{tpu_custom_call.1} parent=79 // pred_check
          %p603 = pneg %p104
        $region90: #{tpu_custom_call.1} parent=79 // pred_check_branch
          %605 = sbr.rel (%p603) target = $region92
        $region91: #{tpu_custom_call.1} parent=79 // pred_region
          %p606 = scmp.lt.s32.totalorder %s32, 1
          %s607 = scalar_select %p606, %s32, 1
          %s608 = smul.addr %s607, 8
          %s609 = scalar_lea.vmem %s2, %s608
        $region92: #{tpu_custom_call.1} parent=79 // pred_fallthru
          _
      $region80: #{tpu_custom_call.1} parent=5 // pred_fallthru
        _
      %p610 = scmp.le.s32.totalorder 1, %s32
      %p611 = scmp.lt.s32.totalorder %s32, 3
      %p612 = pnand %p610, %p611
      %p613 = pneg %p612
      // Predicated region
      $region93: #{tpu_custom_call.1} parent=5 // pred_check
        _
      $region94: #{tpu_custom_call.1} parent=5 // pred_check_branch
        %615 = sbr.rel (%p612) target = $region96
      $region95: #{tpu_custom_call.1} parent=5 // pred_region
        %s616 = ssub.s32 %s32, 1
        // Predicated region
        $region97: #{tpu_custom_call.1} parent=95 // pred_check
          %p617 = pneg %p173
        $region98: #{tpu_custom_call.1} parent=95 // pred_check_branch
          %619 = sbr.rel (%p617) target = $region100
        $region99: #{tpu_custom_call.1} parent=95 // pred_region
          %620 = dma.done [#allocation3], 256
        $region100: #{tpu_custom_call.1} parent=95 // pred_fallthru
          _
        // Predicated region
        $region101: #{tpu_custom_call.1} parent=95 // pred_check
          %p621 = pneg %p215
        $region102: #{tpu_custom_call.1} parent=95 // pred_check_branch
          %623 = sbr.rel (%p621) target = $region104
        $region103: #{tpu_custom_call.1} parent=95 // pred_region
          %624 = dma.done [#allocation6], 16
        $region104: #{tpu_custom_call.1} parent=95 // pred_fallthru
          _
        // Predicated region
        $region105: #{tpu_custom_call.1} parent=95 // pred_check
          %p625 = pneg %p236
        $region106: #{tpu_custom_call.1} parent=95 // pred_check_branch
          %627 = sbr.rel (%p625) target = $region108
        $region107: #{tpu_custom_call.1} parent=95 // pred_region
          %628 = dma.done [#allocation6], 16
        $region108: #{tpu_custom_call.1} parent=95 // pred_fallthru
          _
        // Predicated region
        $region109: #{tpu_custom_call.1} parent=95 // pred_check
          %p629 = pneg %p278
        $region110: #{tpu_custom_call.1} parent=95 // pred_check_branch
          %631 = sbr.rel (%p629) target = $region112
        $region111: #{tpu_custom_call.1} parent=95 // pred_region
          %632 = dma.done [#allocation9], 16
        $region112: #{tpu_custom_call.1} parent=95 // pred_fallthru
          _
        // Predicated region
        $region113: #{tpu_custom_call.1} parent=95 // pred_check
          %p633 = pneg %p299
        $region114: #{tpu_custom_call.1} parent=95 // pred_check_branch
          %635 = sbr.rel (%p633) target = $region116
        $region115: #{tpu_custom_call.1} parent=95 // pred_region
          %636 = dma.done [#allocation9], 16
        $region116: #{tpu_custom_call.1} parent=95 // pred_fallthru
          _
        // Predicated region
        $region117: #{tpu_custom_call.1} parent=95 // pred_check
          %p637 = pneg %p320
        $region118: #{tpu_custom_call.1} parent=95 // pred_check_branch
          %639 = sbr.rel (%p637) target = $region120
        $region119: #{tpu_custom_call.1} parent=95 // pred_region
          %640 = dma.done [#allocation12], 16
        $region120: #{tpu_custom_call.1} parent=95 // pred_fallthru
          _
        %p641 = scmp.lt.s32.totalorder %s37, 1
        %s642 = scalar_select %p641, %s37, 1
        %s643 = smul.addr %s642, 8
        %s644 = scalar_lea.vmem %s0, %s643
        %p645 = pneg %p58
        %p646 = pneg %p55
        %p647 = scmp.lt.s32.totalorder %s37, 1
        %s648 = scalar_select %p647, %s37, 1
        %s649 = smul.addr %s648, 8
        %s650 = scalar_lea.vmem %s1, %s649
        %p651 = pneg %p84
        %p652 = pneg %p81
        %p653 = scmp.lt.s32.totalorder %s37, 1
        %s654 = scalar_select %p653, %s37, 1
        %s655 = smul.addr %s654, 8
        %s656 = scalar_lea.vmem %s2, %s655
        %p657 = pneg %p110
        %p658 = pneg %p107
        %p659 = pneg %p131
        %p660 = pneg %p128
        %p661 = pneg %p152
        %p662 = pneg %p149
        %p663 = pneg %p173
        %p664 = pneg %p170
        %p665 = pneg %p194
        %p666 = pneg %p191
        %p667 = pneg %p215
        %p668 = pneg %p212
        %p669 = pneg %p236
        %p670 = pneg %p233
        %p671 = pneg %p257
        %p672 = pneg %p254
        %p673 = pneg %p278
        %p674 = pneg %p275
        %p675 = pneg %p299
        %p676 = pneg %p296
        %p677 = pneg %p320
        %p678 = pneg %p317
        %p679 = pneg %p341
        %p680 = pneg %p338
        %p681 = pneg %p362
        %p682 = pneg %p359
        %p683 = pneg %p383
        %p684 = pneg %p380
        %p685 = pneg %p404
        %p686 = pneg %p401
        %p687 = pneg %p425
        %p688 = pneg %p422
        %p689 = pneg %p446
        %p690 = pneg %p443
        %p691 = pneg %p472
        %p692 = pneg %p469
        %s693 = sand.u32 %s459, 1
        %s694 = scalar_lea.sflag [#allocation4], %s693
        %s695 = sand.u32 %s459, 1
        %s696 = smul.addr %s695, 8
        %s697 = scalar_lea.vmem [#allocation13], %s696
        %p698 = scmp.lt.s32.totalorder %s37, 1
        %s699 = scalar_select %p698, %s37, 1
        %s700 = smul.addr %s699, 8
        %s701 = scalar_lea.vmem %s0, %s700
        %p702 = scmp.lt.s32.totalorder %s37, 1
        %s703 = scalar_select %p702, %s37, 1
        %s704 = smul.addr %s703, 8
        %s705 = scalar_lea.vmem %s1, %s704
        %p706 = scmp.lt.s32.totalorder %s37, 1
        %s707 = scalar_select %p706, %s37, 1
        %s708 = smul.addr %s707, 8
        %s709 = scalar_lea.vmem %s2, %s708
        %v711 = vld [vmem:[%s701] sm:$0xff]
        %v712 = vld [vmem:[%s705] sm:$0xff]
        %v713 = vld [vmem:[%s709] sm:$0xff]
        %v714 = vpack.c.bf16 %v711, %v711
        %v715 = vld [vmem:[%s3] sm:$0xf]
        %v716 = vld [vmem:[%s3 + $0x4] sm:$0xf]
        %v717 = vld [vmem:[%s3 + $0x8] sm:$0xf]
        %v718 = vld [vmem:[%s3 + $0xc] sm:$0xf]
        %v719 = vld [vmem:[%s6] sm:$0x1]
        %v721 = vlaneseq
        %v722 = vshrl.u32 %v721, 7
        %v723 = vsub.s32 0, %v722
        %v724 = vrot.slane %v719, %v723
        %v730 = vunpack.c.l.b16 %v715
        %v731 = vunpack.c.l.b16 %v716
        %v732 = vunpack.c.l.b16 %v717
        %v733 = vunpack.c.l.b16 %v718
        %v734 = vpack.c.b16 %v731, %v730
        %v735 = vpack.c.b16 %v733, %v732
        %vm738 = vcmask 261120
        %v740 = vsel %vm738, %v714, 0
        %742 = vmatprep.subr.bf16.mxu0 0
        %743 = vmatpush1.bf16.msra.mxu0 %v734
        %744 = vmatprep.subr.bf16.mxu0 0
        %745 = vmatpush1.bf16.msra.mxu0 %v735
        %746 = vmatprep.subr.bf16.mxu0 0
        %747 = vmatpush1.bf16.msra.mxu0 0
        %748 = vmatprep.subr.bf16.mxu0 0
        %749 = vmatpush1.bf16.msra.mxu0 0
        %750 = vmatprep.subr.bf16.mxu0 0
        %751 = vmatpush1.bf16.msra.mxu0 0
        %752 = vmatprep.subr.bf16.mxu0 0
        %753 = vmatpush1.bf16.msra.mxu0 0
        %754 = vmatprep.subr.bf16.mxu0 0
        %755 = vmatpush1.bf16.msra.mxu0 0
        %756 = vmatprep.subr.bf16.mxu0 0
        %757 = vmatpush1.bf16.msra.mxu0 0
        %758 = vmatprep.subr.bf16.mxu0 0
        %759 = vmatpush1.bf16.msra.mxu0 0
        %760 = vmatprep.subr.bf16.mxu0 0
        %761 = vmatpush1.bf16.msra.mxu0 0
        %762 = vmatprep.subr.bf16.mxu0 0
        %763 = vmatpush1.bf16.msra.mxu0 0
        %764 = vmatprep.subr.bf16.mxu0 0
        %765 = vmatpush1.bf16.msra.mxu0 0
        %766 = vmatprep.subr.bf16.mxu0 0
        %767 = vmatpush1.bf16.msra.mxu0 0
        %768 = vmatprep.subr.bf16.mxu0 0
        %769 = vmatpush1.bf16.msra.mxu0 0
        %770 = vmatprep.subr.bf16.mxu0 0
        %771 = vmatpush1.bf16.msra.mxu0 0
        %772 = vmatprep.subr.bf16.mxu0 0
        %773 = vmatpush1.bf16.msra.mxu0 0
        %774 = vmatprep.mubr.bf16.mxu0 0
        %775 = vmatmul.mubr.bf16.gmra.mrb[0].mxu0 %v740
        %v776 = vpop.f32.mrb[0].mxu0
        %v777 = vadd.f32 %v724, %v776
        %v778 = vpop.f32.mrb[0].mxu0
        %v779 = vpop.f32.mrb[0].mxu0
        %v780 = vpop.f32.mrb[0].mxu0
        %781 = vdwg.mxu0
        %v782 = vpack.c.bf16 %v712, %v712
        %v783 = vld [vmem:[%s4] sm:$0xf]
        %v784 = vld [vmem:[%s4 + $0x4] sm:$0xf]
        %v785 = vld [vmem:[%s4 + $0x8] sm:$0xf]
        %v786 = vld [vmem:[%s4 + $0xc] sm:$0xf]
        %v787 = vld [vmem:[#allocation5] sm:$0x1]
        %v789 = vlaneseq
        %v790 = vshrl.u32 %v789, 7
        %v791 = vsub.s32 0, %v790
        %v792 = vrot.slane %v787, %v791
        %v798 = vunpack.c.l.b16 %v783
        %v799 = vunpack.c.l.b16 %v784
        %v800 = vunpack.c.l.b16 %v785
        %v801 = vunpack.c.l.b16 %v786
        %v802 = vpack.c.b16 %v799, %v798
        %v803 = vpack.c.b16 %v801, %v800
        %v807 = vsel %vm738, %v782, 0
        %809 = vmatprep.subr.bf16.mxu0 0
        %810 = vmatpush1.bf16.msra.mxu0 %v802
        %811 = vmatprep.subr.bf16.mxu0 0
        %812 = vmatpush1.bf16.msra.mxu0 %v803
        %813 = vmatprep.subr.bf16.mxu0 0
        %814 = vmatpush1.bf16.msra.mxu0 0
        %815 = vmatprep.subr.bf16.mxu0 0
        %816 = vmatpush1.bf16.msra.mxu0 0
        %817 = vmatprep.subr.bf16.mxu0 0
        %818 = vmatpush1.bf16.msra.mxu0 0
        %819 = vmatprep.subr.bf16.mxu0 0
        %820 = vmatpush1.bf16.msra.mxu0 0
        %821 = vmatprep.subr.bf16.mxu0 0
        %822 = vmatpush1.bf16.msra.mxu0 0
        %823 = vmatprep.subr.bf16.mxu0 0
        %824 = vmatpush1.bf16.msra.mxu0 0
        %825 = vmatprep.subr.bf16.mxu0 0
        %826 = vmatpush1.bf16.msra.mxu0 0
        %827 = vmatprep.subr.bf16.mxu0 0
        %828 = vmatpush1.bf16.msra.mxu0 0
        %829 = vmatprep.subr.bf16.mxu0 0
        %830 = vmatpush1.bf16.msra.mxu0 0
        %831 = vmatprep.subr.bf16.mxu0 0
        %832 = vmatpush1.bf16.msra.mxu0 0
        %833 = vmatprep.subr.bf16.mxu0 0
        %834 = vmatpush1.bf16.msra.mxu0 0
        %835 = vmatprep.subr.bf16.mxu0 0
        %836 = vmatpush1.bf16.msra.mxu0 0
        %837 = vmatprep.subr.bf16.mxu0 0
        %838 = vmatpush1.bf16.msra.mxu0 0
        %839 = vmatprep.subr.bf16.mxu0 0
        %840 = vmatpush1.bf16.msra.mxu0 0
        %841 = vmatprep.mubr.bf16.mxu0 0
        %842 = vmatmul.mubr.bf16.gmra.mrb[0].mxu0 %v807
        %v843 = vpop.f32.mrb[0].mxu0
        %v844 = vadd.f32 %v792, %v843
        %v845 = vpop.f32.mrb[0].mxu0
        %v846 = vpop.f32.mrb[0].mxu0
        %v847 = vpop.f32.mrb[0].mxu0
        %848 = vdwg.mxu0
        %v849 = vpack.c.bf16 %v713, %v713
        %v850 = vld [vmem:[#allocation2] sm:$0xf]
        %v851 = vld [vmem:[#allocation2 + $0x4] sm:$0xf]
        %v852 = vld [vmem:[#allocation2 + $0x8] sm:$0xf]
        %v853 = vld [vmem:[#allocation2 + $0xc] sm:$0xf]
        %v854 = vld [vmem:[#allocation7] sm:$0x1]
        %v856 = vlaneseq
        %v857 = vshrl.u32 %v856, 7
        %v858 = vsub.s32 0, %v857
        %v859 = vrot.slane %v854, %v858
        %v865 = vunpack.c.l.b16 %v850
        %v866 = vunpack.c.l.b16 %v851
        %v867 = vunpack.c.l.b16 %v852
        %v868 = vunpack.c.l.b16 %v853
        %v869 = vpack.c.b16 %v866, %v865
        %v870 = vpack.c.b16 %v868, %v867
        %v874 = vsel %vm738, %v849, 0
        %876 = vmatprep.subr.bf16.mxu0 0
        %877 = vmatpush1.bf16.msra.mxu0 %v869
        %878 = vmatprep.subr.bf16.mxu0 0
        %879 = vmatpush1.bf16.msra.mxu0 %v870
        %880 = vmatprep.subr.bf16.mxu0 0
        %881 = vmatpush1.bf16.msra.mxu0 0
        %882 = vmatprep.subr.bf16.mxu0 0
        %883 = vmatpush1.bf16.msra.mxu0 0
        %884 = vmatprep.subr.bf16.mxu0 0
        %885 = vmatpush1.bf16.msra.mxu0 0
        %886 = vmatprep.subr.bf16.mxu0 0
        %887 = vmatpush1.bf16.msra.mxu0 0
        %888 = vmatprep.subr.bf16.mxu0 0
        %889 = vmatpush1.bf16.msra.mxu0 0
        %890 = vmatprep.subr.bf16.mxu0 0
        %891 = vmatpush1.bf16.msra.mxu0 0
        %892 = vmatprep.subr.bf16.mxu0 0
        %893 = vmatpush1.bf16.msra.mxu0 0
        %894 = vmatprep.subr.bf16.mxu0 0
        %895 = vmatpush1.bf16.msra.mxu0 0
        %896 = vmatprep.subr.bf16.mxu0 0
        %897 = vmatpush1.bf16.msra.mxu0 0
        %898 = vmatprep.subr.bf16.mxu0 0
        %899 = vmatpush1.bf16.msra.mxu0 0
        %900 = vmatprep.subr.bf16.mxu0 0
        %901 = vmatpush1.bf16.msra.mxu0 0
        %902 = vmatprep.subr.bf16.mxu0 0
        %903 = vmatpush1.bf16.msra.mxu0 0
        %904 = vmatprep.subr.bf16.mxu0 0
        %905 = vmatpush1.bf16.msra.mxu0 0
        %906 = vmatprep.subr.bf16.mxu0 0
        %907 = vmatpush1.bf16.msra.mxu0 0
        %908 = vmatprep.mubr.bf16.mxu0 0
        %909 = vmatmul.mubr.bf16.gmra.mrb[0].mxu0 %v874
        %v910 = vpop.f32.mrb[0].mxu0
        %v911 = vadd.f32 %v859, %v910
        %v912 = vpop.f32.mrb[0].mxu0
        %v913 = vpop.f32.mrb[0].mxu0
        %v914 = vpop.f32.mrb[0].mxu0
        %915 = vdwg.mxu0
        %v916 = vmul.f32 %v777, 0.35355338
        %v917 = vpack.c.bf16 %v916, %v916
        %v918 = vpack.c.bf16 %v844, %v844
        %v919 = vpack.c.bf16 %v911, %v911
        %v920 = vld [vmem:[#allocation8] sm:$0x1]
        %v922 = vlaneseq
        %v923 = vshrl.u32 %v922, 7
        %v924 = vsub.s32 0, %v923
        %v925 = vrot.slane %v920, %v924
        %vm927 = vcmask 64512
        %v929 = vsel %vm927, %v917, 0
        %v932 = vsel %vm927, %v918, 0
        %934 = vmatprep.subr.bf16.mxu0 0
        %935 = vmatpush1.bf16.xpose.msra.mxu0 %v932
        %936 = vmatprep.subr.bf16.mxu0 0
        %937 = vmatpush1.bf16.xpose.msra.mxu0 0
        %938 = vmatprep.subr.bf16.mxu0 0
        %939 = vmatpush1.bf16.xpose.msra.mxu0 0
        %940 = vmatprep.subr.bf16.mxu0 0
        %941 = vmatpush1.bf16.xpose.msra.mxu0 0
        %942 = vmatprep.subr.bf16.mxu0 0
        %943 = vmatpush1.bf16.xpose.msra.mxu0 0
        %944 = vmatprep.subr.bf16.mxu0 0
        %945 = vmatpush1.bf16.xpose.msra.mxu0 0
        %946 = vmatprep.subr.bf16.mxu0 0
        %947 = vmatpush1.bf16.xpose.msra.mxu0 0
        %948 = vmatprep.subr.bf16.mxu0 0
        %949 = vmatpush1.bf16.xpose.msra.mxu0 0
        %950 = vmatprep.subr.bf16.mxu0 0
        %951 = vmatpush1.bf16.xpose.msra.mxu0 0
        %952 = vmatprep.subr.bf16.mxu0 0
        %953 = vmatpush1.bf16.xpose.msra.mxu0 0
        %954 = vmatprep.subr.bf16.mxu0 0
        %955 = vmatpush1.bf16.xpose.msra.mxu0 0
        %956 = vmatprep.subr.bf16.mxu0 0
        %957 = vmatpush1.bf16.xpose.msra.mxu0 0
        %958 = vmatprep.subr.bf16.mxu0 0
        %959 = vmatpush1.bf16.xpose.msra.mxu0 0
        %960 = vmatprep.subr.bf16.mxu0 0
        %961 = vmatpush1.bf16.xpose.msra.mxu0 0
        %962 = vmatprep.subr.bf16.mxu0 0
        %963 = vmatpush1.bf16.xpose.msra.mxu0 0
        %964 = vmatprep.subr.bf16.mxu0 0
        %965 = vmatpush1.bf16.xpose.msra.mxu0 0
        %966 = vmatprep.mubr.bf16.mxu0 0
        %967 = vmatmul.mubr.bf16.gmra.mrb[0].mxu0 %v929
        %v968 = vpop.f32.mrb[0].mxu0
        %v969 = vadd.f32 0.0, %v968
        %v970 = vpop.f32.mrb[0].mxu0
        %v971 = vpop.f32.mrb[0].mxu0
        %v972 = vpop.f32.mrb[0].mxu0
        %973 = vdwg.mxu0
        %v974 = vsel %vm927, %v969, -inf
        %975 = vmax.xlane.f32.xlu0 %v974
        %v976 = vpop.xlane.xlu0 %975
        %v977 = vsub.f32 %v969, %v976
        %v978 = vmul.f32 %v977, 1.442695
        %v979 = vpow.pop %v978
        %v980 = vsel %vm927, %v979, 0.0
        %981 = vadd.xlane.f32.xlu0 %v980
        %v982 = vpop.xlane.xlu0 %981
        %v983 = vrcp.pop %v982
        %v984 = vmul.f32 %v979, %v983
        %v985 = vpack.c.bf16 %v984, %v984
        %v987 = vsel %vm927, %v985, 0
        %vm989 = vcmask 1043456
        %v991 = vsel %vm989, %v919, 0
        %993 = vmatprep.subr.bf16.mxu0 0
        %994 = vmatpush1.bf16.msra.mxu0 %v991
        %995 = vmatprep.subr.bf16.mxu0 0
        %996 = vmatpush1.bf16.msra.mxu0 0
        %997 = vmatprep.subr.bf16.mxu0 0
        %998 = vmatpush1.bf16.msra.mxu0 0
        %999 = vmatprep.subr.bf16.mxu0 0
        %1000 = vmatpush1.bf16.msra.mxu0 0
        %1001 = vmatprep.subr.bf16.mxu0 0
        %1002 = vmatpush1.bf16.msra.mxu0 0
        %1003 = vmatprep.subr.bf16.mxu0 0
        %1004 = vmatpush1.bf16.msra.mxu0 0
        %1005 = vmatprep.subr.bf16.mxu0 0
        %1006 = vmatpush1.bf16.msra.mxu0 0
        %1007 = vmatprep.subr.bf16.mxu0 0
        %1008 = vmatpush1.bf16.msra.mxu0 0
        %1009 = vmatprep.subr.bf16.mxu0 0
        %1010 = vmatpush1.bf16.msra.mxu0 0
        %1011 = vmatprep.subr.bf16.mxu0 0
        %1012 = vmatpush1.bf16.msra.mxu0 0
        %1013 = vmatprep.subr.bf16.mxu0 0
        %1014 = vmatpush1.bf16.msra.mxu0 0
        %1015 = vmatprep.subr.bf16.mxu0 0
        %1016 = vmatpush1.bf16.msra.mxu0 0
        %1017 = vmatprep.subr.bf16.mxu0 0
        %1018 = vmatpush1.bf16.msra.mxu0 0
        %1019 = vmatprep.subr.bf16.mxu0 0
        %1020 = vmatpush1.bf16.msra.mxu0 0
        %1021 = vmatprep.subr.bf16.mxu0 0
        %1022 = vmatpush1.bf16.msra.mxu0 0
        %1023 = vmatprep.subr.bf16.mxu0 0
        %1024 = vmatpush1.bf16.msra.mxu0 0
        %1025 = vmatprep.mubr.bf16.mxu0 0
        %1026 = vmatmul.mubr.bf16.gmra.mrb[0].mxu0 %v987
        %v1027 = vpop.f32.mrb[0].mxu0
        %v1028 = vadd.f32 0.0, %v1027
        %v1029 = vpop.f32.mrb[0].mxu0
        %v1030 = vpop.f32.mrb[0].mxu0
        %v1031 = vpop.f32.mrb[0].mxu0
        %1032 = vdwg.mxu0
        %v1033 = vpack.c.bf16 %v1028, %v1028
        %v1034 = vld [vmem:[%s9] sm:$0xf]
        %v1036 = vsel %vm927, %v1033, 0
        %v1039 = vsel %vm989, %v1034, 0
        %1041 = vmatprep.subr.bf16.mxu0 0
        %1042 = vmatpush1.bf16.msra.mxu0 %v1039
        %1043 = vmatprep.subr.bf16.mxu0 0
        %1044 = vmatpush1.bf16.msra.mxu0 0
        %1045 = vmatprep.subr.bf16.mxu0 0
        %1046 = vmatpush1.bf16.msra.mxu0 0
        %1047 = vmatprep.subr.bf16.mxu0 0
        %1048 = vmatpush1.bf16.msra.mxu0 0
        %1049 = vmatprep.subr.bf16.mxu0 0
        %1050 = vmatpush1.bf16.msra.mxu0 0
        %1051 = vmatprep.subr.bf16.mxu0 0
        %1052 = vmatpush1.bf16.msra.mxu0 0
        %1053 = vmatprep.subr.bf16.mxu0 0
        %1054 = vmatpush1.bf16.msra.mxu0 0
        %1055 = vmatprep.subr.bf16.mxu0 0
        %1056 = vmatpush1.bf16.msra.mxu0 0
        %1057 = vmatprep.subr.bf16.mxu0 0
        %1058 = vmatpush1.bf16.msra.mxu0 0
        %1059 = vmatprep.subr.bf16.mxu0 0
        %1060 = vmatpush1.bf16.msra.mxu0 0
        %1061 = vmatprep.subr.bf16.mxu0 0
        %1062 = vmatpush1.bf16.msra.mxu0 0
        %1063 = vmatprep.subr.bf16.mxu0 0
        %1064 = vmatpush1.bf16.msra.mxu0 0
        %1065 = vmatprep.subr.bf16.mxu0 0
        %1066 = vmatpush1.bf16.msra.mxu0 0
        %1067 = vmatprep.subr.bf16.mxu0 0
        %1068 = vmatpush1.bf16.msra.mxu0 0
        %1069 = vmatprep.subr.bf16.mxu0 0
        %1070 = vmatpush1.bf16.msra.mxu0 0
        %1071 = vmatprep.subr.bf16.mxu0 0
        %1072 = vmatpush1.bf16.msra.mxu0 0
        %1073 = vmatprep.mubr.bf16.mxu0 0
        %1074 = vmatmul.mubr.bf16.gmra.mrb[0].mxu0 %v1036
        %v1075 = vpop.f32.mrb[0].mxu0
        %v1076 = vadd.f32 0.0, %v1075
        %v1077 = vpop.f32.mrb[0].mxu0
        %v1078 = vpop.f32.mrb[0].mxu0
        %v1079 = vpop.f32.mrb[0].mxu0
        %1080 = vdwg.mxu0
        %v1081 = vadd.f32 %v925, %v1076
        %1083 = vrot.lane.b32.xlu0 %v917, 120
        %v1084 = vpop.permute.xlu0 %1083
        %1086 = vrot.lane.b32.xlu0 %v918, 120
        %v1087 = vpop.permute.xlu0 %1086
        %v1089 = vsel %vm927, %v1084, 0
        %v1092 = vsel %vm927, %v1087, 0
        %1094 = vmatprep.subr.bf16.mxu0 0
        %1095 = vmatpush1.bf16.xpose.msra.mxu0 %v1092
        %1096 = vmatprep.subr.bf16.mxu0 0
        %1097 = vmatpush1.bf16.xpose.msra.mxu0 0
        %1098 = vmatprep.subr.bf16.mxu0 0
        %1099 = vmatpush1.bf16.xpose.msra.mxu0 0
        %1100 = vmatprep.subr.bf16.mxu0 0
        %1101 = vmatpush1.bf16.xpose.msra.mxu0 0
        %1102 = vmatprep.subr.bf16.mxu0 0
        %1103 = vmatpush1.bf16.xpose.msra.mxu0 0
        %1104 = vmatprep.subr.bf16.mxu0 0
        %1105 = vmatpush1.bf16.xpose.msra.mxu0 0
        %1106 = vmatprep.subr.bf16.mxu0 0
        %1107 = vmatpush1.bf16.xpose.msra.mxu0 0
        %1108 = vmatprep.subr.bf16.mxu0 0
        %1109 = vmatpush1.bf16.xpose.msra.mxu0 0
        %1110 = vmatprep.subr.bf16.mxu0 0
        %1111 = vmatpush1.bf16.xpose.msra.mxu0 0
        %1112 = vmatprep.subr.bf16.mxu0 0
        %1113 = vmatpush1.bf16.xpose.msra.mxu0 0
        %1114 = vmatprep.subr.bf16.mxu0 0
        %1115 = vmatpush1.bf16.xpose.msra.mxu0 0
        %1116 = vmatprep.subr.bf16.mxu0 0
        %1117 = vmatpush1.bf16.xpose.msra.mxu0 0
        %1118 = vmatprep.subr.bf16.mxu0 0
        %1119 = vmatpush1.bf16.xpose.msra.mxu0 0
        %1120 = vmatprep.subr.bf16.mxu0 0
        %1121 = vmatpush1.bf16.xpose.msra.mxu0 0
        %1122 = vmatprep.subr.bf16.mxu0 0
        %1123 = vmatpush1.bf16.xpose.msra.mxu0 0
        %1124 = vmatprep.subr.bf16.mxu0 0
        %1125 = vmatpush1.bf16.xpose.msra.mxu0 0
        %1126 = vmatprep.mubr.bf16.mxu0 0
        %1127 = vmatmul.mubr.bf16.gmra.mrb[0].mxu0 %v1089
        %v1128 = vpop.f32.mrb[0].mxu0
        %v1129 = vadd.f32 0.0, %v1128
        %v1130 = vpop.f32.mrb[0].mxu0
        %v1131 = vpop.f32.mrb[0].mxu0
        %v1132 = vpop.f32.mrb[0].mxu0
        %1133 = vdwg.mxu0
        %v1134 = vsel %vm927, %v1129, -inf
        %1135 = vmax.xlane.f32.xlu0 %v1134
        %v1136 = vpop.xlane.xlu0 %1135
        %v1137 = vsub.f32 %v1129, %v1136
        %v1138 = vmul.f32 %v1137, 1.442695
        %v1139 = vpow.pop %v1138
        %v1140 = vsel %vm927, %v1139, 0.0
        %1141 = vadd.xlane.f32.xlu0 %v1140
        %v1142 = vpop.xlane.xlu0 %1141
        %v1143 = vrcp.pop %v1142
        %v1144 = vmul.f32 %v1139, %v1143
        %v1145 = vpack.c.bf16 %v1144, %v1144
        %1147 = vrot.lane.b32.xlu0 %v919, 120
        %v1148 = vpop.permute.xlu0 %1147
        %v1150 = vsel %vm927, %v1145, 0
        %v1153 = vsel %vm989, %v1148, 0
        %1155 = vmatprep.subr.bf16.mxu0 0
        %1156 = vmatpush1.bf16.msra.mxu0 %v1153
        %1157 = vmatprep.subr.bf16.mxu0 0
        %1158 = vmatpush1.bf16.msra.mxu0 0
        %1159 = vmatprep.subr.bf16.mxu0 0
        %1160 = vmatpush1.bf16.msra.mxu0 0
        %1161 = vmatprep.subr.bf16.mxu0 0
        %1162 = vmatpush1.bf16.msra.mxu0 0
        %1163 = vmatprep.subr.bf16.mxu0 0
        %1164 = vmatpush1.bf16.msra.mxu0 0
        %1165 = vmatprep.subr.bf16.mxu0 0
        %1166 = vmatpush1.bf16.msra.mxu0 0
        %1167 = vmatprep.subr.bf16.mxu0 0
        %1168 = vmatpush1.bf16.msra.mxu0 0
        %1169 = vmatprep.subr.bf16.mxu0 0
        %1170 = vmatpush1.bf16.msra.mxu0 0
        %1171 = vmatprep.subr.bf16.mxu0 0
        %1172 = vmatpush1.bf16.msra.mxu0 0
        %1173 = vmatprep.subr.bf16.mxu0 0
        %1174 = vmatpush1.bf16.msra.mxu0 0
        %1175 = vmatprep.subr.bf16.mxu0 0
        %1176 = vmatpush1.bf16.msra.mxu0 0
        %1177 = vmatprep.subr.bf16.mxu0 0
        %1178 = vmatpush1.bf16.msra.mxu0 0
        %1179 = vmatprep.subr.bf16.mxu0 0
        %1180 = vmatpush1.bf16.msra.mxu0 0
        %1181 = vmatprep.subr.bf16.mxu0 0
        %1182 = vmatpush1.bf16.msra.mxu0 0
        %1183 = vmatprep.subr.bf16.mxu0 0
        %1184 = vmatpush1.bf16.msra.mxu0 0
        %1185 = vmatprep.subr.bf16.mxu0 0
        %1186 = vmatpush1.bf16.msra.mxu0 0
        %1187 = vmatprep.mubr.bf16.mxu0 0
        %1188 = vmatmul.mubr.bf16.gmra.mrb[0].mxu0 %v1150
        %v1189 = vpop.f32.mrb[0].mxu0
        %v1190 = vadd.f32 0.0, %v1189
        %v1191 = vpop.f32.mrb[0].mxu0
        %v1192 = vpop.f32.mrb[0].mxu0
        %v1193 = vpop.f32.mrb[0].mxu0
        %1194 = vdwg.mxu0
        %v1195 = vpack.c.bf16 %v1190, %v1190
        %s1196 = scalar_lea.vmem %s9, 4
        %v1197 = vld [vmem:[%s1196] sm:$0xf]
        %v1199 = vsel %vm927, %v1195, 0
        %v1202 = vsel %vm989, %v1197, 0
        %1204 = vmatprep.subr.bf16.mxu0 0
        %1205 = vmatpush1.bf16.msra.mxu0 %v1202
        %1206 = vmatprep.subr.bf16.mxu0 0
        %1207 = vmatpush1.bf16.msra.mxu0 0
        %1208 = vmatprep.subr.bf16.mxu0 0
        %1209 = vmatpush1.bf16.msra.mxu0 0
        %1210 = vmatprep.subr.bf16.mxu0 0
        %1211 = vmatpush1.bf16.msra.mxu0 0
        %1212 = vmatprep.subr.bf16.mxu0 0
        %1213 = vmatpush1.bf16.msra.mxu0 0
        %1214 = vmatprep.subr.bf16.mxu0 0
        %1215 = vmatpush1.bf16.msra.mxu0 0
        %1216 = vmatprep.subr.bf16.mxu0 0
        %1217 = vmatpush1.bf16.msra.mxu0 0
        %1218 = vmatprep.subr.bf16.mxu0 0
        %1219 = vmatpush1.bf16.msra.mxu0 0
        %1220 = vmatprep.subr.bf16.mxu0 0
        %1221 = vmatpush1.bf16.msra.mxu0 0
        %1222 = vmatprep.subr.bf16.mxu0 0
        %1223 = vmatpush1.bf16.msra.mxu0 0
        %1224 = vmatprep.subr.bf16.mxu0 0
        %1225 = vmatpush1.bf16.msra.mxu0 0
        %1226 = vmatprep.subr.bf16.mxu0 0
        %1227 = vmatpush1.bf16.msra.mxu0 0
        %1228 = vmatprep.subr.bf16.mxu0 0
        %1229 = vmatpush1.bf16.msra.mxu0 0
        %1230 = vmatprep.subr.bf16.mxu0 0
        %1231 = vmatpush1.bf16.msra.mxu0 0
        %1232 = vmatprep.subr.bf16.mxu0 0
        %1233 = vmatpush1.bf16.msra.mxu0 0
        %1234 = vmatprep.subr.bf16.mxu0 0
        %1235 = vmatpush1.bf16.msra.mxu0 0
        %1236 = vmatprep.mubr.bf16.mxu0 0
        %1237 = vmatmul.mubr.bf16.gmra.mrb[0].mxu0 %v1199
        %v1238 = vpop.f32.mrb[0].mxu0
        %v1239 = vadd.f32 0.0, %v1238
        %v1240 = vpop.f32.mrb[0].mxu0
        %v1241 = vpop.f32.mrb[0].mxu0
        %v1242 = vpop.f32.mrb[0].mxu0
        %1243 = vdwg.mxu0
        %v1244 = vadd.f32 %v1081, %v1239
        %1245 = vrot.lane.b32.xlu0 %v917, 112
        %v1246 = vpop.permute.xlu0 %1245
        %1247 = vrot.lane.b32.xlu0 %v918, 112
        %v1248 = vpop.permute.xlu0 %1247
        %v1250 = vsel %vm927, %v1246, 0
        %v1253 = vsel %vm927, %v1248, 0
        %1255 = vmatprep.subr.bf16.mxu0 0
        %1256 = vmatpush1.bf16.xpose.msra.mxu0 %v1253
        %1257 = vmatprep.subr.bf16.mxu0 0
        %1258 = vmatpush1.bf16.xpose.msra.mxu0 0
        %1259 = vmatprep.subr.bf16.mxu0 0
        %1260 = vmatpush1.bf16.xpose.msra.mxu0 0
        %1261 = vmatprep.subr.bf16.mxu0 0
        %1262 = vmatpush1.bf16.xpose.msra.mxu0 0
        %1263 = vmatprep.subr.bf16.mxu0 0
        %1264 = vmatpush1.bf16.xpose.msra.mxu0 0
        %1265 = vmatprep.subr.bf16.mxu0 0
        %1266 = vmatpush1.bf16.xpose.msra.mxu0 0
        %1267 = vmatprep.subr.bf16.mxu0 0
        %1268 = vmatpush1.bf16.xpose.msra.mxu0 0
        %1269 = vmatprep.subr.bf16.mxu0 0
        %1270 = vmatpush1.bf16.xpose.msra.mxu0 0
        %1271 = vmatprep.subr.bf16.mxu0 0
        %1272 = vmatpush1.bf16.xpose.msra.mxu0 0
        %1273 = vmatprep.subr.bf16.mxu0 0
        %1274 = vmatpush1.bf16.xpose.msra.mxu0 0
        %1275 = vmatprep.subr.bf16.mxu0 0
        %1276 = vmatpush1.bf16.xpose.msra.mxu0 0
        %1277 = vmatprep.subr.bf16.mxu0 0
        %1278 = vmatpush1.bf16.xpose.msra.mxu0 0
        %1279 = vmatprep.subr.bf16.mxu0 0
        %1280 = vmatpush1.bf16.xpose.msra.mxu0 0
        %1281 = vmatprep.subr.bf16.mxu0 0
        %1282 = vmatpush1.bf16.xpose.msra.mxu0 0
        %1283 = vmatprep.subr.bf16.mxu0 0
        %1284 = vmatpush1.bf16.xpose.msra.mxu0 0
        %1285 = vmatprep.subr.bf16.mxu0 0
        %1286 = vmatpush1.bf16.xpose.msra.mxu0 0
        %1287 = vmatprep.mubr.bf16.mxu0 0
        %1288 = vmatmul.mubr.bf16.gmra.mrb[0].mxu0 %v1250
        %v1289 = vpop.f32.mrb[0].mxu0
        %v1290 = vadd.f32 0.0, %v1289
        %v1291 = vpop.f32.mrb[0].mxu0
        %v1292 = vpop.f32.mrb[0].mxu0
        %v1293 = vpop.f32.mrb[0].mxu0
        %1294 = vdwg.mxu0
        %v1295 = vsel %vm927, %v1290, -inf
        %1296 = vmax.xlane.f32.xlu0 %v1295
        %v1297 = vpop.xlane.xlu0 %1296
        %v1298 = vsub.f32 %v1290, %v1297
        %v1299 = vmul.f32 %v1298, 1.442695
        %v1300 = vpow.pop %v1299
        %v1301 = vsel %vm927, %v1300, 0.0
        %1302 = vadd.xlane.f32.xlu0 %v1301
        %v1303 = vpop.xlane.xlu0 %1302
        %v1304 = vrcp.pop %v1303
        %v1305 = vmul.f32 %v1300, %v1304
        %v1306 = vpack.c.bf16 %v1305, %v1305
        %1307 = vrot.lane.b32.xlu0 %v919, 112
        %v1308 = vpop.permute.xlu0 %1307
        %v1310 = vsel %vm927, %v1306, 0
        %v1313 = vsel %vm989, %v1308, 0
        %1315 = vmatprep.subr.bf16.mxu0 0
        %1316 = vmatpush1.bf16.msra.mxu0 %v1313
        %1317 = vmatprep.subr.bf16.mxu0 0
        %1318 = vmatpush1.bf16.msra.mxu0 0
        %1319 = vmatprep.subr.bf16.mxu0 0
        %1320 = vmatpush1.bf16.msra.mxu0 0
        %1321 = vmatprep.subr.bf16.mxu0 0
        %1322 = vmatpush1.bf16.msra.mxu0 0
        %1323 = vmatprep.subr.bf16.mxu0 0
        %1324 = vmatpush1.bf16.msra.mxu0 0
        %1325 = vmatprep.subr.bf16.mxu0 0
        %1326 = vmatpush1.bf16.msra.mxu0 0
        %1327 = vmatprep.subr.bf16.mxu0 0
        %1328 = vmatpush1.bf16.msra.mxu0 0
        %1329 = vmatprep.subr.bf16.mxu0 0
        %1330 = vmatpush1.bf16.msra.mxu0 0
        %1331 = vmatprep.subr.bf16.mxu0 0
        %1332 = vmatpush1.bf16.msra.mxu0 0
        %1333 = vmatprep.subr.bf16.mxu0 0
        %1334 = vmatpush1.bf16.msra.mxu0 0
        %1335 = vmatprep.subr.bf16.mxu0 0
        %1336 = vmatpush1.bf16.msra.mxu0 0
        %1337 = vmatprep.subr.bf16.mxu0 0
        %1338 = vmatpush1.bf16.msra.mxu0 0
        %1339 = vmatprep.subr.bf16.mxu0 0
        %1340 = vmatpush1.bf16.msra.mxu0 0
        %1341 = vmatprep.subr.bf16.mxu0 0
        %1342 = vmatpush1.bf16.msra.mxu0 0
        %1343 = vmatprep.subr.bf16.mxu0 0
        %1344 = vmatpush1.bf16.msra.mxu0 0
        %1345 = vmatprep.subr.bf16.mxu0 0
        %1346 = vmatpush1.bf16.msra.mxu0 0
        %1347 = vmatprep.mubr.bf16.mxu0 0
        %1348 = vmatmul.mubr.bf16.gmra.mrb[0].mxu0 %v1310
        %v1349 = vpop.f32.mrb[0].mxu0
        %v1350 = vadd.f32 0.0, %v1349
        %v1351 = vpop.f32.mrb[0].mxu0
        %v1352 = vpop.f32.mrb[0].mxu0
        %v1353 = vpop.f32.mrb[0].mxu0
        %1354 = vdwg.mxu0
        %v1355 = vpack.c.bf16 %v1350, %v1350
        %s1356 = scalar_lea.vmem %s9, 8
        %v1357 = vld [vmem:[%s1356] sm:$0xf]
        %v1359 = vsel %vm927, %v1355, 0
        %v1362 = vsel %vm989, %v1357, 0
        %1364 = vmatprep.subr.bf16.mxu0 0
        %1365 = vmatpush1.bf16.msra.mxu0 %v1362
        %1366 = vmatprep.subr.bf16.mxu0 0
        %1367 = vmatpush1.bf16.msra.mxu0 0
        %1368 = vmatprep.subr.bf16.mxu0 0
        %1369 = vmatpush1.bf16.msra.mxu0 0
        %1370 = vmatprep.subr.bf16.mxu0 0
        %1371 = vmatpush1.bf16.msra.mxu0 0
        %1372 = vmatprep.subr.bf16.mxu0 0
        %1373 = vmatpush1.bf16.msra.mxu0 0
        %1374 = vmatprep.subr.bf16.mxu0 0
        %1375 = vmatpush1.bf16.msra.mxu0 0
        %1376 = vmatprep.subr.bf16.mxu0 0
        %1377 = vmatpush1.bf16.msra.mxu0 0
        %1378 = vmatprep.subr.bf16.mxu0 0
        %1379 = vmatpush1.bf16.msra.mxu0 0
        %1380 = vmatprep.subr.bf16.mxu0 0
        %1381 = vmatpush1.bf16.msra.mxu0 0
        %1382 = vmatprep.subr.bf16.mxu0 0
        %1383 = vmatpush1.bf16.msra.mxu0 0
        %1384 = vmatprep.subr.bf16.mxu0 0
        %1385 = vmatpush1.bf16.msra.mxu0 0
        %1386 = vmatprep.subr.bf16.mxu0 0
        %1387 = vmatpush1.bf16.msra.mxu0 0
        %1388 = vmatprep.subr.bf16.mxu0 0
        %1389 = vmatpush1.bf16.msra.mxu0 0
        %1390 = vmatprep.subr.bf16.mxu0 0
        %1391 = vmatpush1.bf16.msra.mxu0 0
        %1392 = vmatprep.subr.bf16.mxu0 0
        %1393 = vmatpush1.bf16.msra.mxu0 0
        %1394 = vmatprep.subr.bf16.mxu0 0
        %1395 = vmatpush1.bf16.msra.mxu0 0
        %1396 = vmatprep.mubr.bf16.mxu0 0
        %1397 = vmatmul.mubr.bf16.gmra.mrb[0].mxu0 %v1359
        %v1398 = vpop.f32.mrb[0].mxu0
        %v1399 = vadd.f32 0.0, %v1398
        %v1400 = vpop.f32.mrb[0].mxu0
        %v1401 = vpop.f32.mrb[0].mxu0
        %v1402 = vpop.f32.mrb[0].mxu0
        %1403 = vdwg.mxu0
        %v1404 = vadd.f32 %v1244, %v1399
        %1405 = vrot.lane.b32.xlu0 %v917, 104
        %v1406 = vpop.permute.xlu0 %1405
        %1407 = vrot.lane.b32.xlu0 %v918, 104
        %v1408 = vpop.permute.xlu0 %1407
        %v1410 = vsel %vm927, %v1406, 0
        %v1413 = vsel %vm927, %v1408, 0
        %1415 = vmatprep.subr.bf16.mxu0 0
        %1416 = vmatpush1.bf16.xpose.msra.mxu0 %v1413
        %1417 = vmatprep.subr.bf16.mxu0 0
        %1418 = vmatpush1.bf16.xpose.msra.mxu0 0
        %1419 = vmatprep.subr.bf16.mxu0 0
        %1420 = vmatpush1.bf16.xpose.msra.mxu0 0
        %1421 = vmatprep.subr.bf16.mxu0 0
        %1422 = vmatpush1.bf16.xpose.msra.mxu0 0
        %1423 = vmatprep.subr.bf16.mxu0 0
        %1424 = vmatpush1.bf16.xpose.msra.mxu0 0
        %1425 = vmatprep.subr.bf16.mxu0 0
        %1426 = vmatpush1.bf16.xpose.msra.mxu0 0
        %1427 = vmatprep.subr.bf16.mxu0 0
        %1428 = vmatpush1.bf16.xpose.msra.mxu0 0
        %1429 = vmatprep.subr.bf16.mxu0 0
        %1430 = vmatpush1.bf16.xpose.msra.mxu0 0
        %1431 = vmatprep.subr.bf16.mxu0 0
        %1432 = vmatpush1.bf16.xpose.msra.mxu0 0
        %1433 = vmatprep.subr.bf16.mxu0 0
        %1434 = vmatpush1.bf16.xpose.msra.mxu0 0
        %1435 = vmatprep.subr.bf16.mxu0 0
        %1436 = vmatpush1.bf16.xpose.msra.mxu0 0
        %1437 = vmatprep.subr.bf16.mxu0 0
        %1438 = vmatpush1.bf16.xpose.msra.mxu0 0
        %1439 = vmatprep.subr.bf16.mxu0 0
        %1440 = vmatpush1.bf16.xpose.msra.mxu0 0
        %1441 = vmatprep.subr.bf16.mxu0 0
        %1442 = vmatpush1.bf16.xpose.msra.mxu0 0
        %1443 = vmatprep.subr.bf16.mxu0 0
        %1444 = vmatpush1.bf16.xpose.msra.mxu0 0
        %1445 = vmatprep.subr.bf16.mxu0 0
        %1446 = vmatpush1.bf16.xpose.msra.mxu0 0
        %1447 = vmatprep.mubr.bf16.mxu0 0
        %1448 = vmatmul.mubr.bf16.gmra.mrb[0].mxu0 %v1410
        %v1449 = vpop.f32.mrb[0].mxu0
        %v1450 = vadd.f32 0.0, %v1449
        %v1451 = vpop.f32.mrb[0].mxu0
        %v1452 = vpop.f32.mrb[0].mxu0
        %v1453 = vpop.f32.mrb[0].mxu0
        %1454 = vdwg.mxu0
        %v1455 = vsel %vm927, %v1450, -inf
        %1456 = vmax.xlane.f32.xlu0 %v1455
        %v1457 = vpop.xlane.xlu0 %1456
        %v1458 = vsub.f32 %v1450, %v1457
        %v1459 = vmul.f32 %v1458, 1.442695
        %v1460 = vpow.pop %v1459
        %v1461 = vsel %vm927, %v1460, 0.0
        %1462 = vadd.xlane.f32.xlu0 %v1461
        %v1463 = vpop.xlane.xlu0 %1462
        %v1464 = vrcp.pop %v1463
        %v1465 = vmul.f32 %v1460, %v1464
        %v1466 = vpack.c.bf16 %v1465, %v1465
        %1467 = vrot.lane.b32.xlu0 %v919, 104
        %v1468 = vpop.permute.xlu0 %1467
        %v1470 = vsel %vm927, %v1466, 0
        %v1473 = vsel %vm989, %v1468, 0
        %1475 = vmatprep.subr.bf16.mxu0 0
        %1476 = vmatpush1.bf16.msra.mxu0 %v1473
        %1477 = vmatprep.subr.bf16.mxu0 0
        %1478 = vmatpush1.bf16.msra.mxu0 0
        %1479 = vmatprep.subr.bf16.mxu0 0
        %1480 = vmatpush1.bf16.msra.mxu0 0
        %1481 = vmatprep.subr.bf16.mxu0 0
        %1482 = vmatpush1.bf16.msra.mxu0 0
        %1483 = vmatprep.subr.bf16.mxu0 0
        %1484 = vmatpush1.bf16.msra.mxu0 0
        %1485 = vmatprep.subr.bf16.mxu0 0
        %1486 = vmatpush1.bf16.msra.mxu0 0
        %1487 = vmatprep.subr.bf16.mxu0 0
        %1488 = vmatpush1.bf16.msra.mxu0 0
        %1489 = vmatprep.subr.bf16.mxu0 0
        %1490 = vmatpush1.bf16.msra.mxu0 0
        %1491 = vmatprep.subr.bf16.mxu0 0
        %1492 = vmatpush1.bf16.msra.mxu0 0
        %1493 = vmatprep.subr.bf16.mxu0 0
        %1494 = vmatpush1.bf16.msra.mxu0 0
        %1495 = vmatprep.subr.bf16.mxu0 0
        %1496 = vmatpush1.bf16.msra.mxu0 0
        %1497 = vmatprep.subr.bf16.mxu0 0
        %1498 = vmatpush1.bf16.msra.mxu0 0
        %1499 = vmatprep.subr.bf16.mxu0 0
        %1500 = vmatpush1.bf16.msra.mxu0 0
        %1501 = vmatprep.subr.bf16.mxu0 0
        %1502 = vmatpush1.bf16.msra.mxu0 0
        %1503 = vmatprep.subr.bf16.mxu0 0
        %1504 = vmatpush1.bf16.msra.mxu0 0
        %1505 = vmatprep.subr.bf16.mxu0 0
        %1506 = vmatpush1.bf16.msra.mxu0 0
        %1507 = vmatprep.mubr.bf16.mxu0 0
        %1508 = vmatmul.mubr.bf16.gmra.mrb[0].mxu0 %v1470
        %v1509 = vpop.f32.mrb[0].mxu0
        %v1510 = vadd.f32 0.0, %v1509
        %v1511 = vpop.f32.mrb[0].mxu0
        %v1512 = vpop.f32.mrb[0].mxu0
        %v1513 = vpop.f32.mrb[0].mxu0
        %1514 = vdwg.mxu0
        %v1515 = vpack.c.bf16 %v1510, %v1510
        %s1516 = scalar_lea.vmem %s9, 12
        %v1517 = vld [vmem:[%s1516] sm:$0xf]
        %v1519 = vsel %vm927, %v1515, 0
        %v1522 = vsel %vm989, %v1517, 0
        %1524 = vmatprep.subr.bf16.mxu0 0
        %1525 = vmatpush1.bf16.msra.mxu0 %v1522
        %1526 = vmatprep.subr.bf16.mxu0 0
        %1527 = vmatpush1.bf16.msra.mxu0 0
        %1528 = vmatprep.subr.bf16.mxu0 0
        %1529 = vmatpush1.bf16.msra.mxu0 0
        %1530 = vmatprep.subr.bf16.mxu0 0
        %1531 = vmatpush1.bf16.msra.mxu0 0
        %1532 = vmatprep.subr.bf16.mxu0 0
        %1533 = vmatpush1.bf16.msra.mxu0 0
        %1534 = vmatprep.subr.bf16.mxu0 0
        %1535 = vmatpush1.bf16.msra.mxu0 0
        %1536 = vmatprep.subr.bf16.mxu0 0
        %1537 = vmatpush1.bf16.msra.mxu0 0
        %1538 = vmatprep.subr.bf16.mxu0 0
        %1539 = vmatpush1.bf16.msra.mxu0 0
        %1540 = vmatprep.subr.bf16.mxu0 0
        %1541 = vmatpush1.bf16.msra.mxu0 0
        %1542 = vmatprep.subr.bf16.mxu0 0
        %1543 = vmatpush1.bf16.msra.mxu0 0
        %1544 = vmatprep.subr.bf16.mxu0 0
        %1545 = vmatpush1.bf16.msra.mxu0 0
        %1546 = vmatprep.subr.bf16.mxu0 0
        %1547 = vmatpush1.bf16.msra.mxu0 0
        %1548 = vmatprep.subr.bf16.mxu0 0
        %1549 = vmatpush1.bf16.msra.mxu0 0
        %1550 = vmatprep.subr.bf16.mxu0 0
        %1551 = vmatpush1.bf16.msra.mxu0 0
        %1552 = vmatprep.subr.bf16.mxu0 0
        %1553 = vmatpush1.bf16.msra.mxu0 0
        %1554 = vmatprep.subr.bf16.mxu0 0
        %1555 = vmatpush1.bf16.msra.mxu0 0
        %1556 = vmatprep.mubr.bf16.mxu0 0
        %1557 = vmatmul.mubr.bf16.gmra.mrb[0].mxu0 %v1519
        %v1558 = vpop.f32.mrb[0].mxu0
        %v1559 = vadd.f32 0.0, %v1558
        %v1560 = vpop.f32.mrb[0].mxu0
        %v1561 = vpop.f32.mrb[0].mxu0
        %v1562 = vpop.f32.mrb[0].mxu0
        %1563 = vdwg.mxu0
        %v1564 = vadd.f32 %v1404, %v1559
        %v1565 = vadd.f32 %v711, %v1564
        %v1566 = vld [vmem:[#allocation10] sm:$0x1]
        %v1567 = vld [vmem:[#allocation11] sm:$0x1]
        %v1568 = vsel %vm738, %v1565, 0.0
        %1569 = vadd.xlane.f32.xlu0 %v1568
        %v1570 = vpop.xlane.xlu0 %1569
        %v1571 = vrcp.pop 32.0
        %v1572 = vmul.f32 %v1570, %v1571
        %v1573 = vsub.f32 %v1565, %v1572
        %v1574 = vmul.f32 %v1573, %v1573
        %v1575 = vsel %vm738, %v1574, 0.0
        %1576 = vadd.xlane.f32.xlu0 %v1575
        %v1577 = vpop.xlane.xlu0 %1576
        %v1578 = vmul.f32 %v1577, %v1571
        %v1579 = vadd.f32 %v1578, 1e-05
        %v1580 = vrsqrt.pop %v1579
        %v1581 = vmul.f32 %v1573, %v1580
        %v1583 = vlaneseq
        %v1584 = vshrl.u32 %v1583, 7
        %v1585 = vsub.s32 0, %v1584
        %v1586 = vrot.slane %v1566, %v1585
        %v1588 = vmul.f32 %v1581, %v1586
        %v1590 = vlaneseq
        %v1591 = vshrl.u32 %v1590, 7
        %v1592 = vsub.s32 0, %v1591
        %v1593 = vrot.slane %v1567, %v1592
        %v1595 = vadd.f32 %v1588, %v1593
        %v1596 = vpack.c.bf16 %v1595, %v1595
        %v1597 = vld [vmem:[%s13] sm:$0xf]
        %v1598 = vld [vmem:[%s13 + $0x4] sm:$0xf]
        %v1599 = vld [vmem:[%s13 + $0x8] sm:$0xf]
        %v1600 = vld [vmem:[%s13 + $0xc] sm:$0xf]
        %v1601 = vld [vmem:[%s14] sm:$0x1]
        %v1603 = vlaneseq
        %v1604 = vshrl.u32 %v1603, 7
        %v1605 = vsub.s32 0, %v1604
        %v1606 = vrot.slane %v1601, %v1605
        %v1612 = vunpack.c.l.b16 %v1597
        %v1613 = vunpack.c.l.b16 %v1598
        %v1614 = vunpack.c.l.b16 %v1599
        %v1615 = vunpack.c.l.b16 %v1600
        %v1616 = vpack.c.b16 %v1613, %v1612
        %v1617 = vpack.c.b16 %v1615, %v1614
        %v1621 = vsel %vm738, %v1596, 0
        %1623 = vmatprep.subr.bf16.mxu0 0
        %1624 = vmatpush1.bf16.msra.mxu0 %v1616
        %1625 = vmatprep.subr.bf16.mxu0 0
        %1626 = vmatpush1.bf16.msra.mxu0 %v1617
        %1627 = vmatprep.subr.bf16.mxu0 0
        %1628 = vmatpush1.bf16.msra.mxu0 0
        %1629 = vmatprep.subr.bf16.mxu0 0
        %1630 = vmatpush1.bf16.msra.mxu0 0
        %1631 = vmatprep.subr.bf16.mxu0 0
        %1632 = vmatpush1.bf16.msra.mxu0 0
        %1633 = vmatprep.subr.bf16.mxu0 0
        %1634 = vmatpush1.bf16.msra.mxu0 0
        %1635 = vmatprep.subr.bf16.mxu0 0
        %1636 = vmatpush1.bf16.msra.mxu0 0
        %1637 = vmatprep.subr.bf16.mxu0 0
        %1638 = vmatpush1.bf16.msra.mxu0 0
        %1639 = vmatprep.subr.bf16.mxu0 0
        %1640 = vmatpush1.bf16.msra.mxu0 0
        %1641 = vmatprep.subr.bf16.mxu0 0
        %1642 = vmatpush1.bf16.msra.mxu0 0
        %1643 = vmatprep.subr.bf16.mxu0 0
        %1644 = vmatpush1.bf16.msra.mxu0 0
        %1645 = vmatprep.subr.bf16.mxu0 0
        %1646 = vmatpush1.bf16.msra.mxu0 0
        %1647 = vmatprep.subr.bf16.mxu0 0
        %1648 = vmatpush1.bf16.msra.mxu0 0
        %1649 = vmatprep.subr.bf16.mxu0 0
        %1650 = vmatpush1.bf16.msra.mxu0 0
        %1651 = vmatprep.subr.bf16.mxu0 0
        %1652 = vmatpush1.bf16.msra.mxu0 0
        %1653 = vmatprep.subr.bf16.mxu0 0
        %1654 = vmatpush1.bf16.msra.mxu0 0
        %1655 = vmatprep.mubr.bf16.mxu0 0
        %1656 = vmatmul.mubr.bf16.gmra.mrb[0].mxu0 %v1621
        %v1657 = vpop.f32.mrb[0].mxu0
        %v1658 = vadd.f32 %v1606, %v1657
        %v1659 = vpop.f32.mrb[0].mxu0
        %v1660 = vpop.f32.mrb[0].mxu0
        %v1661 = vpop.f32.mrb[0].mxu0
        %1662 = vdwg.mxu0
        %v1663 = vmax.f32 %v1658, 0.0
        %v1664 = vpack.c.bf16 %v1663, %v1663
        %v1665 = vld [vmem:[%s15] sm:$0xf]
        %v1666 = vld [vmem:[%s15 + $0x4] sm:$0xf]
        %v1667 = vld [vmem:[%s15 + $0x8] sm:$0xf]
        %v1668 = vld [vmem:[%s15 + $0xc] sm:$0xf]
        %v1669 = vld [vmem:[%s15 + $0x10] sm:$0xf]
        %v1670 = vld [vmem:[%s15 + $0x14] sm:$0xf]
        %v1671 = vld [vmem:[%s15 + $0x18] sm:$0xf]
        %v1672 = vld [vmem:[%s15 + $0x1c] sm:$0xf]
        %v1673 = vld [vmem:[%s15 + $0x20] sm:$0xf]
        %v1674 = vld [vmem:[%s15 + $0x24] sm:$0xf]
        %v1675 = vld [vmem:[%s15 + $0x28] sm:$0xf]
        %v1676 = vld [vmem:[%s15 + $0x2c] sm:$0xf]
        %v1677 = vld [vmem:[%s15 + $0x30] sm:$0xf]
        %v1678 = vld [vmem:[%s15 + $0x34] sm:$0xf]
        %v1679 = vld [vmem:[%s15 + $0x38] sm:$0xf]
        %v1680 = vld [vmem:[%s15 + $0x3c] sm:$0xf]
        %v1681 = vld [vmem:[%s16] sm:$0x1]
        %v1683 = vlaneseq
        %v1684 = vshrl.u32 %v1683, 7
        %v1685 = vsub.s32 0, %v1684
        %v1686 = vrot.slane %v1681, %v1685
        %v1704 = vunpack.c.l.b16 %v1665
        %v1705 = vunpack.c.l.b16 %v1666
        %v1706 = vunpack.c.l.b16 %v1667
        %v1707 = vunpack.c.l.b16 %v1668
        %v1708 = vunpack.c.l.b16 %v1669
        %v1709 = vunpack.c.l.b16 %v1670
        %v1710 = vunpack.c.l.b16 %v1671
        %v1711 = vunpack.c.l.b16 %v1672
        %v1712 = vunpack.c.l.b16 %v1673
        %v1713 = vunpack.c.l.b16 %v1674
        %v1714 = vunpack.c.l.b16 %v1675
        %v1715 = vunpack.c.l.b16 %v1676
        %v1716 = vunpack.c.l.b16 %v1677
        %v1717 = vunpack.c.l.b16 %v1678
        %v1718 = vunpack.c.l.b16 %v1679
        %v1719 = vunpack.c.l.b16 %v1680
        %v1720 = vpack.c.b16 %v1705, %v1704
        %v1721 = vpack.c.b16 %v1707, %v1706
        %v1722 = vpack.c.b16 %v1709, %v1708
        %v1723 = vpack.c.b16 %v1711, %v1710
        %v1724 = vpack.c.b16 %v1713, %v1712
        %v1725 = vpack.c.b16 %v1715, %v1714
        %v1726 = vpack.c.b16 %v1717, %v1716
        %v1727 = vpack.c.b16 %v1719, %v1718
        %1736 = vmatprep.subr.bf16.mxu0 0
        %1737 = vmatpush1.bf16.msra.mxu0 %v1720
        %1738 = vmatprep.subr.bf16.mxu0 0
        %1739 = vmatpush1.bf16.msra.mxu0 %v1721
        %1740 = vmatprep.subr.bf16.mxu0 0
        %1741 = vmatpush1.bf16.msra.mxu0 %v1722
        %1742 = vmatprep.subr.bf16.mxu0 0
        %1743 = vmatpush1.bf16.msra.mxu0 %v1723
        %1744 = vmatprep.subr.bf16.mxu0 0
        %1745 = vmatpush1.bf16.msra.mxu0 %v1724
        %1746 = vmatprep.subr.bf16.mxu0 0
        %1747 = vmatpush1.bf16.msra.mxu0 %v1725
        %1748 = vmatprep.subr.bf16.mxu0 0
        %1749 = vmatpush1.bf16.msra.mxu0 %v1726
        %1750 = vmatprep.subr.bf16.mxu0 0
        %1751 = vmatpush1.bf16.msra.mxu0 %v1727
        %1752 = vmatprep.subr.bf16.mxu0 0
        %1753 = vmatpush1.bf16.msra.mxu0 0
        %1754 = vmatprep.subr.bf16.mxu0 0
        %1755 = vmatpush1.bf16.msra.mxu0 0
        %1756 = vmatprep.subr.bf16.mxu0 0
        %1757 = vmatpush1.bf16.msra.mxu0 0
        %1758 = vmatprep.subr.bf16.mxu0 0
        %1759 = vmatpush1.bf16.msra.mxu0 0
        %1760 = vmatprep.subr.bf16.mxu0 0
        %1761 = vmatpush1.bf16.msra.mxu0 0
        %1762 = vmatprep.subr.bf16.mxu0 0
        %1763 = vmatpush1.bf16.msra.mxu0 0
        %1764 = vmatprep.subr.bf16.mxu0 0
        %1765 = vmatpush1.bf16.msra.mxu0 0
        %1766 = vmatprep.subr.bf16.mxu0 0
        %1767 = vmatpush1.bf16.msra.mxu0 0
        %1768 = vmatprep.mubr.bf16.mxu0 0
        %1769 = vmatmul.mubr.bf16.gmra.mrb[0].mxu0 %v1664
        %v1770 = vpop.f32.mrb[0].mxu0
        %v1771 = vadd.f32 %v1686, %v1770
        %v1772 = vpop.f32.mrb[0].mxu0
        %v1773 = vpop.f32.mrb[0].mxu0
        %v1774 = vpop.f32.mrb[0].mxu0
        %1775 = vdwg.mxu0
        %v1776 = vadd.f32 %v1595, %v1771
        %v1777 = vld [vmem:[%s17] sm:$0x1]
        %v1778 = vld [vmem:[%s18] sm:$0x1]
        %v1779 = vsel %vm738, %v1776, 0.0
        %1780 = vadd.xlane.f32.xlu0 %v1779
        %v1781 = vpop.xlane.xlu0 %1780
        %v1782 = vmul.f32 %v1781, %v1571
        %v1783 = vsub.f32 %v1776, %v1782
        %v1784 = vmul.f32 %v1783, %v1783
        %v1785 = vsel %vm738, %v1784, 0.0
        %1786 = vadd.xlane.f32.xlu0 %v1785
        %v1787 = vpop.xlane.xlu0 %1786
        %v1788 = vmul.f32 %v1787, %v1571
        %v1789 = vadd.f32 %v1788, 1e-05
        %v1790 = vrsqrt.pop %v1789
        %v1791 = vmul.f32 %v1783, %v1790
        %v1793 = vlaneseq
        %v1794 = vshrl.u32 %v1793, 7
        %v1795 = vsub.s32 0, %v1794
        %v1796 = vrot.slane %v1777, %v1795
        %v1798 = vmul.f32 %v1791, %v1796
        %v1800 = vlaneseq
        %v1801 = vshrl.u32 %v1800, 7
        %v1802 = vsub.s32 0, %v1801
        %v1803 = vrot.slane %v1778, %v1802
        %v1805 = vadd.f32 %v1798, %v1803
        %1806 = vst.msk [vmem:[%s697] sm:$0xff] %vm738, %v1805
        %s1807 = sand.u32 %s459, 1
        %s1808 = scalar_lea.sflag [#allocation4], %s1807
        %s1809 = sand.u32 %s459, 1
        %s1810 = smul.addr %s1809, 8
        %s1811 = scalar_lea.vmem [#allocation13], %s1810
        // Predicated region
        $region121: #{tpu_custom_call.1} parent=95 // pred_check
          %p1812 = pneg %p469
        $region122: #{tpu_custom_call.1} parent=95 // pred_check_branch
          %1814 = sbr.rel (%p1812) target = $region124
        $region123: #{tpu_custom_call.1} parent=95 // pred_region
          %s1816 = ssub.s32 128, 128
          %1817 = vsyncadd %s1808, %s1816
          %s1818 = smul.addr %s37, 128
          %s1819 = scalar_lea.hbm %s19, %s1818
          %s1821 = sshll.u32 %s1811, 4
          %s1822 = int_to_ptr.vmem [resolvable:$true] %s1821
          %1824 = dma.vmem_to_hbm [thread:$0]  %s1822, 128, %s1819, %s1808
        $region124: #{tpu_custom_call.1} parent=95 // pred_fallthru
          _
      $region96: #{tpu_custom_call.1} parent=5 // pred_fallthru
        _
      %p1825 = scmp.le.s32.totalorder 2, %s32
      // Predicated region
      $region125: #{tpu_custom_call.1} parent=5 // pred_check
        %p1826 = pneg %p1825
      $region126: #{tpu_custom_call.1} parent=5 // pred_check_branch
        %1828 = sbr.rel (%p1826) target = $region128
      $region127: #{tpu_custom_call.1} parent=5 // pred_region
        %s1829 = ssub.s32 %s32, 2
        // Predicated region
        $region129: #{tpu_custom_call.1} parent=127 // pred_check
          %p1830 = pneg %p475
        $region130: #{tpu_custom_call.1} parent=127 // pred_check_branch
          %1832 = sbr.rel (%p1830) target = $region132
        $region131: #{tpu_custom_call.1} parent=127 // pred_region
          %s1833 = sand.u32 %s460, 1
          %s1834 = scalar_lea.sflag [#allocation4], %s1833
          %s1835 = sand.u32 %s460, 1
          %s1836 = smul.addr %s1835, 8
          %s1837 = scalar_lea.vmem [#allocation13], %s1836
          %1838 = dma.done %s1834, 128
        $region132: #{tpu_custom_call.1} parent=127 // pred_fallthru
          _
      $region128: #{tpu_custom_call.1} parent=5 // pred_fallthru
        _
    $region6: #{tpu_custom_call.1} parent=1 // loop_footer
      %s36 = sadd.s32 1, %s32
    $region7: #{tpu_custom_call.1} parent=1 // loop_footer_branch
      %31 = sbr.rel target = $region3
    $region8: #{tpu_custom_call.1} parent=1 // loop_exit
      _
    %1839 = vsyncpa [#allocation3], 1
    %s1840 = scalar_lea.sflag [#allocation3], 1
    %1841 = vsyncpa %s1840, 1
    %1842 = vsyncpa [#allocation6], 1
    %1843 = vsyncpa [#allocation9], 1
    %1844 = vsyncpa [#allocation12], 1
    %1845 = vsyncpa [#allocation4], 1
    %s1846 = scalar_lea.sflag [#allocation4], 1
    %1847 = vsyncpa %s1846, 1

</llo_original>
